<compile_context>
chip_gen: v7x
topology: tpu7x:2x2x1
jax: 0.10.0
libtpu: 0.0.40
codegen_flags: <defaults>
</compile_context>

<pallas_src>
import functools

import jax
import jax.numpy as jnp
from jax.experimental import pallas as pl
from jax.experimental.pallas import tpu as pltpu


_VMEM_LIMIT = 32 * 1024 * 1024  # explicit scoped-VMEM budget (safe on v5e/v6e/v7x)


# ----------------------------------------------------------------------------
# Kernel 1: tiled matmul + bias (+ optional fused LeakyReLU).
# Used for every 1x1 conv (bf16 MXU operands, fp32 accumulate / vector math).
# ----------------------------------------------------------------------------
def _matmul_bias_kernel(x_ref, w_ref, b_ref, o_ref, *, negative_slope):
    x = x_ref[...].astype(jnp.bfloat16)
    w = w_ref[...].astype(jnp.bfloat16)
    acc = jnp.dot(x, w, preferred_element_type=jnp.float32)
    acc = acc + b_ref[...].astype(jnp.float32)      # (1, N) broadcast over rows
    if negative_slope is not None:
        acc = jnp.where(acc >= 0, acc, acc * negative_slope)
    o_ref[...] = acc.astype(o_ref.dtype)


def matmul_bias(x, w, b, *, leaky=False, tm=256):
    """x: (M, K), w: (K, N), b: (N,) -> (M, N)."""
    M, K = x.shape
    K2, N = w.shape
    assert K == K2
    if M <= tm:
        tm = max(8, ((M + 7) // 8) * 8)             # single sublane-aligned block
    grid_m = pl.cdiv(M, tm)
    Mp = grid_m * tm
    x_in = jnp.pad(x, ((0, Mp - M), (0, 0))) if Mp != M else x

    kernel = functools.partial(
        _matmul_bias_kernel, negative_slope=0.01 if leaky else None)
    out = pl.pallas_call(
        kernel,
        out_shape=jax.ShapeDtypeStruct((Mp, N), x.dtype),
        grid=(grid_m,),
        in_specs=[
            pl.BlockSpec((tm, K), lambda i: (i, 0)),
            pl.BlockSpec((K, N), lambda i: (0, 0)),
            pl.BlockSpec((1, N), lambda i: (0, 0)),
        ],
        out_specs=pl.BlockSpec((tm, N), lambda i: (i, 0)),
        compiler_params=pltpu.CompilerParams(
            dimension_semantics=("parallel",), vmem_limit_bytes=_VMEM_LIMIT),
    )(x_in, w, b.reshape(1, N))
    return out[:M] if Mp != M else out


def conv1x1(x, w, b, *, leaky=False):
    """x: (B,H,W,Cin), w: (Cin,Cout), b: (Cout,) -> (B,H,W,Cout)."""
    B, H, W, Cin = x.shape
    y = matmul_bias(x.reshape(B * H * W, Cin), w, b, leaky=leaky)
    return y.reshape(B, H, W, -1)


# ----------------------------------------------------------------------------
# Kernel 2: fused 3x3 conv (padding=1), no im2col materialization.
# One grid step per image: the padded image is DMA'd once and the 9 (dy,dx)
# taps are accumulated as shifted bf16 matmuls into an fp32 accumulator.
# ----------------------------------------------------------------------------
def _conv3x3_kernel(xp_ref, w_ref, b_ref, o_ref):
    _, H, W, Cout = o_ref.shape
    Cin = w_ref.shape[1]
    xp = xp_ref[0]                                   # (H+2, W+2, Cin)
    w = w_ref[...].astype(jnp.bfloat16)              # (9, Cin, Cout)
    acc = jnp.zeros((H * W, Cout), jnp.float32)
    for t in range(9):                               # static, fully unrolled
        dy, dx = divmod(t, 3)
        win = xp[dy:dy + H, dx:dx + W, :].astype(jnp.bfloat16).reshape(H * W, Cin)
        acc = acc + jnp.dot(win, w[t], preferred_element_type=jnp.float32)
    acc = acc + b_ref[...].astype(jnp.float32)
    o_ref[0] = acc.reshape(H, W, Cout).astype(o_ref.dtype)


def conv3x3(x, w, b, *, stride=1):
    """x: (B,H,W,Cin), w: (3,3,Cin,Cout), b: (Cout,), padding=1, stride 1 or 2."""
    B, H, W, Cin = x.shape
    Cout = w.shape[-1]
    xp = jnp.pad(x, ((0, 0), (1, 1), (1, 1), (0, 0)))    # ~1.25x, not 9x, traffic
    w9 = w.reshape(9, Cin, Cout)

    y = pl.pallas_call(
        _conv3x3_kernel,
        out_shape=jax.ShapeDtypeStruct((B, H, W, Cout), x.dtype),
        grid=(B,),
        in_specs=[
            pl.BlockSpec((1, H + 2, W + 2, Cin), lambda bi: (bi, 0, 0, 0)),
            pl.BlockSpec((9, Cin, Cout), lambda bi: (0, 0, 0)),
            pl.BlockSpec((1, Cout), lambda bi: (0, 0)),
        ],
        out_specs=pl.BlockSpec((1, H, W, Cout), lambda bi: (bi, 0, 0, 0)),
        compiler_params=pltpu.CompilerParams(
            dimension_semantics=("parallel",), vmem_limit_bytes=_VMEM_LIMIT),
    )(xp, w9, b.reshape(1, Cout))

    if stride == 2:
        # stride-2 (pad=1, k=3) output == every other row/col of the stride-1
        # result; subsample with an XLA slice (output tensor is tiny here).
        # TODO(synk): fold the subsampling into the kernel for large spatial dims.
        y = y[:, ::2, ::2, :]
    return y


# ----------------------------------------------------------------------------
# Kernel 3: SCAM cross-attention, R (batch,row) pairs per grid step.
#   att      = Q_l @ Q_r^T * scale                         (R, W, W)
#   out      = x_l + x_r + softmax(att) @ (beta*V_r)
#                        + softmax(att^T) @ (gamma*V_l)
# beta/gamma are pre-folded into the V projections outside the kernel.
# ----------------------------------------------------------------------------
def _softmax_lastdim(a):
    m = jnp.max(a, axis=-1, keepdims=True)
    e = jnp.exp(a - m)
    return e * pl.reciprocal(jnp.sum(e, axis=-1, keepdims=True), approx=True)


def _scam_attn_kernel(ql_ref, qr_ref, vl_ref, vr_ref, xl_ref, xr_ref, o_ref,
                      *, scale):
    ql = ql_ref[...].astype(jnp.bfloat16)     # (R, W, C)
    qr = qr_ref[...].astype(jnp.bfloat16)
    vl = vl_ref[...].astype(jnp.bfloat16)     # gamma already folded in
    vr = vr_ref[...].astype(jnp.bfloat16)     # beta  already folded in

    # Channel-contraction einsums (no explicit transpose); the transposed
    # logits are produced by a second cheap MXU matmul instead of an XLU .T.
    att = jnp.einsum("rqc,rkc->rqk", ql, qr,
                     preferred_element_type=jnp.float32) * scale
    att_t = jnp.einsum("rkc,rqc->rkq", qr, ql,
                       preferred_element_type=jnp.float32) * scale

    p1 = _softmax_lastdim(att)                                  # fp32
    f_r2l = jnp.einsum("rqk,rkc->rqc", p1.astype(jnp.bfloat16), vr,
                       preferred_element_type=jnp.float32)
    p2 = _softmax_lastdim(att_t)
    f_l2r = jnp.einsum("rkq,rqc->rkc", p2.astype(jnp.bfloat16), vl,
                       preferred_element_type=jnp.float32)

    out = (xl_ref[...].astype(jnp.float32) + xr_ref[...].astype(jnp.float32)
           + f_r2l + f_l2r)
    o_ref[...] = out.astype(o_ref.dtype)


def _pick_rows(bh, cap=64):
    """Largest divisor of bh <= cap that still leaves >= 2 grid steps
    (so v7x's two TensorCores both get work)."""
    best = 1
    for r in range(1, min(bh, cap) + 1):
        if bh % r == 0 and bh // r >= 2:
            best = r
    return best


def scam(x_l, x_r, p):
    """SCAM(x_l, x_r) in NHWC.  The unused LayerNorms of the PyTorch module are
    never applied in its forward, so they are omitted here."""
    B, H, W, C = x_l.shape
    scale = C ** (-0.5)

    # Fuse the four 1x1 projections into two matmuls ([Q|V] along N) and fold
    # beta/gamma into the V weights: beta*(P@Vr) == P@(Vr*diag(beta)).
    wl = jnp.concatenate([p["l1_w"], p["l2_w"] * p["gamma"][None, :]], axis=1)
    bl = jnp.concatenate([p["l1_b"], p["l2_b"] * p["gamma"]], axis=0)
    wr = jnp.concatenate([p["r1_w"], p["r2_w"] * p["beta"][None, :]], axis=1)
    br = jnp.concatenate([p["r1_b"], p["r2_b"] * p["beta"]], axis=0)
    qv_l = conv1x1(x_l, wl, bl)            # (B,H,W,2C): [Q_l | gamma*V_l]
    qv_r = conv1x1(x_r, wr, br)            # (B,H,W,2C): [Q_r | beta*V_r]
    Ql, Vl = qv_l[..., :C], qv_l[..., C:]  # cheap XLA slices at these sizes
    Qr, Vr = qv_r[..., :C], qv_r[..., C:]

    BH = B * H
    R = _pick_rows(BH)
    rs = lambda a: a.reshape(BH, W, C)
    row_spec = pl.BlockSpec((R, W, C), lambda i: (i, 0, 0))

    out = pl.pallas_call(
        functools.partial(_scam_attn_kernel, scale=scale),
        out_shape=jax.ShapeDtypeStruct((BH, W, C), x_l.dtype),
        grid=(BH // R,),
        in_specs=[row_spec] * 6,
        out_specs=row_spec,
        compiler_params=pltpu.CompilerParams(
            dimension_semantics=("parallel",), vmem_limit_bytes=_VMEM_LIMIT),
    )(rs(Ql), rs(Qr), rs(Vl), rs(Vr), rs(x_l), rs(x_r))
    return out.reshape(B, H, W, C)


# ----------------------------------------------------------------------------
# Cross_block forward.
# ----------------------------------------------------------------------------
def cross_block(Y, Z, p, *, cro=True):
    # conv1 / conv2: 1x1 conv + LeakyReLU, then 3x3 conv (pad 1)
    Y1 = conv3x3(conv1x1(Y, p["c1_1_w"], p["c1_1_b"], leaky=True),
                 p["c1_2_w"], p["c1_2_b"])
    Z1 = conv3x3(conv1x1(Z, p["c2_1_w"], p["c2_1_b"], leaky=True),
                 p["c2_2_w"], p["c2_2_b"])

    def down(x, pre):  # 3x3 pad1 stride1, then 3x3 pad1 stride2 (no activation)
        x = conv3x3(x, p[pre + "_1_w"], p[pre + "_1_b"], stride=1)
        return conv3x3(x, p[pre + "_2_w"], p[pre + "_2_b"], stride=2)

    if cro:
        c = scam(Y1, Z1, p)
        # NOTE: the PyTorch forward applies self.down1 to BOTH Y1 and Z1 here.
        Y1d = down(Y1, "d1")
        Z1d = down(Z1, "d1")
        return c, Y1d, Z1d
    Y1d = down(Y1, "d1")
    Z1d = down(Z1, "d2")
    return Y1d, Z1d


# ----------------------------------------------------------------------------
# Deterministic parameter construction (synthetic, not a checkpoint load).
# ----------------------------------------------------------------------------
def make_params(key, in_c1, in_c2, mid_c):
    keys = iter(jax.random.split(key, 64))
    nrm = lambda shape, s=0.1: (s * jax.random.normal(next(keys), shape)
                                ).astype(jnp.float32)
    p = {}
    # conv1 branch
    p["c1_1_w"], p["c1_1_b"] = nrm((in_c1, mid_c)), nrm((mid_c,))
    p["c1_2_w"], p["c1_2_b"] = nrm((3, 3, mid_c, mid_c)), nrm((mid_c,))
    # conv2 branch
    p["c2_1_w"], p["c2_1_b"] = nrm((in_c2, mid_c)), nrm((mid_c,))
    p["c2_2_w"], p["c2_2_b"] = nrm((3, 3, mid_c, mid_c)), nrm((mid_c,))
    # down1 / down2
    for pre in ("d1", "d2"):
        p[pre + "_1_w"], p[pre + "_1_b"] = nrm((3, 3, mid_c, mid_c)), nrm((mid_c,))
        p[pre + "_2_w"], p[pre + "_2_b"] = nrm((3, 3, mid_c, mid_c)), nrm((mid_c,))
    # SCAM 1x1 projections
    for pre in ("l1", "r1", "l2", "r2"):
        p[pre + "_w"], p[pre + "_b"] = nrm((mid_c, mid_c)), nrm((mid_c,))
    # beta / gamma (PyTorch inits them to zeros; use small nonzero values so the
    # attention path contributes numerically in this synthetic test).
    p["beta"] = jnp.full((mid_c,), 0.1, jnp.float32)
    p["gamma"] = jnp.full((mid_c,), -0.05, jnp.float32)
    return p


if __name__ == "__main__":
    B, H, W = 2, 16, 16
    in_c1, in_c2, mid_c = 4, 4, 8

    key = jax.random.PRNGKey(0)
    k_y, k_z, k_p = jax.random.split(key, 3)
    # layout: NHWC inputs (PyTorch equivalent would be NCHW (B, C, H, W)).
    Y = jax.random.normal(k_y, (B, H, W, in_c1), jnp.float32)
    Z = jax.random.normal(k_z, (B, H, W, in_c2), jnp.float32)
    params = make_params(k_p, in_c1, in_c2, mid_c)

    fwd = jax.jit(functools.partial(cross_block, cro=True))
    c, Y1d, Z1d = fwd(Y, Z, params)
    jax.block_until_ready((c, Y1d, Z1d))

    assert c.shape == (B, H, W, mid_c)
    assert Y1d.shape == (B, H // 2, W // 2, mid_c)
    assert Z1d.shape == (B, H // 2, W // 2, mid_c)
    print("KERNEL_OK")
</pallas_src>

<mosaic_0001>
module attributes {stable_mosaic.version = 11 : i64} {
  func.func @_conv3x3_kernel(%arg0: i32, %arg1: memref<1x18x18x8xf32, #tpu.memory_space<vmem>>, %arg2: memref<9x8x8xf32, #tpu.memory_space<vmem>>, %arg3: memref<1x8xf32, #tpu.memory_space<vmem>>, %arg4: memref<1x16x16x8xf32, #tpu.memory_space<vmem>>) attributes {dimension_semantics = [#tpu.dimension_semantics<parallel>], iteration_bounds = array<i64: 2>, scalar_prefetch = 0 : i64, scratch_operands = 0 : i64, tpu.core_type = #tpu.core_type<tc>, window_params = [{transform_indices = @transform_0, window_bounds = array<i64: 1, 18, 18, 8>}, {pipeline_mode = #tpu.pipeline_mode<synchronous>, transform_indices = @transform_1, window_bounds = array<i64: 9, 8, 8>}, {pipeline_mode = #tpu.pipeline_mode<synchronous>, transform_indices = @transform_2, window_bounds = array<i64: 1, 8>}, {transform_indices = @transform_3, window_bounds = array<i64: 1, 16, 16, 8>}]} {
    %c0 = arith.constant 0 : index
    %c0_0 = arith.constant 0 : index
    %c0_1 = arith.constant 0 : index
    %c0_2 = arith.constant 0 : index
    %0 = vector.load %arg1[%c0, %c0_0, %c0_1, %c0_2] : memref<1x18x18x8xf32, #tpu.memory_space<vmem>>, vector<1x18x18x8xf32>
    %1 = vector.shape_cast %0 : vector<1x18x18x8xf32> to vector<18x18x8xf32>
    %c0_3 = arith.constant 0 : index
    %c0_4 = arith.constant 0 : index
    %c0_5 = arith.constant 0 : index
    %2 = vector.load %arg2[%c0_3, %c0_4, %c0_5] : memref<9x8x8xf32, #tpu.memory_space<vmem>>, vector<9x8x8xf32>
    %3 = arith.truncf %2 : vector<9x8x8xf32> to vector<9x8x8xbf16>
    %cst = arith.constant 0.000000e+00 : f32
    %4 = vector.broadcast %cst : f32 to vector<256x8xf32>
    %5 = vector.extract_strided_slice %1 {offsets = [0, 0, 0], sizes = [16, 16, 8], strides = [1, 1, 1]} : vector<18x18x8xf32> to vector<16x16x8xf32>
    %6 = arith.truncf %5 : vector<16x16x8xf32> to vector<16x16x8xbf16>
    %7 = vector.shape_cast %6 : vector<16x16x8xbf16> to vector<256x8xbf16>
    %8 = vector.extract_strided_slice %3 {offsets = [0, 0, 0], sizes = [1, 8, 8], strides = [1, 1, 1]} : vector<9x8x8xbf16> to vector<1x8x8xbf16>
    %9 = vector.shape_cast %8 : vector<1x8x8xbf16> to vector<8x8xbf16>
    %cst_6 = arith.constant dense<0.000000e+00> : vector<256x8xf32>
    %10 = tpu.matmul %7, %9, %cst_6 {dimension_numbers = #tpu.dot_dimension_numbers<[1], [0], [0], [1], [0, 0, 1, 1], [], []>} : vector<256x8xbf16>, vector<8x8xbf16>, vector<256x8xf32> -> vector<256x8xf32>
    %11 = arith.addf %4, %10 : vector<256x8xf32>
    %12 = vector.extract_strided_slice %1 {offsets = [0, 1, 0], sizes = [16, 16, 8], strides = [1, 1, 1]} : vector<18x18x8xf32> to vector<16x16x8xf32>
    %13 = arith.truncf %12 : vector<16x16x8xf32> to vector<16x16x8xbf16>
    %14 = vector.shape_cast %13 : vector<16x16x8xbf16> to vector<256x8xbf16>
    %15 = vector.extract_strided_slice %3 {offsets = [1, 0, 0], sizes = [1, 8, 8], strides = [1, 1, 1]} : vector<9x8x8xbf16> to vector<1x8x8xbf16>
    %16 = vector.shape_cast %15 : vector<1x8x8xbf16> to vector<8x8xbf16>
    %cst_7 = arith.constant dense<0.000000e+00> : vector<256x8xf32>
    %17 = tpu.matmul %14, %16, %cst_7 {dimension_numbers = #tpu.dot_dimension_numbers<[1], [0], [0], [1], [0, 0, 1, 1], [], []>} : vector<256x8xbf16>, vector<8x8xbf16>, vector<256x8xf32> -> vector<256x8xf32>
    %18 = arith.addf %11, %17 : vector<256x8xf32>
    %19 = vector.extract_strided_slice %1 {offsets = [0, 2, 0], sizes = [16, 16, 8], strides = [1, 1, 1]} : vector<18x18x8xf32> to vector<16x16x8xf32>
    %20 = arith.truncf %19 : vector<16x16x8xf32> to vector<16x16x8xbf16>
    %21 = vector.shape_cast %20 : vector<16x16x8xbf16> to vector<256x8xbf16>
    %22 = vector.extract_strided_slice %3 {offsets = [2, 0, 0], sizes = [1, 8, 8], strides = [1, 1, 1]} : vector<9x8x8xbf16> to vector<1x8x8xbf16>
    %23 = vector.shape_cast %22 : vector<1x8x8xbf16> to vector<8x8xbf16>
    %cst_8 = arith.constant dense<0.000000e+00> : vector<256x8xf32>
    %24 = tpu.matmul %21, %23, %cst_8 {dimension_numbers = #tpu.dot_dimension_numbers<[1], [0], [0], [1], [0, 0, 1, 1], [], []>} : vector<256x8xbf16>, vector<8x8xbf16>, vector<256x8xf32> -> vector<256x8xf32>
    %25 = arith.addf %18, %24 : vector<256x8xf32>
    %26 = vector.extract_strided_slice %1 {offsets = [1, 0, 0], sizes = [16, 16, 8], strides = [1, 1, 1]} : vector<18x18x8xf32> to vector<16x16x8xf32>
    %27 = arith.truncf %26 : vector<16x16x8xf32> to vector<16x16x8xbf16>
    %28 = vector.shape_cast %27 : vector<16x16x8xbf16> to vector<256x8xbf16>
    %29 = vector.extract_strided_slice %3 {offsets = [3, 0, 0], sizes = [1, 8, 8], strides = [1, 1, 1]} : vector<9x8x8xbf16> to vector<1x8x8xbf16>
    %30 = vector.shape_cast %29 : vector<1x8x8xbf16> to vector<8x8xbf16>
    %cst_9 = arith.constant dense<0.000000e+00> : vector<256x8xf32>
    %31 = tpu.matmul %28, %30, %cst_9 {dimension_numbers = #tpu.dot_dimension_numbers<[1], [0], [0], [1], [0, 0, 1, 1], [], []>} : vector<256x8xbf16>, vector<8x8xbf16>, vector<256x8xf32> -> vector<256x8xf32>
    %32 = arith.addf %25, %31 : vector<256x8xf32>
    %33 = vector.extract_strided_slice %1 {offsets = [1, 1, 0], sizes = [16, 16, 8], strides = [1, 1, 1]} : vector<18x18x8xf32> to vector<16x16x8xf32>
    %34 = arith.truncf %33 : vector<16x16x8xf32> to vector<16x16x8xbf16>
    %35 = vector.shape_cast %34 : vector<16x16x8xbf16> to vector<256x8xbf16>
    %36 = vector.extract_strided_slice %3 {offsets = [4, 0, 0], sizes = [1, 8, 8], strides = [1, 1, 1]} : vector<9x8x8xbf16> to vector<1x8x8xbf16>
    %37 = vector.shape_cast %36 : vector<1x8x8xbf16> to vector<8x8xbf16>
    %cst_10 = arith.constant dense<0.000000e+00> : vector<256x8xf32>
    %38 = tpu.matmul %35, %37, %cst_10 {dimension_numbers = #tpu.dot_dimension_numbers<[1], [0], [0], [1], [0, 0, 1, 1], [], []>} : vector<256x8xbf16>, vector<8x8xbf16>, vector<256x8xf32> -> vector<256x8xf32>
    %39 = arith.addf %32, %38 : vector<256x8xf32>
    %40 = vector.extract_strided_slice %1 {offsets = [1, 2, 0], sizes = [16, 16, 8], strides = [1, 1, 1]} : vector<18x18x8xf32> to vector<16x16x8xf32>
    %41 = arith.truncf %40 : vector<16x16x8xf32> to vector<16x16x8xbf16>
    %42 = vector.shape_cast %41 : vector<16x16x8xbf16> to vector<256x8xbf16>
    %43 = vector.extract_strided_slice %3 {offsets = [5, 0, 0], sizes = [1, 8, 8], strides = [1, 1, 1]} : vector<9x8x8xbf16> to vector<1x8x8xbf16>
    %44 = vector.shape_cast %43 : vector<1x8x8xbf16> to vector<8x8xbf16>
    %cst_11 = arith.constant dense<0.000000e+00> : vector<256x8xf32>
    %45 = tpu.matmul %42, %44, %cst_11 {dimension_numbers = #tpu.dot_dimension_numbers<[1], [0], [0], [1], [0, 0, 1, 1], [], []>} : vector<256x8xbf16>, vector<8x8xbf16>, vector<256x8xf32> -> vector<256x8xf32>
    %46 = arith.addf %39, %45 : vector<256x8xf32>
    %47 = vector.extract_strided_slice %1 {offsets = [2, 0, 0], sizes = [16, 16, 8], strides = [1, 1, 1]} : vector<18x18x8xf32> to vector<16x16x8xf32>
    %48 = arith.truncf %47 : vector<16x16x8xf32> to vector<16x16x8xbf16>
    %49 = vector.shape_cast %48 : vector<16x16x8xbf16> to vector<256x8xbf16>
    %50 = vector.extract_strided_slice %3 {offsets = [6, 0, 0], sizes = [1, 8, 8], strides = [1, 1, 1]} : vector<9x8x8xbf16> to vector<1x8x8xbf16>
    %51 = vector.shape_cast %50 : vector<1x8x8xbf16> to vector<8x8xbf16>
    %cst_12 = arith.constant dense<0.000000e+00> : vector<256x8xf32>
    %52 = tpu.matmul %49, %51, %cst_12 {dimension_numbers = #tpu.dot_dimension_numbers<[1], [0], [0], [1], [0, 0, 1, 1], [], []>} : vector<256x8xbf16>, vector<8x8xbf16>, vector<256x8xf32> -> vector<256x8xf32>
    %53 = arith.addf %46, %52 : vector<256x8xf32>
    %54 = vector.extract_strided_slice %1 {offsets = [2, 1, 0], sizes = [16, 16, 8], strides = [1, 1, 1]} : vector<18x18x8xf32> to vector<16x16x8xf32>
    %55 = arith.truncf %54 : vector<16x16x8xf32> to vector<16x16x8xbf16>
    %56 = vector.shape_cast %55 : vector<16x16x8xbf16> to vector<256x8xbf16>
    %57 = vector.extract_strided_slice %3 {offsets = [7, 0, 0], sizes = [1, 8, 8], strides = [1, 1, 1]} : vector<9x8x8xbf16> to vector<1x8x8xbf16>
    %58 = vector.shape_cast %57 : vector<1x8x8xbf16> to vector<8x8xbf16>
    %cst_13 = arith.constant dense<0.000000e+00> : vector<256x8xf32>
    %59 = tpu.matmul %56, %58, %cst_13 {dimension_numbers = #tpu.dot_dimension_numbers<[1], [0], [0], [1], [0, 0, 1, 1], [], []>} : vector<256x8xbf16>, vector<8x8xbf16>, vector<256x8xf32> -> vector<256x8xf32>
    %60 = arith.addf %53, %59 : vector<256x8xf32>
    %61 = vector.extract_strided_slice %1 {offsets = [2, 2, 0], sizes = [16, 16, 8], strides = [1, 1, 1]} : vector<18x18x8xf32> to vector<16x16x8xf32>
    %62 = arith.truncf %61 : vector<16x16x8xf32> to vector<16x16x8xbf16>
    %63 = vector.shape_cast %62 : vector<16x16x8xbf16> to vector<256x8xbf16>
    %64 = vector.extract_strided_slice %3 {offsets = [8, 0, 0], sizes = [1, 8, 8], strides = [1, 1, 1]} : vector<9x8x8xbf16> to vector<1x8x8xbf16>
    %65 = vector.shape_cast %64 : vector<1x8x8xbf16> to vector<8x8xbf16>
    %cst_14 = arith.constant dense<0.000000e+00> : vector<256x8xf32>
    %66 = tpu.matmul %63, %65, %cst_14 {dimension_numbers = #tpu.dot_dimension_numbers<[1], [0], [0], [1], [0, 0, 1, 1], [], []>} : vector<256x8xbf16>, vector<8x8xbf16>, vector<256x8xf32> -> vector<256x8xf32>
    %67 = arith.addf %60, %66 : vector<256x8xf32>
    %c0_15 = arith.constant 0 : index
    %c0_16 = arith.constant 0 : index
    %68 = vector.load %arg3[%c0_15, %c0_16] : memref<1x8xf32, #tpu.memory_space<vmem>>, vector<1x8xf32>
    %69 = vector.broadcast %68 : vector<1x8xf32> to vector<256x8xf32>
    %70 = arith.addf %67, %69 : vector<256x8xf32>
    %71 = vector.shape_cast %70 : vector<256x8xf32> to vector<16x16x8xf32>
    %c0_17 = arith.constant 0 : index
    %c0_18 = arith.constant 0 : index
    %c0_19 = arith.constant 0 : index
    %c0_20 = arith.constant 0 : index
    %72 = vector.load %arg4[%c0_17, %c0_18, %c0_19, %c0_20] : memref<1x16x16x8xf32, #tpu.memory_space<vmem>>, vector<1x16x16x8xf32>
    %73 = vector.shape_cast %72 : vector<1x16x16x8xf32> to vector<16x16x8xf32>
    %74 = vector.shape_cast %71 : vector<16x16x8xf32> to vector<1x16x16x8xf32>
    tpu.vector_store %arg4[%c0_17, %c0_18, %c0_19, %c0_20], %74 {strides = array<i32>} : memref<1x16x16x8xf32, #tpu.memory_space<vmem>>, vector<1x16x16x8xf32>,
    return
  }
  func.func @transform_0(%arg0: i32) -> (i32, i32, i32, i32) {
    %c0_i32 = arith.constant 0 : i32
    %c0_i32_0 = arith.constant 0 : i32
    %c0_i32_1 = arith.constant 0 : i32
    %c0_i32_2 = arith.constant 0 : i32
    return %arg0, %c0_i32, %c0_i32_0, %c0_i32_1 : i32, i32, i32, i32
  }
  func.func @transform_1(%arg0: i32) -> (i32, i32, i32) {
    %c0_i32 = arith.constant 0 : i32
    %c0_i32_0 = arith.constant 0 : i32
    %c0_i32_1 = arith.constant 0 : i32
    %c0_i32_2 = arith.constant 0 : i32
    return %c0_i32, %c0_i32_0, %c0_i32_1 : i32, i32, i32
  }
  func.func @transform_2(%arg0: i32) -> (i32, i32) {
    %c0_i32 = arith.constant 0 : i32
    %c0_i32_0 = arith.constant 0 : i32
    %c0_i32_1 = arith.constant 0 : i32
    return %c0_i32, %c0_i32_0 : i32, i32
  }
  func.func @transform_3(%arg0: i32) -> (i32, i32, i32, i32) {
    %c0_i32 = arith.constant 0 : i32
    %c0_i32_0 = arith.constant 0 : i32
    %c0_i32_1 = arith.constant 0 : i32
    %c0_i32_2 = arith.constant 0 : i32
    return %arg0, %c0_i32, %c0_i32_0, %c0_i32_1 : i32, i32, i32, i32
  }
}

module attributes {stable_mosaic.version = 11 : i64} {
  func.func @_matmul_bias_kernel(%arg0: i32, %arg1: memref<256x4xf32, #tpu.memory_space<vmem>>, %arg2: memref<4x8xf32, #tpu.memory_space<vmem>>, %arg3: memref<1x8xf32, #tpu.memory_space<vmem>>, %arg4: memref<256x8xf32, #tpu.memory_space<vmem>>) attributes {dimension_semantics = [#tpu.dimension_semantics<parallel>], iteration_bounds = array<i64: 2>, scalar_prefetch = 0 : i64, scratch_operands = 0 : i64, tpu.core_type = #tpu.core_type<tc>, window_params = [{transform_indices = @transform_0, window_bounds = array<i64: 256, 4>}, {pipeline_mode = #tpu.pipeline_mode<synchronous>, transform_indices = @transform_1, window_bounds = array<i64: 4, 8>}, {pipeline_mode = #tpu.pipeline_mode<synchronous>, transform_indices = @transform_2, window_bounds = array<i64: 1, 8>}, {transform_indices = @transform_3, window_bounds = array<i64: 256, 8>}]} {
    %c0 = arith.constant 0 : index
    %c0_0 = arith.constant 0 : index
    %0 = vector.load %arg1[%c0, %c0_0] : memref<256x4xf32, #tpu.memory_space<vmem>>, vector<256x4xf32>
    %1 = arith.truncf %0 : vector<256x4xf32> to vector<256x4xbf16>
    %c0_1 = arith.constant 0 : index
    %c0_2 = arith.constant 0 : index
    %2 = vector.load %arg2[%c0_1, %c0_2] : memref<4x8xf32, #tpu.memory_space<vmem>>, vector<4x8xf32>
    %3 = arith.truncf %2 : vector<4x8xf32> to vector<4x8xbf16>
    %cst = arith.constant dense<0.000000e+00> : vector<256x8xf32>
    %4 = tpu.matmul %1, %3, %cst {dimension_numbers = #tpu.dot_dimension_numbers<[1], [0], [0], [1], [0, 0, 1, 1], [], []>} : vector<256x4xbf16>, vector<4x8xbf16>, vector<256x8xf32> -> vector<256x8xf32>
    %c0_3 = arith.constant 0 : index
    %c0_4 = arith.constant 0 : index
    %5 = vector.load %arg3[%c0_3, %c0_4] : memref<1x8xf32, #tpu.memory_space<vmem>>, vector<1x8xf32>
    %6 = vector.broadcast %5 : vector<1x8xf32> to vector<256x8xf32>
    %7 = arith.addf %4, %6 : vector<256x8xf32>
    %cst_5 = arith.constant 0.000000e+00 : f32
    %8 = vector.broadcast %cst_5 : f32 to vector<256x8xf32>
    %9 = arith.cmpf oge, %7, %8 : vector<256x8xf32>
    %cst_6 = arith.constant 0.00999999977 : f32
    %10 = vector.broadcast %cst_6 : f32 to vector<256x8xf32>
    %11 = arith.mulf %7, %10 : vector<256x8xf32>
    %12 = arith.select %9, %7, %11 : vector<256x8xi1>, vector<256x8xf32>
    %c0_7 = arith.constant 0 : index
    %c0_8 = arith.constant 0 : index
    %13 = vector.load %arg4[%c0_7, %c0_8] : memref<256x8xf32, #tpu.memory_space<vmem>>, vector<256x8xf32>
    tpu.vector_store %arg4[%c0_7, %c0_8], %12 {strides = array<i32>} : memref<256x8xf32, #tpu.memory_space<vmem>>, vector<256x8xf32>,
    return
  }
  func.func @transform_0(%arg0: i32) -> (i32, i32) {
    %c0_i32 = arith.constant 0 : i32
    %c0_i32_0 = arith.constant 0 : i32
    return %arg0, %c0_i32 : i32, i32
  }
  func.func @transform_1(%arg0: i32) -> (i32, i32) {
    %c0_i32 = arith.constant 0 : i32
    %c0_i32_0 = arith.constant 0 : i32
    %c0_i32_1 = arith.constant 0 : i32
    return %c0_i32, %c0_i32_0 : i32, i32
  }
  func.func @transform_2(%arg0: i32) -> (i32, i32) {
    %c0_i32 = arith.constant 0 : i32
    %c0_i32_0 = arith.constant 0 : i32
    %c0_i32_1 = arith.constant 0 : i32
    return %c0_i32, %c0_i32_0 : i32, i32
  }
  func.func @transform_3(%arg0: i32) -> (i32, i32) {
    %c0_i32 = arith.constant 0 : i32
    %c0_i32_0 = arith.constant 0 : i32
    return %arg0, %c0_i32 : i32, i32
  }
}

module attributes {stable_mosaic.version = 11 : i64} {
  func.func @_matmul_bias_kernel(%arg0: i32, %arg1: memref<256x8xf32, #tpu.memory_space<vmem>>, %arg2: memref<8x16xf32, #tpu.memory_space<vmem>>, %arg3: memref<1x16xf32, #tpu.memory_space<vmem>>, %arg4: memref<256x16xf32, #tpu.memory_space<vmem>>) attributes {dimension_semantics = [#tpu.dimension_semantics<parallel>], iteration_bounds = array<i64: 2>, scalar_prefetch = 0 : i64, scratch_operands = 0 : i64, tpu.core_type = #tpu.core_type<tc>, window_params = [{transform_indices = @transform_0, window_bounds = array<i64: 256, 8>}, {pipeline_mode = #tpu.pipeline_mode<synchronous>, transform_indices = @transform_1, window_bounds = array<i64: 8, 16>}, {pipeline_mode = #tpu.pipeline_mode<synchronous>, transform_indices = @transform_2, window_bounds = array<i64: 1, 16>}, {transform_indices = @transform_3, window_bounds = array<i64: 256, 16>}]} {
    %c0 = arith.constant 0 : index
    %c0_0 = arith.constant 0 : index
    %0 = vector.load %arg1[%c0, %c0_0] : memref<256x8xf32, #tpu.memory_space<vmem>>, vector<256x8xf32>
    %1 = arith.truncf %0 : vector<256x8xf32> to vector<256x8xbf16>
    %c0_1 = arith.constant 0 : index
    %c0_2 = arith.constant 0 : index
    %2 = vector.load %arg2[%c0_1, %c0_2] : memref<8x16xf32, #tpu.memory_space<vmem>>, vector<8x16xf32>
    %3 = arith.truncf %2 : vector<8x16xf32> to vector<8x16xbf16>
    %cst = arith.constant dense<0.000000e+00> : vector<256x16xf32>
    %4 = tpu.matmul %1, %3, %cst {dimension_numbers = #tpu.dot_dimension_numbers<[1], [0], [0], [1], [0, 0, 1, 1], [], []>} : vector<256x8xbf16>, vector<8x16xbf16>, vector<256x16xf32> -> vector<256x16xf32>
    %c0_3 = arith.constant 0 : index
    %c0_4 = arith.constant 0 : index
    %5 = vector.load %arg3[%c0_3, %c0_4] : memref<1x16xf32, #tpu.memory_space<vmem>>, vector<1x16xf32>
    %6 = vector.broadcast %5 : vector<1x16xf32> to vector<256x16xf32>
    %7 = arith.addf %4, %6 : vector<256x16xf32>
    %c0_5 = arith.constant 0 : index
    %c0_6 = arith.constant 0 : index
    %8 = vector.load %arg4[%c0_5, %c0_6] : memref<256x16xf32, #tpu.memory_space<vmem>>, vector<256x16xf32>
    tpu.vector_store %arg4[%c0_5, %c0_6], %7 {strides = array<i32>} : memref<256x16xf32, #tpu.memory_space<vmem>>, vector<256x16xf32>,
    return
  }
  func.func @transform_0(%arg0: i32) -> (i32, i32) {
    %c0_i32 = arith.constant 0 : i32
    %c0_i32_0 = arith.constant 0 : i32
    return %arg0, %c0_i32 : i32, i32
  }
  func.func @transform_1(%arg0: i32) -> (i32, i32) {
    %c0_i32 = arith.constant 0 : i32
    %c0_i32_0 = arith.constant 0 : i32
    %c0_i32_1 = arith.constant 0 : i32
    return %c0_i32, %c0_i32_0 : i32, i32
  }
  func.func @transform_2(%arg0: i32) -> (i32, i32) {
    %c0_i32 = arith.constant 0 : i32
    %c0_i32_0 = arith.constant 0 : i32
    %c0_i32_1 = arith.constant 0 : i32
    return %c0_i32, %c0_i32_0 : i32, i32
  }
  func.func @transform_3(%arg0: i32) -> (i32, i32) {
    %c0_i32 = arith.constant 0 : i32
    %c0_i32_0 = arith.constant 0 : i32
    return %arg0, %c0_i32 : i32, i32
  }
}

module attributes {stable_mosaic.version = 11 : i64} {
  func.func @_scam_attn_kernel(%arg0: i32, %arg1: memref<16x16x8xf32, #tpu.memory_space<vmem>>, %arg2: memref<16x16x8xf32, #tpu.memory_space<vmem>>, %arg3: memref<16x16x8xf32, #tpu.memory_space<vmem>>, %arg4: memref<16x16x8xf32, #tpu.memory_space<vmem>>, %arg5: memref<16x16x8xf32, #tpu.memory_space<vmem>>, %arg6: memref<16x16x8xf32, #tpu.memory_space<vmem>>, %arg7: memref<16x16x8xf32, #tpu.memory_space<vmem>>) attributes {dimension_semantics = [#tpu.dimension_semantics<parallel>], iteration_bounds = array<i64: 2>, scalar_prefetch = 0 : i64, scratch_operands = 0 : i64, tpu.core_type = #tpu.core_type<tc>, window_params = [{transform_indices = @transform_0, window_bounds = array<i64: 16, 16, 8>}, {transform_indices = @transform_1, window_bounds = array<i64: 16, 16, 8>}, {transform_indices = @transform_2, window_bounds = array<i64: 16, 16, 8>}, {transform_indices = @transform_3, window_bounds = array<i64: 16, 16, 8>}, {transform_indices = @transform_4, window_bounds = array<i64: 16, 16, 8>}, {transform_indices = @transform_5, window_bounds = array<i64: 16, 16, 8>}, {transform_indices = @transform_6, window_bounds = array<i64: 16, 16, 8>}]} {
    %c0 = arith.constant 0 : index
    %c0_0 = arith.constant 0 : index
    %c0_1 = arith.constant 0 : index
    %0 = vector.load %arg1[%c0, %c0_0, %c0_1] : memref<16x16x8xf32, #tpu.memory_space<vmem>>, vector<16x16x8xf32>
    %1 = arith.truncf %0 : vector<16x16x8xf32> to vector<16x16x8xbf16>
    %c0_2 = arith.constant 0 : index
    %c0_3 = arith.constant 0 : index
    %c0_4 = arith.constant 0 : index
    %2 = vector.load %arg2[%c0_2, %c0_3, %c0_4] : memref<16x16x8xf32, #tpu.memory_space<vmem>>, vector<16x16x8xf32>
    %3 = arith.truncf %2 : vector<16x16x8xf32> to vector<16x16x8xbf16>
    %c0_5 = arith.constant 0 : index
    %c0_6 = arith.constant 0 : index
    %c0_7 = arith.constant 0 : index
    %4 = vector.load %arg3[%c0_5, %c0_6, %c0_7] : memref<16x16x8xf32, #tpu.memory_space<vmem>>, vector<16x16x8xf32>
    %5 = arith.truncf %4 : vector<16x16x8xf32> to vector<16x16x8xbf16>
    %c0_8 = arith.constant 0 : index
    %c0_9 = arith.constant 0 : index
    %c0_10 = arith.constant 0 : index
    %6 = vector.load %arg4[%c0_8, %c0_9, %c0_10] : memref<16x16x8xf32, #tpu.memory_space<vmem>>, vector<16x16x8xf32>
    %7 = arith.truncf %6 : vector<16x16x8xf32> to vector<16x16x8xbf16>
    "tpu.trace_start"() <{level = 10 : i32, message = "rqc,rkc->rqk"}> : () -> ()
    %cst = arith.constant dense<0.000000e+00> : vector<16x16x16xf32>
    %8 = tpu.matmul %1, %3, %cst {dimension_numbers = #tpu.dot_dimension_numbers<[2], [2], [1], [1], [0, 0, 0, 1, 1, 1], [0], [0]>} : vector<16x16x8xbf16>, vector<16x16x8xbf16>, vector<16x16x16xf32> -> vector<16x16x16xf32>
    "tpu.trace_stop"() : () -> ()
    %cst_11 = arith.constant 0.353553385 : f32
    %9 = vector.broadcast %cst_11 : f32 to vector<16x16x16xf32>
    %10 = arith.mulf %8, %9 : vector<16x16x16xf32>
    "tpu.trace_start"() <{level = 10 : i32, message = "rkc,rqc->rkq"}> : () -> ()
    %cst_12 = arith.constant dense<0.000000e+00> : vector<16x16x16xf32>
    %11 = tpu.matmul %3, %1, %cst_12 {dimension_numbers = #tpu.dot_dimension_numbers<[2], [2], [1], [1], [0, 0, 0, 1, 1, 1], [0], [0]>} : vector<16x16x8xbf16>, vector<16x16x8xbf16>, vector<16x16x16xf32> -> vector<16x16x16xf32>
    "tpu.trace_stop"() : () -> ()
    %cst_13 = arith.constant 0.353553385 : f32
    %12 = vector.broadcast %cst_13 : f32 to vector<16x16x16xf32>
    %13 = arith.mulf %11, %12 : vector<16x16x16xf32>
    %cst_14 = arith.constant dense<0xFF800000> : vector<16x16xf32>
    %14 = vector.multi_reduction <maximumf>, %10, %cst_14 [2] : vector<16x16x16xf32> to vector<16x16xf32>
    %15 = vector.shape_cast %14 : vector<16x16xf32> to vector<16x16x1xf32>
    %16 = vector.broadcast %15 : vector<16x16x1xf32> to vector<16x16x16xf32>
    %17 = arith.subf %10, %16 : vector<16x16x16xf32>
    %18 = math.exp %17 : vector<16x16x16xf32>
    %cst_15 = arith.constant dense<0.000000e+00> : vector<16x16xf32>
    %19 = vector.multi_reduction <add>, %18, %cst_15 [2] : vector<16x16x16xf32> to vector<16x16xf32>
    %20 = vector.shape_cast %19 : vector<16x16xf32> to vector<16x16x1xf32>
    %21 = tpu.reciprocal %20 {approx = true} : vector<16x16x1xf32> -> vector<16x16x1xf32>
    %22 = vector.broadcast %21 : vector<16x16x1xf32> to vector<16x16x16xf32>
    %23 = arith.mulf %18, %22 : vector<16x16x16xf32>
    %24 = arith.truncf %23 : vector<16x16x16xf32> to vector<16x16x16xbf16>
    "tpu.trace_start"() <{level = 10 : i32, message = "rqk,rkc->rqc"}> : () -> ()
    %cst_16 = arith.constant dense<0.000000e+00> : vector<16x16x8xf32>
    %25 = tpu.matmul %24, %7, %cst_16 {dimension_numbers = #tpu.dot_dimension_numbers<[2], [1], [1], [2], [0, 0, 0, 1, 1, 2], [0], [0]>} : vector<16x16x16xbf16>, vector<16x16x8xbf16>, vector<16x16x8xf32> -> vector<16x16x8xf32>
    "tpu.trace_stop"() : () -> ()
    %cst_17 = arith.constant dense<0xFF800000> : vector<16x16xf32>
    %26 = vector.multi_reduction <maximumf>, %13, %cst_17 [2] : vector<16x16x16xf32> to vector<16x16xf32>
    %27 = vector.shape_cast %26 : vector<16x16xf32> to vector<16x16x1xf32>
    %28 = vector.broadcast %27 : vector<16x16x1xf32> to vector<16x16x16xf32>
    %29 = arith.subf %13, %28 : vector<16x16x16xf32>
    %30 = math.exp %29 : vector<16x16x16xf32>
    %cst_18 = arith.constant dense<0.000000e+00> : vector<16x16xf32>
    %31 = vector.multi_reduction <add>, %30, %cst_18 [2] : vector<16x16x16xf32> to vector<16x16xf32>
    %32 = vector.shape_cast %31 : vector<16x16xf32> to vector<16x16x1xf32>
    %33 = tpu.reciprocal %32 {approx = true} : vector<16x16x1xf32> -> vector<16x16x1xf32>
    %34 = vector.broadcast %33 : vector<16x16x1xf32> to vector<16x16x16xf32>
    %35 = arith.mulf %30, %34 : vector<16x16x16xf32>
    %36 = arith.truncf %35 : vector<16x16x16xf32> to vector<16x16x16xbf16>
    "tpu.trace_start"() <{level = 10 : i32, message = "rkq,rqc->rkc"}> : () -> ()
    %cst_19 = arith.constant dense<0.000000e+00> : vector<16x16x8xf32>
    %37 = tpu.matmul %36, %5, %cst_19 {dimension_numbers = #tpu.dot_dimension_numbers<[2], [1], [1], [2], [0, 0, 0, 1, 1, 2], [0], [0]>} : vector<16x16x16xbf16>, vector<16x16x8xbf16>, vector<16x16x8xf32> -> vector<16x16x8xf32>
    "tpu.trace_stop"() : () -> ()
    %c0_20 = arith.constant 0 : index
    %c0_21 = arith.constant 0 : index
    %c0_22 = arith.constant 0 : index
    %38 = vector.load %arg5[%c0_20, %c0_21, %c0_22] : memref<16x16x8xf32, #tpu.memory_space<vmem>>, vector<16x16x8xf32>
    %c0_23 = arith.constant 0 : index
    %c0_24 = arith.constant 0 : index
    %c0_25 = arith.constant 0 : index
    %39 = vector.load %arg6[%c0_23, %c0_24, %c0_25] : memref<16x16x8xf32, #tpu.memory_space<vmem>>, vector<16x16x8xf32>
    %40 = arith.addf %38, %39 : vector<16x16x8xf32>
    %41 = arith.addf %40, %25 : vector<16x16x8xf32>
    %42 = arith.addf %41, %37 : vector<16x16x8xf32>
    %c0_26 = arith.constant 0 : index
    %c0_27 = arith.constant 0 : index
    %c0_28 = arith.constant 0 : index
    %43 = vector.load %arg7[%c0_26, %c0_27, %c0_28] : memref<16x16x8xf32, #tpu.memory_space<vmem>>, vector<16x16x8xf32>
    tpu.vector_store %arg7[%c0_26, %c0_27, %c0_28], %42 {strides = array<i32>} : memref<16x16x8xf32, #tpu.memory_space<vmem>>, vector<16x16x8xf32>,
    return
  }
  func.func @transform_0(%arg0: i32) -> (i32, i32, i32) {
    %c0_i32 = arith.constant 0 : i32
    %c0_i32_0 = arith.constant 0 : i32
    %c0_i32_1 = arith.constant 0 : i32
    return %arg0, %c0_i32, %c0_i32_0 : i32, i32, i32
  }
  func.func @transform_1(%arg0: i32) -> (i32, i32, i32) {
    %c0_i32 = arith.constant 0 : i32
    %c0_i32_0 = arith.constant 0 : i32
    %c0_i32_1 = arith.constant 0 : i32
    return %arg0, %c0_i32, %c0_i32_0 : i32, i32, i32
  }
  func.func @transform_2(%arg0: i32) -> (i32, i32, i32) {
    %c0_i32 = arith.constant 0 : i32
    %c0_i32_0 = arith.constant 0 : i32
    %c0_i32_1 = arith.constant 0 : i32
    return %arg0, %c0_i32, %c0_i32_0 : i32, i32, i32
  }
  func.func @transform_3(%arg0: i32) -> (i32, i32, i32) {
    %c0_i32 = arith.constant 0 : i32
    %c0_i32_0 = arith.constant 0 : i32
    %c0_i32_1 = arith.constant 0 : i32
    return %arg0, %c0_i32, %c0_i32_0 : i32, i32, i32
  }
  func.func @transform_4(%arg0: i32) -> (i32, i32, i32) {
    %c0_i32 = arith.constant 0 : i32
    %c0_i32_0 = arith.constant 0 : i32
    %c0_i32_1 = arith.constant 0 : i32
    return %arg0, %c0_i32, %c0_i32_0 : i32, i32, i32
  }
  func.func @transform_5(%arg0: i32) -> (i32, i32, i32) {
    %c0_i32 = arith.constant 0 : i32
    %c0_i32_0 = arith.constant 0 : i32
    %c0_i32_1 = arith.constant 0 : i32
    return %arg0, %c0_i32, %c0_i32_0 : i32, i32, i32
  }
  func.func @transform_6(%arg0: i32) -> (i32, i32, i32) {
    %c0_i32 = arith.constant 0 : i32
    %c0_i32_0 = arith.constant 0 : i32
    %c0_i32_1 = arith.constant 0 : i32
    return %arg0, %c0_i32, %c0_i32_0 : i32, i32, i32
  }
}

</mosaic_0001>

<llo_original>
// kernel: mul.14
$region0: #{mul.14}
  #allocation0 [shape = 's32[1]{0}', space=sflag, size = 0x4, scoped, tag = 'scoped memory for mul.14']
  %s0 = inlined_call_operand.vmem [shape: f32[8], index: 0, kind: input, shape index: {}]
  %s1 = inlined_call_operand.vmem [shape: f32[8], index: 1, kind: input, shape index: {}]
  %s2 = inlined_call_operand.vmem [shape: f32[8], index: 2, kind: output, shape index: {}]
  %v3 = vld [vmem:[%s0] sm:$0x1]
  %v4 = vld [vmem:[%s1] sm:$0x1]
  %5 = xla_tuple %v3, %v4
  %6 = xla_tuple %5
  %v7 = vmul.f32 %v3, %v4
  %8 = xla_tuple %v7
  %9 = vst [vmem:[%s2] sm:$0x1] %v7

// kernel: cross_block.15
$region0: #{cross_block.15}
  #allocation0 [shape = 'u32[]', space=smem, size = 0x4, offset = 0x4, fixed_abs, tag = 'smem constant byte address 0x4 - core index']
  #allocation1 [shape = 'u32[144,128]{1,0:T(1,128)}', space=vmem, size = 0x12000, scoped, tag = 'internal scratch']
  %s0 = inlined_call_operand.vmem [shape: f32[512,8], index: 0, kind: input, shape index: {}]
  %s1 = inlined_call_operand.vmem [shape: f32[8,16], index: 1, kind: input, shape index: {}]
  %s2 = inlined_call_operand.vmem [shape: f32[1,16], index: 2, kind: input, shape index: {}]
  %s3 = inlined_call_operand.vmem [shape: f32[512,16], index: 3, kind: output, shape index: {}]
  %s4 = sld [smem:[#allocation0]]
  $region45: #{cross_block.15} parent=0
    _
  %s6 = ssub.s32 1, %s4
  %s7 = scalar_select 0, %s6, %s4
  loop: start=0, step=1, limit=4
  $region2: #{cross_block.15} parent=0 // loop_pre_header
    _
  $region3: #{cross_block.15} parent=0 // loop_header
    %s9 = sphi 0, %s13
    %p10 = scmp.ge.s32.totalorder %s9, 4
    %s19 = sphi 0, %s21
    %s22 = sphi 0, %s19
    %s23 = sphi 0, %s22
    %s39 = sphi 0, %s23
    %s43 = sphi 0, %s43
    %s45 = sphi 0, %s43
    %s46 = sphi 0, %s45
    %s60 = sphi 0, %s46
    %s64 = sphi 0, %s64
    %s66 = sphi 0, %s64
    %s67 = sphi 0, %s66
    %s81 = sphi 0, %s67
    %s87 = sphi 0, %s89
    %s90 = sphi 0, %s87
    %s91 = sphi 0, %s90
    %s107 = sphi 0, %s91
  $region4: #{cross_block.15} parent=0 // loop_header_branch
    %12 = sbr.rel (%p10) target = $region8
  $region5: #{cross_block.15} parent=0 // loop_body
    %s14 = ssub.s32 %s9, 1
    %s15 = ssub.s32 %s9, 2
    %s16 = sadd.s32 %s9, 1
    %s17 = ssub.s32 %s9, %s16
    %p18 = scmp.eq.s32.totalorder %s17, 0
    %s20 = sadd.s32 %s19, 1
    %s21 = scalar_select %p18, %s19, %s20
    %p24 = pneg %p18
    %p25 = scmp.eq.s32.totalorder %s9, 1
    %p26 = por %p24, %p25
    %p27 = scmp.ne.s32.totalorder %s19, %s22
    %p28 = scmp.eq.s32.totalorder %s9, 0
    %p29 = por %p27, %p28
    %p30 = scmp.ne.s32.totalorder %s19, %s22
    %p31 = scmp.eq.s32.totalorder %s14, 1
    %p32 = por %p30, %p31
    %p33 = scmp.ne.s32.totalorder %s22, %s23
    %p34 = scmp.eq.s32.totalorder %s14, 0
    %p35 = por %p33, %p34
    %p36 = scmp.ne.s32.totalorder %s22, %s23
    %p37 = scmp.eq.s32.totalorder %s15, 1
    %p38 = por %p36, %p37
    %p40 = scmp.ne.s32.totalorder %s23, %s39
    %p41 = scmp.eq.s32.totalorder %s15, 0
    %p42 = por %p40, %p41
    %s44 = sadd.s32 %s43, 1
    %p47 = scmp.eq.s32.totalorder %s9, 1
    %p48 = scmp.ne.s32.totalorder %s43, %s45
    %p49 = scmp.eq.s32.totalorder %s9, 0
    %p50 = por %p48, %p49
    %p51 = scmp.ne.s32.totalorder %s43, %s45
    %p52 = scmp.eq.s32.totalorder %s14, 1
    %p53 = por %p51, %p52
    %p54 = scmp.ne.s32.totalorder %s45, %s46
    %p55 = scmp.eq.s32.totalorder %s14, 0
    %p56 = por %p54, %p55
    %p57 = scmp.ne.s32.totalorder %s45, %s46
    %p58 = scmp.eq.s32.totalorder %s15, 1
    %p59 = por %p57, %p58
    %p61 = scmp.ne.s32.totalorder %s46, %s60
    %p62 = scmp.eq.s32.totalorder %s15, 0
    %p63 = por %p61, %p62
    %s65 = sadd.s32 %s64, 1
    %p68 = scmp.eq.s32.totalorder %s9, 1
    %p69 = scmp.ne.s32.totalorder %s64, %s66
    %p70 = scmp.eq.s32.totalorder %s9, 0
    %p71 = por %p69, %p70
    %p72 = scmp.ne.s32.totalorder %s64, %s66
    %p73 = scmp.eq.s32.totalorder %s14, 1
    %p74 = por %p72, %p73
    %p75 = scmp.ne.s32.totalorder %s66, %s67
    %p76 = scmp.eq.s32.totalorder %s14, 0
    %p77 = por %p75, %p76
    %p78 = scmp.ne.s32.totalorder %s66, %s67
    %p79 = scmp.eq.s32.totalorder %s15, 1
    %p80 = por %p78, %p79
    %p82 = scmp.ne.s32.totalorder %s67, %s81
    %p83 = scmp.eq.s32.totalorder %s15, 0
    %p84 = por %p82, %p83
    %s85 = ssub.s32 %s9, %s16
    %p86 = scmp.eq.s32.totalorder %s85, 0
    %s88 = sadd.s32 %s87, 1
    %s89 = scalar_select %p86, %s87, %s88
    %p92 = pneg %p86
    %p93 = scmp.eq.s32.totalorder %s9, 1
    %p94 = por %p92, %p93
    %p95 = scmp.ne.s32.totalorder %s87, %s90
    %p96 = scmp.eq.s32.totalorder %s9, 0
    %p97 = por %p95, %p96
    %p98 = scmp.ne.s32.totalorder %s87, %s90
    %p99 = scmp.eq.s32.totalorder %s14, 1
    %p100 = por %p98, %p99
    %p101 = scmp.ne.s32.totalorder %s90, %s91
    %p102 = scmp.eq.s32.totalorder %s14, 0
    %p103 = por %p101, %p102
    %p104 = scmp.ne.s32.totalorder %s90, %s91
    %p105 = scmp.eq.s32.totalorder %s15, 1
    %p106 = por %p104, %p105
    %p108 = scmp.ne.s32.totalorder %s91, %s107
    %p109 = scmp.eq.s32.totalorder %s15, 0
    %p110 = por %p108, %p109
    %p111 = scmp.le.s32.totalorder 1, %s9
    %p112 = scmp.lt.s32.totalorder %s9, 3
    %p113 = pnand %p111, %p112
    %p114 = pneg %p113
    // Predicated region
    $region9: #{cross_block.15} parent=5 // pred_check
      _
    $region10: #{cross_block.15} parent=5 // pred_check_branch
      %116 = sbr.rel (%p113) target = $region12
    $region11: #{cross_block.15} parent=5 // pred_region
      %s117 = ssub.s32 %s9, 1
      // Predicated region
      $region13: #{cross_block.15} parent=11 // pred_check
        %p118 = pneg %p56
      $region14: #{cross_block.15} parent=11 // pred_check_branch
        %120 = sbr.rel (%p118) target = $region16
      $region15: #{cross_block.15} parent=11 // pred_region
        _
      $region16: #{cross_block.15} parent=11 // pred_fallthru
        _
      // Predicated region
      $region17: #{cross_block.15} parent=11 // pred_check
        %p121 = pneg %p77
      $region18: #{cross_block.15} parent=11 // pred_check_branch
        %123 = sbr.rel (%p121) target = $region20
      $region19: #{cross_block.15} parent=11 // pred_region
        _
      $region20: #{cross_block.15} parent=11 // pred_fallthru
        _
    $region12: #{cross_block.15} parent=5 // pred_fallthru
      _
    %p124 = scmp.lt.s32.totalorder %s9, 2
    // Predicated region
    $region21: #{cross_block.15} parent=5 // pred_check
      %p125 = pneg %p124
    $region22: #{cross_block.15} parent=5 // pred_check_branch
      %127 = sbr.rel (%p125) target = $region24
    $region23: #{cross_block.15} parent=5 // pred_region
      // Predicated region
      $region25: #{cross_block.15} parent=23 // pred_check
        %p128 = pneg %p29
      $region26: #{cross_block.15} parent=23 // pred_check_branch
        %130 = sbr.rel (%p128) target = $region28
      $region27: #{cross_block.15} parent=23 // pred_region
        %s131 = smul.u32 32, %s9
        %p132 = scmp.lt.s32.totalorder %s131, 63
        %s133 = scalar_select %p132, %s131, 63
        %s134 = smul.addr %s133, 8
        %s135 = scalar_lea.vmem %s0, %s134
        %s136 = smul.u32 32, %s9
      $region28: #{cross_block.15} parent=23 // pred_fallthru
        _
    $region24: #{cross_block.15} parent=5 // pred_fallthru
      _
    %p137 = scmp.le.s32.totalorder 1, %s9
    %p138 = scmp.lt.s32.totalorder %s9, 3
    %p139 = pnand %p137, %p138
    %p140 = pneg %p139
    // Predicated region
    $region29: #{cross_block.15} parent=5 // pred_check
      _
    $region30: #{cross_block.15} parent=5 // pred_check_branch
      %142 = sbr.rel (%p139) target = $region32
    $region31: #{cross_block.15} parent=5 // pred_region
      %s143 = ssub.s32 %s9, 1
      %s144 = smul.u32 32, %s14
      %p145 = scmp.lt.s32.totalorder %s144, 63
      %s146 = scalar_select %p145, %s144, 63
      %s147 = smul.addr %s146, 8
      %s148 = scalar_lea.vmem %s0, %s147
      %p149 = pneg %p35
      %p150 = pneg %p32
      %p151 = pneg %p56
      %p152 = pneg %p53
      %p153 = pneg %p77
      %p154 = pneg %p74
      %p155 = pneg %p103
      %p156 = pneg %p100
      %s157 = smul.u32 32, %s14
      %p158 = scmp.lt.s32.totalorder %s157, 63
      %s159 = scalar_select %p158, %s157, 63
      %s160 = smul.addr %s159, 8
      %s161 = scalar_lea.vmem %s3, %s160
      %s162 = smul.u32 32, %s14
      %p163 = scmp.lt.s32.totalorder %s162, 63
      %s164 = scalar_select %p163, %s162, 63
      %s165 = smul.addr %s164, 8
      %s166 = scalar_lea.vmem %s0, %s165
      %s167 = smul.u32 32, %s14
      %s168 = smul.u32 32, %s14
      %p169 = scmp.lt.s32.totalorder %s168, 63
      %s170 = scalar_select %p169, %s168, 63
      %s171 = smul.addr %s170, 8
      %s172 = scalar_lea.vmem %s3, %s171
      %s173 = smul.u32 32, %s14
      %v175 = vld [vmem:[%s166] sm:$0xff]
      %v176 = vld [vmem:[%s166 + $0x8] sm:$0xff]
      %v177 = vld [vmem:[%s166 + $0x10] sm:$0xff]
      %v178 = vld [vmem:[%s166 + $0x18] sm:$0xff]
      %v179 = vld [vmem:[%s166 + $0x20] sm:$0xff]
      %v180 = vld [vmem:[%s166 + $0x28] sm:$0xff]
      %v181 = vld [vmem:[%s166 + $0x30] sm:$0xff]
      %v182 = vld [vmem:[%s166 + $0x38] sm:$0xff]
      %v183 = vld [vmem:[%s166 + $0x40] sm:$0xff]
      %v184 = vld [vmem:[%s166 + $0x48] sm:$0xff]
      %v185 = vld [vmem:[%s166 + $0x50] sm:$0xff]
      %v186 = vld [vmem:[%s166 + $0x58] sm:$0xff]
      %v187 = vld [vmem:[%s166 + $0x60] sm:$0xff]
      %v188 = vld [vmem:[%s166 + $0x68] sm:$0xff]
      %v189 = vld [vmem:[%s166 + $0x70] sm:$0xff]
      %v190 = vld [vmem:[%s166 + $0x78] sm:$0xff]
      %v191 = vld [vmem:[%s166 + $0x80] sm:$0xff]
      %v192 = vld [vmem:[%s166 + $0x88] sm:$0xff]
      %v193 = vld [vmem:[%s166 + $0x90] sm:$0xff]
      %v194 = vld [vmem:[%s166 + $0x98] sm:$0xff]
      %v195 = vld [vmem:[%s166 + $0xa0] sm:$0xff]
      %v196 = vld [vmem:[%s166 + $0xa8] sm:$0xff]
      %v197 = vld [vmem:[%s166 + $0xb0] sm:$0xff]
      %v198 = vld [vmem:[%s166 + $0xb8] sm:$0xff]
      %v199 = vld [vmem:[%s166 + $0xc0] sm:$0xff]
      %v200 = vld [vmem:[%s166 + $0xc8] sm:$0xff]
      %v201 = vld [vmem:[%s166 + $0xd0] sm:$0xff]
      %v202 = vld [vmem:[%s166 + $0xd8] sm:$0xff]
      %v203 = vld [vmem:[%s166 + $0xe0] sm:$0xff]
      %v204 = vld [vmem:[%s166 + $0xe8] sm:$0xff]
      %v205 = vld [vmem:[%s166 + $0xf0] sm:$0xff]
      %v206 = vld [vmem:[%s166 + $0xf8] sm:$0xff]
      %v207 = vpack.c.bf16 %v176, %v175
      %v208 = vpack.c.bf16 %v178, %v177
      %v209 = vpack.c.bf16 %v180, %v179
      %v210 = vpack.c.bf16 %v182, %v181
      %v211 = vpack.c.bf16 %v184, %v183
      %v212 = vpack.c.bf16 %v186, %v185
      %v213 = vpack.c.bf16 %v188, %v187
      %v214 = vpack.c.bf16 %v190, %v189
      %v215 = vpack.c.bf16 %v192, %v191
      %v216 = vpack.c.bf16 %v194, %v193
      %v217 = vpack.c.bf16 %v196, %v195
      %v218 = vpack.c.bf16 %v198, %v197
      %v219 = vpack.c.bf16 %v200, %v199
      %v220 = vpack.c.bf16 %v202, %v201
      %v221 = vpack.c.bf16 %v204, %v203
      %v222 = vpack.c.bf16 %v206, %v205
      %v223 = vld [vmem:[%s1] sm:$0xff]
      %v224 = vpack.c.bf16 %v223, %v223
      %v225 = vld [vmem:[%s2] sm:$0x1]
      %v227 = vlaneseq
      %v228 = vshrl.u32 %v227, 7
      %v229 = vsub.s32 0, %v228
      %v230 = vrot.slane %v225, %v229
      %vm232 = vcmask 64512
      %v234 = vsel %vm232, %v207, 0
      %v237 = vsel %vm232, %v208, 0
      %v240 = vsel %vm232, %v209, 0
      %v243 = vsel %vm232, %v210, 0
      %v246 = vsel %vm232, %v211, 0
      %v249 = vsel %vm232, %v212, 0
      %v252 = vsel %vm232, %v213, 0
      %v255 = vsel %vm232, %v214, 0
      %v258 = vsel %vm232, %v215, 0
      %v261 = vsel %vm232, %v216, 0
      %v264 = vsel %vm232, %v217, 0
      %v267 = vsel %vm232, %v218, 0
      %v270 = vsel %vm232, %v219, 0
      %v273 = vsel %vm232, %v220, 0
      %v276 = vsel %vm232, %v221, 0
      %v279 = vsel %vm232, %v222, 0
      %vm281 = vcmask 1043456
      %v283 = vsel %vm281, %v224, 0
      %285 = vmatprep.subr.bf16.mxu0 0
      %286 = vmatpush1.bf16.msra.mxu0 %v283
      %287 = vmatprep.subr.bf16.mxu0 0
      %288 = vmatpush1.bf16.msra.mxu0 0
      %289 = vmatprep.subr.bf16.mxu0 0
      %290 = vmatpush1.bf16.msra.mxu0 0
      %291 = vmatprep.subr.bf16.mxu0 0
      %292 = vmatpush1.bf16.msra.mxu0 0
      %293 = vmatprep.subr.bf16.mxu0 0
      %294 = vmatpush1.bf16.msra.mxu0 0
      %295 = vmatprep.subr.bf16.mxu0 0
      %296 = vmatpush1.bf16.msra.mxu0 0
      %297 = vmatprep.subr.bf16.mxu0 0
      %298 = vmatpush1.bf16.msra.mxu0 0
      %299 = vmatprep.subr.bf16.mxu0 0
      %300 = vmatpush1.bf16.msra.mxu0 0
      %301 = vmatprep.subr.bf16.mxu0 0
      %302 = vmatpush1.bf16.msra.mxu0 0
      %303 = vmatprep.subr.bf16.mxu0 0
      %304 = vmatpush1.bf16.msra.mxu0 0
      %305 = vmatprep.subr.bf16.mxu0 0
      %306 = vmatpush1.bf16.msra.mxu0 0
      %307 = vmatprep.subr.bf16.mxu0 0
      %308 = vmatpush1.bf16.msra.mxu0 0
      %309 = vmatprep.subr.bf16.mxu0 0
      %310 = vmatpush1.bf16.msra.mxu0 0
      %311 = vmatprep.subr.bf16.mxu0 0
      %312 = vmatpush1.bf16.msra.mxu0 0
      %313 = vmatprep.subr.bf16.mxu0 0
      %314 = vmatpush1.bf16.msra.mxu0 0
      %315 = vmatprep.subr.bf16.mxu0 0
      %316 = vmatpush1.bf16.msra.mxu0 0
      %317 = vmatprep.mubr.bf16.mxu0 0
      %318 = vmatmul.mubr.bf16.gmra.mrb[0].mxu0 %v234
      %v319 = vpop.f32.mrb[0].mxu0
      %v320 = vadd.f32 %v230, %v319
      %v321 = vpop.f32.mrb[0].mxu0
      %v322 = vpop.f32.mrb[0].mxu0
      %v323 = vadd.f32 %v230, %v322
      %v324 = vpop.f32.mrb[0].mxu0
      %325 = vmatprep.mubr.bf16.mxu0 0
      %326 = vmatmul.mubr.bf16.gmra.mrb[0].mxu0 %v237
      %v327 = vpop.f32.mrb[0].mxu0
      %v328 = vadd.f32 %v230, %v327
      %v329 = vpop.f32.mrb[0].mxu0
      %v330 = vpop.f32.mrb[0].mxu0
      %v331 = vadd.f32 %v230, %v330
      %v332 = vpop.f32.mrb[0].mxu0
      %333 = vmatprep.mubr.bf16.mxu0 0
      %334 = vmatmul.mubr.bf16.gmra.mrb[0].mxu0 %v240
      %v335 = vpop.f32.mrb[0].mxu0
      %v336 = vadd.f32 %v230, %v335
      %v337 = vpop.f32.mrb[0].mxu0
      %v338 = vpop.f32.mrb[0].mxu0
      %v339 = vadd.f32 %v230, %v338
      %v340 = vpop.f32.mrb[0].mxu0
      %341 = vmatprep.mubr.bf16.mxu0 0
      %342 = vmatmul.mubr.bf16.gmra.mrb[0].mxu0 %v243
      %v343 = vpop.f32.mrb[0].mxu0
      %v344 = vadd.f32 %v230, %v343
      %v345 = vpop.f32.mrb[0].mxu0
      %v346 = vpop.f32.mrb[0].mxu0
      %v347 = vadd.f32 %v230, %v346
      %v348 = vpop.f32.mrb[0].mxu0
      %349 = vmatprep.mubr.bf16.mxu0 0
      %350 = vmatmul.mubr.bf16.gmra.mrb[0].mxu0 %v246
      %v351 = vpop.f32.mrb[0].mxu0
      %v352 = vadd.f32 %v230, %v351
      %v353 = vpop.f32.mrb[0].mxu0
      %v354 = vpop.f32.mrb[0].mxu0
      %v355 = vadd.f32 %v230, %v354
      %v356 = vpop.f32.mrb[0].mxu0
      %357 = vmatprep.mubr.bf16.mxu0 0
      %358 = vmatmul.mubr.bf16.gmra.mrb[0].mxu0 %v249
      %v359 = vpop.f32.mrb[0].mxu0
      %v360 = vadd.f32 %v230, %v359
      %v361 = vpop.f32.mrb[0].mxu0
      %v362 = vpop.f32.mrb[0].mxu0
      %v363 = vadd.f32 %v230, %v362
      %v364 = vpop.f32.mrb[0].mxu0
      %365 = vmatprep.mubr.bf16.mxu0 0
      %366 = vmatmul.mubr.bf16.gmra.mrb[0].mxu0 %v252
      %v367 = vpop.f32.mrb[0].mxu0
      %v368 = vadd.f32 %v230, %v367
      %v369 = vpop.f32.mrb[0].mxu0
      %v370 = vpop.f32.mrb[0].mxu0
      %v371 = vadd.f32 %v230, %v370
      %v372 = vpop.f32.mrb[0].mxu0
      %373 = vmatprep.mubr.bf16.mxu0 0
      %374 = vmatmul.mubr.bf16.gmra.mrb[0].mxu0 %v255
      %v375 = vpop.f32.mrb[0].mxu0
      %v376 = vadd.f32 %v230, %v375
      %v377 = vpop.f32.mrb[0].mxu0
      %v378 = vpop.f32.mrb[0].mxu0
      %v379 = vadd.f32 %v230, %v378
      %v380 = vpop.f32.mrb[0].mxu0
      %381 = vmatprep.mubr.bf16.mxu0 0
      %382 = vmatmul.mubr.bf16.gmra.mrb[0].mxu0 %v258
      %v383 = vpop.f32.mrb[0].mxu0
      %v384 = vadd.f32 %v230, %v383
      %v385 = vpop.f32.mrb[0].mxu0
      %v386 = vpop.f32.mrb[0].mxu0
      %v387 = vadd.f32 %v230, %v386
      %v388 = vpop.f32.mrb[0].mxu0
      %389 = vmatprep.mubr.bf16.mxu0 0
      %390 = vmatmul.mubr.bf16.gmra.mrb[0].mxu0 %v261
      %v391 = vpop.f32.mrb[0].mxu0
      %v392 = vadd.f32 %v230, %v391
      %v393 = vpop.f32.mrb[0].mxu0
      %v394 = vpop.f32.mrb[0].mxu0
      %v395 = vadd.f32 %v230, %v394
      %v396 = vpop.f32.mrb[0].mxu0
      %397 = vmatprep.mubr.bf16.mxu0 0
      %398 = vmatmul.mubr.bf16.gmra.mrb[0].mxu0 %v264
      %v399 = vpop.f32.mrb[0].mxu0
      %v400 = vadd.f32 %v230, %v399
      %v401 = vpop.f32.mrb[0].mxu0
      %v402 = vpop.f32.mrb[0].mxu0
      %v403 = vadd.f32 %v230, %v402
      %v404 = vpop.f32.mrb[0].mxu0
      %405 = vmatprep.mubr.bf16.mxu0 0
      %406 = vmatmul.mubr.bf16.gmra.mrb[0].mxu0 %v267
      %v407 = vpop.f32.mrb[0].mxu0
      %v408 = vadd.f32 %v230, %v407
      %v409 = vpop.f32.mrb[0].mxu0
      %v410 = vpop.f32.mrb[0].mxu0
      %v411 = vadd.f32 %v230, %v410
      %v412 = vpop.f32.mrb[0].mxu0
      %413 = vmatprep.mubr.bf16.mxu0 0
      %414 = vmatmul.mubr.bf16.gmra.mrb[0].mxu0 %v270
      %v415 = vpop.f32.mrb[0].mxu0
      %v416 = vadd.f32 %v230, %v415
      %v417 = vpop.f32.mrb[0].mxu0
      %v418 = vpop.f32.mrb[0].mxu0
      %v419 = vadd.f32 %v230, %v418
      %v420 = vpop.f32.mrb[0].mxu0
      %421 = vmatprep.mubr.bf16.mxu0 0
      %422 = vmatmul.mubr.bf16.gmra.mrb[0].mxu0 %v273
      %v423 = vpop.f32.mrb[0].mxu0
      %v424 = vadd.f32 %v230, %v423
      %v425 = vpop.f32.mrb[0].mxu0
      %v426 = vpop.f32.mrb[0].mxu0
      %v427 = vadd.f32 %v230, %v426
      %v428 = vpop.f32.mrb[0].mxu0
      %429 = vmatprep.mubr.bf16.mxu0 0
      %430 = vmatmul.mubr.bf16.gmra.mrb[0].mxu0 %v276
      %v431 = vpop.f32.mrb[0].mxu0
      %v432 = vadd.f32 %v230, %v431
      %v433 = vpop.f32.mrb[0].mxu0
      %v434 = vpop.f32.mrb[0].mxu0
      %v435 = vadd.f32 %v230, %v434
      %v436 = vpop.f32.mrb[0].mxu0
      %437 = vmatprep.mubr.bf16.mxu0 0
      %438 = vmatmul.mubr.bf16.gmra.mrb[0].mxu0 %v279
      %v439 = vpop.f32.mrb[0].mxu0
      %v440 = vadd.f32 %v230, %v439
      %v441 = vpop.f32.mrb[0].mxu0
      %v442 = vpop.f32.mrb[0].mxu0
      %v443 = vadd.f32 %v230, %v442
      %v444 = vpop.f32.mrb[0].mxu0
      %445 = vdwg.mxu0
      %vm446 = vcmask 130048
      %447 = vst.msk [vmem:[%s172] sm:$0xff] %vm446, %v320
      %448 = vst.msk [vmem:[%s172 + $0x8] sm:$0xff] %vm446, %v323
      %449 = vst.msk [vmem:[%s172 + $0x10] sm:$0xff] %vm446, %v328
      %450 = vst.msk [vmem:[%s172 + $0x18] sm:$0xff] %vm446, %v331
      %451 = vst.msk [vmem:[%s172 + $0x20] sm:$0xff] %vm446, %v336
      %452 = vst.msk [vmem:[%s172 + $0x28] sm:$0xff] %vm446, %v339
      %453 = vst.msk [vmem:[%s172 + $0x30] sm:$0xff] %vm446, %v344
      %454 = vst.msk [vmem:[%s172 + $0x38] sm:$0xff] %vm446, %v347
      %455 = vst.msk [vmem:[%s172 + $0x40] sm:$0xff] %vm446, %v352
      %456 = vst.msk [vmem:[%s172 + $0x48] sm:$0xff] %vm446, %v355
      %457 = vst.msk [vmem:[%s172 + $0x50] sm:$0xff] %vm446, %v360
      %458 = vst.msk [vmem:[%s172 + $0x58] sm:$0xff] %vm446, %v363
      %459 = vst.msk [vmem:[%s172 + $0x60] sm:$0xff] %vm446, %v368
      %460 = vst.msk [vmem:[%s172 + $0x68] sm:$0xff] %vm446, %v371
      %461 = vst.msk [vmem:[%s172 + $0x70] sm:$0xff] %vm446, %v376
      %462 = vst.msk [vmem:[%s172 + $0x78] sm:$0xff] %vm446, %v379
      %463 = vst.msk [vmem:[%s172 + $0x80] sm:$0xff] %vm446, %v384
      %464 = vst.msk [vmem:[%s172 + $0x88] sm:$0xff] %vm446, %v387
      %465 = vst.msk [vmem:[%s172 + $0x90] sm:$0xff] %vm446, %v392
      %466 = vst.msk [vmem:[%s172 + $0x98] sm:$0xff] %vm446, %v395
      %467 = vst.msk [vmem:[%s172 + $0xa0] sm:$0xff] %vm446, %v400
      %468 = vst.msk [vmem:[%s172 + $0xa8] sm:$0xff] %vm446, %v403
      %469 = vst.msk [vmem:[%s172 + $0xb0] sm:$0xff] %vm446, %v408
      %470 = vst.msk [vmem:[%s172 + $0xb8] sm:$0xff] %vm446, %v411
      %471 = vst.msk [vmem:[%s172 + $0xc0] sm:$0xff] %vm446, %v416
      %472 = vst.msk [vmem:[%s172 + $0xc8] sm:$0xff] %vm446, %v419
      %473 = vst.msk [vmem:[%s172 + $0xd0] sm:$0xff] %vm446, %v424
      %474 = vst.msk [vmem:[%s172 + $0xd8] sm:$0xff] %vm446, %v427
      %475 = vst.msk [vmem:[%s172 + $0xe0] sm:$0xff] %vm446, %v432
      %476 = vst.msk [vmem:[%s172 + $0xe8] sm:$0xff] %vm446, %v435
      %477 = vst.msk [vmem:[%s172 + $0xf0] sm:$0xff] %vm446, %v440
      %478 = vst.msk [vmem:[%s172 + $0xf8] sm:$0xff] %vm446, %v443
      %s479 = smul.u32 32, %s14
      %p480 = scmp.lt.s32.totalorder %s479, 63
      %s481 = scalar_select %p480, %s479, 63
      %s482 = smul.addr %s481, 8
      %s483 = scalar_lea.vmem %s3, %s482
      // Predicated region
      $region33: #{cross_block.15} parent=31 // pred_check
        %p484 = pneg %p100
      $region34: #{cross_block.15} parent=31 // pred_check_branch
        %486 = sbr.rel (%p484) target = $region36
      $region35: #{cross_block.15} parent=31 // pred_region
        %s487 = smul.u32 32, %s14
      $region36: #{cross_block.15} parent=31 // pred_fallthru
        _
    $region32: #{cross_block.15} parent=5 // pred_fallthru
      _
    %p488 = scmp.le.s32.totalorder 2, %s9
    // Predicated region
    $region37: #{cross_block.15} parent=5 // pred_check
      %p489 = pneg %p488
    $region38: #{cross_block.15} parent=5 // pred_check_branch
      %491 = sbr.rel (%p489) target = $region40
    $region39: #{cross_block.15} parent=5 // pred_region
      %s492 = ssub.s32 %s9, 2
      // Predicated region
      $region41: #{cross_block.15} parent=39 // pred_check
        %p493 = pneg %p106
      $region42: #{cross_block.15} parent=39 // pred_check_branch
        %495 = sbr.rel (%p493) target = $region44
      $region43: #{cross_block.15} parent=39 // pred_region
        %s496 = smul.u32 32, %s15
        %p497 = scmp.lt.s32.totalorder %s496, 63
        %s498 = scalar_select %p497, %s496, 63
        %s499 = smul.addr %s498, 8
        %s500 = scalar_lea.vmem %s3, %s499
      $region44: #{cross_block.15} parent=39 // pred_fallthru
        _
    $region40: #{cross_block.15} parent=5 // pred_fallthru
      _
  $region6: #{cross_block.15} parent=0 // loop_footer
    %s13 = sadd.s32 1, %s9
  $region7: #{cross_block.15} parent=0 // loop_footer_branch
    %8 = sbr.rel target = $region3
  $region8: #{cross_block.15} parent=0 // loop_exit
    _

// kernel: cross_block.11
$region0: #{cross_block.11}
  #allocation0 [shape = 'u32[]', space=smem, size = 0x4, offset = 0x4, fixed_abs, tag = 'smem constant byte address 0x4 - core index']
  #allocation1 [shape = 'u32[144,128]{1,0:T(1,128)}', space=vmem, size = 0x12000, scoped, tag = 'internal scratch']
  %s0 = inlined_call_operand.vmem [shape: f32[512,4], index: 0, kind: input, shape index: {}]
  %s1 = inlined_call_operand.vmem [shape: f32[4,8], index: 1, kind: input, shape index: {}]
  %s2 = inlined_call_operand.vmem [shape: f32[1,8], index: 2, kind: input, shape index: {}]
  %s3 = inlined_call_operand.vmem [shape: f32[512,8], index: 3, kind: output, shape index: {}]
  %s4 = sld [smem:[#allocation0]]
  $region45: #{cross_block.11} parent=0
    _
  %s6 = ssub.s32 1, %s4
  %s7 = scalar_select 0, %s6, %s4
  loop: start=0, step=1, limit=4
  $region2: #{cross_block.11} parent=0 // loop_pre_header
    _
  $region3: #{cross_block.11} parent=0 // loop_header
    %s9 = sphi 0, %s13
    %p10 = scmp.ge.s32.totalorder %s9, 4
    %s19 = sphi 0, %s21
    %s22 = sphi 0, %s19
    %s23 = sphi 0, %s22
    %s39 = sphi 0, %s23
    %s43 = sphi 0, %s43
    %s45 = sphi 0, %s43
    %s46 = sphi 0, %s45
    %s60 = sphi 0, %s46
    %s64 = sphi 0, %s64
    %s66 = sphi 0, %s64
    %s67 = sphi 0, %s66
    %s81 = sphi 0, %s67
    %s87 = sphi 0, %s89
    %s90 = sphi 0, %s87
    %s91 = sphi 0, %s90
    %s107 = sphi 0, %s91
  $region4: #{cross_block.11} parent=0 // loop_header_branch
    %12 = sbr.rel (%p10) target = $region8
  $region5: #{cross_block.11} parent=0 // loop_body
    %s14 = ssub.s32 %s9, 1
    %s15 = ssub.s32 %s9, 2
    %s16 = sadd.s32 %s9, 1
    %s17 = ssub.s32 %s9, %s16
    %p18 = scmp.eq.s32.totalorder %s17, 0
    %s20 = sadd.s32 %s19, 1
    %s21 = scalar_select %p18, %s19, %s20
    %p24 = pneg %p18
    %p25 = scmp.eq.s32.totalorder %s9, 1
    %p26 = por %p24, %p25
    %p27 = scmp.ne.s32.totalorder %s19, %s22
    %p28 = scmp.eq.s32.totalorder %s9, 0
    %p29 = por %p27, %p28
    %p30 = scmp.ne.s32.totalorder %s19, %s22
    %p31 = scmp.eq.s32.totalorder %s14, 1
    %p32 = por %p30, %p31
    %p33 = scmp.ne.s32.totalorder %s22, %s23
    %p34 = scmp.eq.s32.totalorder %s14, 0
    %p35 = por %p33, %p34
    %p36 = scmp.ne.s32.totalorder %s22, %s23
    %p37 = scmp.eq.s32.totalorder %s15, 1
    %p38 = por %p36, %p37
    %p40 = scmp.ne.s32.totalorder %s23, %s39
    %p41 = scmp.eq.s32.totalorder %s15, 0
    %p42 = por %p40, %p41
    %s44 = sadd.s32 %s43, 1
    %p47 = scmp.eq.s32.totalorder %s9, 1
    %p48 = scmp.ne.s32.totalorder %s43, %s45
    %p49 = scmp.eq.s32.totalorder %s9, 0
    %p50 = por %p48, %p49
    %p51 = scmp.ne.s32.totalorder %s43, %s45
    %p52 = scmp.eq.s32.totalorder %s14, 1
    %p53 = por %p51, %p52
    %p54 = scmp.ne.s32.totalorder %s45, %s46
    %p55 = scmp.eq.s32.totalorder %s14, 0
    %p56 = por %p54, %p55
    %p57 = scmp.ne.s32.totalorder %s45, %s46
    %p58 = scmp.eq.s32.totalorder %s15, 1
    %p59 = por %p57, %p58
    %p61 = scmp.ne.s32.totalorder %s46, %s60
    %p62 = scmp.eq.s32.totalorder %s15, 0
    %p63 = por %p61, %p62
    %s65 = sadd.s32 %s64, 1
    %p68 = scmp.eq.s32.totalorder %s9, 1
    %p69 = scmp.ne.s32.totalorder %s64, %s66
    %p70 = scmp.eq.s32.totalorder %s9, 0
    %p71 = por %p69, %p70
    %p72 = scmp.ne.s32.totalorder %s64, %s66
    %p73 = scmp.eq.s32.totalorder %s14, 1
    %p74 = por %p72, %p73
    %p75 = scmp.ne.s32.totalorder %s66, %s67
    %p76 = scmp.eq.s32.totalorder %s14, 0
    %p77 = por %p75, %p76
    %p78 = scmp.ne.s32.totalorder %s66, %s67
    %p79 = scmp.eq.s32.totalorder %s15, 1
    %p80 = por %p78, %p79
    %p82 = scmp.ne.s32.totalorder %s67, %s81
    %p83 = scmp.eq.s32.totalorder %s15, 0
    %p84 = por %p82, %p83
    %s85 = ssub.s32 %s9, %s16
    %p86 = scmp.eq.s32.totalorder %s85, 0
    %s88 = sadd.s32 %s87, 1
    %s89 = scalar_select %p86, %s87, %s88
    %p92 = pneg %p86
    %p93 = scmp.eq.s32.totalorder %s9, 1
    %p94 = por %p92, %p93
    %p95 = scmp.ne.s32.totalorder %s87, %s90
    %p96 = scmp.eq.s32.totalorder %s9, 0
    %p97 = por %p95, %p96
    %p98 = scmp.ne.s32.totalorder %s87, %s90
    %p99 = scmp.eq.s32.totalorder %s14, 1
    %p100 = por %p98, %p99
    %p101 = scmp.ne.s32.totalorder %s90, %s91
    %p102 = scmp.eq.s32.totalorder %s14, 0
    %p103 = por %p101, %p102
    %p104 = scmp.ne.s32.totalorder %s90, %s91
    %p105 = scmp.eq.s32.totalorder %s15, 1
    %p106 = por %p104, %p105
    %p108 = scmp.ne.s32.totalorder %s91, %s107
    %p109 = scmp.eq.s32.totalorder %s15, 0
    %p110 = por %p108, %p109
    %p111 = scmp.le.s32.totalorder 1, %s9
    %p112 = scmp.lt.s32.totalorder %s9, 3
    %p113 = pnand %p111, %p112
    %p114 = pneg %p113
    // Predicated region
    $region9: #{cross_block.11} parent=5 // pred_check
      _
    $region10: #{cross_block.11} parent=5 // pred_check_branch
      %116 = sbr.rel (%p113) target = $region12
    $region11: #{cross_block.11} parent=5 // pred_region
      %s117 = ssub.s32 %s9, 1
      // Predicated region
      $region13: #{cross_block.11} parent=11 // pred_check
        %p118 = pneg %p56
      $region14: #{cross_block.11} parent=11 // pred_check_branch
        %120 = sbr.rel (%p118) target = $region16
      $region15: #{cross_block.11} parent=11 // pred_region
        _
      $region16: #{cross_block.11} parent=11 // pred_fallthru
        _
      // Predicated region
      $region17: #{cross_block.11} parent=11 // pred_check
        %p121 = pneg %p77
      $region18: #{cross_block.11} parent=11 // pred_check_branch
        %123 = sbr.rel (%p121) target = $region20
      $region19: #{cross_block.11} parent=11 // pred_region
        _
      $region20: #{cross_block.11} parent=11 // pred_fallthru
        _
    $region12: #{cross_block.11} parent=5 // pred_fallthru
      _
    %p124 = scmp.lt.s32.totalorder %s9, 2
    // Predicated region
    $region21: #{cross_block.11} parent=5 // pred_check
      %p125 = pneg %p124
    $region22: #{cross_block.11} parent=5 // pred_check_branch
      %127 = sbr.rel (%p125) target = $region24
    $region23: #{cross_block.11} parent=5 // pred_region
      // Predicated region
      $region25: #{cross_block.11} parent=23 // pred_check
        %p128 = pneg %p29
      $region26: #{cross_block.11} parent=23 // pred_check_branch
        %130 = sbr.rel (%p128) target = $region28
      $region27: #{cross_block.11} parent=23 // pred_region
        %s131 = smul.u32 32, %s9
        %p132 = scmp.lt.s32.totalorder %s131, 63
        %s133 = scalar_select %p132, %s131, 63
        %s134 = smul.addr %s133, 8
        %s135 = scalar_lea.vmem %s0, %s134
        %s136 = smul.u32 32, %s9
      $region28: #{cross_block.11} parent=23 // pred_fallthru
        _
    $region24: #{cross_block.11} parent=5 // pred_fallthru
      _
    %p137 = scmp.le.s32.totalorder 1, %s9
    %p138 = scmp.lt.s32.totalorder %s9, 3
    %p139 = pnand %p137, %p138
    %p140 = pneg %p139
    // Predicated region
    $region29: #{cross_block.11} parent=5 // pred_check
      _
    $region30: #{cross_block.11} parent=5 // pred_check_branch
      %142 = sbr.rel (%p139) target = $region32
    $region31: #{cross_block.11} parent=5 // pred_region
      %s143 = ssub.s32 %s9, 1
      %s144 = smul.u32 32, %s14
      %p145 = scmp.lt.s32.totalorder %s144, 63
      %s146 = scalar_select %p145, %s144, 63
      %s147 = smul.addr %s146, 8
      %s148 = scalar_lea.vmem %s0, %s147
      %p149 = pneg %p35
      %p150 = pneg %p32
      %p151 = pneg %p56
      %p152 = pneg %p53
      %p153 = pneg %p77
      %p154 = pneg %p74
      %p155 = pneg %p103
      %p156 = pneg %p100
      %s157 = smul.u32 32, %s14
      %p158 = scmp.lt.s32.totalorder %s157, 63
      %s159 = scalar_select %p158, %s157, 63
      %s160 = smul.addr %s159, 8
      %s161 = scalar_lea.vmem %s3, %s160
      %s162 = smul.u32 32, %s14
      %p163 = scmp.lt.s32.totalorder %s162, 63
      %s164 = scalar_select %p163, %s162, 63
      %s165 = smul.addr %s164, 8
      %s166 = scalar_lea.vmem %s0, %s165
      %s167 = smul.u32 32, %s14
      %s168 = smul.u32 32, %s14
      %p169 = scmp.lt.s32.totalorder %s168, 63
      %s170 = scalar_select %p169, %s168, 63
      %s171 = smul.addr %s170, 8
      %s172 = scalar_lea.vmem %s3, %s171
      %s173 = smul.u32 32, %s14
      %v175 = vld [vmem:[%s166] sm:$0xff]
      %v176 = vld [vmem:[%s166 + $0x8] sm:$0xff]
      %v177 = vld [vmem:[%s166 + $0x10] sm:$0xff]
      %v178 = vld [vmem:[%s166 + $0x18] sm:$0xff]
      %v179 = vld [vmem:[%s166 + $0x20] sm:$0xff]
      %v180 = vld [vmem:[%s166 + $0x28] sm:$0xff]
      %v181 = vld [vmem:[%s166 + $0x30] sm:$0xff]
      %v182 = vld [vmem:[%s166 + $0x38] sm:$0xff]
      %v183 = vld [vmem:[%s166 + $0x40] sm:$0xff]
      %v184 = vld [vmem:[%s166 + $0x48] sm:$0xff]
      %v185 = vld [vmem:[%s166 + $0x50] sm:$0xff]
      %v186 = vld [vmem:[%s166 + $0x58] sm:$0xff]
      %v187 = vld [vmem:[%s166 + $0x60] sm:$0xff]
      %v188 = vld [vmem:[%s166 + $0x68] sm:$0xff]
      %v189 = vld [vmem:[%s166 + $0x70] sm:$0xff]
      %v190 = vld [vmem:[%s166 + $0x78] sm:$0xff]
      %v191 = vld [vmem:[%s166 + $0x80] sm:$0xff]
      %v192 = vld [vmem:[%s166 + $0x88] sm:$0xff]
      %v193 = vld [vmem:[%s166 + $0x90] sm:$0xff]
      %v194 = vld [vmem:[%s166 + $0x98] sm:$0xff]
      %v195 = vld [vmem:[%s166 + $0xa0] sm:$0xff]
      %v196 = vld [vmem:[%s166 + $0xa8] sm:$0xff]
      %v197 = vld [vmem:[%s166 + $0xb0] sm:$0xff]
      %v198 = vld [vmem:[%s166 + $0xb8] sm:$0xff]
      %v199 = vld [vmem:[%s166 + $0xc0] sm:$0xff]
      %v200 = vld [vmem:[%s166 + $0xc8] sm:$0xff]
      %v201 = vld [vmem:[%s166 + $0xd0] sm:$0xff]
      %v202 = vld [vmem:[%s166 + $0xd8] sm:$0xff]
      %v203 = vld [vmem:[%s166 + $0xe0] sm:$0xff]
      %v204 = vld [vmem:[%s166 + $0xe8] sm:$0xff]
      %v205 = vld [vmem:[%s166 + $0xf0] sm:$0xff]
      %v206 = vld [vmem:[%s166 + $0xf8] sm:$0xff]
      %v207 = vpack.c.bf16 %v176, %v175
      %v208 = vpack.c.bf16 %v178, %v177
      %v209 = vpack.c.bf16 %v180, %v179
      %v210 = vpack.c.bf16 %v182, %v181
      %v211 = vpack.c.bf16 %v184, %v183
      %v212 = vpack.c.bf16 %v186, %v185
      %v213 = vpack.c.bf16 %v188, %v187
      %v214 = vpack.c.bf16 %v190, %v189
      %v215 = vpack.c.bf16 %v192, %v191
      %v216 = vpack.c.bf16 %v194, %v193
      %v217 = vpack.c.bf16 %v196, %v195
      %v218 = vpack.c.bf16 %v198, %v197
      %v219 = vpack.c.bf16 %v200, %v199
      %v220 = vpack.c.bf16 %v202, %v201
      %v221 = vpack.c.bf16 %v204, %v203
      %v222 = vpack.c.bf16 %v206, %v205
      %v223 = vld [vmem:[%s1] sm:$0xf]
      %v224 = vpack.c.bf16 %v223, %v223
      %v225 = vld [vmem:[%s2] sm:$0x1]
      %v227 = vlaneseq
      %v228 = vshrl.u32 %v227, 7
      %v229 = vsub.s32 0, %v228
      %v230 = vrot.slane %v225, %v229
      %vm232 = vcmask 31744
      %v234 = vsel %vm232, %v207, 0
      %v237 = vsel %vm232, %v208, 0
      %v240 = vsel %vm232, %v209, 0
      %v243 = vsel %vm232, %v210, 0
      %v246 = vsel %vm232, %v211, 0
      %v249 = vsel %vm232, %v212, 0
      %v252 = vsel %vm232, %v213, 0
      %v255 = vsel %vm232, %v214, 0
      %v258 = vsel %vm232, %v215, 0
      %v261 = vsel %vm232, %v216, 0
      %v264 = vsel %vm232, %v217, 0
      %v267 = vsel %vm232, %v218, 0
      %v270 = vsel %vm232, %v219, 0
      %v273 = vsel %vm232, %v220, 0
      %v276 = vsel %vm232, %v221, 0
      %v279 = vsel %vm232, %v222, 0
      %vm281 = vcmask 1041408
      %v283 = vsel %vm281, %v224, 0
      %285 = vmatprep.subr.bf16.mxu0 0
      %286 = vmatpush1.bf16.msra.mxu0 %v283
      %287 = vmatprep.subr.bf16.mxu0 0
      %288 = vmatpush1.bf16.msra.mxu0 0
      %289 = vmatprep.subr.bf16.mxu0 0
      %290 = vmatpush1.bf16.msra.mxu0 0
      %291 = vmatprep.subr.bf16.mxu0 0
      %292 = vmatpush1.bf16.msra.mxu0 0
      %293 = vmatprep.subr.bf16.mxu0 0
      %294 = vmatpush1.bf16.msra.mxu0 0
      %295 = vmatprep.subr.bf16.mxu0 0
      %296 = vmatpush1.bf16.msra.mxu0 0
      %297 = vmatprep.subr.bf16.mxu0 0
      %298 = vmatpush1.bf16.msra.mxu0 0
      %299 = vmatprep.subr.bf16.mxu0 0
      %300 = vmatpush1.bf16.msra.mxu0 0
      %301 = vmatprep.subr.bf16.mxu0 0
      %302 = vmatpush1.bf16.msra.mxu0 0
      %303 = vmatprep.subr.bf16.mxu0 0
      %304 = vmatpush1.bf16.msra.mxu0 0
      %305 = vmatprep.subr.bf16.mxu0 0
      %306 = vmatpush1.bf16.msra.mxu0 0
      %307 = vmatprep.subr.bf16.mxu0 0
      %308 = vmatpush1.bf16.msra.mxu0 0
      %309 = vmatprep.subr.bf16.mxu0 0
      %310 = vmatpush1.bf16.msra.mxu0 0
      %311 = vmatprep.subr.bf16.mxu0 0
      %312 = vmatpush1.bf16.msra.mxu0 0
      %313 = vmatprep.subr.bf16.mxu0 0
      %314 = vmatpush1.bf16.msra.mxu0 0
      %315 = vmatprep.subr.bf16.mxu0 0
      %316 = vmatpush1.bf16.msra.mxu0 0
      %317 = vmatprep.mubr.bf16.mxu0 0
      %318 = vmatmul.mubr.bf16.gmra.mrb[0].mxu0 %v234
      %v319 = vpop.f32.mrb[0].mxu0
      %v320 = vadd.f32 %v230, %v319
      %v321 = vpop.f32.mrb[0].mxu0
      %v322 = vpop.f32.mrb[0].mxu0
      %v323 = vadd.f32 %v230, %v322
      %v324 = vpop.f32.mrb[0].mxu0
      %325 = vmatprep.mubr.bf16.mxu0 0
      %326 = vmatmul.mubr.bf16.gmra.mrb[0].mxu0 %v237
      %v327 = vpop.f32.mrb[0].mxu0
      %v328 = vadd.f32 %v230, %v327
      %v329 = vpop.f32.mrb[0].mxu0
      %v330 = vpop.f32.mrb[0].mxu0
      %v331 = vadd.f32 %v230, %v330
      %v332 = vpop.f32.mrb[0].mxu0
      %333 = vmatprep.mubr.bf16.mxu0 0
      %334 = vmatmul.mubr.bf16.gmra.mrb[0].mxu0 %v240
      %v335 = vpop.f32.mrb[0].mxu0
      %v336 = vadd.f32 %v230, %v335
      %v337 = vpop.f32.mrb[0].mxu0
      %v338 = vpop.f32.mrb[0].mxu0
      %v339 = vadd.f32 %v230, %v338
      %v340 = vpop.f32.mrb[0].mxu0
      %341 = vmatprep.mubr.bf16.mxu0 0
      %342 = vmatmul.mubr.bf16.gmra.mrb[0].mxu0 %v243
      %v343 = vpop.f32.mrb[0].mxu0
      %v344 = vadd.f32 %v230, %v343
      %v345 = vpop.f32.mrb[0].mxu0
      %v346 = vpop.f32.mrb[0].mxu0
      %v347 = vadd.f32 %v230, %v346
      %v348 = vpop.f32.mrb[0].mxu0
      %349 = vmatprep.mubr.bf16.mxu0 0
      %350 = vmatmul.mubr.bf16.gmra.mrb[0].mxu0 %v246
      %v351 = vpop.f32.mrb[0].mxu0
      %v352 = vadd.f32 %v230, %v351
      %v353 = vpop.f32.mrb[0].mxu0
      %v354 = vpop.f32.mrb[0].mxu0
      %v355 = vadd.f32 %v230, %v354
      %v356 = vpop.f32.mrb[0].mxu0
      %357 = vmatprep.mubr.bf16.mxu0 0
      %358 = vmatmul.mubr.bf16.gmra.mrb[0].mxu0 %v249
      %v359 = vpop.f32.mrb[0].mxu0
      %v360 = vadd.f32 %v230, %v359
      %v361 = vpop.f32.mrb[0].mxu0
      %v362 = vpop.f32.mrb[0].mxu0
      %v363 = vadd.f32 %v230, %v362
      %v364 = vpop.f32.mrb[0].mxu0
      %365 = vmatprep.mubr.bf16.mxu0 0
      %366 = vmatmul.mubr.bf16.gmra.mrb[0].mxu0 %v252
      %v367 = vpop.f32.mrb[0].mxu0
      %v368 = vadd.f32 %v230, %v367
      %v369 = vpop.f32.mrb[0].mxu0
      %v370 = vpop.f32.mrb[0].mxu0
      %v371 = vadd.f32 %v230, %v370
      %v372 = vpop.f32.mrb[0].mxu0
      %373 = vmatprep.mubr.bf16.mxu0 0
      %374 = vmatmul.mubr.bf16.gmra.mrb[0].mxu0 %v255
      %v375 = vpop.f32.mrb[0].mxu0
      %v376 = vadd.f32 %v230, %v375
      %v377 = vpop.f32.mrb[0].mxu0
      %v378 = vpop.f32.mrb[0].mxu0
      %v379 = vadd.f32 %v230, %v378
      %v380 = vpop.f32.mrb[0].mxu0
      %381 = vmatprep.mubr.bf16.mxu0 0
      %382 = vmatmul.mubr.bf16.gmra.mrb[0].mxu0 %v258
      %v383 = vpop.f32.mrb[0].mxu0
      %v384 = vadd.f32 %v230, %v383
      %v385 = vpop.f32.mrb[0].mxu0
      %v386 = vpop.f32.mrb[0].mxu0
      %v387 = vadd.f32 %v230, %v386
      %v388 = vpop.f32.mrb[0].mxu0
      %389 = vmatprep.mubr.bf16.mxu0 0
      %390 = vmatmul.mubr.bf16.gmra.mrb[0].mxu0 %v261
      %v391 = vpop.f32.mrb[0].mxu0
      %v392 = vadd.f32 %v230, %v391
      %v393 = vpop.f32.mrb[0].mxu0
      %v394 = vpop.f32.mrb[0].mxu0
      %v395 = vadd.f32 %v230, %v394
      %v396 = vpop.f32.mrb[0].mxu0
      %397 = vmatprep.mubr.bf16.mxu0 0
      %398 = vmatmul.mubr.bf16.gmra.mrb[0].mxu0 %v264
      %v399 = vpop.f32.mrb[0].mxu0
      %v400 = vadd.f32 %v230, %v399
      %v401 = vpop.f32.mrb[0].mxu0
      %v402 = vpop.f32.mrb[0].mxu0
      %v403 = vadd.f32 %v230, %v402
      %v404 = vpop.f32.mrb[0].mxu0
      %405 = vmatprep.mubr.bf16.mxu0 0
      %406 = vmatmul.mubr.bf16.gmra.mrb[0].mxu0 %v267
      %v407 = vpop.f32.mrb[0].mxu0
      %v408 = vadd.f32 %v230, %v407
      %v409 = vpop.f32.mrb[0].mxu0
      %v410 = vpop.f32.mrb[0].mxu0
      %v411 = vadd.f32 %v230, %v410
      %v412 = vpop.f32.mrb[0].mxu0
      %413 = vmatprep.mubr.bf16.mxu0 0
      %414 = vmatmul.mubr.bf16.gmra.mrb[0].mxu0 %v270
      %v415 = vpop.f32.mrb[0].mxu0
      %v416 = vadd.f32 %v230, %v415
      %v417 = vpop.f32.mrb[0].mxu0
      %v418 = vpop.f32.mrb[0].mxu0
      %v419 = vadd.f32 %v230, %v418
      %v420 = vpop.f32.mrb[0].mxu0
      %421 = vmatprep.mubr.bf16.mxu0 0
      %422 = vmatmul.mubr.bf16.gmra.mrb[0].mxu0 %v273
      %v423 = vpop.f32.mrb[0].mxu0
      %v424 = vadd.f32 %v230, %v423
      %v425 = vpop.f32.mrb[0].mxu0
      %v426 = vpop.f32.mrb[0].mxu0
      %v427 = vadd.f32 %v230, %v426
      %v428 = vpop.f32.mrb[0].mxu0
      %429 = vmatprep.mubr.bf16.mxu0 0
      %430 = vmatmul.mubr.bf16.gmra.mrb[0].mxu0 %v276
      %v431 = vpop.f32.mrb[0].mxu0
      %v432 = vadd.f32 %v230, %v431
      %v433 = vpop.f32.mrb[0].mxu0
      %v434 = vpop.f32.mrb[0].mxu0
      %v435 = vadd.f32 %v230, %v434
      %v436 = vpop.f32.mrb[0].mxu0
      %437 = vmatprep.mubr.bf16.mxu0 0
      %438 = vmatmul.mubr.bf16.gmra.mrb[0].mxu0 %v279
      %v439 = vpop.f32.mrb[0].mxu0
      %v440 = vadd.f32 %v230, %v439
      %v441 = vpop.f32.mrb[0].mxu0
      %v442 = vpop.f32.mrb[0].mxu0
      %v443 = vadd.f32 %v230, %v442
      %v444 = vpop.f32.mrb[0].mxu0
      %445 = vdwg.mxu0
      %vm446 = vcmp.ge.f32.partialorder %v320, 0.0
      %vm447 = vcmp.ge.f32.partialorder %v323, 0.0
      %vm448 = vcmp.ge.f32.partialorder %v328, 0.0
      %vm449 = vcmp.ge.f32.partialorder %v331, 0.0
      %vm450 = vcmp.ge.f32.partialorder %v336, 0.0
      %vm451 = vcmp.ge.f32.partialorder %v339, 0.0
      %vm452 = vcmp.ge.f32.partialorder %v344, 0.0
      %vm453 = vcmp.ge.f32.partialorder %v347, 0.0
      %vm454 = vcmp.ge.f32.partialorder %v352, 0.0
      %vm455 = vcmp.ge.f32.partialorder %v355, 0.0
      %vm456 = vcmp.ge.f32.partialorder %v360, 0.0
      %vm457 = vcmp.ge.f32.partialorder %v363, 0.0
      %vm458 = vcmp.ge.f32.partialorder %v368, 0.0
      %vm459 = vcmp.ge.f32.partialorder %v371, 0.0
      %vm460 = vcmp.ge.f32.partialorder %v376, 0.0
      %vm461 = vcmp.ge.f32.partialorder %v379, 0.0
      %vm462 = vcmp.ge.f32.partialorder %v384, 0.0
      %vm463 = vcmp.ge.f32.partialorder %v387, 0.0
      %vm464 = vcmp.ge.f32.partialorder %v392, 0.0
      %vm465 = vcmp.ge.f32.partialorder %v395, 0.0
      %vm466 = vcmp.ge.f32.partialorder %v400, 0.0
      %vm467 = vcmp.ge.f32.partialorder %v403, 0.0
      %vm468 = vcmp.ge.f32.partialorder %v408, 0.0
      %vm469 = vcmp.ge.f32.partialorder %v411, 0.0
      %vm470 = vcmp.ge.f32.partialorder %v416, 0.0
      %vm471 = vcmp.ge.f32.partialorder %v419, 0.0
      %vm472 = vcmp.ge.f32.partialorder %v424, 0.0
      %vm473 = vcmp.ge.f32.partialorder %v427, 0.0
      %vm474 = vcmp.ge.f32.partialorder %v432, 0.0
      %vm475 = vcmp.ge.f32.partialorder %v435, 0.0
      %vm476 = vcmp.ge.f32.partialorder %v440, 0.0
      %vm477 = vcmp.ge.f32.partialorder %v443, 0.0
      %v478 = vmul.f32 %v320, 0.01
      %v479 = vmul.f32 %v323, 0.01
      %v480 = vmul.f32 %v328, 0.01
      %v481 = vmul.f32 %v331, 0.01
      %v482 = vmul.f32 %v336, 0.01
      %v483 = vmul.f32 %v339, 0.01
      %v484 = vmul.f32 %v344, 0.01
      %v485 = vmul.f32 %v347, 0.01
      %v486 = vmul.f32 %v352, 0.01
      %v487 = vmul.f32 %v355, 0.01
      %v488 = vmul.f32 %v360, 0.01
      %v489 = vmul.f32 %v363, 0.01
      %v490 = vmul.f32 %v368, 0.01
      %v491 = vmul.f32 %v371, 0.01
      %v492 = vmul.f32 %v376, 0.01
      %v493 = vmul.f32 %v379, 0.01
      %v494 = vmul.f32 %v384, 0.01
      %v495 = vmul.f32 %v387, 0.01
      %v496 = vmul.f32 %v392, 0.01
      %v497 = vmul.f32 %v395, 0.01
      %v498 = vmul.f32 %v400, 0.01
      %v499 = vmul.f32 %v403, 0.01
      %v500 = vmul.f32 %v408, 0.01
      %v501 = vmul.f32 %v411, 0.01
      %v502 = vmul.f32 %v416, 0.01
      %v503 = vmul.f32 %v419, 0.01
      %v504 = vmul.f32 %v424, 0.01
      %v505 = vmul.f32 %v427, 0.01
      %v506 = vmul.f32 %v432, 0.01
      %v507 = vmul.f32 %v435, 0.01
      %v508 = vmul.f32 %v440, 0.01
      %v509 = vmul.f32 %v443, 0.01
      %v510 = vsel %vm446, %v320, %v478
      %v511 = vsel %vm447, %v323, %v479
      %v512 = vsel %vm448, %v328, %v480
      %v513 = vsel %vm449, %v331, %v481
      %v514 = vsel %vm450, %v336, %v482
      %v515 = vsel %vm451, %v339, %v483
      %v516 = vsel %vm452, %v344, %v484
      %v517 = vsel %vm453, %v347, %v485
      %v518 = vsel %vm454, %v352, %v486
      %v519 = vsel %vm455, %v355, %v487
      %v520 = vsel %vm456, %v360, %v488
      %v521 = vsel %vm457, %v363, %v489
      %v522 = vsel %vm458, %v368, %v490
      %v523 = vsel %vm459, %v371, %v491
      %v524 = vsel %vm460, %v376, %v492
      %v525 = vsel %vm461, %v379, %v493
      %v526 = vsel %vm462, %v384, %v494
      %v527 = vsel %vm463, %v387, %v495
      %v528 = vsel %vm464, %v392, %v496
      %v529 = vsel %vm465, %v395, %v497
      %v530 = vsel %vm466, %v400, %v498
      %v531 = vsel %vm467, %v403, %v499
      %v532 = vsel %vm468, %v408, %v500
      %v533 = vsel %vm469, %v411, %v501
      %v534 = vsel %vm470, %v416, %v502
      %v535 = vsel %vm471, %v419, %v503
      %v536 = vsel %vm472, %v424, %v504
      %v537 = vsel %vm473, %v427, %v505
      %v538 = vsel %vm474, %v432, %v506
      %v539 = vsel %vm475, %v435, %v507
      %v540 = vsel %vm476, %v440, %v508
      %v541 = vsel %vm477, %v443, %v509
      %vm542 = vcmask 64512
      %543 = vst.msk [vmem:[%s172] sm:$0xff] %vm542, %v510
      %544 = vst.msk [vmem:[%s172 + $0x8] sm:$0xff] %vm542, %v511
      %545 = vst.msk [vmem:[%s172 + $0x10] sm:$0xff] %vm542, %v512
      %546 = vst.msk [vmem:[%s172 + $0x18] sm:$0xff] %vm542, %v513
      %547 = vst.msk [vmem:[%s172 + $0x20] sm:$0xff] %vm542, %v514
      %548 = vst.msk [vmem:[%s172 + $0x28] sm:$0xff] %vm542, %v515
      %549 = vst.msk [vmem:[%s172 + $0x30] sm:$0xff] %vm542, %v516
      %550 = vst.msk [vmem:[%s172 + $0x38] sm:$0xff] %vm542, %v517
      %551 = vst.msk [vmem:[%s172 + $0x40] sm:$0xff] %vm542, %v518
      %552 = vst.msk [vmem:[%s172 + $0x48] sm:$0xff] %vm542, %v519
      %553 = vst.msk [vmem:[%s172 + $0x50] sm:$0xff] %vm542, %v520
      %554 = vst.msk [vmem:[%s172 + $0x58] sm:$0xff] %vm542, %v521
      %555 = vst.msk [vmem:[%s172 + $0x60] sm:$0xff] %vm542, %v522
      %556 = vst.msk [vmem:[%s172 + $0x68] sm:$0xff] %vm542, %v523
      %557 = vst.msk [vmem:[%s172 + $0x70] sm:$0xff] %vm542, %v524
      %558 = vst.msk [vmem:[%s172 + $0x78] sm:$0xff] %vm542, %v525
      %559 = vst.msk [vmem:[%s172 + $0x80] sm:$0xff] %vm542, %v526
      %560 = vst.msk [vmem:[%s172 + $0x88] sm:$0xff] %vm542, %v527
      %561 = vst.msk [vmem:[%s172 + $0x90] sm:$0xff] %vm542, %v528
      %562 = vst.msk [vmem:[%s172 + $0x98] sm:$0xff] %vm542, %v529
      %563 = vst.msk [vmem:[%s172 + $0xa0] sm:$0xff] %vm542, %v530
      %564 = vst.msk [vmem:[%s172 + $0xa8] sm:$0xff] %vm542, %v531
      %565 = vst.msk [vmem:[%s172 + $0xb0] sm:$0xff] %vm542, %v532
      %566 = vst.msk [vmem:[%s172 + $0xb8] sm:$0xff] %vm542, %v533
      %567 = vst.msk [vmem:[%s172 + $0xc0] sm:$0xff] %vm542, %v534
      %568 = vst.msk [vmem:[%s172 + $0xc8] sm:$0xff] %vm542, %v535
      %569 = vst.msk [vmem:[%s172 + $0xd0] sm:$0xff] %vm542, %v536
      %570 = vst.msk [vmem:[%s172 + $0xd8] sm:$0xff] %vm542, %v537
      %571 = vst.msk [vmem:[%s172 + $0xe0] sm:$0xff] %vm542, %v538
      %572 = vst.msk [vmem:[%s172 + $0xe8] sm:$0xff] %vm542, %v539
      %573 = vst.msk [vmem:[%s172 + $0xf0] sm:$0xff] %vm542, %v540
      %574 = vst.msk [vmem:[%s172 + $0xf8] sm:$0xff] %vm542, %v541
      %s575 = smul.u32 32, %s14
      %p576 = scmp.lt.s32.totalorder %s575, 63
      %s577 = scalar_select %p576, %s575, 63
      %s578 = smul.addr %s577, 8
      %s579 = scalar_lea.vmem %s3, %s578
      // Predicated region
      $region33: #{cross_block.11} parent=31 // pred_check
        %p580 = pneg %p100
      $region34: #{cross_block.11} parent=31 // pred_check_branch
        %582 = sbr.rel (%p580) target = $region36
      $region35: #{cross_block.11} parent=31 // pred_region
        %s583 = smul.u32 32, %s14
      $region36: #{cross_block.11} parent=31 // pred_fallthru
        _
    $region32: #{cross_block.11} parent=5 // pred_fallthru
      _
    %p584 = scmp.le.s32.totalorder 2, %s9
    // Predicated region
    $region37: #{cross_block.11} parent=5 // pred_check
      %p585 = pneg %p584
    $region38: #{cross_block.11} parent=5 // pred_check_branch
      %587 = sbr.rel (%p585) target = $region40
    $region39: #{cross_block.11} parent=5 // pred_region
      %s588 = ssub.s32 %s9, 2
      // Predicated region
      $region41: #{cross_block.11} parent=39 // pred_check
        %p589 = pneg %p106
      $region42: #{cross_block.11} parent=39 // pred_check_branch
        %591 = sbr.rel (%p589) target = $region44
      $region43: #{cross_block.11} parent=39 // pred_region
        %s592 = smul.u32 32, %s15
        %p593 = scmp.lt.s32.totalorder %s592, 63
        %s594 = scalar_select %p593, %s592, 63
        %s595 = smul.addr %s594, 8
        %s596 = scalar_lea.vmem %s3, %s595
      $region44: #{cross_block.11} parent=39 // pred_fallthru
        _
    $region40: #{cross_block.11} parent=5 // pred_fallthru
      _
  $region6: #{cross_block.11} parent=0 // loop_footer
    %s13 = sadd.s32 1, %s9
  $region7: #{cross_block.11} parent=0 // loop_footer_branch
    %8 = sbr.rel target = $region3
  $region8: #{cross_block.11} parent=0 // loop_exit
    _

// kernel: cross_block.12
$region0: #{cross_block.12}
  #allocation0 [shape = 'u32[]', space=smem, size = 0x4, offset = 0x4, fixed_abs, tag = 'smem constant byte address 0x4 - core index']
  #allocation1 [shape = 'u32[144,128]{1,0:T(1,128)}', space=vmem, size = 0x12000, scoped, tag = 'internal scratch']
  %s0 = inlined_call_operand.vmem [shape: f32[2,18,18,8], index: 0, kind: input, shape index: {}]
  %s1 = inlined_call_operand.vmem [shape: f32[9,8,8], index: 1, kind: input, shape index: {}]
  %s2 = inlined_call_operand.vmem [shape: f32[1,8], index: 2, kind: input, shape index: {}]
  %s3 = inlined_call_operand.vmem [shape: f32[2,16,16,8], index: 3, kind: output, shape index: {}]
  %s4 = sld [smem:[#allocation0]]
  $region45: #{cross_block.12} parent=0
    _
  %s6 = ssub.s32 1, %s4
  %s7 = scalar_select 0, %s6, %s4
  loop: start=0, step=1, limit=4
  $region2: #{cross_block.12} parent=0 // loop_pre_header
    _
  $region3: #{cross_block.12} parent=0 // loop_header
    %s9 = sphi 0, %s13
    %p10 = scmp.ge.s32.totalorder %s9, 4
    %s19 = sphi 0, %s21
    %s22 = sphi 0, %s19
    %s23 = sphi 0, %s22
    %s39 = sphi 0, %s23
    %s43 = sphi 0, %s43
    %s45 = sphi 0, %s43
    %s46 = sphi 0, %s45
    %s60 = sphi 0, %s46
    %s64 = sphi 0, %s64
    %s66 = sphi 0, %s64
    %s67 = sphi 0, %s66
    %s81 = sphi 0, %s67
    %s87 = sphi 0, %s89
    %s90 = sphi 0, %s87
    %s91 = sphi 0, %s90
    %s107 = sphi 0, %s91
  $region4: #{cross_block.12} parent=0 // loop_header_branch
    %12 = sbr.rel (%p10) target = $region8
  $region5: #{cross_block.12} parent=0 // loop_body
    %s14 = ssub.s32 %s9, 1
    %s15 = ssub.s32 %s9, 2
    %s16 = sadd.s32 %s9, 1
    %s17 = ssub.s32 %s9, %s16
    %p18 = scmp.eq.s32.totalorder %s17, 0
    %s20 = sadd.s32 %s19, 1
    %s21 = scalar_select %p18, %s19, %s20
    %p24 = pneg %p18
    %p25 = scmp.eq.s32.totalorder %s9, 1
    %p26 = por %p24, %p25
    %p27 = scmp.ne.s32.totalorder %s19, %s22
    %p28 = scmp.eq.s32.totalorder %s9, 0
    %p29 = por %p27, %p28
    %p30 = scmp.ne.s32.totalorder %s19, %s22
    %p31 = scmp.eq.s32.totalorder %s14, 1
    %p32 = por %p30, %p31
    %p33 = scmp.ne.s32.totalorder %s22, %s23
    %p34 = scmp.eq.s32.totalorder %s14, 0
    %p35 = por %p33, %p34
    %p36 = scmp.ne.s32.totalorder %s22, %s23
    %p37 = scmp.eq.s32.totalorder %s15, 1
    %p38 = por %p36, %p37
    %p40 = scmp.ne.s32.totalorder %s23, %s39
    %p41 = scmp.eq.s32.totalorder %s15, 0
    %p42 = por %p40, %p41
    %s44 = sadd.s32 %s43, 1
    %p47 = scmp.eq.s32.totalorder %s9, 1
    %p48 = scmp.ne.s32.totalorder %s43, %s45
    %p49 = scmp.eq.s32.totalorder %s9, 0
    %p50 = por %p48, %p49
    %p51 = scmp.ne.s32.totalorder %s43, %s45
    %p52 = scmp.eq.s32.totalorder %s14, 1
    %p53 = por %p51, %p52
    %p54 = scmp.ne.s32.totalorder %s45, %s46
    %p55 = scmp.eq.s32.totalorder %s14, 0
    %p56 = por %p54, %p55
    %p57 = scmp.ne.s32.totalorder %s45, %s46
    %p58 = scmp.eq.s32.totalorder %s15, 1
    %p59 = por %p57, %p58
    %p61 = scmp.ne.s32.totalorder %s46, %s60
    %p62 = scmp.eq.s32.totalorder %s15, 0
    %p63 = por %p61, %p62
    %s65 = sadd.s32 %s64, 1
    %p68 = scmp.eq.s32.totalorder %s9, 1
    %p69 = scmp.ne.s32.totalorder %s64, %s66
    %p70 = scmp.eq.s32.totalorder %s9, 0
    %p71 = por %p69, %p70
    %p72 = scmp.ne.s32.totalorder %s64, %s66
    %p73 = scmp.eq.s32.totalorder %s14, 1
    %p74 = por %p72, %p73
    %p75 = scmp.ne.s32.totalorder %s66, %s67
    %p76 = scmp.eq.s32.totalorder %s14, 0
    %p77 = por %p75, %p76
    %p78 = scmp.ne.s32.totalorder %s66, %s67
    %p79 = scmp.eq.s32.totalorder %s15, 1
    %p80 = por %p78, %p79
    %p82 = scmp.ne.s32.totalorder %s67, %s81
    %p83 = scmp.eq.s32.totalorder %s15, 0
    %p84 = por %p82, %p83
    %s85 = ssub.s32 %s9, %s16
    %p86 = scmp.eq.s32.totalorder %s85, 0
    %s88 = sadd.s32 %s87, 1
    %s89 = scalar_select %p86, %s87, %s88
    %p92 = pneg %p86
    %p93 = scmp.eq.s32.totalorder %s9, 1
    %p94 = por %p92, %p93
    %p95 = scmp.ne.s32.totalorder %s87, %s90
    %p96 = scmp.eq.s32.totalorder %s9, 0
    %p97 = por %p95, %p96
    %p98 = scmp.ne.s32.totalorder %s87, %s90
    %p99 = scmp.eq.s32.totalorder %s14, 1
    %p100 = por %p98, %p99
    %p101 = scmp.ne.s32.totalorder %s90, %s91
    %p102 = scmp.eq.s32.totalorder %s14, 0
    %p103 = por %p101, %p102
    %p104 = scmp.ne.s32.totalorder %s90, %s91
    %p105 = scmp.eq.s32.totalorder %s15, 1
    %p106 = por %p104, %p105
    %p108 = scmp.ne.s32.totalorder %s91, %s107
    %p109 = scmp.eq.s32.totalorder %s15, 0
    %p110 = por %p108, %p109
    %p111 = scmp.le.s32.totalorder 1, %s9
    %p112 = scmp.lt.s32.totalorder %s9, 3
    %p113 = pnand %p111, %p112
    %p114 = pneg %p113
    // Predicated region
    $region9: #{cross_block.12} parent=5 // pred_check
      _
    $region10: #{cross_block.12} parent=5 // pred_check_branch
      %116 = sbr.rel (%p113) target = $region12
    $region11: #{cross_block.12} parent=5 // pred_region
      %s117 = ssub.s32 %s9, 1
      // Predicated region
      $region13: #{cross_block.12} parent=11 // pred_check
        %p118 = pneg %p56
      $region14: #{cross_block.12} parent=11 // pred_check_branch
        %120 = sbr.rel (%p118) target = $region16
      $region15: #{cross_block.12} parent=11 // pred_region
        _
      $region16: #{cross_block.12} parent=11 // pred_fallthru
        _
      // Predicated region
      $region17: #{cross_block.12} parent=11 // pred_check
        %p121 = pneg %p77
      $region18: #{cross_block.12} parent=11 // pred_check_branch
        %123 = sbr.rel (%p121) target = $region20
      $region19: #{cross_block.12} parent=11 // pred_region
        _
      $region20: #{cross_block.12} parent=11 // pred_fallthru
        _
    $region12: #{cross_block.12} parent=5 // pred_fallthru
      _
    %p124 = scmp.lt.s32.totalorder %s9, 2
    // Predicated region
    $region21: #{cross_block.12} parent=5 // pred_check
      %p125 = pneg %p124
    $region22: #{cross_block.12} parent=5 // pred_check_branch
      %127 = sbr.rel (%p125) target = $region24
    $region23: #{cross_block.12} parent=5 // pred_region
      // Predicated region
      $region25: #{cross_block.12} parent=23 // pred_check
        %p128 = pneg %p29
      $region26: #{cross_block.12} parent=23 // pred_check_branch
        %130 = sbr.rel (%p128) target = $region28
      $region27: #{cross_block.12} parent=23 // pred_region
        %p131 = scmp.lt.s32.totalorder %s9, 1
        %s132 = scalar_select %p131, %s9, 1
        %s133 = smul.addr %s132, 54
        %s134 = smul.addr %s133, 8
        %s135 = scalar_lea.vmem %s0, %s134
      $region28: #{cross_block.12} parent=23 // pred_fallthru
        _
    $region24: #{cross_block.12} parent=5 // pred_fallthru
      _
    %p136 = scmp.le.s32.totalorder 1, %s9
    %p137 = scmp.lt.s32.totalorder %s9, 3
    %p138 = pnand %p136, %p137
    %p139 = pneg %p138
    // Predicated region
    $region29: #{cross_block.12} parent=5 // pred_check
      _
    $region30: #{cross_block.12} parent=5 // pred_check_branch
      %141 = sbr.rel (%p138) target = $region32
    $region31: #{cross_block.12} parent=5 // pred_region
      %s142 = ssub.s32 %s9, 1
      %p143 = scmp.lt.s32.totalorder %s14, 1
      %s144 = scalar_select %p143, %s14, 1
      %s145 = smul.addr %s144, 54
      %s146 = smul.addr %s145, 8
      %s147 = scalar_lea.vmem %s0, %s146
      %p148 = pneg %p35
      %p149 = pneg %p32
      %p150 = pneg %p56
      %p151 = pneg %p53
      %p152 = pneg %p77
      %p153 = pneg %p74
      %p154 = pneg %p103
      %p155 = pneg %p100
      %p156 = scmp.lt.s32.totalorder %s14, 1
      %s157 = scalar_select %p156, %s14, 1
      %s158 = smul.addr %s157, 32
      %s159 = smul.addr %s158, 8
      %s160 = scalar_lea.vmem %s3, %s159
      %p161 = scmp.lt.s32.totalorder %s14, 1
      %s162 = scalar_select %p161, %s14, 1
      %s163 = smul.addr %s162, 54
      %s164 = smul.addr %s163, 8
      %s165 = scalar_lea.vmem %s0, %s164
      %p166 = scmp.lt.s32.totalorder %s14, 1
      %s167 = scalar_select %p166, %s14, 1
      %s168 = smul.addr %s167, 32
      %s169 = smul.addr %s168, 8
      %s170 = scalar_lea.vmem %s3, %s169
      %v172 = vld [vmem:[%s165] sm:$0xff]
      %v173 = vld [vmem:[%s165 + $0x8] sm:$0xff]
      %v174 = vld [vmem:[%s165 + $0x10] sm:$0x3]
      %v175 = vld [vmem:[%s165 + $0x18] sm:$0xff]
      %v176 = vld [vmem:[%s165 + $0x20] sm:$0xff]
      %v177 = vld [vmem:[%s165 + $0x28] sm:$0x3]
      %v178 = vld [vmem:[%s165 + $0x30] sm:$0xff]
      %v179 = vld [vmem:[%s165 + $0x38] sm:$0xff]
      %v180 = vld [vmem:[%s165 + $0x40] sm:$0x3]
      %v181 = vld [vmem:[%s165 + $0x48] sm:$0xff]
      %v182 = vld [vmem:[%s165 + $0x50] sm:$0xff]
      %v183 = vld [vmem:[%s165 + $0x58] sm:$0x3]
      %v184 = vld [vmem:[%s165 + $0x60] sm:$0xff]
      %v185 = vld [vmem:[%s165 + $0x68] sm:$0xff]
      %v186 = vld [vmem:[%s165 + $0x70] sm:$0x3]
      %v187 = vld [vmem:[%s165 + $0x78] sm:$0xff]
      %v188 = vld [vmem:[%s165 + $0x80] sm:$0xff]
      %v189 = vld [vmem:[%s165 + $0x88] sm:$0x3]
      %v190 = vld [vmem:[%s165 + $0x90] sm:$0xff]
      %v191 = vld [vmem:[%s165 + $0x98] sm:$0xff]
      %v192 = vld [vmem:[%s165 + $0xa0] sm:$0x3]
      %v193 = vld [vmem:[%s165 + $0xa8] sm:$0xff]
      %v194 = vld [vmem:[%s165 + $0xb0] sm:$0xff]
      %v195 = vld [vmem:[%s165 + $0xb8] sm:$0x3]
      %v196 = vld [vmem:[%s165 + $0xc0] sm:$0xff]
      %v197 = vld [vmem:[%s165 + $0xc8] sm:$0xff]
      %v198 = vld [vmem:[%s165 + $0xd0] sm:$0x3]
      %v199 = vld [vmem:[%s165 + $0xd8] sm:$0xff]
      %v200 = vld [vmem:[%s165 + $0xe0] sm:$0xff]
      %v201 = vld [vmem:[%s165 + $0xe8] sm:$0x3]
      %v202 = vld [vmem:[%s165 + $0xf0] sm:$0xff]
      %v203 = vld [vmem:[%s165 + $0xf8] sm:$0xff]
      %v204 = vld [vmem:[%s165 + $0x100] sm:$0x3]
      %v205 = vld [vmem:[%s165 + $0x108] sm:$0xff]
      %v206 = vld [vmem:[%s165 + $0x110] sm:$0xff]
      %v207 = vld [vmem:[%s165 + $0x118] sm:$0x3]
      %v208 = vld [vmem:[%s165 + $0x120] sm:$0xff]
      %v209 = vld [vmem:[%s165 + $0x128] sm:$0xff]
      %v210 = vld [vmem:[%s165 + $0x130] sm:$0x3]
      %v211 = vld [vmem:[%s165 + $0x138] sm:$0xff]
      %v212 = vld [vmem:[%s165 + $0x140] sm:$0xff]
      %v213 = vld [vmem:[%s165 + $0x148] sm:$0x3]
      %v214 = vld [vmem:[%s165 + $0x150] sm:$0xff]
      %v215 = vld [vmem:[%s165 + $0x158] sm:$0xff]
      %v216 = vld [vmem:[%s165 + $0x160] sm:$0x3]
      %v217 = vld [vmem:[%s165 + $0x168] sm:$0xff]
      %v218 = vld [vmem:[%s165 + $0x170] sm:$0xff]
      %v219 = vld [vmem:[%s165 + $0x178] sm:$0x3]
      %v220 = vld [vmem:[%s165 + $0x180] sm:$0xff]
      %v221 = vld [vmem:[%s165 + $0x188] sm:$0xff]
      %v222 = vld [vmem:[%s165 + $0x190] sm:$0x3]
      %v223 = vld [vmem:[%s165 + $0x198] sm:$0xff]
      %v224 = vld [vmem:[%s165 + $0x1a0] sm:$0xff]
      %v225 = vld [vmem:[%s165 + $0x1a8] sm:$0x3]
      %v226 = vld [vmem:[%s1] sm:$0xff]
      %v227 = vld [vmem:[%s1 + $0x8] sm:$0xff]
      %v228 = vld [vmem:[%s1 + $0x10] sm:$0xff]
      %v229 = vld [vmem:[%s1 + $0x18] sm:$0xff]
      %v230 = vld [vmem:[%s1 + $0x20] sm:$0xff]
      %v231 = vld [vmem:[%s1 + $0x28] sm:$0xff]
      %v232 = vld [vmem:[%s1 + $0x30] sm:$0xff]
      %v233 = vld [vmem:[%s1 + $0x38] sm:$0xff]
      %v234 = vld [vmem:[%s1 + $0x40] sm:$0xff]
      %v235 = vpack.c.bf16 %v226, %v226
      %v236 = vpack.c.bf16 %v227, %v227
      %v237 = vpack.c.bf16 %v228, %v228
      %v238 = vpack.c.bf16 %v229, %v229
      %v239 = vpack.c.bf16 %v230, %v230
      %v240 = vpack.c.bf16 %v231, %v231
      %v241 = vpack.c.bf16 %v232, %v232
      %v242 = vpack.c.bf16 %v233, %v233
      %v243 = vpack.c.bf16 %v234, %v234
      %v244 = vpack.c.bf16 %v173, %v172
      %v245 = vpack.c.bf16 %v176, %v175
      %v246 = vpack.c.bf16 %v179, %v178
      %v247 = vpack.c.bf16 %v182, %v181
      %v248 = vpack.c.bf16 %v185, %v184
      %v249 = vpack.c.bf16 %v188, %v187
      %v250 = vpack.c.bf16 %v191, %v190
      %v251 = vpack.c.bf16 %v194, %v193
      %v252 = vpack.c.bf16 %v197, %v196
      %v253 = vpack.c.bf16 %v200, %v199
      %v254 = vpack.c.bf16 %v203, %v202
      %v255 = vpack.c.bf16 %v206, %v205
      %v256 = vpack.c.bf16 %v209, %v208
      %v257 = vpack.c.bf16 %v212, %v211
      %v258 = vpack.c.bf16 %v215, %v214
      %v259 = vpack.c.bf16 %v218, %v217
      %v260 = vpack.c.bf16 %v174, %v174
      %v261 = vpack.c.bf16 %v177, %v177
      %v262 = vpack.c.bf16 %v180, %v180
      %v263 = vpack.c.bf16 %v183, %v183
      %v264 = vpack.c.bf16 %v186, %v186
      %v265 = vpack.c.bf16 %v189, %v189
      %v266 = vpack.c.bf16 %v192, %v192
      %v267 = vpack.c.bf16 %v195, %v195
      %v268 = vpack.c.bf16 %v198, %v198
      %v269 = vpack.c.bf16 %v201, %v201
      %v270 = vpack.c.bf16 %v204, %v204
      %v271 = vpack.c.bf16 %v207, %v207
      %v272 = vpack.c.bf16 %v210, %v210
      %v273 = vpack.c.bf16 %v213, %v213
      %v274 = vpack.c.bf16 %v216, %v216
      %v275 = vpack.c.bf16 %v219, %v219
      %vm276 = vsmask.f32 7424
      %v278 = vshrl.u32 %v244, 16
      %v280 = vshll.u32 %v244, 16
      %v282 = vrot.slane %v280, 1
      %v283 = vor.u32 %v278, %v282
      %v285 = vshll.u32 %v260, 16
      %v287 = vrot.slane %v285, 1
      %v288 = vsel %vm276, %v283, %v287
      %v290 = vshrl.u32 %v245, 16
      %v292 = vshll.u32 %v245, 16
      %v294 = vrot.slane %v292, 1
      %v295 = vor.u32 %v290, %v294
      %v297 = vshll.u32 %v261, 16
      %v299 = vrot.slane %v297, 1
      %v300 = vsel %vm276, %v295, %v299
      %v302 = vshrl.u32 %v246, 16
      %v304 = vshll.u32 %v246, 16
      %v306 = vrot.slane %v304, 1
      %v307 = vor.u32 %v302, %v306
      %v309 = vshll.u32 %v262, 16
      %v311 = vrot.slane %v309, 1
      %v312 = vsel %vm276, %v307, %v311
      %v314 = vshrl.u32 %v247, 16
      %v316 = vshll.u32 %v247, 16
      %v318 = vrot.slane %v316, 1
      %v319 = vor.u32 %v314, %v318
      %v321 = vshll.u32 %v263, 16
      %v323 = vrot.slane %v321, 1
      %v324 = vsel %vm276, %v319, %v323
      %v326 = vshrl.u32 %v248, 16
      %v328 = vshll.u32 %v248, 16
      %v330 = vrot.slane %v328, 1
      %v331 = vor.u32 %v326, %v330
      %v333 = vshll.u32 %v264, 16
      %v335 = vrot.slane %v333, 1
      %v336 = vsel %vm276, %v331, %v335
      %v338 = vshrl.u32 %v249, 16
      %v340 = vshll.u32 %v249, 16
      %v342 = vrot.slane %v340, 1
      %v343 = vor.u32 %v338, %v342
      %v345 = vshll.u32 %v265, 16
      %v347 = vrot.slane %v345, 1
      %v348 = vsel %vm276, %v343, %v347
      %v350 = vshrl.u32 %v250, 16
      %v352 = vshll.u32 %v250, 16
      %v354 = vrot.slane %v352, 1
      %v355 = vor.u32 %v350, %v354
      %v357 = vshll.u32 %v266, 16
      %v359 = vrot.slane %v357, 1
      %v360 = vsel %vm276, %v355, %v359
      %v362 = vshrl.u32 %v251, 16
      %v364 = vshll.u32 %v251, 16
      %v366 = vrot.slane %v364, 1
      %v367 = vor.u32 %v362, %v366
      %v369 = vshll.u32 %v267, 16
      %v371 = vrot.slane %v369, 1
      %v372 = vsel %vm276, %v367, %v371
      %v374 = vshrl.u32 %v252, 16
      %v376 = vshll.u32 %v252, 16
      %v378 = vrot.slane %v376, 1
      %v379 = vor.u32 %v374, %v378
      %v381 = vshll.u32 %v268, 16
      %v383 = vrot.slane %v381, 1
      %v384 = vsel %vm276, %v379, %v383
      %v386 = vshrl.u32 %v253, 16
      %v388 = vshll.u32 %v253, 16
      %v390 = vrot.slane %v388, 1
      %v391 = vor.u32 %v386, %v390
      %v393 = vshll.u32 %v269, 16
      %v395 = vrot.slane %v393, 1
      %v396 = vsel %vm276, %v391, %v395
      %v398 = vshrl.u32 %v254, 16
      %v400 = vshll.u32 %v254, 16
      %v402 = vrot.slane %v400, 1
      %v403 = vor.u32 %v398, %v402
      %v405 = vshll.u32 %v270, 16
      %v407 = vrot.slane %v405, 1
      %v408 = vsel %vm276, %v403, %v407
      %v410 = vshrl.u32 %v255, 16
      %v412 = vshll.u32 %v255, 16
      %v414 = vrot.slane %v412, 1
      %v415 = vor.u32 %v410, %v414
      %v417 = vshll.u32 %v271, 16
      %v419 = vrot.slane %v417, 1
      %v420 = vsel %vm276, %v415, %v419
      %v422 = vshrl.u32 %v256, 16
      %v424 = vshll.u32 %v256, 16
      %v426 = vrot.slane %v424, 1
      %v427 = vor.u32 %v422, %v426
      %v429 = vshll.u32 %v272, 16
      %v431 = vrot.slane %v429, 1
      %v432 = vsel %vm276, %v427, %v431
      %v434 = vshrl.u32 %v257, 16
      %v436 = vshll.u32 %v257, 16
      %v438 = vrot.slane %v436, 1
      %v439 = vor.u32 %v434, %v438
      %v441 = vshll.u32 %v273, 16
      %v443 = vrot.slane %v441, 1
      %v444 = vsel %vm276, %v439, %v443
      %v446 = vshrl.u32 %v258, 16
      %v448 = vshll.u32 %v258, 16
      %v450 = vrot.slane %v448, 1
      %v451 = vor.u32 %v446, %v450
      %v453 = vshll.u32 %v274, 16
      %v455 = vrot.slane %v453, 1
      %v456 = vsel %vm276, %v451, %v455
      %v458 = vshrl.u32 %v259, 16
      %v460 = vshll.u32 %v259, 16
      %v462 = vrot.slane %v460, 1
      %v463 = vor.u32 %v458, %v462
      %v465 = vshll.u32 %v275, 16
      %v467 = vrot.slane %v465, 1
      %v468 = vsel %vm276, %v463, %v467
      %vm469 = vcmask 64512
      %v471 = vsel %vm469, %v288, 0
      %v474 = vsel %vm469, %v300, 0
      %v477 = vsel %vm469, %v312, 0
      %v480 = vsel %vm469, %v324, 0
      %v483 = vsel %vm469, %v336, 0
      %v486 = vsel %vm469, %v348, 0
      %v489 = vsel %vm469, %v360, 0
      %v492 = vsel %vm469, %v372, 0
      %v495 = vsel %vm469, %v384, 0
      %v498 = vsel %vm469, %v396, 0
      %v501 = vsel %vm469, %v408, 0
      %v504 = vsel %vm469, %v420, 0
      %v507 = vsel %vm469, %v432, 0
      %v510 = vsel %vm469, %v444, 0
      %v513 = vsel %vm469, %v456, 0
      %v516 = vsel %vm469, %v468, 0
      %vm518 = vcmask 1043456
      %v520 = vsel %vm518, %v236, 0
      %522 = vmatprep.subr.bf16.mxu0 0
      %523 = vmatpush1.bf16.msra.mxu0 %v520
      %524 = vmatprep.subr.bf16.mxu0 0
      %525 = vmatpush1.bf16.msra.mxu0 0
      %526 = vmatprep.subr.bf16.mxu0 0
      %527 = vmatpush1.bf16.msra.mxu0 0
      %528 = vmatprep.subr.bf16.mxu0 0
      %529 = vmatpush1.bf16.msra.mxu0 0
      %530 = vmatprep.subr.bf16.mxu0 0
      %531 = vmatpush1.bf16.msra.mxu0 0
      %532 = vmatprep.subr.bf16.mxu0 0
      %533 = vmatpush1.bf16.msra.mxu0 0
      %534 = vmatprep.subr.bf16.mxu0 0
      %535 = vmatpush1.bf16.msra.mxu0 0
      %536 = vmatprep.subr.bf16.mxu0 0
      %537 = vmatpush1.bf16.msra.mxu0 0
      %538 = vmatprep.subr.bf16.mxu0 0
      %539 = vmatpush1.bf16.msra.mxu0 0
      %540 = vmatprep.subr.bf16.mxu0 0
      %541 = vmatpush1.bf16.msra.mxu0 0
      %542 = vmatprep.subr.bf16.mxu0 0
      %543 = vmatpush1.bf16.msra.mxu0 0
      %544 = vmatprep.subr.bf16.mxu0 0
      %545 = vmatpush1.bf16.msra.mxu0 0
      %546 = vmatprep.subr.bf16.mxu0 0
      %547 = vmatpush1.bf16.msra.mxu0 0
      %548 = vmatprep.subr.bf16.mxu0 0
      %549 = vmatpush1.bf16.msra.mxu0 0
      %550 = vmatprep.subr.bf16.mxu0 0
      %551 = vmatpush1.bf16.msra.mxu0 0
      %552 = vmatprep.subr.bf16.mxu0 0
      %553 = vmatpush1.bf16.msra.mxu0 0
      %554 = vmatprep.mubr.bf16.mxu0 0
      %555 = vmatmul.mubr.bf16.gmra.mrb[0].mxu0 %v471
      %v556 = vpop.f32.mrb[0].mxu0
      %v557 = vadd.f32 0.0, %v556
      %v558 = vpop.f32.mrb[0].mxu0
      %v559 = vpop.f32.mrb[0].mxu0
      %v560 = vadd.f32 0.0, %v559
      %v561 = vpop.f32.mrb[0].mxu0
      %562 = vmatprep.mubr.bf16.mxu0 0
      %563 = vmatmul.mubr.bf16.gmra.mrb[0].mxu0 %v474
      %v564 = vpop.f32.mrb[0].mxu0
      %v565 = vadd.f32 0.0, %v564
      %v566 = vpop.f32.mrb[0].mxu0
      %v567 = vpop.f32.mrb[0].mxu0
      %v568 = vadd.f32 0.0, %v567
      %v569 = vpop.f32.mrb[0].mxu0
      %570 = vmatprep.mubr.bf16.mxu0 0
      %571 = vmatmul.mubr.bf16.gmra.mrb[0].mxu0 %v477
      %v572 = vpop.f32.mrb[0].mxu0
      %v573 = vadd.f32 0.0, %v572
      %v574 = vpop.f32.mrb[0].mxu0
      %v575 = vpop.f32.mrb[0].mxu0
      %v576 = vadd.f32 0.0, %v575
      %v577 = vpop.f32.mrb[0].mxu0
      %578 = vmatprep.mubr.bf16.mxu0 0
      %579 = vmatmul.mubr.bf16.gmra.mrb[0].mxu0 %v480
      %v580 = vpop.f32.mrb[0].mxu0
      %v581 = vadd.f32 0.0, %v580
      %v582 = vpop.f32.mrb[0].mxu0
      %v583 = vpop.f32.mrb[0].mxu0
      %v584 = vadd.f32 0.0, %v583
      %v585 = vpop.f32.mrb[0].mxu0
      %586 = vmatprep.mubr.bf16.mxu0 0
      %587 = vmatmul.mubr.bf16.gmra.mrb[0].mxu0 %v483
      %v588 = vpop.f32.mrb[0].mxu0
      %v589 = vadd.f32 0.0, %v588
      %v590 = vpop.f32.mrb[0].mxu0
      %v591 = vpop.f32.mrb[0].mxu0
      %v592 = vadd.f32 0.0, %v591
      %v593 = vpop.f32.mrb[0].mxu0
      %594 = vmatprep.mubr.bf16.mxu0 0
      %595 = vmatmul.mubr.bf16.gmra.mrb[0].mxu0 %v486
      %v596 = vpop.f32.mrb[0].mxu0
      %v597 = vadd.f32 0.0, %v596
      %v598 = vpop.f32.mrb[0].mxu0
      %v599 = vpop.f32.mrb[0].mxu0
      %v600 = vadd.f32 0.0, %v599
      %v601 = vpop.f32.mrb[0].mxu0
      %602 = vmatprep.mubr.bf16.mxu0 0
      %603 = vmatmul.mubr.bf16.gmra.mrb[0].mxu0 %v489
      %v604 = vpop.f32.mrb[0].mxu0
      %v605 = vadd.f32 0.0, %v604
      %v606 = vpop.f32.mrb[0].mxu0
      %v607 = vpop.f32.mrb[0].mxu0
      %v608 = vadd.f32 0.0, %v607
      %v609 = vpop.f32.mrb[0].mxu0
      %610 = vmatprep.mubr.bf16.mxu0 0
      %611 = vmatmul.mubr.bf16.gmra.mrb[0].mxu0 %v492
      %v612 = vpop.f32.mrb[0].mxu0
      %v613 = vadd.f32 0.0, %v612
      %v614 = vpop.f32.mrb[0].mxu0
      %v615 = vpop.f32.mrb[0].mxu0
      %v616 = vadd.f32 0.0, %v615
      %v617 = vpop.f32.mrb[0].mxu0
      %618 = vmatprep.mubr.bf16.mxu0 0
      %619 = vmatmul.mubr.bf16.gmra.mrb[0].mxu0 %v495
      %v620 = vpop.f32.mrb[0].mxu0
      %v621 = vadd.f32 0.0, %v620
      %v622 = vpop.f32.mrb[0].mxu0
      %v623 = vpop.f32.mrb[0].mxu0
      %v624 = vadd.f32 0.0, %v623
      %v625 = vpop.f32.mrb[0].mxu0
      %626 = vmatprep.mubr.bf16.mxu0 0
      %627 = vmatmul.mubr.bf16.gmra.mrb[0].mxu0 %v498
      %v628 = vpop.f32.mrb[0].mxu0
      %v629 = vadd.f32 0.0, %v628
      %v630 = vpop.f32.mrb[0].mxu0
      %v631 = vpop.f32.mrb[0].mxu0
      %v632 = vadd.f32 0.0, %v631
      %v633 = vpop.f32.mrb[0].mxu0
      %634 = vmatprep.mubr.bf16.mxu0 0
      %635 = vmatmul.mubr.bf16.gmra.mrb[0].mxu0 %v501
      %v636 = vpop.f32.mrb[0].mxu0
      %v637 = vadd.f32 0.0, %v636
      %v638 = vpop.f32.mrb[0].mxu0
      %v639 = vpop.f32.mrb[0].mxu0
      %v640 = vadd.f32 0.0, %v639
      %v641 = vpop.f32.mrb[0].mxu0
      %642 = vmatprep.mubr.bf16.mxu0 0
      %643 = vmatmul.mubr.bf16.gmra.mrb[0].mxu0 %v504
      %v644 = vpop.f32.mrb[0].mxu0
      %v645 = vadd.f32 0.0, %v644
      %v646 = vpop.f32.mrb[0].mxu0
      %v647 = vpop.f32.mrb[0].mxu0
      %v648 = vadd.f32 0.0, %v647
      %v649 = vpop.f32.mrb[0].mxu0
      %650 = vmatprep.mubr.bf16.mxu0 0
      %651 = vmatmul.mubr.bf16.gmra.mrb[0].mxu0 %v507
      %v652 = vpop.f32.mrb[0].mxu0
      %v653 = vadd.f32 0.0, %v652
      %v654 = vpop.f32.mrb[0].mxu0
      %v655 = vpop.f32.mrb[0].mxu0
      %v656 = vadd.f32 0.0, %v655
      %v657 = vpop.f32.mrb[0].mxu0
      %658 = vmatprep.mubr.bf16.mxu0 0
      %659 = vmatmul.mubr.bf16.gmra.mrb[0].mxu0 %v510
      %v660 = vpop.f32.mrb[0].mxu0
      %v661 = vadd.f32 0.0, %v660
      %v662 = vpop.f32.mrb[0].mxu0
      %v663 = vpop.f32.mrb[0].mxu0
      %v664 = vadd.f32 0.0, %v663
      %v665 = vpop.f32.mrb[0].mxu0
      %666 = vmatprep.mubr.bf16.mxu0 0
      %667 = vmatmul.mubr.bf16.gmra.mrb[0].mxu0 %v513
      %v668 = vpop.f32.mrb[0].mxu0
      %v669 = vadd.f32 0.0, %v668
      %v670 = vpop.f32.mrb[0].mxu0
      %v671 = vpop.f32.mrb[0].mxu0
      %v672 = vadd.f32 0.0, %v671
      %v673 = vpop.f32.mrb[0].mxu0
      %674 = vmatprep.mubr.bf16.mxu0 0
      %675 = vmatmul.mubr.bf16.gmra.mrb[0].mxu0 %v516
      %v676 = vpop.f32.mrb[0].mxu0
      %v677 = vadd.f32 0.0, %v676
      %v678 = vpop.f32.mrb[0].mxu0
      %v679 = vpop.f32.mrb[0].mxu0
      %v680 = vadd.f32 0.0, %v679
      %v681 = vpop.f32.mrb[0].mxu0
      %682 = vdwg.mxu0
      %v683 = vsel %vm469, %v244, 0
      %v685 = vsel %vm469, %v245, 0
      %v687 = vsel %vm469, %v246, 0
      %v689 = vsel %vm469, %v247, 0
      %v691 = vsel %vm469, %v248, 0
      %v693 = vsel %vm469, %v249, 0
      %v695 = vsel %vm469, %v250, 0
      %v697 = vsel %vm469, %v251, 0
      %v699 = vsel %vm469, %v252, 0
      %v701 = vsel %vm469, %v253, 0
      %v703 = vsel %vm469, %v254, 0
      %v705 = vsel %vm469, %v255, 0
      %v707 = vsel %vm469, %v256, 0
      %v709 = vsel %vm469, %v257, 0
      %v711 = vsel %vm469, %v258, 0
      %v713 = vsel %vm469, %v259, 0
      %v716 = vsel %vm518, %v235, 0
      %718 = vmatprep.subr.bf16.mxu0 0
      %719 = vmatpush1.bf16.msra.mxu0 %v716
      %720 = vmatprep.subr.bf16.mxu0 0
      %721 = vmatpush1.bf16.msra.mxu0 0
      %722 = vmatprep.subr.bf16.mxu0 0
      %723 = vmatpush1.bf16.msra.mxu0 0
      %724 = vmatprep.subr.bf16.mxu0 0
      %725 = vmatpush1.bf16.msra.mxu0 0
      %726 = vmatprep.subr.bf16.mxu0 0
      %727 = vmatpush1.bf16.msra.mxu0 0
      %728 = vmatprep.subr.bf16.mxu0 0
      %729 = vmatpush1.bf16.msra.mxu0 0
      %730 = vmatprep.subr.bf16.mxu0 0
      %731 = vmatpush1.bf16.msra.mxu0 0
      %732 = vmatprep.subr.bf16.mxu0 0
      %733 = vmatpush1.bf16.msra.mxu0 0
      %734 = vmatprep.subr.bf16.mxu0 0
      %735 = vmatpush1.bf16.msra.mxu0 0
      %736 = vmatprep.subr.bf16.mxu0 0
      %737 = vmatpush1.bf16.msra.mxu0 0
      %738 = vmatprep.subr.bf16.mxu0 0
      %739 = vmatpush1.bf16.msra.mxu0 0
      %740 = vmatprep.subr.bf16.mxu0 0
      %741 = vmatpush1.bf16.msra.mxu0 0
      %742 = vmatprep.subr.bf16.mxu0 0
      %743 = vmatpush1.bf16.msra.mxu0 0
      %744 = vmatprep.subr.bf16.mxu0 0
      %745 = vmatpush1.bf16.msra.mxu0 0
      %746 = vmatprep.subr.bf16.mxu0 0
      %747 = vmatpush1.bf16.msra.mxu0 0
      %748 = vmatprep.subr.bf16.mxu0 0
      %749 = vmatpush1.bf16.msra.mxu0 0
      %750 = vmatprep.mubr.bf16.mxu0 0
      %751 = vmatmul.mubr.bf16.gmra.mrb[0].mxu0 %v683
      %v752 = vpop.f32.mrb[0].mxu0
      %v753 = vadd.f32 %v557, %v752
      %v754 = vpop.f32.mrb[0].mxu0
      %v755 = vpop.f32.mrb[0].mxu0
      %v756 = vadd.f32 %v560, %v755
      %v757 = vpop.f32.mrb[0].mxu0
      %758 = vmatprep.mubr.bf16.mxu0 0
      %759 = vmatmul.mubr.bf16.gmra.mrb[0].mxu0 %v685
      %v760 = vpop.f32.mrb[0].mxu0
      %v761 = vadd.f32 %v565, %v760
      %v762 = vpop.f32.mrb[0].mxu0
      %v763 = vpop.f32.mrb[0].mxu0
      %v764 = vadd.f32 %v568, %v763
      %v765 = vpop.f32.mrb[0].mxu0
      %766 = vmatprep.mubr.bf16.mxu0 0
      %767 = vmatmul.mubr.bf16.gmra.mrb[0].mxu0 %v687
      %v768 = vpop.f32.mrb[0].mxu0
      %v769 = vadd.f32 %v573, %v768
      %v770 = vpop.f32.mrb[0].mxu0
      %v771 = vpop.f32.mrb[0].mxu0
      %v772 = vadd.f32 %v576, %v771
      %v773 = vpop.f32.mrb[0].mxu0
      %774 = vmatprep.mubr.bf16.mxu0 0
      %775 = vmatmul.mubr.bf16.gmra.mrb[0].mxu0 %v689
      %v776 = vpop.f32.mrb[0].mxu0
      %v777 = vadd.f32 %v581, %v776
      %v778 = vpop.f32.mrb[0].mxu0
      %v779 = vpop.f32.mrb[0].mxu0
      %v780 = vadd.f32 %v584, %v779
      %v781 = vpop.f32.mrb[0].mxu0
      %782 = vmatprep.mubr.bf16.mxu0 0
      %783 = vmatmul.mubr.bf16.gmra.mrb[0].mxu0 %v691
      %v784 = vpop.f32.mrb[0].mxu0
      %v785 = vadd.f32 %v589, %v784
      %v786 = vpop.f32.mrb[0].mxu0
      %v787 = vpop.f32.mrb[0].mxu0
      %v788 = vadd.f32 %v592, %v787
      %v789 = vpop.f32.mrb[0].mxu0
      %790 = vmatprep.mubr.bf16.mxu0 0
      %791 = vmatmul.mubr.bf16.gmra.mrb[0].mxu0 %v693
      %v792 = vpop.f32.mrb[0].mxu0
      %v793 = vadd.f32 %v597, %v792
      %v794 = vpop.f32.mrb[0].mxu0
      %v795 = vpop.f32.mrb[0].mxu0
      %v796 = vadd.f32 %v600, %v795
      %v797 = vpop.f32.mrb[0].mxu0
      %798 = vmatprep.mubr.bf16.mxu0 0
      %799 = vmatmul.mubr.bf16.gmra.mrb[0].mxu0 %v695
      %v800 = vpop.f32.mrb[0].mxu0
      %v801 = vadd.f32 %v605, %v800
      %v802 = vpop.f32.mrb[0].mxu0
      %v803 = vpop.f32.mrb[0].mxu0
      %v804 = vadd.f32 %v608, %v803
      %v805 = vpop.f32.mrb[0].mxu0
      %806 = vmatprep.mubr.bf16.mxu0 0
      %807 = vmatmul.mubr.bf16.gmra.mrb[0].mxu0 %v697
      %v808 = vpop.f32.mrb[0].mxu0
      %v809 = vadd.f32 %v613, %v808
      %v810 = vpop.f32.mrb[0].mxu0
      %v811 = vpop.f32.mrb[0].mxu0
      %v812 = vadd.f32 %v616, %v811
      %v813 = vpop.f32.mrb[0].mxu0
      %814 = vmatprep.mubr.bf16.mxu0 0
      %815 = vmatmul.mubr.bf16.gmra.mrb[0].mxu0 %v699
      %v816 = vpop.f32.mrb[0].mxu0
      %v817 = vadd.f32 %v621, %v816
      %v818 = vpop.f32.mrb[0].mxu0
      %v819 = vpop.f32.mrb[0].mxu0
      %v820 = vadd.f32 %v624, %v819
      %v821 = vpop.f32.mrb[0].mxu0
      %822 = vmatprep.mubr.bf16.mxu0 0
      %823 = vmatmul.mubr.bf16.gmra.mrb[0].mxu0 %v701
      %v824 = vpop.f32.mrb[0].mxu0
      %v825 = vadd.f32 %v629, %v824
      %v826 = vpop.f32.mrb[0].mxu0
      %v827 = vpop.f32.mrb[0].mxu0
      %v828 = vadd.f32 %v632, %v827
      %v829 = vpop.f32.mrb[0].mxu0
      %830 = vmatprep.mubr.bf16.mxu0 0
      %831 = vmatmul.mubr.bf16.gmra.mrb[0].mxu0 %v703
      %v832 = vpop.f32.mrb[0].mxu0
      %v833 = vadd.f32 %v637, %v832
      %v834 = vpop.f32.mrb[0].mxu0
      %v835 = vpop.f32.mrb[0].mxu0
      %v836 = vadd.f32 %v640, %v835
      %v837 = vpop.f32.mrb[0].mxu0
      %838 = vmatprep.mubr.bf16.mxu0 0
      %839 = vmatmul.mubr.bf16.gmra.mrb[0].mxu0 %v705
      %v840 = vpop.f32.mrb[0].mxu0
      %v841 = vadd.f32 %v645, %v840
      %v842 = vpop.f32.mrb[0].mxu0
      %v843 = vpop.f32.mrb[0].mxu0
      %v844 = vadd.f32 %v648, %v843
      %v845 = vpop.f32.mrb[0].mxu0
      %846 = vmatprep.mubr.bf16.mxu0 0
      %847 = vmatmul.mubr.bf16.gmra.mrb[0].mxu0 %v707
      %v848 = vpop.f32.mrb[0].mxu0
      %v849 = vadd.f32 %v653, %v848
      %v850 = vpop.f32.mrb[0].mxu0
      %v851 = vpop.f32.mrb[0].mxu0
      %v852 = vadd.f32 %v656, %v851
      %v853 = vpop.f32.mrb[0].mxu0
      %854 = vmatprep.mubr.bf16.mxu0 0
      %855 = vmatmul.mubr.bf16.gmra.mrb[0].mxu0 %v709
      %v856 = vpop.f32.mrb[0].mxu0
      %v857 = vadd.f32 %v661, %v856
      %v858 = vpop.f32.mrb[0].mxu0
      %v859 = vpop.f32.mrb[0].mxu0
      %v860 = vadd.f32 %v664, %v859
      %v861 = vpop.f32.mrb[0].mxu0
      %862 = vmatprep.mubr.bf16.mxu0 0
      %863 = vmatmul.mubr.bf16.gmra.mrb[0].mxu0 %v711
      %v864 = vpop.f32.mrb[0].mxu0
      %v865 = vadd.f32 %v669, %v864
      %v866 = vpop.f32.mrb[0].mxu0
      %v867 = vpop.f32.mrb[0].mxu0
      %v868 = vadd.f32 %v672, %v867
      %v869 = vpop.f32.mrb[0].mxu0
      %870 = vmatprep.mubr.bf16.mxu0 0
      %871 = vmatmul.mubr.bf16.gmra.mrb[0].mxu0 %v713
      %v872 = vpop.f32.mrb[0].mxu0
      %v873 = vadd.f32 %v677, %v872
      %v874 = vpop.f32.mrb[0].mxu0
      %v875 = vpop.f32.mrb[0].mxu0
      %v876 = vadd.f32 %v680, %v875
      %v877 = vpop.f32.mrb[0].mxu0
      %878 = vdwg.mxu0
      %vm911 = vcmask 1046528
      %v912 = vrot.slane %v244, 1
      %v913 = vrot.slane %v260, 1
      %v914 = vsel %vm911, %v912, %v913
      %v915 = vrot.slane %v245, 1
      %v916 = vrot.slane %v261, 1
      %v917 = vsel %vm911, %v915, %v916
      %v918 = vrot.slane %v246, 1
      %v919 = vrot.slane %v262, 1
      %v920 = vsel %vm911, %v918, %v919
      %v921 = vrot.slane %v247, 1
      %v922 = vrot.slane %v263, 1
      %v923 = vsel %vm911, %v921, %v922
      %v924 = vrot.slane %v248, 1
      %v925 = vrot.slane %v264, 1
      %v926 = vsel %vm911, %v924, %v925
      %v927 = vrot.slane %v249, 1
      %v928 = vrot.slane %v265, 1
      %v929 = vsel %vm911, %v927, %v928
      %v930 = vrot.slane %v250, 1
      %v931 = vrot.slane %v266, 1
      %v932 = vsel %vm911, %v930, %v931
      %v933 = vrot.slane %v251, 1
      %v934 = vrot.slane %v267, 1
      %v935 = vsel %vm911, %v933, %v934
      %v936 = vrot.slane %v252, 1
      %v937 = vrot.slane %v268, 1
      %v938 = vsel %vm911, %v936, %v937
      %v939 = vrot.slane %v253, 1
      %v940 = vrot.slane %v269, 1
      %v941 = vsel %vm911, %v939, %v940
      %v942 = vrot.slane %v254, 1
      %v943 = vrot.slane %v270, 1
      %v944 = vsel %vm911, %v942, %v943
      %v945 = vrot.slane %v255, 1
      %v946 = vrot.slane %v271, 1
      %v947 = vsel %vm911, %v945, %v946
      %v948 = vrot.slane %v256, 1
      %v949 = vrot.slane %v272, 1
      %v950 = vsel %vm911, %v948, %v949
      %v951 = vrot.slane %v257, 1
      %v952 = vrot.slane %v273, 1
      %v953 = vsel %vm911, %v951, %v952
      %v954 = vrot.slane %v258, 1
      %v955 = vrot.slane %v274, 1
      %v956 = vsel %vm911, %v954, %v955
      %v957 = vrot.slane %v259, 1
      %v958 = vrot.slane %v275, 1
      %v959 = vsel %vm911, %v957, %v958
      %v961 = vsel %vm469, %v914, 0
      %v964 = vsel %vm469, %v917, 0
      %v967 = vsel %vm469, %v920, 0
      %v970 = vsel %vm469, %v923, 0
      %v973 = vsel %vm469, %v926, 0
      %v976 = vsel %vm469, %v929, 0
      %v979 = vsel %vm469, %v932, 0
      %v982 = vsel %vm469, %v935, 0
      %v985 = vsel %vm469, %v938, 0
      %v988 = vsel %vm469, %v941, 0
      %v991 = vsel %vm469, %v944, 0
      %v994 = vsel %vm469, %v947, 0
      %v997 = vsel %vm469, %v950, 0
      %v1000 = vsel %vm469, %v953, 0
      %v1003 = vsel %vm469, %v956, 0
      %v1006 = vsel %vm469, %v959, 0
      %v1009 = vsel %vm518, %v237, 0
      %1011 = vmatprep.subr.bf16.mxu0 0
      %1012 = vmatpush1.bf16.msra.mxu0 %v1009
      %1013 = vmatprep.subr.bf16.mxu0 0
      %1014 = vmatpush1.bf16.msra.mxu0 0
      %1015 = vmatprep.subr.bf16.mxu0 0
      %1016 = vmatpush1.bf16.msra.mxu0 0
      %1017 = vmatprep.subr.bf16.mxu0 0
      %1018 = vmatpush1.bf16.msra.mxu0 0
      %1019 = vmatprep.subr.bf16.mxu0 0
      %1020 = vmatpush1.bf16.msra.mxu0 0
      %1021 = vmatprep.subr.bf16.mxu0 0
      %1022 = vmatpush1.bf16.msra.mxu0 0
      %1023 = vmatprep.subr.bf16.mxu0 0
      %1024 = vmatpush1.bf16.msra.mxu0 0
      %1025 = vmatprep.subr.bf16.mxu0 0
      %1026 = vmatpush1.bf16.msra.mxu0 0
      %1027 = vmatprep.subr.bf16.mxu0 0
      %1028 = vmatpush1.bf16.msra.mxu0 0
      %1029 = vmatprep.subr.bf16.mxu0 0
      %1030 = vmatpush1.bf16.msra.mxu0 0
      %1031 = vmatprep.subr.bf16.mxu0 0
      %1032 = vmatpush1.bf16.msra.mxu0 0
      %1033 = vmatprep.subr.bf16.mxu0 0
      %1034 = vmatpush1.bf16.msra.mxu0 0
      %1035 = vmatprep.subr.bf16.mxu0 0
      %1036 = vmatpush1.bf16.msra.mxu0 0
      %1037 = vmatprep.subr.bf16.mxu0 0
      %1038 = vmatpush1.bf16.msra.mxu0 0
      %1039 = vmatprep.subr.bf16.mxu0 0
      %1040 = vmatpush1.bf16.msra.mxu0 0
      %1041 = vmatprep.subr.bf16.mxu0 0
      %1042 = vmatpush1.bf16.msra.mxu0 0
      %1043 = vmatprep.mubr.bf16.mxu0 0
      %1044 = vmatmul.mubr.bf16.gmra.mrb[0].mxu0 %v961
      %v1045 = vpop.f32.mrb[0].mxu0
      %v1046 = vadd.f32 0.0, %v1045
      %v1047 = vpop.f32.mrb[0].mxu0
      %v1048 = vpop.f32.mrb[0].mxu0
      %v1049 = vadd.f32 0.0, %v1048
      %v1050 = vpop.f32.mrb[0].mxu0
      %1051 = vmatprep.mubr.bf16.mxu0 0
      %1052 = vmatmul.mubr.bf16.gmra.mrb[0].mxu0 %v964
      %v1053 = vpop.f32.mrb[0].mxu0
      %v1054 = vadd.f32 0.0, %v1053
      %v1055 = vpop.f32.mrb[0].mxu0
      %v1056 = vpop.f32.mrb[0].mxu0
      %v1057 = vadd.f32 0.0, %v1056
      %v1058 = vpop.f32.mrb[0].mxu0
      %1059 = vmatprep.mubr.bf16.mxu0 0
      %1060 = vmatmul.mubr.bf16.gmra.mrb[0].mxu0 %v967
      %v1061 = vpop.f32.mrb[0].mxu0
      %v1062 = vadd.f32 0.0, %v1061
      %v1063 = vpop.f32.mrb[0].mxu0
      %v1064 = vpop.f32.mrb[0].mxu0
      %v1065 = vadd.f32 0.0, %v1064
      %v1066 = vpop.f32.mrb[0].mxu0
      %1067 = vmatprep.mubr.bf16.mxu0 0
      %1068 = vmatmul.mubr.bf16.gmra.mrb[0].mxu0 %v970
      %v1069 = vpop.f32.mrb[0].mxu0
      %v1070 = vadd.f32 0.0, %v1069
      %v1071 = vpop.f32.mrb[0].mxu0
      %v1072 = vpop.f32.mrb[0].mxu0
      %v1073 = vadd.f32 0.0, %v1072
      %v1074 = vpop.f32.mrb[0].mxu0
      %1075 = vmatprep.mubr.bf16.mxu0 0
      %1076 = vmatmul.mubr.bf16.gmra.mrb[0].mxu0 %v973
      %v1077 = vpop.f32.mrb[0].mxu0
      %v1078 = vadd.f32 0.0, %v1077
      %v1079 = vpop.f32.mrb[0].mxu0
      %v1080 = vpop.f32.mrb[0].mxu0
      %v1081 = vadd.f32 0.0, %v1080
      %v1082 = vpop.f32.mrb[0].mxu0
      %1083 = vmatprep.mubr.bf16.mxu0 0
      %1084 = vmatmul.mubr.bf16.gmra.mrb[0].mxu0 %v976
      %v1085 = vpop.f32.mrb[0].mxu0
      %v1086 = vadd.f32 0.0, %v1085
      %v1087 = vpop.f32.mrb[0].mxu0
      %v1088 = vpop.f32.mrb[0].mxu0
      %v1089 = vadd.f32 0.0, %v1088
      %v1090 = vpop.f32.mrb[0].mxu0
      %1091 = vmatprep.mubr.bf16.mxu0 0
      %1092 = vmatmul.mubr.bf16.gmra.mrb[0].mxu0 %v979
      %v1093 = vpop.f32.mrb[0].mxu0
      %v1094 = vadd.f32 0.0, %v1093
      %v1095 = vpop.f32.mrb[0].mxu0
      %v1096 = vpop.f32.mrb[0].mxu0
      %v1097 = vadd.f32 0.0, %v1096
      %v1098 = vpop.f32.mrb[0].mxu0
      %1099 = vmatprep.mubr.bf16.mxu0 0
      %1100 = vmatmul.mubr.bf16.gmra.mrb[0].mxu0 %v982
      %v1101 = vpop.f32.mrb[0].mxu0
      %v1102 = vadd.f32 0.0, %v1101
      %v1103 = vpop.f32.mrb[0].mxu0
      %v1104 = vpop.f32.mrb[0].mxu0
      %v1105 = vadd.f32 0.0, %v1104
      %v1106 = vpop.f32.mrb[0].mxu0
      %1107 = vmatprep.mubr.bf16.mxu0 0
      %1108 = vmatmul.mubr.bf16.gmra.mrb[0].mxu0 %v985
      %v1109 = vpop.f32.mrb[0].mxu0
      %v1110 = vadd.f32 0.0, %v1109
      %v1111 = vpop.f32.mrb[0].mxu0
      %v1112 = vpop.f32.mrb[0].mxu0
      %v1113 = vadd.f32 0.0, %v1112
      %v1114 = vpop.f32.mrb[0].mxu0
      %1115 = vmatprep.mubr.bf16.mxu0 0
      %1116 = vmatmul.mubr.bf16.gmra.mrb[0].mxu0 %v988
      %v1117 = vpop.f32.mrb[0].mxu0
      %v1118 = vadd.f32 0.0, %v1117
      %v1119 = vpop.f32.mrb[0].mxu0
      %v1120 = vpop.f32.mrb[0].mxu0
      %v1121 = vadd.f32 0.0, %v1120
      %v1122 = vpop.f32.mrb[0].mxu0
      %1123 = vmatprep.mubr.bf16.mxu0 0
      %1124 = vmatmul.mubr.bf16.gmra.mrb[0].mxu0 %v991
      %v1125 = vpop.f32.mrb[0].mxu0
      %v1126 = vadd.f32 0.0, %v1125
      %v1127 = vpop.f32.mrb[0].mxu0
      %v1128 = vpop.f32.mrb[0].mxu0
      %v1129 = vadd.f32 0.0, %v1128
      %v1130 = vpop.f32.mrb[0].mxu0
      %1131 = vmatprep.mubr.bf16.mxu0 0
      %1132 = vmatmul.mubr.bf16.gmra.mrb[0].mxu0 %v994
      %v1133 = vpop.f32.mrb[0].mxu0
      %v1134 = vadd.f32 0.0, %v1133
      %v1135 = vpop.f32.mrb[0].mxu0
      %v1136 = vpop.f32.mrb[0].mxu0
      %v1137 = vadd.f32 0.0, %v1136
      %v1138 = vpop.f32.mrb[0].mxu0
      %1139 = vmatprep.mubr.bf16.mxu0 0
      %1140 = vmatmul.mubr.bf16.gmra.mrb[0].mxu0 %v997
      %v1141 = vpop.f32.mrb[0].mxu0
      %v1142 = vadd.f32 0.0, %v1141
      %v1143 = vpop.f32.mrb[0].mxu0
      %v1144 = vpop.f32.mrb[0].mxu0
      %v1145 = vadd.f32 0.0, %v1144
      %v1146 = vpop.f32.mrb[0].mxu0
      %1147 = vmatprep.mubr.bf16.mxu0 0
      %1148 = vmatmul.mubr.bf16.gmra.mrb[0].mxu0 %v1000
      %v1149 = vpop.f32.mrb[0].mxu0
      %v1150 = vadd.f32 0.0, %v1149
      %v1151 = vpop.f32.mrb[0].mxu0
      %v1152 = vpop.f32.mrb[0].mxu0
      %v1153 = vadd.f32 0.0, %v1152
      %v1154 = vpop.f32.mrb[0].mxu0
      %1155 = vmatprep.mubr.bf16.mxu0 0
      %1156 = vmatmul.mubr.bf16.gmra.mrb[0].mxu0 %v1003
      %v1157 = vpop.f32.mrb[0].mxu0
      %v1158 = vadd.f32 0.0, %v1157
      %v1159 = vpop.f32.mrb[0].mxu0
      %v1160 = vpop.f32.mrb[0].mxu0
      %v1161 = vadd.f32 0.0, %v1160
      %v1162 = vpop.f32.mrb[0].mxu0
      %1163 = vmatprep.mubr.bf16.mxu0 0
      %1164 = vmatmul.mubr.bf16.gmra.mrb[0].mxu0 %v1006
      %v1165 = vpop.f32.mrb[0].mxu0
      %v1166 = vadd.f32 0.0, %v1165
      %v1167 = vpop.f32.mrb[0].mxu0
      %v1168 = vpop.f32.mrb[0].mxu0
      %v1169 = vadd.f32 0.0, %v1168
      %v1170 = vpop.f32.mrb[0].mxu0
      %1171 = vdwg.mxu0
      %v1172 = vadd.f32 %v753, %v1046
      %v1173 = vadd.f32 %v756, %v1049
      %v1174 = vadd.f32 %v761, %v1054
      %v1175 = vadd.f32 %v764, %v1057
      %v1176 = vadd.f32 %v769, %v1062
      %v1177 = vadd.f32 %v772, %v1065
      %v1178 = vadd.f32 %v777, %v1070
      %v1179 = vadd.f32 %v780, %v1073
      %v1180 = vadd.f32 %v785, %v1078
      %v1181 = vadd.f32 %v788, %v1081
      %v1182 = vadd.f32 %v793, %v1086
      %v1183 = vadd.f32 %v796, %v1089
      %v1184 = vadd.f32 %v801, %v1094
      %v1185 = vadd.f32 %v804, %v1097
      %v1186 = vadd.f32 %v809, %v1102
      %v1187 = vadd.f32 %v812, %v1105
      %v1188 = vadd.f32 %v817, %v1110
      %v1189 = vadd.f32 %v820, %v1113
      %v1190 = vadd.f32 %v825, %v1118
      %v1191 = vadd.f32 %v828, %v1121
      %v1192 = vadd.f32 %v833, %v1126
      %v1193 = vadd.f32 %v836, %v1129
      %v1194 = vadd.f32 %v841, %v1134
      %v1195 = vadd.f32 %v844, %v1137
      %v1196 = vadd.f32 %v849, %v1142
      %v1197 = vadd.f32 %v852, %v1145
      %v1198 = vadd.f32 %v857, %v1150
      %v1199 = vadd.f32 %v860, %v1153
      %v1200 = vadd.f32 %v865, %v1158
      %v1201 = vadd.f32 %v868, %v1161
      %v1202 = vadd.f32 %v873, %v1166
      %v1203 = vadd.f32 %v876, %v1169
      %v1204 = vpack.c.bf16 %v221, %v220
      %v1206 = vsel %vm469, %v1204, 0
      %v1209 = vsel %vm518, %v238, 0
      %1211 = vmatprep.subr.bf16.mxu0 0
      %1212 = vmatpush1.bf16.msra.mxu0 %v1209
      %1213 = vmatprep.subr.bf16.mxu0 0
      %1214 = vmatpush1.bf16.msra.mxu0 0
      %1215 = vmatprep.subr.bf16.mxu0 0
      %1216 = vmatpush1.bf16.msra.mxu0 0
      %1217 = vmatprep.subr.bf16.mxu0 0
      %1218 = vmatpush1.bf16.msra.mxu0 0
      %1219 = vmatprep.subr.bf16.mxu0 0
      %1220 = vmatpush1.bf16.msra.mxu0 0
      %1221 = vmatprep.subr.bf16.mxu0 0
      %1222 = vmatpush1.bf16.msra.mxu0 0
      %1223 = vmatprep.subr.bf16.mxu0 0
      %1224 = vmatpush1.bf16.msra.mxu0 0
      %1225 = vmatprep.subr.bf16.mxu0 0
      %1226 = vmatpush1.bf16.msra.mxu0 0
      %1227 = vmatprep.subr.bf16.mxu0 0
      %1228 = vmatpush1.bf16.msra.mxu0 0
      %1229 = vmatprep.subr.bf16.mxu0 0
      %1230 = vmatpush1.bf16.msra.mxu0 0
      %1231 = vmatprep.subr.bf16.mxu0 0
      %1232 = vmatpush1.bf16.msra.mxu0 0
      %1233 = vmatprep.subr.bf16.mxu0 0
      %1234 = vmatpush1.bf16.msra.mxu0 0
      %1235 = vmatprep.subr.bf16.mxu0 0
      %1236 = vmatpush1.bf16.msra.mxu0 0
      %1237 = vmatprep.subr.bf16.mxu0 0
      %1238 = vmatpush1.bf16.msra.mxu0 0
      %1239 = vmatprep.subr.bf16.mxu0 0
      %1240 = vmatpush1.bf16.msra.mxu0 0
      %1241 = vmatprep.subr.bf16.mxu0 0
      %1242 = vmatpush1.bf16.msra.mxu0 0
      %1243 = vmatprep.mubr.bf16.mxu0 0
      %1244 = vmatmul.mubr.bf16.gmra.mrb[0].mxu0 %v685
      %v1245 = vpop.f32.mrb[0].mxu0
      %v1246 = vadd.f32 0.0, %v1245
      %v1247 = vpop.f32.mrb[0].mxu0
      %v1248 = vpop.f32.mrb[0].mxu0
      %v1249 = vadd.f32 0.0, %v1248
      %v1250 = vpop.f32.mrb[0].mxu0
      %1251 = vmatprep.mubr.bf16.mxu0 0
      %1252 = vmatmul.mubr.bf16.gmra.mrb[0].mxu0 %v687
      %v1253 = vpop.f32.mrb[0].mxu0
      %v1254 = vadd.f32 0.0, %v1253
      %v1255 = vpop.f32.mrb[0].mxu0
      %v1256 = vpop.f32.mrb[0].mxu0
      %v1257 = vadd.f32 0.0, %v1256
      %v1258 = vpop.f32.mrb[0].mxu0
      %1259 = vmatprep.mubr.bf16.mxu0 0
      %1260 = vmatmul.mubr.bf16.gmra.mrb[0].mxu0 %v689
      %v1261 = vpop.f32.mrb[0].mxu0
      %v1262 = vadd.f32 0.0, %v1261
      %v1263 = vpop.f32.mrb[0].mxu0
      %v1264 = vpop.f32.mrb[0].mxu0
      %v1265 = vadd.f32 0.0, %v1264
      %v1266 = vpop.f32.mrb[0].mxu0
      %1267 = vmatprep.mubr.bf16.mxu0 0
      %1268 = vmatmul.mubr.bf16.gmra.mrb[0].mxu0 %v691
      %v1269 = vpop.f32.mrb[0].mxu0
      %v1270 = vadd.f32 0.0, %v1269
      %v1271 = vpop.f32.mrb[0].mxu0
      %v1272 = vpop.f32.mrb[0].mxu0
      %v1273 = vadd.f32 0.0, %v1272
      %v1274 = vpop.f32.mrb[0].mxu0
      %1275 = vmatprep.mubr.bf16.mxu0 0
      %1276 = vmatmul.mubr.bf16.gmra.mrb[0].mxu0 %v693
      %v1277 = vpop.f32.mrb[0].mxu0
      %v1278 = vadd.f32 0.0, %v1277
      %v1279 = vpop.f32.mrb[0].mxu0
      %v1280 = vpop.f32.mrb[0].mxu0
      %v1281 = vadd.f32 0.0, %v1280
      %v1282 = vpop.f32.mrb[0].mxu0
      %1283 = vmatprep.mubr.bf16.mxu0 0
      %1284 = vmatmul.mubr.bf16.gmra.mrb[0].mxu0 %v695
      %v1285 = vpop.f32.mrb[0].mxu0
      %v1286 = vadd.f32 0.0, %v1285
      %v1287 = vpop.f32.mrb[0].mxu0
      %v1288 = vpop.f32.mrb[0].mxu0
      %v1289 = vadd.f32 0.0, %v1288
      %v1290 = vpop.f32.mrb[0].mxu0
      %1291 = vmatprep.mubr.bf16.mxu0 0
      %1292 = vmatmul.mubr.bf16.gmra.mrb[0].mxu0 %v697
      %v1293 = vpop.f32.mrb[0].mxu0
      %v1294 = vadd.f32 0.0, %v1293
      %v1295 = vpop.f32.mrb[0].mxu0
      %v1296 = vpop.f32.mrb[0].mxu0
      %v1297 = vadd.f32 0.0, %v1296
      %v1298 = vpop.f32.mrb[0].mxu0
      %1299 = vmatprep.mubr.bf16.mxu0 0
      %1300 = vmatmul.mubr.bf16.gmra.mrb[0].mxu0 %v699
      %v1301 = vpop.f32.mrb[0].mxu0
      %v1302 = vadd.f32 0.0, %v1301
      %v1303 = vpop.f32.mrb[0].mxu0
      %v1304 = vpop.f32.mrb[0].mxu0
      %v1305 = vadd.f32 0.0, %v1304
      %v1306 = vpop.f32.mrb[0].mxu0
      %1307 = vmatprep.mubr.bf16.mxu0 0
      %1308 = vmatmul.mubr.bf16.gmra.mrb[0].mxu0 %v701
      %v1309 = vpop.f32.mrb[0].mxu0
      %v1310 = vadd.f32 0.0, %v1309
      %v1311 = vpop.f32.mrb[0].mxu0
      %v1312 = vpop.f32.mrb[0].mxu0
      %v1313 = vadd.f32 0.0, %v1312
      %v1314 = vpop.f32.mrb[0].mxu0
      %1315 = vmatprep.mubr.bf16.mxu0 0
      %1316 = vmatmul.mubr.bf16.gmra.mrb[0].mxu0 %v703
      %v1317 = vpop.f32.mrb[0].mxu0
      %v1318 = vadd.f32 0.0, %v1317
      %v1319 = vpop.f32.mrb[0].mxu0
      %v1320 = vpop.f32.mrb[0].mxu0
      %v1321 = vadd.f32 0.0, %v1320
      %v1322 = vpop.f32.mrb[0].mxu0
      %1323 = vmatprep.mubr.bf16.mxu0 0
      %1324 = vmatmul.mubr.bf16.gmra.mrb[0].mxu0 %v705
      %v1325 = vpop.f32.mrb[0].mxu0
      %v1326 = vadd.f32 0.0, %v1325
      %v1327 = vpop.f32.mrb[0].mxu0
      %v1328 = vpop.f32.mrb[0].mxu0
      %v1329 = vadd.f32 0.0, %v1328
      %v1330 = vpop.f32.mrb[0].mxu0
      %1331 = vmatprep.mubr.bf16.mxu0 0
      %1332 = vmatmul.mubr.bf16.gmra.mrb[0].mxu0 %v707
      %v1333 = vpop.f32.mrb[0].mxu0
      %v1334 = vadd.f32 0.0, %v1333
      %v1335 = vpop.f32.mrb[0].mxu0
      %v1336 = vpop.f32.mrb[0].mxu0
      %v1337 = vadd.f32 0.0, %v1336
      %v1338 = vpop.f32.mrb[0].mxu0
      %1339 = vmatprep.mubr.bf16.mxu0 0
      %1340 = vmatmul.mubr.bf16.gmra.mrb[0].mxu0 %v709
      %v1341 = vpop.f32.mrb[0].mxu0
      %v1342 = vadd.f32 0.0, %v1341
      %v1343 = vpop.f32.mrb[0].mxu0
      %v1344 = vpop.f32.mrb[0].mxu0
      %v1345 = vadd.f32 0.0, %v1344
      %v1346 = vpop.f32.mrb[0].mxu0
      %1347 = vmatprep.mubr.bf16.mxu0 0
      %1348 = vmatmul.mubr.bf16.gmra.mrb[0].mxu0 %v711
      %v1349 = vpop.f32.mrb[0].mxu0
      %v1350 = vadd.f32 0.0, %v1349
      %v1351 = vpop.f32.mrb[0].mxu0
      %v1352 = vpop.f32.mrb[0].mxu0
      %v1353 = vadd.f32 0.0, %v1352
      %v1354 = vpop.f32.mrb[0].mxu0
      %1355 = vmatprep.mubr.bf16.mxu0 0
      %1356 = vmatmul.mubr.bf16.gmra.mrb[0].mxu0 %v713
      %v1357 = vpop.f32.mrb[0].mxu0
      %v1358 = vadd.f32 0.0, %v1357
      %v1359 = vpop.f32.mrb[0].mxu0
      %v1360 = vpop.f32.mrb[0].mxu0
      %v1361 = vadd.f32 0.0, %v1360
      %v1362 = vpop.f32.mrb[0].mxu0
      %1363 = vmatprep.mubr.bf16.mxu0 0
      %1364 = vmatmul.mubr.bf16.gmra.mrb[0].mxu0 %v1206
      %v1365 = vpop.f32.mrb[0].mxu0
      %v1366 = vadd.f32 0.0, %v1365
      %v1367 = vpop.f32.mrb[0].mxu0
      %v1368 = vpop.f32.mrb[0].mxu0
      %v1369 = vadd.f32 0.0, %v1368
      %v1370 = vpop.f32.mrb[0].mxu0
      %1371 = vdwg.mxu0
      %v1372 = vadd.f32 %v1172, %v1246
      %v1373 = vadd.f32 %v1173, %v1249
      %v1374 = vadd.f32 %v1174, %v1254
      %v1375 = vadd.f32 %v1175, %v1257
      %v1376 = vadd.f32 %v1176, %v1262
      %v1377 = vadd.f32 %v1177, %v1265
      %v1378 = vadd.f32 %v1178, %v1270
      %v1379 = vadd.f32 %v1179, %v1273
      %v1380 = vadd.f32 %v1180, %v1278
      %v1381 = vadd.f32 %v1181, %v1281
      %v1382 = vadd.f32 %v1182, %v1286
      %v1383 = vadd.f32 %v1183, %v1289
      %v1384 = vadd.f32 %v1184, %v1294
      %v1385 = vadd.f32 %v1185, %v1297
      %v1386 = vadd.f32 %v1186, %v1302
      %v1387 = vadd.f32 %v1187, %v1305
      %v1388 = vadd.f32 %v1188, %v1310
      %v1389 = vadd.f32 %v1189, %v1313
      %v1390 = vadd.f32 %v1190, %v1318
      %v1391 = vadd.f32 %v1191, %v1321
      %v1392 = vadd.f32 %v1192, %v1326
      %v1393 = vadd.f32 %v1193, %v1329
      %v1394 = vadd.f32 %v1194, %v1334
      %v1395 = vadd.f32 %v1195, %v1337
      %v1396 = vadd.f32 %v1196, %v1342
      %v1397 = vadd.f32 %v1197, %v1345
      %v1398 = vadd.f32 %v1198, %v1350
      %v1399 = vadd.f32 %v1199, %v1353
      %v1400 = vadd.f32 %v1200, %v1358
      %v1401 = vadd.f32 %v1201, %v1361
      %v1402 = vadd.f32 %v1202, %v1366
      %v1403 = vadd.f32 %v1203, %v1369
      %v1404 = vpack.c.bf16 %v222, %v222
      %v1405 = vshrl.u32 %v1204, 16
      %v1407 = vshll.u32 %v1204, 16
      %v1409 = vrot.slane %v1407, 1
      %v1410 = vor.u32 %v1405, %v1409
      %v1412 = vshll.u32 %v1404, 16
      %v1414 = vrot.slane %v1412, 1
      %v1415 = vsel %vm276, %v1410, %v1414
      %v1417 = vsel %vm469, %v1415, 0
      %v1420 = vsel %vm518, %v239, 0
      %1422 = vmatprep.subr.bf16.mxu0 0
      %1423 = vmatpush1.bf16.msra.mxu0 %v1420
      %1424 = vmatprep.subr.bf16.mxu0 0
      %1425 = vmatpush1.bf16.msra.mxu0 0
      %1426 = vmatprep.subr.bf16.mxu0 0
      %1427 = vmatpush1.bf16.msra.mxu0 0
      %1428 = vmatprep.subr.bf16.mxu0 0
      %1429 = vmatpush1.bf16.msra.mxu0 0
      %1430 = vmatprep.subr.bf16.mxu0 0
      %1431 = vmatpush1.bf16.msra.mxu0 0
      %1432 = vmatprep.subr.bf16.mxu0 0
      %1433 = vmatpush1.bf16.msra.mxu0 0
      %1434 = vmatprep.subr.bf16.mxu0 0
      %1435 = vmatpush1.bf16.msra.mxu0 0
      %1436 = vmatprep.subr.bf16.mxu0 0
      %1437 = vmatpush1.bf16.msra.mxu0 0
      %1438 = vmatprep.subr.bf16.mxu0 0
      %1439 = vmatpush1.bf16.msra.mxu0 0
      %1440 = vmatprep.subr.bf16.mxu0 0
      %1441 = vmatpush1.bf16.msra.mxu0 0
      %1442 = vmatprep.subr.bf16.mxu0 0
      %1443 = vmatpush1.bf16.msra.mxu0 0
      %1444 = vmatprep.subr.bf16.mxu0 0
      %1445 = vmatpush1.bf16.msra.mxu0 0
      %1446 = vmatprep.subr.bf16.mxu0 0
      %1447 = vmatpush1.bf16.msra.mxu0 0
      %1448 = vmatprep.subr.bf16.mxu0 0
      %1449 = vmatpush1.bf16.msra.mxu0 0
      %1450 = vmatprep.subr.bf16.mxu0 0
      %1451 = vmatpush1.bf16.msra.mxu0 0
      %1452 = vmatprep.subr.bf16.mxu0 0
      %1453 = vmatpush1.bf16.msra.mxu0 0
      %1454 = vmatprep.mubr.bf16.mxu0 0
      %1455 = vmatmul.mubr.bf16.gmra.mrb[0].mxu0 %v474
      %v1456 = vpop.f32.mrb[0].mxu0
      %v1457 = vadd.f32 0.0, %v1456
      %v1458 = vpop.f32.mrb[0].mxu0
      %v1459 = vpop.f32.mrb[0].mxu0
      %v1460 = vadd.f32 0.0, %v1459
      %v1461 = vpop.f32.mrb[0].mxu0
      %1462 = vmatprep.mubr.bf16.mxu0 0
      %1463 = vmatmul.mubr.bf16.gmra.mrb[0].mxu0 %v477
      %v1464 = vpop.f32.mrb[0].mxu0
      %v1465 = vadd.f32 0.0, %v1464
      %v1466 = vpop.f32.mrb[0].mxu0
      %v1467 = vpop.f32.mrb[0].mxu0
      %v1468 = vadd.f32 0.0, %v1467
      %v1469 = vpop.f32.mrb[0].mxu0
      %1470 = vmatprep.mubr.bf16.mxu0 0
      %1471 = vmatmul.mubr.bf16.gmra.mrb[0].mxu0 %v480
      %v1472 = vpop.f32.mrb[0].mxu0
      %v1473 = vadd.f32 0.0, %v1472
      %v1474 = vpop.f32.mrb[0].mxu0
      %v1475 = vpop.f32.mrb[0].mxu0
      %v1476 = vadd.f32 0.0, %v1475
      %v1477 = vpop.f32.mrb[0].mxu0
      %1478 = vmatprep.mubr.bf16.mxu0 0
      %1479 = vmatmul.mubr.bf16.gmra.mrb[0].mxu0 %v483
      %v1480 = vpop.f32.mrb[0].mxu0
      %v1481 = vadd.f32 0.0, %v1480
      %v1482 = vpop.f32.mrb[0].mxu0
      %v1483 = vpop.f32.mrb[0].mxu0
      %v1484 = vadd.f32 0.0, %v1483
      %v1485 = vpop.f32.mrb[0].mxu0
      %1486 = vmatprep.mubr.bf16.mxu0 0
      %1487 = vmatmul.mubr.bf16.gmra.mrb[0].mxu0 %v486
      %v1488 = vpop.f32.mrb[0].mxu0
      %v1489 = vadd.f32 0.0, %v1488
      %v1490 = vpop.f32.mrb[0].mxu0
      %v1491 = vpop.f32.mrb[0].mxu0
      %v1492 = vadd.f32 0.0, %v1491
      %v1493 = vpop.f32.mrb[0].mxu0
      %1494 = vmatprep.mubr.bf16.mxu0 0
      %1495 = vmatmul.mubr.bf16.gmra.mrb[0].mxu0 %v489
      %v1496 = vpop.f32.mrb[0].mxu0
      %v1497 = vadd.f32 0.0, %v1496
      %v1498 = vpop.f32.mrb[0].mxu0
      %v1499 = vpop.f32.mrb[0].mxu0
      %v1500 = vadd.f32 0.0, %v1499
      %v1501 = vpop.f32.mrb[0].mxu0
      %1502 = vmatprep.mubr.bf16.mxu0 0
      %1503 = vmatmul.mubr.bf16.gmra.mrb[0].mxu0 %v492
      %v1504 = vpop.f32.mrb[0].mxu0
      %v1505 = vadd.f32 0.0, %v1504
      %v1506 = vpop.f32.mrb[0].mxu0
      %v1507 = vpop.f32.mrb[0].mxu0
      %v1508 = vadd.f32 0.0, %v1507
      %v1509 = vpop.f32.mrb[0].mxu0
      %1510 = vmatprep.mubr.bf16.mxu0 0
      %1511 = vmatmul.mubr.bf16.gmra.mrb[0].mxu0 %v495
      %v1512 = vpop.f32.mrb[0].mxu0
      %v1513 = vadd.f32 0.0, %v1512
      %v1514 = vpop.f32.mrb[0].mxu0
      %v1515 = vpop.f32.mrb[0].mxu0
      %v1516 = vadd.f32 0.0, %v1515
      %v1517 = vpop.f32.mrb[0].mxu0
      %1518 = vmatprep.mubr.bf16.mxu0 0
      %1519 = vmatmul.mubr.bf16.gmra.mrb[0].mxu0 %v498
      %v1520 = vpop.f32.mrb[0].mxu0
      %v1521 = vadd.f32 0.0, %v1520
      %v1522 = vpop.f32.mrb[0].mxu0
      %v1523 = vpop.f32.mrb[0].mxu0
      %v1524 = vadd.f32 0.0, %v1523
      %v1525 = vpop.f32.mrb[0].mxu0
      %1526 = vmatprep.mubr.bf16.mxu0 0
      %1527 = vmatmul.mubr.bf16.gmra.mrb[0].mxu0 %v501
      %v1528 = vpop.f32.mrb[0].mxu0
      %v1529 = vadd.f32 0.0, %v1528
      %v1530 = vpop.f32.mrb[0].mxu0
      %v1531 = vpop.f32.mrb[0].mxu0
      %v1532 = vadd.f32 0.0, %v1531
      %v1533 = vpop.f32.mrb[0].mxu0
      %1534 = vmatprep.mubr.bf16.mxu0 0
      %1535 = vmatmul.mubr.bf16.gmra.mrb[0].mxu0 %v504
      %v1536 = vpop.f32.mrb[0].mxu0
      %v1537 = vadd.f32 0.0, %v1536
      %v1538 = vpop.f32.mrb[0].mxu0
      %v1539 = vpop.f32.mrb[0].mxu0
      %v1540 = vadd.f32 0.0, %v1539
      %v1541 = vpop.f32.mrb[0].mxu0
      %1542 = vmatprep.mubr.bf16.mxu0 0
      %1543 = vmatmul.mubr.bf16.gmra.mrb[0].mxu0 %v507
      %v1544 = vpop.f32.mrb[0].mxu0
      %v1545 = vadd.f32 0.0, %v1544
      %v1546 = vpop.f32.mrb[0].mxu0
      %v1547 = vpop.f32.mrb[0].mxu0
      %v1548 = vadd.f32 0.0, %v1547
      %v1549 = vpop.f32.mrb[0].mxu0
      %1550 = vmatprep.mubr.bf16.mxu0 0
      %1551 = vmatmul.mubr.bf16.gmra.mrb[0].mxu0 %v510
      %v1552 = vpop.f32.mrb[0].mxu0
      %v1553 = vadd.f32 0.0, %v1552
      %v1554 = vpop.f32.mrb[0].mxu0
      %v1555 = vpop.f32.mrb[0].mxu0
      %v1556 = vadd.f32 0.0, %v1555
      %v1557 = vpop.f32.mrb[0].mxu0
      %1558 = vmatprep.mubr.bf16.mxu0 0
      %1559 = vmatmul.mubr.bf16.gmra.mrb[0].mxu0 %v513
      %v1560 = vpop.f32.mrb[0].mxu0
      %v1561 = vadd.f32 0.0, %v1560
      %v1562 = vpop.f32.mrb[0].mxu0
      %v1563 = vpop.f32.mrb[0].mxu0
      %v1564 = vadd.f32 0.0, %v1563
      %v1565 = vpop.f32.mrb[0].mxu0
      %1566 = vmatprep.mubr.bf16.mxu0 0
      %1567 = vmatmul.mubr.bf16.gmra.mrb[0].mxu0 %v516
      %v1568 = vpop.f32.mrb[0].mxu0
      %v1569 = vadd.f32 0.0, %v1568
      %v1570 = vpop.f32.mrb[0].mxu0
      %v1571 = vpop.f32.mrb[0].mxu0
      %v1572 = vadd.f32 0.0, %v1571
      %v1573 = vpop.f32.mrb[0].mxu0
      %1574 = vmatprep.mubr.bf16.mxu0 0
      %1575 = vmatmul.mubr.bf16.gmra.mrb[0].mxu0 %v1417
      %v1576 = vpop.f32.mrb[0].mxu0
      %v1577 = vadd.f32 0.0, %v1576
      %v1578 = vpop.f32.mrb[0].mxu0
      %v1579 = vpop.f32.mrb[0].mxu0
      %v1580 = vadd.f32 0.0, %v1579
      %v1581 = vpop.f32.mrb[0].mxu0
      %1582 = vdwg.mxu0
      %v1583 = vadd.f32 %v1372, %v1457
      %v1584 = vadd.f32 %v1373, %v1460
      %v1585 = vadd.f32 %v1374, %v1465
      %v1586 = vadd.f32 %v1375, %v1468
      %v1587 = vadd.f32 %v1376, %v1473
      %v1588 = vadd.f32 %v1377, %v1476
      %v1589 = vadd.f32 %v1378, %v1481
      %v1590 = vadd.f32 %v1379, %v1484
      %v1591 = vadd.f32 %v1380, %v1489
      %v1592 = vadd.f32 %v1381, %v1492
      %v1593 = vadd.f32 %v1382, %v1497
      %v1594 = vadd.f32 %v1383, %v1500
      %v1595 = vadd.f32 %v1384, %v1505
      %v1596 = vadd.f32 %v1385, %v1508
      %v1597 = vadd.f32 %v1386, %v1513
      %v1598 = vadd.f32 %v1387, %v1516
      %v1599 = vadd.f32 %v1388, %v1521
      %v1600 = vadd.f32 %v1389, %v1524
      %v1601 = vadd.f32 %v1390, %v1529
      %v1602 = vadd.f32 %v1391, %v1532
      %v1603 = vadd.f32 %v1392, %v1537
      %v1604 = vadd.f32 %v1393, %v1540
      %v1605 = vadd.f32 %v1394, %v1545
      %v1606 = vadd.f32 %v1395, %v1548
      %v1607 = vadd.f32 %v1396, %v1553
      %v1608 = vadd.f32 %v1397, %v1556
      %v1609 = vadd.f32 %v1398, %v1561
      %v1610 = vadd.f32 %v1399, %v1564
      %v1611 = vadd.f32 %v1400, %v1569
      %v1612 = vadd.f32 %v1401, %v1572
      %v1613 = vadd.f32 %v1402, %v1577
      %v1614 = vadd.f32 %v1403, %v1580
      %v1617 = vrot.slane %v1204, 1
      %v1618 = vrot.slane %v1404, 1
      %v1619 = vsel %vm911, %v1617, %v1618
      %v1621 = vsel %vm469, %v1619, 0
      %v1624 = vsel %vm518, %v240, 0
      %1626 = vmatprep.subr.bf16.mxu0 0
      %1627 = vmatpush1.bf16.msra.mxu0 %v1624
      %1628 = vmatprep.subr.bf16.mxu0 0
      %1629 = vmatpush1.bf16.msra.mxu0 0
      %1630 = vmatprep.subr.bf16.mxu0 0
      %1631 = vmatpush1.bf16.msra.mxu0 0
      %1632 = vmatprep.subr.bf16.mxu0 0
      %1633 = vmatpush1.bf16.msra.mxu0 0
      %1634 = vmatprep.subr.bf16.mxu0 0
      %1635 = vmatpush1.bf16.msra.mxu0 0
      %1636 = vmatprep.subr.bf16.mxu0 0
      %1637 = vmatpush1.bf16.msra.mxu0 0
      %1638 = vmatprep.subr.bf16.mxu0 0
      %1639 = vmatpush1.bf16.msra.mxu0 0
      %1640 = vmatprep.subr.bf16.mxu0 0
      %1641 = vmatpush1.bf16.msra.mxu0 0
      %1642 = vmatprep.subr.bf16.mxu0 0
      %1643 = vmatpush1.bf16.msra.mxu0 0
      %1644 = vmatprep.subr.bf16.mxu0 0
      %1645 = vmatpush1.bf16.msra.mxu0 0
      %1646 = vmatprep.subr.bf16.mxu0 0
      %1647 = vmatpush1.bf16.msra.mxu0 0
      %1648 = vmatprep.subr.bf16.mxu0 0
      %1649 = vmatpush1.bf16.msra.mxu0 0
      %1650 = vmatprep.subr.bf16.mxu0 0
      %1651 = vmatpush1.bf16.msra.mxu0 0
      %1652 = vmatprep.subr.bf16.mxu0 0
      %1653 = vmatpush1.bf16.msra.mxu0 0
      %1654 = vmatprep.subr.bf16.mxu0 0
      %1655 = vmatpush1.bf16.msra.mxu0 0
      %1656 = vmatprep.subr.bf16.mxu0 0
      %1657 = vmatpush1.bf16.msra.mxu0 0
      %1658 = vmatprep.mubr.bf16.mxu0 0
      %1659 = vmatmul.mubr.bf16.gmra.mrb[0].mxu0 %v964
      %v1660 = vpop.f32.mrb[0].mxu0
      %v1661 = vadd.f32 0.0, %v1660
      %v1662 = vpop.f32.mrb[0].mxu0
      %v1663 = vpop.f32.mrb[0].mxu0
      %v1664 = vadd.f32 0.0, %v1663
      %v1665 = vpop.f32.mrb[0].mxu0
      %1666 = vmatprep.mubr.bf16.mxu0 0
      %1667 = vmatmul.mubr.bf16.gmra.mrb[0].mxu0 %v967
      %v1668 = vpop.f32.mrb[0].mxu0
      %v1669 = vadd.f32 0.0, %v1668
      %v1670 = vpop.f32.mrb[0].mxu0
      %v1671 = vpop.f32.mrb[0].mxu0
      %v1672 = vadd.f32 0.0, %v1671
      %v1673 = vpop.f32.mrb[0].mxu0
      %1674 = vmatprep.mubr.bf16.mxu0 0
      %1675 = vmatmul.mubr.bf16.gmra.mrb[0].mxu0 %v970
      %v1676 = vpop.f32.mrb[0].mxu0
      %v1677 = vadd.f32 0.0, %v1676
      %v1678 = vpop.f32.mrb[0].mxu0
      %v1679 = vpop.f32.mrb[0].mxu0
      %v1680 = vadd.f32 0.0, %v1679
      %v1681 = vpop.f32.mrb[0].mxu0
      %1682 = vmatprep.mubr.bf16.mxu0 0
      %1683 = vmatmul.mubr.bf16.gmra.mrb[0].mxu0 %v973
      %v1684 = vpop.f32.mrb[0].mxu0
      %v1685 = vadd.f32 0.0, %v1684
      %v1686 = vpop.f32.mrb[0].mxu0
      %v1687 = vpop.f32.mrb[0].mxu0
      %v1688 = vadd.f32 0.0, %v1687
      %v1689 = vpop.f32.mrb[0].mxu0
      %1690 = vmatprep.mubr.bf16.mxu0 0
      %1691 = vmatmul.mubr.bf16.gmra.mrb[0].mxu0 %v976
      %v1692 = vpop.f32.mrb[0].mxu0
      %v1693 = vadd.f32 0.0, %v1692
      %v1694 = vpop.f32.mrb[0].mxu0
      %v1695 = vpop.f32.mrb[0].mxu0
      %v1696 = vadd.f32 0.0, %v1695
      %v1697 = vpop.f32.mrb[0].mxu0
      %1698 = vmatprep.mubr.bf16.mxu0 0
      %1699 = vmatmul.mubr.bf16.gmra.mrb[0].mxu0 %v979
      %v1700 = vpop.f32.mrb[0].mxu0
      %v1701 = vadd.f32 0.0, %v1700
      %v1702 = vpop.f32.mrb[0].mxu0
      %v1703 = vpop.f32.mrb[0].mxu0
      %v1704 = vadd.f32 0.0, %v1703
      %v1705 = vpop.f32.mrb[0].mxu0
      %1706 = vmatprep.mubr.bf16.mxu0 0
      %1707 = vmatmul.mubr.bf16.gmra.mrb[0].mxu0 %v982
      %v1708 = vpop.f32.mrb[0].mxu0
      %v1709 = vadd.f32 0.0, %v1708
      %v1710 = vpop.f32.mrb[0].mxu0
      %v1711 = vpop.f32.mrb[0].mxu0
      %v1712 = vadd.f32 0.0, %v1711
      %v1713 = vpop.f32.mrb[0].mxu0
      %1714 = vmatprep.mubr.bf16.mxu0 0
      %1715 = vmatmul.mubr.bf16.gmra.mrb[0].mxu0 %v985
      %v1716 = vpop.f32.mrb[0].mxu0
      %v1717 = vadd.f32 0.0, %v1716
      %v1718 = vpop.f32.mrb[0].mxu0
      %v1719 = vpop.f32.mrb[0].mxu0
      %v1720 = vadd.f32 0.0, %v1719
      %v1721 = vpop.f32.mrb[0].mxu0
      %1722 = vmatprep.mubr.bf16.mxu0 0
      %1723 = vmatmul.mubr.bf16.gmra.mrb[0].mxu0 %v988
      %v1724 = vpop.f32.mrb[0].mxu0
      %v1725 = vadd.f32 0.0, %v1724
      %v1726 = vpop.f32.mrb[0].mxu0
      %v1727 = vpop.f32.mrb[0].mxu0
      %v1728 = vadd.f32 0.0, %v1727
      %v1729 = vpop.f32.mrb[0].mxu0
      %1730 = vmatprep.mubr.bf16.mxu0 0
      %1731 = vmatmul.mubr.bf16.gmra.mrb[0].mxu0 %v991
      %v1732 = vpop.f32.mrb[0].mxu0
      %v1733 = vadd.f32 0.0, %v1732
      %v1734 = vpop.f32.mrb[0].mxu0
      %v1735 = vpop.f32.mrb[0].mxu0
      %v1736 = vadd.f32 0.0, %v1735
      %v1737 = vpop.f32.mrb[0].mxu0
      %1738 = vmatprep.mubr.bf16.mxu0 0
      %1739 = vmatmul.mubr.bf16.gmra.mrb[0].mxu0 %v994
      %v1740 = vpop.f32.mrb[0].mxu0
      %v1741 = vadd.f32 0.0, %v1740
      %v1742 = vpop.f32.mrb[0].mxu0
      %v1743 = vpop.f32.mrb[0].mxu0
      %v1744 = vadd.f32 0.0, %v1743
      %v1745 = vpop.f32.mrb[0].mxu0
      %1746 = vmatprep.mubr.bf16.mxu0 0
      %1747 = vmatmul.mubr.bf16.gmra.mrb[0].mxu0 %v997
      %v1748 = vpop.f32.mrb[0].mxu0
      %v1749 = vadd.f32 0.0, %v1748
      %v1750 = vpop.f32.mrb[0].mxu0
      %v1751 = vpop.f32.mrb[0].mxu0
      %v1752 = vadd.f32 0.0, %v1751
      %v1753 = vpop.f32.mrb[0].mxu0
      %1754 = vmatprep.mubr.bf16.mxu0 0
      %1755 = vmatmul.mubr.bf16.gmra.mrb[0].mxu0 %v1000
      %v1756 = vpop.f32.mrb[0].mxu0
      %v1757 = vadd.f32 0.0, %v1756
      %v1758 = vpop.f32.mrb[0].mxu0
      %v1759 = vpop.f32.mrb[0].mxu0
      %v1760 = vadd.f32 0.0, %v1759
      %v1761 = vpop.f32.mrb[0].mxu0
      %1762 = vmatprep.mubr.bf16.mxu0 0
      %1763 = vmatmul.mubr.bf16.gmra.mrb[0].mxu0 %v1003
      %v1764 = vpop.f32.mrb[0].mxu0
      %v1765 = vadd.f32 0.0, %v1764
      %v1766 = vpop.f32.mrb[0].mxu0
      %v1767 = vpop.f32.mrb[0].mxu0
      %v1768 = vadd.f32 0.0, %v1767
      %v1769 = vpop.f32.mrb[0].mxu0
      %1770 = vmatprep.mubr.bf16.mxu0 0
      %1771 = vmatmul.mubr.bf16.gmra.mrb[0].mxu0 %v1006
      %v1772 = vpop.f32.mrb[0].mxu0
      %v1773 = vadd.f32 0.0, %v1772
      %v1774 = vpop.f32.mrb[0].mxu0
      %v1775 = vpop.f32.mrb[0].mxu0
      %v1776 = vadd.f32 0.0, %v1775
      %v1777 = vpop.f32.mrb[0].mxu0
      %1778 = vmatprep.mubr.bf16.mxu0 0
      %1779 = vmatmul.mubr.bf16.gmra.mrb[0].mxu0 %v1621
      %v1780 = vpop.f32.mrb[0].mxu0
      %v1781 = vadd.f32 0.0, %v1780
      %v1782 = vpop.f32.mrb[0].mxu0
      %v1783 = vpop.f32.mrb[0].mxu0
      %v1784 = vadd.f32 0.0, %v1783
      %v1785 = vpop.f32.mrb[0].mxu0
      %1786 = vdwg.mxu0
      %v1787 = vadd.f32 %v1583, %v1661
      %v1788 = vadd.f32 %v1584, %v1664
      %v1789 = vadd.f32 %v1585, %v1669
      %v1790 = vadd.f32 %v1586, %v1672
      %v1791 = vadd.f32 %v1587, %v1677
      %v1792 = vadd.f32 %v1588, %v1680
      %v1793 = vadd.f32 %v1589, %v1685
      %v1794 = vadd.f32 %v1590, %v1688
      %v1795 = vadd.f32 %v1591, %v1693
      %v1796 = vadd.f32 %v1592, %v1696
      %v1797 = vadd.f32 %v1593, %v1701
      %v1798 = vadd.f32 %v1594, %v1704
      %v1799 = vadd.f32 %v1595, %v1709
      %v1800 = vadd.f32 %v1596, %v1712
      %v1801 = vadd.f32 %v1597, %v1717
      %v1802 = vadd.f32 %v1598, %v1720
      %v1803 = vadd.f32 %v1599, %v1725
      %v1804 = vadd.f32 %v1600, %v1728
      %v1805 = vadd.f32 %v1601, %v1733
      %v1806 = vadd.f32 %v1602, %v1736
      %v1807 = vadd.f32 %v1603, %v1741
      %v1808 = vadd.f32 %v1604, %v1744
      %v1809 = vadd.f32 %v1605, %v1749
      %v1810 = vadd.f32 %v1606, %v1752
      %v1811 = vadd.f32 %v1607, %v1757
      %v1812 = vadd.f32 %v1608, %v1760
      %v1813 = vadd.f32 %v1609, %v1765
      %v1814 = vadd.f32 %v1610, %v1768
      %v1815 = vadd.f32 %v1611, %v1773
      %v1816 = vadd.f32 %v1612, %v1776
      %v1817 = vadd.f32 %v1613, %v1781
      %v1818 = vadd.f32 %v1614, %v1784
      %v1819 = vpack.c.bf16 %v224, %v223
      %v1821 = vsel %vm469, %v1819, 0
      %v1824 = vsel %vm518, %v241, 0
      %1826 = vmatprep.subr.bf16.mxu0 0
      %1827 = vmatpush1.bf16.msra.mxu0 %v1824
      %1828 = vmatprep.subr.bf16.mxu0 0
      %1829 = vmatpush1.bf16.msra.mxu0 0
      %1830 = vmatprep.subr.bf16.mxu0 0
      %1831 = vmatpush1.bf16.msra.mxu0 0
      %1832 = vmatprep.subr.bf16.mxu0 0
      %1833 = vmatpush1.bf16.msra.mxu0 0
      %1834 = vmatprep.subr.bf16.mxu0 0
      %1835 = vmatpush1.bf16.msra.mxu0 0
      %1836 = vmatprep.subr.bf16.mxu0 0
      %1837 = vmatpush1.bf16.msra.mxu0 0
      %1838 = vmatprep.subr.bf16.mxu0 0
      %1839 = vmatpush1.bf16.msra.mxu0 0
      %1840 = vmatprep.subr.bf16.mxu0 0
      %1841 = vmatpush1.bf16.msra.mxu0 0
      %1842 = vmatprep.subr.bf16.mxu0 0
      %1843 = vmatpush1.bf16.msra.mxu0 0
      %1844 = vmatprep.subr.bf16.mxu0 0
      %1845 = vmatpush1.bf16.msra.mxu0 0
      %1846 = vmatprep.subr.bf16.mxu0 0
      %1847 = vmatpush1.bf16.msra.mxu0 0
      %1848 = vmatprep.subr.bf16.mxu0 0
      %1849 = vmatpush1.bf16.msra.mxu0 0
      %1850 = vmatprep.subr.bf16.mxu0 0
      %1851 = vmatpush1.bf16.msra.mxu0 0
      %1852 = vmatprep.subr.bf16.mxu0 0
      %1853 = vmatpush1.bf16.msra.mxu0 0
      %1854 = vmatprep.subr.bf16.mxu0 0
      %1855 = vmatpush1.bf16.msra.mxu0 0
      %1856 = vmatprep.subr.bf16.mxu0 0
      %1857 = vmatpush1.bf16.msra.mxu0 0
      %1858 = vmatprep.mubr.bf16.mxu0 0
      %1859 = vmatmul.mubr.bf16.gmra.mrb[0].mxu0 %v687
      %v1860 = vpop.f32.mrb[0].mxu0
      %v1861 = vadd.f32 0.0, %v1860
      %v1862 = vpop.f32.mrb[0].mxu0
      %v1863 = vpop.f32.mrb[0].mxu0
      %v1864 = vadd.f32 0.0, %v1863
      %v1865 = vpop.f32.mrb[0].mxu0
      %1866 = vmatprep.mubr.bf16.mxu0 0
      %1867 = vmatmul.mubr.bf16.gmra.mrb[0].mxu0 %v689
      %v1868 = vpop.f32.mrb[0].mxu0
      %v1869 = vadd.f32 0.0, %v1868
      %v1870 = vpop.f32.mrb[0].mxu0
      %v1871 = vpop.f32.mrb[0].mxu0
      %v1872 = vadd.f32 0.0, %v1871
      %v1873 = vpop.f32.mrb[0].mxu0
      %1874 = vmatprep.mubr.bf16.mxu0 0
      %1875 = vmatmul.mubr.bf16.gmra.mrb[0].mxu0 %v691
      %v1876 = vpop.f32.mrb[0].mxu0
      %v1877 = vadd.f32 0.0, %v1876
      %v1878 = vpop.f32.mrb[0].mxu0
      %v1879 = vpop.f32.mrb[0].mxu0
      %v1880 = vadd.f32 0.0, %v1879
      %v1881 = vpop.f32.mrb[0].mxu0
      %1882 = vmatprep.mubr.bf16.mxu0 0
      %1883 = vmatmul.mubr.bf16.gmra.mrb[0].mxu0 %v693
      %v1884 = vpop.f32.mrb[0].mxu0
      %v1885 = vadd.f32 0.0, %v1884
      %v1886 = vpop.f32.mrb[0].mxu0
      %v1887 = vpop.f32.mrb[0].mxu0
      %v1888 = vadd.f32 0.0, %v1887
      %v1889 = vpop.f32.mrb[0].mxu0
      %1890 = vmatprep.mubr.bf16.mxu0 0
      %1891 = vmatmul.mubr.bf16.gmra.mrb[0].mxu0 %v695
      %v1892 = vpop.f32.mrb[0].mxu0
      %v1893 = vadd.f32 0.0, %v1892
      %v1894 = vpop.f32.mrb[0].mxu0
      %v1895 = vpop.f32.mrb[0].mxu0
      %v1896 = vadd.f32 0.0, %v1895
      %v1897 = vpop.f32.mrb[0].mxu0
      %1898 = vmatprep.mubr.bf16.mxu0 0
      %1899 = vmatmul.mubr.bf16.gmra.mrb[0].mxu0 %v697
      %v1900 = vpop.f32.mrb[0].mxu0
      %v1901 = vadd.f32 0.0, %v1900
      %v1902 = vpop.f32.mrb[0].mxu0
      %v1903 = vpop.f32.mrb[0].mxu0
      %v1904 = vadd.f32 0.0, %v1903
      %v1905 = vpop.f32.mrb[0].mxu0
      %1906 = vmatprep.mubr.bf16.mxu0 0
      %1907 = vmatmul.mubr.bf16.gmra.mrb[0].mxu0 %v699
      %v1908 = vpop.f32.mrb[0].mxu0
      %v1909 = vadd.f32 0.0, %v1908
      %v1910 = vpop.f32.mrb[0].mxu0
      %v1911 = vpop.f32.mrb[0].mxu0
      %v1912 = vadd.f32 0.0, %v1911
      %v1913 = vpop.f32.mrb[0].mxu0
      %1914 = vmatprep.mubr.bf16.mxu0 0
      %1915 = vmatmul.mubr.bf16.gmra.mrb[0].mxu0 %v701
      %v1916 = vpop.f32.mrb[0].mxu0
      %v1917 = vadd.f32 0.0, %v1916
      %v1918 = vpop.f32.mrb[0].mxu0
      %v1919 = vpop.f32.mrb[0].mxu0
      %v1920 = vadd.f32 0.0, %v1919
      %v1921 = vpop.f32.mrb[0].mxu0
      %1922 = vmatprep.mubr.bf16.mxu0 0
      %1923 = vmatmul.mubr.bf16.gmra.mrb[0].mxu0 %v703
      %v1924 = vpop.f32.mrb[0].mxu0
      %v1925 = vadd.f32 0.0, %v1924
      %v1926 = vpop.f32.mrb[0].mxu0
      %v1927 = vpop.f32.mrb[0].mxu0
      %v1928 = vadd.f32 0.0, %v1927
      %v1929 = vpop.f32.mrb[0].mxu0
      %1930 = vmatprep.mubr.bf16.mxu0 0
      %1931 = vmatmul.mubr.bf16.gmra.mrb[0].mxu0 %v705
      %v1932 = vpop.f32.mrb[0].mxu0
      %v1933 = vadd.f32 0.0, %v1932
      %v1934 = vpop.f32.mrb[0].mxu0
      %v1935 = vpop.f32.mrb[0].mxu0
      %v1936 = vadd.f32 0.0, %v1935
      %v1937 = vpop.f32.mrb[0].mxu0
      %1938 = vmatprep.mubr.bf16.mxu0 0
      %1939 = vmatmul.mubr.bf16.gmra.mrb[0].mxu0 %v707
      %v1940 = vpop.f32.mrb[0].mxu0
      %v1941 = vadd.f32 0.0, %v1940
      %v1942 = vpop.f32.mrb[0].mxu0
      %v1943 = vpop.f32.mrb[0].mxu0
      %v1944 = vadd.f32 0.0, %v1943
      %v1945 = vpop.f32.mrb[0].mxu0
      %1946 = vmatprep.mubr.bf16.mxu0 0
      %1947 = vmatmul.mubr.bf16.gmra.mrb[0].mxu0 %v709
      %v1948 = vpop.f32.mrb[0].mxu0
      %v1949 = vadd.f32 0.0, %v1948
      %v1950 = vpop.f32.mrb[0].mxu0
      %v1951 = vpop.f32.mrb[0].mxu0
      %v1952 = vadd.f32 0.0, %v1951
      %v1953 = vpop.f32.mrb[0].mxu0
      %1954 = vmatprep.mubr.bf16.mxu0 0
      %1955 = vmatmul.mubr.bf16.gmra.mrb[0].mxu0 %v711
      %v1956 = vpop.f32.mrb[0].mxu0
      %v1957 = vadd.f32 0.0, %v1956
      %v1958 = vpop.f32.mrb[0].mxu0
      %v1959 = vpop.f32.mrb[0].mxu0
      %v1960 = vadd.f32 0.0, %v1959
      %v1961 = vpop.f32.mrb[0].mxu0
      %1962 = vmatprep.mubr.bf16.mxu0 0
      %1963 = vmatmul.mubr.bf16.gmra.mrb[0].mxu0 %v713
      %v1964 = vpop.f32.mrb[0].mxu0
      %v1965 = vadd.f32 0.0, %v1964
      %v1966 = vpop.f32.mrb[0].mxu0
      %v1967 = vpop.f32.mrb[0].mxu0
      %v1968 = vadd.f32 0.0, %v1967
      %v1969 = vpop.f32.mrb[0].mxu0
      %1970 = vmatprep.mubr.bf16.mxu0 0
      %1971 = vmatmul.mubr.bf16.gmra.mrb[0].mxu0 %v1206
      %v1972 = vpop.f32.mrb[0].mxu0
      %v1973 = vadd.f32 0.0, %v1972
      %v1974 = vpop.f32.mrb[0].mxu0
      %v1975 = vpop.f32.mrb[0].mxu0
      %v1976 = vadd.f32 0.0, %v1975
      %v1977 = vpop.f32.mrb[0].mxu0
      %1978 = vmatprep.mubr.bf16.mxu0 0
      %1979 = vmatmul.mubr.bf16.gmra.mrb[0].mxu0 %v1821
      %v1980 = vpop.f32.mrb[0].mxu0
      %v1981 = vadd.f32 0.0, %v1980
      %v1982 = vpop.f32.mrb[0].mxu0
      %v1983 = vpop.f32.mrb[0].mxu0
      %v1984 = vadd.f32 0.0, %v1983
      %v1985 = vpop.f32.mrb[0].mxu0
      %1986 = vdwg.mxu0
      %v1987 = vadd.f32 %v1787, %v1861
      %v1988 = vadd.f32 %v1788, %v1864
      %v1989 = vadd.f32 %v1789, %v1869
      %v1990 = vadd.f32 %v1790, %v1872
      %v1991 = vadd.f32 %v1791, %v1877
      %v1992 = vadd.f32 %v1792, %v1880
      %v1993 = vadd.f32 %v1793, %v1885
      %v1994 = vadd.f32 %v1794, %v1888
      %v1995 = vadd.f32 %v1795, %v1893
      %v1996 = vadd.f32 %v1796, %v1896
      %v1997 = vadd.f32 %v1797, %v1901
      %v1998 = vadd.f32 %v1798, %v1904
      %v1999 = vadd.f32 %v1799, %v1909
      %v2000 = vadd.f32 %v1800, %v1912
      %v2001 = vadd.f32 %v1801, %v1917
      %v2002 = vadd.f32 %v1802, %v1920
      %v2003 = vadd.f32 %v1803, %v1925
      %v2004 = vadd.f32 %v1804, %v1928
      %v2005 = vadd.f32 %v1805, %v1933
      %v2006 = vadd.f32 %v1806, %v1936
      %v2007 = vadd.f32 %v1807, %v1941
      %v2008 = vadd.f32 %v1808, %v1944
      %v2009 = vadd.f32 %v1809, %v1949
      %v2010 = vadd.f32 %v1810, %v1952
      %v2011 = vadd.f32 %v1811, %v1957
      %v2012 = vadd.f32 %v1812, %v1960
      %v2013 = vadd.f32 %v1813, %v1965
      %v2014 = vadd.f32 %v1814, %v1968
      %v2015 = vadd.f32 %v1815, %v1973
      %v2016 = vadd.f32 %v1816, %v1976
      %v2017 = vadd.f32 %v1817, %v1981
      %v2018 = vadd.f32 %v1818, %v1984
      %v2019 = vpack.c.bf16 %v225, %v225
      %v2020 = vshrl.u32 %v1819, 16
      %v2022 = vshll.u32 %v1819, 16
      %v2024 = vrot.slane %v2022, 1
      %v2025 = vor.u32 %v2020, %v2024
      %v2027 = vshll.u32 %v2019, 16
      %v2029 = vrot.slane %v2027, 1
      %v2030 = vsel %vm276, %v2025, %v2029
      %v2032 = vsel %vm469, %v2030, 0
      %v2035 = vsel %vm518, %v242, 0
      %2037 = vmatprep.subr.bf16.mxu0 0
      %2038 = vmatpush1.bf16.msra.mxu0 %v2035
      %2039 = vmatprep.subr.bf16.mxu0 0
      %2040 = vmatpush1.bf16.msra.mxu0 0
      %2041 = vmatprep.subr.bf16.mxu0 0
      %2042 = vmatpush1.bf16.msra.mxu0 0
      %2043 = vmatprep.subr.bf16.mxu0 0
      %2044 = vmatpush1.bf16.msra.mxu0 0
      %2045 = vmatprep.subr.bf16.mxu0 0
      %2046 = vmatpush1.bf16.msra.mxu0 0
      %2047 = vmatprep.subr.bf16.mxu0 0
      %2048 = vmatpush1.bf16.msra.mxu0 0
      %2049 = vmatprep.subr.bf16.mxu0 0
      %2050 = vmatpush1.bf16.msra.mxu0 0
      %2051 = vmatprep.subr.bf16.mxu0 0
      %2052 = vmatpush1.bf16.msra.mxu0 0
      %2053 = vmatprep.subr.bf16.mxu0 0
      %2054 = vmatpush1.bf16.msra.mxu0 0
      %2055 = vmatprep.subr.bf16.mxu0 0
      %2056 = vmatpush1.bf16.msra.mxu0 0
      %2057 = vmatprep.subr.bf16.mxu0 0
      %2058 = vmatpush1.bf16.msra.mxu0 0
      %2059 = vmatprep.subr.bf16.mxu0 0
      %2060 = vmatpush1.bf16.msra.mxu0 0
      %2061 = vmatprep.subr.bf16.mxu0 0
      %2062 = vmatpush1.bf16.msra.mxu0 0
      %2063 = vmatprep.subr.bf16.mxu0 0
      %2064 = vmatpush1.bf16.msra.mxu0 0
      %2065 = vmatprep.subr.bf16.mxu0 0
      %2066 = vmatpush1.bf16.msra.mxu0 0
      %2067 = vmatprep.subr.bf16.mxu0 0
      %2068 = vmatpush1.bf16.msra.mxu0 0
      %2069 = vmatprep.mubr.bf16.mxu0 0
      %2070 = vmatmul.mubr.bf16.gmra.mrb[0].mxu0 %v477
      %v2071 = vpop.f32.mrb[0].mxu0
      %v2072 = vadd.f32 0.0, %v2071
      %v2073 = vpop.f32.mrb[0].mxu0
      %v2074 = vpop.f32.mrb[0].mxu0
      %v2075 = vadd.f32 0.0, %v2074
      %v2076 = vpop.f32.mrb[0].mxu0
      %2077 = vmatprep.mubr.bf16.mxu0 0
      %2078 = vmatmul.mubr.bf16.gmra.mrb[0].mxu0 %v480
      %v2079 = vpop.f32.mrb[0].mxu0
      %v2080 = vadd.f32 0.0, %v2079
      %v2081 = vpop.f32.mrb[0].mxu0
      %v2082 = vpop.f32.mrb[0].mxu0
      %v2083 = vadd.f32 0.0, %v2082
      %v2084 = vpop.f32.mrb[0].mxu0
      %2085 = vmatprep.mubr.bf16.mxu0 0
      %2086 = vmatmul.mubr.bf16.gmra.mrb[0].mxu0 %v483
      %v2087 = vpop.f32.mrb[0].mxu0
      %v2088 = vadd.f32 0.0, %v2087
      %v2089 = vpop.f32.mrb[0].mxu0
      %v2090 = vpop.f32.mrb[0].mxu0
      %v2091 = vadd.f32 0.0, %v2090
      %v2092 = vpop.f32.mrb[0].mxu0
      %2093 = vmatprep.mubr.bf16.mxu0 0
      %2094 = vmatmul.mubr.bf16.gmra.mrb[0].mxu0 %v486
      %v2095 = vpop.f32.mrb[0].mxu0
      %v2096 = vadd.f32 0.0, %v2095
      %v2097 = vpop.f32.mrb[0].mxu0
      %v2098 = vpop.f32.mrb[0].mxu0
      %v2099 = vadd.f32 0.0, %v2098
      %v2100 = vpop.f32.mrb[0].mxu0
      %2101 = vmatprep.mubr.bf16.mxu0 0
      %2102 = vmatmul.mubr.bf16.gmra.mrb[0].mxu0 %v489
      %v2103 = vpop.f32.mrb[0].mxu0
      %v2104 = vadd.f32 0.0, %v2103
      %v2105 = vpop.f32.mrb[0].mxu0
      %v2106 = vpop.f32.mrb[0].mxu0
      %v2107 = vadd.f32 0.0, %v2106
      %v2108 = vpop.f32.mrb[0].mxu0
      %2109 = vmatprep.mubr.bf16.mxu0 0
      %2110 = vmatmul.mubr.bf16.gmra.mrb[0].mxu0 %v492
      %v2111 = vpop.f32.mrb[0].mxu0
      %v2112 = vadd.f32 0.0, %v2111
      %v2113 = vpop.f32.mrb[0].mxu0
      %v2114 = vpop.f32.mrb[0].mxu0
      %v2115 = vadd.f32 0.0, %v2114
      %v2116 = vpop.f32.mrb[0].mxu0
      %2117 = vmatprep.mubr.bf16.mxu0 0
      %2118 = vmatmul.mubr.bf16.gmra.mrb[0].mxu0 %v495
      %v2119 = vpop.f32.mrb[0].mxu0
      %v2120 = vadd.f32 0.0, %v2119
      %v2121 = vpop.f32.mrb[0].mxu0
      %v2122 = vpop.f32.mrb[0].mxu0
      %v2123 = vadd.f32 0.0, %v2122
      %v2124 = vpop.f32.mrb[0].mxu0
      %2125 = vmatprep.mubr.bf16.mxu0 0
      %2126 = vmatmul.mubr.bf16.gmra.mrb[0].mxu0 %v498
      %v2127 = vpop.f32.mrb[0].mxu0
      %v2128 = vadd.f32 0.0, %v2127
      %v2129 = vpop.f32.mrb[0].mxu0
      %v2130 = vpop.f32.mrb[0].mxu0
      %v2131 = vadd.f32 0.0, %v2130
      %v2132 = vpop.f32.mrb[0].mxu0
      %2133 = vmatprep.mubr.bf16.mxu0 0
      %2134 = vmatmul.mubr.bf16.gmra.mrb[0].mxu0 %v501
      %v2135 = vpop.f32.mrb[0].mxu0
      %v2136 = vadd.f32 0.0, %v2135
      %v2137 = vpop.f32.mrb[0].mxu0
      %v2138 = vpop.f32.mrb[0].mxu0
      %v2139 = vadd.f32 0.0, %v2138
      %v2140 = vpop.f32.mrb[0].mxu0
      %2141 = vmatprep.mubr.bf16.mxu0 0
      %2142 = vmatmul.mubr.bf16.gmra.mrb[0].mxu0 %v504
      %v2143 = vpop.f32.mrb[0].mxu0
      %v2144 = vadd.f32 0.0, %v2143
      %v2145 = vpop.f32.mrb[0].mxu0
      %v2146 = vpop.f32.mrb[0].mxu0
      %v2147 = vadd.f32 0.0, %v2146
      %v2148 = vpop.f32.mrb[0].mxu0
      %2149 = vmatprep.mubr.bf16.mxu0 0
      %2150 = vmatmul.mubr.bf16.gmra.mrb[0].mxu0 %v507
      %v2151 = vpop.f32.mrb[0].mxu0
      %v2152 = vadd.f32 0.0, %v2151
      %v2153 = vpop.f32.mrb[0].mxu0
      %v2154 = vpop.f32.mrb[0].mxu0
      %v2155 = vadd.f32 0.0, %v2154
      %v2156 = vpop.f32.mrb[0].mxu0
      %2157 = vmatprep.mubr.bf16.mxu0 0
      %2158 = vmatmul.mubr.bf16.gmra.mrb[0].mxu0 %v510
      %v2159 = vpop.f32.mrb[0].mxu0
      %v2160 = vadd.f32 0.0, %v2159
      %v2161 = vpop.f32.mrb[0].mxu0
      %v2162 = vpop.f32.mrb[0].mxu0
      %v2163 = vadd.f32 0.0, %v2162
      %v2164 = vpop.f32.mrb[0].mxu0
      %2165 = vmatprep.mubr.bf16.mxu0 0
      %2166 = vmatmul.mubr.bf16.gmra.mrb[0].mxu0 %v513
      %v2167 = vpop.f32.mrb[0].mxu0
      %v2168 = vadd.f32 0.0, %v2167
      %v2169 = vpop.f32.mrb[0].mxu0
      %v2170 = vpop.f32.mrb[0].mxu0
      %v2171 = vadd.f32 0.0, %v2170
      %v2172 = vpop.f32.mrb[0].mxu0
      %2173 = vmatprep.mubr.bf16.mxu0 0
      %2174 = vmatmul.mubr.bf16.gmra.mrb[0].mxu0 %v516
      %v2175 = vpop.f32.mrb[0].mxu0
      %v2176 = vadd.f32 0.0, %v2175
      %v2177 = vpop.f32.mrb[0].mxu0
      %v2178 = vpop.f32.mrb[0].mxu0
      %v2179 = vadd.f32 0.0, %v2178
      %v2180 = vpop.f32.mrb[0].mxu0
      %2181 = vmatprep.mubr.bf16.mxu0 0
      %2182 = vmatmul.mubr.bf16.gmra.mrb[0].mxu0 %v1417
      %v2183 = vpop.f32.mrb[0].mxu0
      %v2184 = vadd.f32 0.0, %v2183
      %v2185 = vpop.f32.mrb[0].mxu0
      %v2186 = vpop.f32.mrb[0].mxu0
      %v2187 = vadd.f32 0.0, %v2186
      %v2188 = vpop.f32.mrb[0].mxu0
      %2189 = vmatprep.mubr.bf16.mxu0 0
      %2190 = vmatmul.mubr.bf16.gmra.mrb[0].mxu0 %v2032
      %v2191 = vpop.f32.mrb[0].mxu0
      %v2192 = vadd.f32 0.0, %v2191
      %v2193 = vpop.f32.mrb[0].mxu0
      %v2194 = vpop.f32.mrb[0].mxu0
      %v2195 = vadd.f32 0.0, %v2194
      %v2196 = vpop.f32.mrb[0].mxu0
      %2197 = vdwg.mxu0
      %v2198 = vadd.f32 %v1987, %v2072
      %v2199 = vadd.f32 %v1988, %v2075
      %v2200 = vadd.f32 %v1989, %v2080
      %v2201 = vadd.f32 %v1990, %v2083
      %v2202 = vadd.f32 %v1991, %v2088
      %v2203 = vadd.f32 %v1992, %v2091
      %v2204 = vadd.f32 %v1993, %v2096
      %v2205 = vadd.f32 %v1994, %v2099
      %v2206 = vadd.f32 %v1995, %v2104
      %v2207 = vadd.f32 %v1996, %v2107
      %v2208 = vadd.f32 %v1997, %v2112
      %v2209 = vadd.f32 %v1998, %v2115
      %v2210 = vadd.f32 %v1999, %v2120
      %v2211 = vadd.f32 %v2000, %v2123
      %v2212 = vadd.f32 %v2001, %v2128
      %v2213 = vadd.f32 %v2002, %v2131
      %v2214 = vadd.f32 %v2003, %v2136
      %v2215 = vadd.f32 %v2004, %v2139
      %v2216 = vadd.f32 %v2005, %v2144
      %v2217 = vadd.f32 %v2006, %v2147
      %v2218 = vadd.f32 %v2007, %v2152
      %v2219 = vadd.f32 %v2008, %v2155
      %v2220 = vadd.f32 %v2009, %v2160
      %v2221 = vadd.f32 %v2010, %v2163
      %v2222 = vadd.f32 %v2011, %v2168
      %v2223 = vadd.f32 %v2012, %v2171
      %v2224 = vadd.f32 %v2013, %v2176
      %v2225 = vadd.f32 %v2014, %v2179
      %v2226 = vadd.f32 %v2015, %v2184
      %v2227 = vadd.f32 %v2016, %v2187
      %v2228 = vadd.f32 %v2017, %v2192
      %v2229 = vadd.f32 %v2018, %v2195
      %v2232 = vrot.slane %v1819, 1
      %v2233 = vrot.slane %v2019, 1
      %v2234 = vsel %vm911, %v2232, %v2233
      %v2236 = vsel %vm469, %v2234, 0
      %v2239 = vsel %vm518, %v243, 0
      %2241 = vmatprep.subr.bf16.mxu0 0
      %2242 = vmatpush1.bf16.msra.mxu0 %v2239
      %2243 = vmatprep.subr.bf16.mxu0 0
      %2244 = vmatpush1.bf16.msra.mxu0 0
      %2245 = vmatprep.subr.bf16.mxu0 0
      %2246 = vmatpush1.bf16.msra.mxu0 0
      %2247 = vmatprep.subr.bf16.mxu0 0
      %2248 = vmatpush1.bf16.msra.mxu0 0
      %2249 = vmatprep.subr.bf16.mxu0 0
      %2250 = vmatpush1.bf16.msra.mxu0 0
      %2251 = vmatprep.subr.bf16.mxu0 0
      %2252 = vmatpush1.bf16.msra.mxu0 0
      %2253 = vmatprep.subr.bf16.mxu0 0
      %2254 = vmatpush1.bf16.msra.mxu0 0
      %2255 = vmatprep.subr.bf16.mxu0 0
      %2256 = vmatpush1.bf16.msra.mxu0 0
      %2257 = vmatprep.subr.bf16.mxu0 0
      %2258 = vmatpush1.bf16.msra.mxu0 0
      %2259 = vmatprep.subr.bf16.mxu0 0
      %2260 = vmatpush1.bf16.msra.mxu0 0
      %2261 = vmatprep.subr.bf16.mxu0 0
      %2262 = vmatpush1.bf16.msra.mxu0 0
      %2263 = vmatprep.subr.bf16.mxu0 0
      %2264 = vmatpush1.bf16.msra.mxu0 0
      %2265 = vmatprep.subr.bf16.mxu0 0
      %2266 = vmatpush1.bf16.msra.mxu0 0
      %2267 = vmatprep.subr.bf16.mxu0 0
      %2268 = vmatpush1.bf16.msra.mxu0 0
      %2269 = vmatprep.subr.bf16.mxu0 0
      %2270 = vmatpush1.bf16.msra.mxu0 0
      %2271 = vmatprep.subr.bf16.mxu0 0
      %2272 = vmatpush1.bf16.msra.mxu0 0
      %2273 = vmatprep.mubr.bf16.mxu0 0
      %2274 = vmatmul.mubr.bf16.gmra.mrb[0].mxu0 %v967
      %v2275 = vpop.f32.mrb[0].mxu0
      %v2276 = vadd.f32 0.0, %v2275
      %v2277 = vpop.f32.mrb[0].mxu0
      %v2278 = vpop.f32.mrb[0].mxu0
      %v2279 = vadd.f32 0.0, %v2278
      %v2280 = vpop.f32.mrb[0].mxu0
      %2281 = vmatprep.mubr.bf16.mxu0 0
      %2282 = vmatmul.mubr.bf16.gmra.mrb[0].mxu0 %v970
      %v2283 = vpop.f32.mrb[0].mxu0
      %v2284 = vadd.f32 0.0, %v2283
      %v2285 = vpop.f32.mrb[0].mxu0
      %v2286 = vpop.f32.mrb[0].mxu0
      %v2287 = vadd.f32 0.0, %v2286
      %v2288 = vpop.f32.mrb[0].mxu0
      %2289 = vmatprep.mubr.bf16.mxu0 0
      %2290 = vmatmul.mubr.bf16.gmra.mrb[0].mxu0 %v973
      %v2291 = vpop.f32.mrb[0].mxu0
      %v2292 = vadd.f32 0.0, %v2291
      %v2293 = vpop.f32.mrb[0].mxu0
      %v2294 = vpop.f32.mrb[0].mxu0
      %v2295 = vadd.f32 0.0, %v2294
      %v2296 = vpop.f32.mrb[0].mxu0
      %2297 = vmatprep.mubr.bf16.mxu0 0
      %2298 = vmatmul.mubr.bf16.gmra.mrb[0].mxu0 %v976
      %v2299 = vpop.f32.mrb[0].mxu0
      %v2300 = vadd.f32 0.0, %v2299
      %v2301 = vpop.f32.mrb[0].mxu0
      %v2302 = vpop.f32.mrb[0].mxu0
      %v2303 = vadd.f32 0.0, %v2302
      %v2304 = vpop.f32.mrb[0].mxu0
      %2305 = vmatprep.mubr.bf16.mxu0 0
      %2306 = vmatmul.mubr.bf16.gmra.mrb[0].mxu0 %v979
      %v2307 = vpop.f32.mrb[0].mxu0
      %v2308 = vadd.f32 0.0, %v2307
      %v2309 = vpop.f32.mrb[0].mxu0
      %v2310 = vpop.f32.mrb[0].mxu0
      %v2311 = vadd.f32 0.0, %v2310
      %v2312 = vpop.f32.mrb[0].mxu0
      %2313 = vmatprep.mubr.bf16.mxu0 0
      %2314 = vmatmul.mubr.bf16.gmra.mrb[0].mxu0 %v982
      %v2315 = vpop.f32.mrb[0].mxu0
      %v2316 = vadd.f32 0.0, %v2315
      %v2317 = vpop.f32.mrb[0].mxu0
      %v2318 = vpop.f32.mrb[0].mxu0
      %v2319 = vadd.f32 0.0, %v2318
      %v2320 = vpop.f32.mrb[0].mxu0
      %2321 = vmatprep.mubr.bf16.mxu0 0
      %2322 = vmatmul.mubr.bf16.gmra.mrb[0].mxu0 %v985
      %v2323 = vpop.f32.mrb[0].mxu0
      %v2324 = vadd.f32 0.0, %v2323
      %v2325 = vpop.f32.mrb[0].mxu0
      %v2326 = vpop.f32.mrb[0].mxu0
      %v2327 = vadd.f32 0.0, %v2326
      %v2328 = vpop.f32.mrb[0].mxu0
      %2329 = vmatprep.mubr.bf16.mxu0 0
      %2330 = vmatmul.mubr.bf16.gmra.mrb[0].mxu0 %v988
      %v2331 = vpop.f32.mrb[0].mxu0
      %v2332 = vadd.f32 0.0, %v2331
      %v2333 = vpop.f32.mrb[0].mxu0
      %v2334 = vpop.f32.mrb[0].mxu0
      %v2335 = vadd.f32 0.0, %v2334
      %v2336 = vpop.f32.mrb[0].mxu0
      %2337 = vmatprep.mubr.bf16.mxu0 0
      %2338 = vmatmul.mubr.bf16.gmra.mrb[0].mxu0 %v991
      %v2339 = vpop.f32.mrb[0].mxu0
      %v2340 = vadd.f32 0.0, %v2339
      %v2341 = vpop.f32.mrb[0].mxu0
      %v2342 = vpop.f32.mrb[0].mxu0
      %v2343 = vadd.f32 0.0, %v2342
      %v2344 = vpop.f32.mrb[0].mxu0
      %2345 = vmatprep.mubr.bf16.mxu0 0
      %2346 = vmatmul.mubr.bf16.gmra.mrb[0].mxu0 %v994
      %v2347 = vpop.f32.mrb[0].mxu0
      %v2348 = vadd.f32 0.0, %v2347
      %v2349 = vpop.f32.mrb[0].mxu0
      %v2350 = vpop.f32.mrb[0].mxu0
      %v2351 = vadd.f32 0.0, %v2350
      %v2352 = vpop.f32.mrb[0].mxu0
      %2353 = vmatprep.mubr.bf16.mxu0 0
      %2354 = vmatmul.mubr.bf16.gmra.mrb[0].mxu0 %v997
      %v2355 = vpop.f32.mrb[0].mxu0
      %v2356 = vadd.f32 0.0, %v2355
      %v2357 = vpop.f32.mrb[0].mxu0
      %v2358 = vpop.f32.mrb[0].mxu0
      %v2359 = vadd.f32 0.0, %v2358
      %v2360 = vpop.f32.mrb[0].mxu0
      %2361 = vmatprep.mubr.bf16.mxu0 0
      %2362 = vmatmul.mubr.bf16.gmra.mrb[0].mxu0 %v1000
      %v2363 = vpop.f32.mrb[0].mxu0
      %v2364 = vadd.f32 0.0, %v2363
      %v2365 = vpop.f32.mrb[0].mxu0
      %v2366 = vpop.f32.mrb[0].mxu0
      %v2367 = vadd.f32 0.0, %v2366
      %v2368 = vpop.f32.mrb[0].mxu0
      %2369 = vmatprep.mubr.bf16.mxu0 0
      %2370 = vmatmul.mubr.bf16.gmra.mrb[0].mxu0 %v1003
      %v2371 = vpop.f32.mrb[0].mxu0
      %v2372 = vadd.f32 0.0, %v2371
      %v2373 = vpop.f32.mrb[0].mxu0
      %v2374 = vpop.f32.mrb[0].mxu0
      %v2375 = vadd.f32 0.0, %v2374
      %v2376 = vpop.f32.mrb[0].mxu0
      %2377 = vmatprep.mubr.bf16.mxu0 0
      %2378 = vmatmul.mubr.bf16.gmra.mrb[0].mxu0 %v1006
      %v2379 = vpop.f32.mrb[0].mxu0
      %v2380 = vadd.f32 0.0, %v2379
      %v2381 = vpop.f32.mrb[0].mxu0
      %v2382 = vpop.f32.mrb[0].mxu0
      %v2383 = vadd.f32 0.0, %v2382
      %v2384 = vpop.f32.mrb[0].mxu0
      %2385 = vmatprep.mubr.bf16.mxu0 0
      %2386 = vmatmul.mubr.bf16.gmra.mrb[0].mxu0 %v1621
      %v2387 = vpop.f32.mrb[0].mxu0
      %v2388 = vadd.f32 0.0, %v2387
      %v2389 = vpop.f32.mrb[0].mxu0
      %v2390 = vpop.f32.mrb[0].mxu0
      %v2391 = vadd.f32 0.0, %v2390
      %v2392 = vpop.f32.mrb[0].mxu0
      %2393 = vmatprep.mubr.bf16.mxu0 0
      %2394 = vmatmul.mubr.bf16.gmra.mrb[0].mxu0 %v2236
      %v2395 = vpop.f32.mrb[0].mxu0
      %v2396 = vadd.f32 0.0, %v2395
      %v2397 = vpop.f32.mrb[0].mxu0
      %v2398 = vpop.f32.mrb[0].mxu0
      %v2399 = vadd.f32 0.0, %v2398
      %v2400 = vpop.f32.mrb[0].mxu0
      %2401 = vdwg.mxu0
      %v2402 = vadd.f32 %v2198, %v2276
      %v2403 = vadd.f32 %v2199, %v2279
      %v2404 = vadd.f32 %v2200, %v2284
      %v2405 = vadd.f32 %v2201, %v2287
      %v2406 = vadd.f32 %v2202, %v2292
      %v2407 = vadd.f32 %v2203, %v2295
      %v2408 = vadd.f32 %v2204, %v2300
      %v2409 = vadd.f32 %v2205, %v2303
      %v2410 = vadd.f32 %v2206, %v2308
      %v2411 = vadd.f32 %v2207, %v2311
      %v2412 = vadd.f32 %v2208, %v2316
      %v2413 = vadd.f32 %v2209, %v2319
      %v2414 = vadd.f32 %v2210, %v2324
      %v2415 = vadd.f32 %v2211, %v2327
      %v2416 = vadd.f32 %v2212, %v2332
      %v2417 = vadd.f32 %v2213, %v2335
      %v2418 = vadd.f32 %v2214, %v2340
      %v2419 = vadd.f32 %v2215, %v2343
      %v2420 = vadd.f32 %v2216, %v2348
      %v2421 = vadd.f32 %v2217, %v2351
      %v2422 = vadd.f32 %v2218, %v2356
      %v2423 = vadd.f32 %v2219, %v2359
      %v2424 = vadd.f32 %v2220, %v2364
      %v2425 = vadd.f32 %v2221, %v2367
      %v2426 = vadd.f32 %v2222, %v2372
      %v2427 = vadd.f32 %v2223, %v2375
      %v2428 = vadd.f32 %v2224, %v2380
      %v2429 = vadd.f32 %v2225, %v2383
      %v2430 = vadd.f32 %v2226, %v2388
      %v2431 = vadd.f32 %v2227, %v2391
      %v2432 = vadd.f32 %v2228, %v2396
      %v2433 = vadd.f32 %v2229, %v2399
      %v2434 = vld [vmem:[%s2] sm:$0x1]
      %v2436 = vlaneseq
      %v2437 = vshrl.u32 %v2436, 7
      %v2438 = vsub.s32 0, %v2437
      %v2439 = vrot.slane %v2434, %v2438
      %v2441 = vadd.f32 %v2402, %v2439
      %v2442 = vadd.f32 %v2403, %v2439
      %v2443 = vadd.f32 %v2404, %v2439
      %v2444 = vadd.f32 %v2405, %v2439
      %v2445 = vadd.f32 %v2406, %v2439
      %v2446 = vadd.f32 %v2407, %v2439
      %v2447 = vadd.f32 %v2408, %v2439
      %v2448 = vadd.f32 %v2409, %v2439
      %v2449 = vadd.f32 %v2410, %v2439
      %v2450 = vadd.f32 %v2411, %v2439
      %v2451 = vadd.f32 %v2412, %v2439
      %v2452 = vadd.f32 %v2413, %v2439
      %v2453 = vadd.f32 %v2414, %v2439
      %v2454 = vadd.f32 %v2415, %v2439
      %v2455 = vadd.f32 %v2416, %v2439
      %v2456 = vadd.f32 %v2417, %v2439
      %v2457 = vadd.f32 %v2418, %v2439
      %v2458 = vadd.f32 %v2419, %v2439
      %v2459 = vadd.f32 %v2420, %v2439
      %v2460 = vadd.f32 %v2421, %v2439
      %v2461 = vadd.f32 %v2422, %v2439
      %v2462 = vadd.f32 %v2423, %v2439
      %v2463 = vadd.f32 %v2424, %v2439
      %v2464 = vadd.f32 %v2425, %v2439
      %v2465 = vadd.f32 %v2426, %v2439
      %v2466 = vadd.f32 %v2427, %v2439
      %v2467 = vadd.f32 %v2428, %v2439
      %v2468 = vadd.f32 %v2429, %v2439
      %v2469 = vadd.f32 %v2430, %v2439
      %v2470 = vadd.f32 %v2431, %v2439
      %v2471 = vadd.f32 %v2432, %v2439
      %v2472 = vadd.f32 %v2433, %v2439
      %2473 = vst.msk [vmem:[%s170] sm:$0xff] %vm469, %v2441
      %2474 = vst.msk [vmem:[%s170 + $0x8] sm:$0xff] %vm469, %v2442
      %2475 = vst.msk [vmem:[%s170 + $0x10] sm:$0xff] %vm469, %v2443
      %2476 = vst.msk [vmem:[%s170 + $0x18] sm:$0xff] %vm469, %v2444
      %2477 = vst.msk [vmem:[%s170 + $0x20] sm:$0xff] %vm469, %v2445
      %2478 = vst.msk [vmem:[%s170 + $0x28] sm:$0xff] %vm469, %v2446
      %2479 = vst.msk [vmem:[%s170 + $0x30] sm:$0xff] %vm469, %v2447
      %2480 = vst.msk [vmem:[%s170 + $0x38] sm:$0xff] %vm469, %v2448
      %2481 = vst.msk [vmem:[%s170 + $0x40] sm:$0xff] %vm469, %v2449
      %2482 = vst.msk [vmem:[%s170 + $0x48] sm:$0xff] %vm469, %v2450
      %2483 = vst.msk [vmem:[%s170 + $0x50] sm:$0xff] %vm469, %v2451
      %2484 = vst.msk [vmem:[%s170 + $0x58] sm:$0xff] %vm469, %v2452
      %2485 = vst.msk [vmem:[%s170 + $0x60] sm:$0xff] %vm469, %v2453
      %2486 = vst.msk [vmem:[%s170 + $0x68] sm:$0xff] %vm469, %v2454
      %2487 = vst.msk [vmem:[%s170 + $0x70] sm:$0xff] %vm469, %v2455
      %2488 = vst.msk [vmem:[%s170 + $0x78] sm:$0xff] %vm469, %v2456
      %2489 = vst.msk [vmem:[%s170 + $0x80] sm:$0xff] %vm469, %v2457
      %2490 = vst.msk [vmem:[%s170 + $0x88] sm:$0xff] %vm469, %v2458
      %2491 = vst.msk [vmem:[%s170 + $0x90] sm:$0xff] %vm469, %v2459
      %2492 = vst.msk [vmem:[%s170 + $0x98] sm:$0xff] %vm469, %v2460
      %2493 = vst.msk [vmem:[%s170 + $0xa0] sm:$0xff] %vm469, %v2461
      %2494 = vst.msk [vmem:[%s170 + $0xa8] sm:$0xff] %vm469, %v2462
      %2495 = vst.msk [vmem:[%s170 + $0xb0] sm:$0xff] %vm469, %v2463
      %2496 = vst.msk [vmem:[%s170 + $0xb8] sm:$0xff] %vm469, %v2464
      %2497 = vst.msk [vmem:[%s170 + $0xc0] sm:$0xff] %vm469, %v2465
      %2498 = vst.msk [vmem:[%s170 + $0xc8] sm:$0xff] %vm469, %v2466
      %2499 = vst.msk [vmem:[%s170 + $0xd0] sm:$0xff] %vm469, %v2467
      %2500 = vst.msk [vmem:[%s170 + $0xd8] sm:$0xff] %vm469, %v2468
      %2501 = vst.msk [vmem:[%s170 + $0xe0] sm:$0xff] %vm469, %v2469
      %2502 = vst.msk [vmem:[%s170 + $0xe8] sm:$0xff] %vm469, %v2470
      %2503 = vst.msk [vmem:[%s170 + $0xf0] sm:$0xff] %vm469, %v2471
      %2504 = vst.msk [vmem:[%s170 + $0xf8] sm:$0xff] %vm469, %v2472
      %p2505 = scmp.lt.s32.totalorder %s14, 1
      %s2506 = scalar_select %p2505, %s14, 1
      %s2507 = smul.addr %s2506, 32
      %s2508 = smul.addr %s2507, 8
      %s2509 = scalar_lea.vmem %s3, %s2508
      // Predicated region
      $region33: #{cross_block.12} parent=31 // pred_check
        %p2510 = pneg %p100
      $region34: #{cross_block.12} parent=31 // pred_check_branch
        %2512 = sbr.rel (%p2510) target = $region36
      $region35: #{cross_block.12} parent=31 // pred_region
        _
      $region36: #{cross_block.12} parent=31 // pred_fallthru
        _
    $region32: #{cross_block.12} parent=5 // pred_fallthru
      _
    %p2513 = scmp.le.s32.totalorder 2, %s9
    // Predicated region
    $region37: #{cross_block.12} parent=5 // pred_check
      %p2514 = pneg %p2513
    $region38: #{cross_block.12} parent=5 // pred_check_branch
      %2516 = sbr.rel (%p2514) target = $region40
    $region39: #{cross_block.12} parent=5 // pred_region
      %s2517 = ssub.s32 %s9, 2
      // Predicated region
      $region41: #{cross_block.12} parent=39 // pred_check
        %p2518 = pneg %p106
      $region42: #{cross_block.12} parent=39 // pred_check_branch
        %2520 = sbr.rel (%p2518) target = $region44
      $region43: #{cross_block.12} parent=39 // pred_region
        %p2521 = scmp.lt.s32.totalorder %s15, 1
        %s2522 = scalar_select %p2521, %s15, 1
        %s2523 = smul.addr %s2522, 32
        %s2524 = smul.addr %s2523, 8
        %s2525 = scalar_lea.vmem %s3, %s2524
      $region44: #{cross_block.12} parent=39 // pred_fallthru
        _
    $region40: #{cross_block.12} parent=5 // pred_fallthru
      _
  $region6: #{cross_block.12} parent=0 // loop_footer
    %s13 = sadd.s32 1, %s9
  $region7: #{cross_block.12} parent=0 // loop_footer_branch
    %8 = sbr.rel target = $region3
  $region8: #{cross_block.12} parent=0 // loop_exit
    _

// kernel: cross_block.17
$region0: #{cross_block.17}
  #allocation0 [shape = 'u32[]', space=smem, size = 0x4, offset = 0x4, fixed_abs, tag = 'smem constant byte address 0x4 - core index']
  #allocation1 [shape = 'u32[144,128]{1,0:T(1,128)}', space=vmem, size = 0x12000, scoped, tag = 'internal scratch']
  %s0 = inlined_call_operand.vmem [shape: f32[32,16,8], index: 0, kind: input, shape index: {}]
  %s1 = inlined_call_operand.vmem [shape: f32[32,16,8], index: 1, kind: input, shape index: {}]
  %s2 = inlined_call_operand.vmem [shape: f32[32,16,8], index: 2, kind: input, shape index: {}]
  %s3 = inlined_call_operand.vmem [shape: f32[32,16,8], index: 3, kind: input, shape index: {}]
  %s4 = inlined_call_operand.vmem [shape: f32[32,16,8], index: 4, kind: input, shape index: {}]
  %s5 = inlined_call_operand.vmem [shape: f32[32,16,8], index: 5, kind: input, shape index: {}]
  %s6 = inlined_call_operand.vmem [shape: f32[32,16,8], index: 6, kind: output, shape index: {}]
  %s7 = sld [smem:[#allocation0]]
  $region57: #{cross_block.17} parent=0
    _
  %s9 = ssub.s32 1, %s7
  %s10 = scalar_select 0, %s9, %s7
  loop: start=0, step=1, limit=4
  $region2: #{cross_block.17} parent=0 // loop_pre_header
    _
  $region3: #{cross_block.17} parent=0 // loop_header
    %s12 = sphi 0, %s16
    %p13 = scmp.ge.s32.totalorder %s12, 4
    %s22 = sphi 0, %s24
    %s25 = sphi 0, %s22
    %s26 = sphi 0, %s25
    %s42 = sphi 0, %s26
    %s48 = sphi 0, %s50
    %s51 = sphi 0, %s48
    %s52 = sphi 0, %s51
    %s68 = sphi 0, %s52
    %s74 = sphi 0, %s76
    %s77 = sphi 0, %s74
    %s78 = sphi 0, %s77
    %s94 = sphi 0, %s78
    %s100 = sphi 0, %s102
    %s103 = sphi 0, %s100
    %s104 = sphi 0, %s103
    %s120 = sphi 0, %s104
    %s126 = sphi 0, %s128
    %s129 = sphi 0, %s126
    %s130 = sphi 0, %s129
    %s146 = sphi 0, %s130
    %s152 = sphi 0, %s154
    %s155 = sphi 0, %s152
    %s156 = sphi 0, %s155
    %s172 = sphi 0, %s156
    %s178 = sphi 0, %s180
    %s181 = sphi 0, %s178
    %s182 = sphi 0, %s181
    %s198 = sphi 0, %s182
  $region4: #{cross_block.17} parent=0 // loop_header_branch
    %15 = sbr.rel (%p13) target = $region8
  $region5: #{cross_block.17} parent=0 // loop_body
    %s17 = ssub.s32 %s12, 1
    %s18 = ssub.s32 %s12, 2
    %s19 = sadd.s32 %s12, 1
    %s20 = ssub.s32 %s12, %s19
    %p21 = scmp.eq.s32.totalorder %s20, 0
    %s23 = sadd.s32 %s22, 1
    %s24 = scalar_select %p21, %s22, %s23
    %p27 = pneg %p21
    %p28 = scmp.eq.s32.totalorder %s12, 1
    %p29 = por %p27, %p28
    %p30 = scmp.ne.s32.totalorder %s22, %s25
    %p31 = scmp.eq.s32.totalorder %s12, 0
    %p32 = por %p30, %p31
    %p33 = scmp.ne.s32.totalorder %s22, %s25
    %p34 = scmp.eq.s32.totalorder %s17, 1
    %p35 = por %p33, %p34
    %p36 = scmp.ne.s32.totalorder %s25, %s26
    %p37 = scmp.eq.s32.totalorder %s17, 0
    %p38 = por %p36, %p37
    %p39 = scmp.ne.s32.totalorder %s25, %s26
    %p40 = scmp.eq.s32.totalorder %s18, 1
    %p41 = por %p39, %p40
    %p43 = scmp.ne.s32.totalorder %s26, %s42
    %p44 = scmp.eq.s32.totalorder %s18, 0
    %p45 = por %p43, %p44
    %s46 = ssub.s32 %s12, %s19
    %p47 = scmp.eq.s32.totalorder %s46, 0
    %s49 = sadd.s32 %s48, 1
    %s50 = scalar_select %p47, %s48, %s49
    %p53 = pneg %p47
    %p54 = scmp.eq.s32.totalorder %s12, 1
    %p55 = por %p53, %p54
    %p56 = scmp.ne.s32.totalorder %s48, %s51
    %p57 = scmp.eq.s32.totalorder %s12, 0
    %p58 = por %p56, %p57
    %p59 = scmp.ne.s32.totalorder %s48, %s51
    %p60 = scmp.eq.s32.totalorder %s17, 1
    %p61 = por %p59, %p60
    %p62 = scmp.ne.s32.totalorder %s51, %s52
    %p63 = scmp.eq.s32.totalorder %s17, 0
    %p64 = por %p62, %p63
    %p65 = scmp.ne.s32.totalorder %s51, %s52
    %p66 = scmp.eq.s32.totalorder %s18, 1
    %p67 = por %p65, %p66
    %p69 = scmp.ne.s32.totalorder %s52, %s68
    %p70 = scmp.eq.s32.totalorder %s18, 0
    %p71 = por %p69, %p70
    %s72 = ssub.s32 %s12, %s19
    %p73 = scmp.eq.s32.totalorder %s72, 0
    %s75 = sadd.s32 %s74, 1
    %s76 = scalar_select %p73, %s74, %s75
    %p79 = pneg %p73
    %p80 = scmp.eq.s32.totalorder %s12, 1
    %p81 = por %p79, %p80
    %p82 = scmp.ne.s32.totalorder %s74, %s77
    %p83 = scmp.eq.s32.totalorder %s12, 0
    %p84 = por %p82, %p83
    %p85 = scmp.ne.s32.totalorder %s74, %s77
    %p86 = scmp.eq.s32.totalorder %s17, 1
    %p87 = por %p85, %p86
    %p88 = scmp.ne.s32.totalorder %s77, %s78
    %p89 = scmp.eq.s32.totalorder %s17, 0
    %p90 = por %p88, %p89
    %p91 = scmp.ne.s32.totalorder %s77, %s78
    %p92 = scmp.eq.s32.totalorder %s18, 1
    %p93 = por %p91, %p92
    %p95 = scmp.ne.s32.totalorder %s78, %s94
    %p96 = scmp.eq.s32.totalorder %s18, 0
    %p97 = por %p95, %p96
    %s98 = ssub.s32 %s12, %s19
    %p99 = scmp.eq.s32.totalorder %s98, 0
    %s101 = sadd.s32 %s100, 1
    %s102 = scalar_select %p99, %s100, %s101
    %p105 = pneg %p99
    %p106 = scmp.eq.s32.totalorder %s12, 1
    %p107 = por %p105, %p106
    %p108 = scmp.ne.s32.totalorder %s100, %s103
    %p109 = scmp.eq.s32.totalorder %s12, 0
    %p110 = por %p108, %p109
    %p111 = scmp.ne.s32.totalorder %s100, %s103
    %p112 = scmp.eq.s32.totalorder %s17, 1
    %p113 = por %p111, %p112
    %p114 = scmp.ne.s32.totalorder %s103, %s104
    %p115 = scmp.eq.s32.totalorder %s17, 0
    %p116 = por %p114, %p115
    %p117 = scmp.ne.s32.totalorder %s103, %s104
    %p118 = scmp.eq.s32.totalorder %s18, 1
    %p119 = por %p117, %p118
    %p121 = scmp.ne.s32.totalorder %s104, %s120
    %p122 = scmp.eq.s32.totalorder %s18, 0
    %p123 = por %p121, %p122
    %s124 = ssub.s32 %s12, %s19
    %p125 = scmp.eq.s32.totalorder %s124, 0
    %s127 = sadd.s32 %s126, 1
    %s128 = scalar_select %p125, %s126, %s127
    %p131 = pneg %p125
    %p132 = scmp.eq.s32.totalorder %s12, 1
    %p133 = por %p131, %p132
    %p134 = scmp.ne.s32.totalorder %s126, %s129
    %p135 = scmp.eq.s32.totalorder %s12, 0
    %p136 = por %p134, %p135
    %p137 = scmp.ne.s32.totalorder %s126, %s129
    %p138 = scmp.eq.s32.totalorder %s17, 1
    %p139 = por %p137, %p138
    %p140 = scmp.ne.s32.totalorder %s129, %s130
    %p141 = scmp.eq.s32.totalorder %s17, 0
    %p142 = por %p140, %p141
    %p143 = scmp.ne.s32.totalorder %s129, %s130
    %p144 = scmp.eq.s32.totalorder %s18, 1
    %p145 = por %p143, %p144
    %p147 = scmp.ne.s32.totalorder %s130, %s146
    %p148 = scmp.eq.s32.totalorder %s18, 0
    %p149 = por %p147, %p148
    %s150 = ssub.s32 %s12, %s19
    %p151 = scmp.eq.s32.totalorder %s150, 0
    %s153 = sadd.s32 %s152, 1
    %s154 = scalar_select %p151, %s152, %s153
    %p157 = pneg %p151
    %p158 = scmp.eq.s32.totalorder %s12, 1
    %p159 = por %p157, %p158
    %p160 = scmp.ne.s32.totalorder %s152, %s155
    %p161 = scmp.eq.s32.totalorder %s12, 0
    %p162 = por %p160, %p161
    %p163 = scmp.ne.s32.totalorder %s152, %s155
    %p164 = scmp.eq.s32.totalorder %s17, 1
    %p165 = por %p163, %p164
    %p166 = scmp.ne.s32.totalorder %s155, %s156
    %p167 = scmp.eq.s32.totalorder %s17, 0
    %p168 = por %p166, %p167
    %p169 = scmp.ne.s32.totalorder %s155, %s156
    %p170 = scmp.eq.s32.totalorder %s18, 1
    %p171 = por %p169, %p170
    %p173 = scmp.ne.s32.totalorder %s156, %s172
    %p174 = scmp.eq.s32.totalorder %s18, 0
    %p175 = por %p173, %p174
    %s176 = ssub.s32 %s12, %s19
    %p177 = scmp.eq.s32.totalorder %s176, 0
    %s179 = sadd.s32 %s178, 1
    %s180 = scalar_select %p177, %s178, %s179
    %p183 = pneg %p177
    %p184 = scmp.eq.s32.totalorder %s12, 1
    %p185 = por %p183, %p184
    %p186 = scmp.ne.s32.totalorder %s178, %s181
    %p187 = scmp.eq.s32.totalorder %s12, 0
    %p188 = por %p186, %p187
    %p189 = scmp.ne.s32.totalorder %s178, %s181
    %p190 = scmp.eq.s32.totalorder %s17, 1
    %p191 = por %p189, %p190
    %p192 = scmp.ne.s32.totalorder %s181, %s182
    %p193 = scmp.eq.s32.totalorder %s17, 0
    %p194 = por %p192, %p193
    %p195 = scmp.ne.s32.totalorder %s181, %s182
    %p196 = scmp.eq.s32.totalorder %s18, 1
    %p197 = por %p195, %p196
    %p199 = scmp.ne.s32.totalorder %s182, %s198
    %p200 = scmp.eq.s32.totalorder %s18, 0
    %p201 = por %p199, %p200
    %p202 = scmp.le.s32.totalorder 1, %s12
    %p203 = scmp.lt.s32.totalorder %s12, 3
    %p204 = pnand %p202, %p203
    %p205 = pneg %p204
    // Predicated region
    $region9: #{cross_block.17} parent=5 // pred_check
      _
    $region10: #{cross_block.17} parent=5 // pred_check_branch
      %207 = sbr.rel (%p204) target = $region12
    $region11: #{cross_block.17} parent=5 // pred_region
      %s208 = ssub.s32 %s12, 1
    $region12: #{cross_block.17} parent=5 // pred_fallthru
      _
    %p209 = scmp.lt.s32.totalorder %s12, 2
    // Predicated region
    $region13: #{cross_block.17} parent=5 // pred_check
      %p210 = pneg %p209
    $region14: #{cross_block.17} parent=5 // pred_check_branch
      %212 = sbr.rel (%p210) target = $region16
    $region15: #{cross_block.17} parent=5 // pred_region
      // Predicated region
      $region17: #{cross_block.17} parent=15 // pred_check
        %p213 = pneg %p32
      $region18: #{cross_block.17} parent=15 // pred_check_branch
        %215 = sbr.rel (%p213) target = $region20
      $region19: #{cross_block.17} parent=15 // pred_region
        %s216 = smul.u32 16, %s12
        %p217 = scmp.lt.s32.totalorder %s216, 31
        %s218 = scalar_select %p217, %s216, 31
        %s219 = smul.addr %s218, 2
        %s220 = smul.addr %s219, 8
        %s221 = scalar_lea.vmem %s0, %s220
        %s222 = smul.u32 16, %s12
      $region20: #{cross_block.17} parent=15 // pred_fallthru
        _
      // Predicated region
      $region21: #{cross_block.17} parent=15 // pred_check
        %p223 = pneg %p58
      $region22: #{cross_block.17} parent=15 // pred_check_branch
        %225 = sbr.rel (%p223) target = $region24
      $region23: #{cross_block.17} parent=15 // pred_region
        %s226 = smul.u32 16, %s12
        %p227 = scmp.lt.s32.totalorder %s226, 31
        %s228 = scalar_select %p227, %s226, 31
        %s229 = smul.addr %s228, 2
        %s230 = smul.addr %s229, 8
        %s231 = scalar_lea.vmem %s1, %s230
        %s232 = smul.u32 16, %s12
      $region24: #{cross_block.17} parent=15 // pred_fallthru
        _
      // Predicated region
      $region25: #{cross_block.17} parent=15 // pred_check
        %p233 = pneg %p84
      $region26: #{cross_block.17} parent=15 // pred_check_branch
        %235 = sbr.rel (%p233) target = $region28
      $region27: #{cross_block.17} parent=15 // pred_region
        %s236 = smul.u32 16, %s12
        %p237 = scmp.lt.s32.totalorder %s236, 31
        %s238 = scalar_select %p237, %s236, 31
        %s239 = smul.addr %s238, 2
        %s240 = smul.addr %s239, 8
        %s241 = scalar_lea.vmem %s2, %s240
        %s242 = smul.u32 16, %s12
      $region28: #{cross_block.17} parent=15 // pred_fallthru
        _
      // Predicated region
      $region29: #{cross_block.17} parent=15 // pred_check
        %p243 = pneg %p110
      $region30: #{cross_block.17} parent=15 // pred_check_branch
        %245 = sbr.rel (%p243) target = $region32
      $region31: #{cross_block.17} parent=15 // pred_region
        %s246 = smul.u32 16, %s12
        %p247 = scmp.lt.s32.totalorder %s246, 31
        %s248 = scalar_select %p247, %s246, 31
        %s249 = smul.addr %s248, 2
        %s250 = smul.addr %s249, 8
        %s251 = scalar_lea.vmem %s3, %s250
        %s252 = smul.u32 16, %s12
      $region32: #{cross_block.17} parent=15 // pred_fallthru
        _
      // Predicated region
      $region33: #{cross_block.17} parent=15 // pred_check
        %p253 = pneg %p136
      $region34: #{cross_block.17} parent=15 // pred_check_branch
        %255 = sbr.rel (%p253) target = $region36
      $region35: #{cross_block.17} parent=15 // pred_region
        %s256 = smul.u32 16, %s12
        %p257 = scmp.lt.s32.totalorder %s256, 31
        %s258 = scalar_select %p257, %s256, 31
        %s259 = smul.addr %s258, 2
        %s260 = smul.addr %s259, 8
        %s261 = scalar_lea.vmem %s4, %s260
        %s262 = smul.u32 16, %s12
      $region36: #{cross_block.17} parent=15 // pred_fallthru
        _
      // Predicated region
      $region37: #{cross_block.17} parent=15 // pred_check
        %p263 = pneg %p162
      $region38: #{cross_block.17} parent=15 // pred_check_branch
        %265 = sbr.rel (%p263) target = $region40
      $region39: #{cross_block.17} parent=15 // pred_region
        %s266 = smul.u32 16, %s12
        %p267 = scmp.lt.s32.totalorder %s266, 31
        %s268 = scalar_select %p267, %s266, 31
        %s269 = smul.addr %s268, 2
        %s270 = smul.addr %s269, 8
        %s271 = scalar_lea.vmem %s5, %s270
        %s272 = smul.u32 16, %s12
      $region40: #{cross_block.17} parent=15 // pred_fallthru
        _
    $region16: #{cross_block.17} parent=5 // pred_fallthru
      _
    %p273 = scmp.le.s32.totalorder 1, %s12
    %p274 = scmp.lt.s32.totalorder %s12, 3
    %p275 = pnand %p273, %p274
    %p276 = pneg %p275
    // Predicated region
    $region41: #{cross_block.17} parent=5 // pred_check
      _
    $region42: #{cross_block.17} parent=5 // pred_check_branch
      %278 = sbr.rel (%p275) target = $region44
    $region43: #{cross_block.17} parent=5 // pred_region
      %s279 = ssub.s32 %s12, 1
      %s280 = smul.u32 16, %s17
      %p281 = scmp.lt.s32.totalorder %s280, 31
      %s282 = scalar_select %p281, %s280, 31
      %s283 = smul.addr %s282, 2
      %s284 = smul.addr %s283, 8
      %s285 = scalar_lea.vmem %s0, %s284
      %p286 = pneg %p38
      %p287 = pneg %p35
      %s288 = smul.u32 16, %s17
      %p289 = scmp.lt.s32.totalorder %s288, 31
      %s290 = scalar_select %p289, %s288, 31
      %s291 = smul.addr %s290, 2
      %s292 = smul.addr %s291, 8
      %s293 = scalar_lea.vmem %s1, %s292
      %p294 = pneg %p64
      %p295 = pneg %p61
      %s296 = smul.u32 16, %s17
      %p297 = scmp.lt.s32.totalorder %s296, 31
      %s298 = scalar_select %p297, %s296, 31
      %s299 = smul.addr %s298, 2
      %s300 = smul.addr %s299, 8
      %s301 = scalar_lea.vmem %s2, %s300
      %p302 = pneg %p90
      %p303 = pneg %p87
      %s304 = smul.u32 16, %s17
      %p305 = scmp.lt.s32.totalorder %s304, 31
      %s306 = scalar_select %p305, %s304, 31
      %s307 = smul.addr %s306, 2
      %s308 = smul.addr %s307, 8
      %s309 = scalar_lea.vmem %s3, %s308
      %p310 = pneg %p116
      %p311 = pneg %p113
      %s312 = smul.u32 16, %s17
      %p313 = scmp.lt.s32.totalorder %s312, 31
      %s314 = scalar_select %p313, %s312, 31
      %s315 = smul.addr %s314, 2
      %s316 = smul.addr %s315, 8
      %s317 = scalar_lea.vmem %s4, %s316
      %p318 = pneg %p142
      %p319 = pneg %p139
      %s320 = smul.u32 16, %s17
      %p321 = scmp.lt.s32.totalorder %s320, 31
      %s322 = scalar_select %p321, %s320, 31
      %s323 = smul.addr %s322, 2
      %s324 = smul.addr %s323, 8
      %s325 = scalar_lea.vmem %s5, %s324
      %p326 = pneg %p168
      %p327 = pneg %p165
      %p328 = pneg %p194
      %p329 = pneg %p191
      %s330 = smul.u32 16, %s17
      %p331 = scmp.lt.s32.totalorder %s330, 31
      %s332 = scalar_select %p331, %s330, 31
      %s333 = smul.addr %s332, 2
      %s334 = smul.addr %s333, 8
      %s335 = scalar_lea.vmem %s6, %s334
      %s336 = smul.u32 16, %s17
      %p337 = scmp.lt.s32.totalorder %s336, 31
      %s338 = scalar_select %p337, %s336, 31
      %s339 = smul.addr %s338, 2
      %s340 = smul.addr %s339, 8
      %s341 = scalar_lea.vmem %s0, %s340
      %s342 = smul.u32 16, %s17
      %s343 = smul.u32 16, %s17
      %p344 = scmp.lt.s32.totalorder %s343, 31
      %s345 = scalar_select %p344, %s343, 31
      %s346 = smul.addr %s345, 2
      %s347 = smul.addr %s346, 8
      %s348 = scalar_lea.vmem %s1, %s347
      %s349 = smul.u32 16, %s17
      %s350 = smul.u32 16, %s17
      %p351 = scmp.lt.s32.totalorder %s350, 31
      %s352 = scalar_select %p351, %s350, 31
      %s353 = smul.addr %s352, 2
      %s354 = smul.addr %s353, 8
      %s355 = scalar_lea.vmem %s2, %s354
      %s356 = smul.u32 16, %s17
      %s357 = smul.u32 16, %s17
      %p358 = scmp.lt.s32.totalorder %s357, 31
      %s359 = scalar_select %p358, %s357, 31
      %s360 = smul.addr %s359, 2
      %s361 = smul.addr %s360, 8
      %s362 = scalar_lea.vmem %s3, %s361
      %s363 = smul.u32 16, %s17
      %s364 = smul.u32 16, %s17
      %p365 = scmp.lt.s32.totalorder %s364, 31
      %s366 = scalar_select %p365, %s364, 31
      %s367 = smul.addr %s366, 2
      %s368 = smul.addr %s367, 8
      %s369 = scalar_lea.vmem %s4, %s368
      %s370 = smul.u32 16, %s17
      %s371 = smul.u32 16, %s17
      %p372 = scmp.lt.s32.totalorder %s371, 31
      %s373 = scalar_select %p372, %s371, 31
      %s374 = smul.addr %s373, 2
      %s375 = smul.addr %s374, 8
      %s376 = scalar_lea.vmem %s5, %s375
      %s377 = smul.u32 16, %s17
      %s378 = smul.u32 16, %s17
      %p379 = scmp.lt.s32.totalorder %s378, 31
      %s380 = scalar_select %p379, %s378, 31
      %s381 = smul.addr %s380, 2
      %s382 = smul.addr %s381, 8
      %s383 = scalar_lea.vmem %s6, %s382
      %s384 = smul.u32 16, %s17
      %v386 = vld [vmem:[%s341] sm:$0xff]
      %v387 = vld [vmem:[%s341 + $0x8] sm:$0xff]
      %v388 = vld [vmem:[%s341 + $0x10] sm:$0xff]
      %v389 = vld [vmem:[%s341 + $0x18] sm:$0xff]
      %v390 = vld [vmem:[%s341 + $0x20] sm:$0xff]
      %v391 = vld [vmem:[%s341 + $0x28] sm:$0xff]
      %v392 = vld [vmem:[%s341 + $0x30] sm:$0xff]
      %v393 = vld [vmem:[%s341 + $0x38] sm:$0xff]
      %v394 = vld [vmem:[%s341 + $0x40] sm:$0xff]
      %v395 = vld [vmem:[%s341 + $0x48] sm:$0xff]
      %v396 = vld [vmem:[%s341 + $0x50] sm:$0xff]
      %v397 = vld [vmem:[%s341 + $0x58] sm:$0xff]
      %v398 = vld [vmem:[%s341 + $0x60] sm:$0xff]
      %v399 = vld [vmem:[%s341 + $0x68] sm:$0xff]
      %v400 = vld [vmem:[%s341 + $0x70] sm:$0xff]
      %v401 = vld [vmem:[%s341 + $0x78] sm:$0xff]
      %v402 = vld [vmem:[%s341 + $0x80] sm:$0xff]
      %v403 = vld [vmem:[%s341 + $0x88] sm:$0xff]
      %v404 = vld [vmem:[%s341 + $0x90] sm:$0xff]
      %v405 = vld [vmem:[%s341 + $0x98] sm:$0xff]
      %v406 = vld [vmem:[%s341 + $0xa0] sm:$0xff]
      %v407 = vld [vmem:[%s341 + $0xa8] sm:$0xff]
      %v408 = vld [vmem:[%s341 + $0xb0] sm:$0xff]
      %v409 = vld [vmem:[%s341 + $0xb8] sm:$0xff]
      %v410 = vld [vmem:[%s341 + $0xc0] sm:$0xff]
      %v411 = vld [vmem:[%s341 + $0xc8] sm:$0xff]
      %v412 = vld [vmem:[%s341 + $0xd0] sm:$0xff]
      %v413 = vld [vmem:[%s341 + $0xd8] sm:$0xff]
      %v414 = vld [vmem:[%s341 + $0xe0] sm:$0xff]
      %v415 = vld [vmem:[%s341 + $0xe8] sm:$0xff]
      %v416 = vld [vmem:[%s341 + $0xf0] sm:$0xff]
      %v417 = vld [vmem:[%s341 + $0xf8] sm:$0xff]
      %v418 = vpack.c.bf16 %v387, %v386
      %v419 = vpack.c.bf16 %v389, %v388
      %v420 = vpack.c.bf16 %v391, %v390
      %v421 = vpack.c.bf16 %v393, %v392
      %v422 = vpack.c.bf16 %v395, %v394
      %v423 = vpack.c.bf16 %v397, %v396
      %v424 = vpack.c.bf16 %v399, %v398
      %v425 = vpack.c.bf16 %v401, %v400
      %v426 = vpack.c.bf16 %v403, %v402
      %v427 = vpack.c.bf16 %v405, %v404
      %v428 = vpack.c.bf16 %v407, %v406
      %v429 = vpack.c.bf16 %v409, %v408
      %v430 = vpack.c.bf16 %v411, %v410
      %v431 = vpack.c.bf16 %v413, %v412
      %v432 = vpack.c.bf16 %v415, %v414
      %v433 = vpack.c.bf16 %v417, %v416
      %v434 = vld [vmem:[%s348] sm:$0xff]
      %v435 = vld [vmem:[%s348 + $0x8] sm:$0xff]
      %v436 = vld [vmem:[%s348 + $0x10] sm:$0xff]
      %v437 = vld [vmem:[%s348 + $0x18] sm:$0xff]
      %v438 = vld [vmem:[%s348 + $0x20] sm:$0xff]
      %v439 = vld [vmem:[%s348 + $0x28] sm:$0xff]
      %v440 = vld [vmem:[%s348 + $0x30] sm:$0xff]
      %v441 = vld [vmem:[%s348 + $0x38] sm:$0xff]
      %v442 = vld [vmem:[%s348 + $0x40] sm:$0xff]
      %v443 = vld [vmem:[%s348 + $0x48] sm:$0xff]
      %v444 = vld [vmem:[%s348 + $0x50] sm:$0xff]
      %v445 = vld [vmem:[%s348 + $0x58] sm:$0xff]
      %v446 = vld [vmem:[%s348 + $0x60] sm:$0xff]
      %v447 = vld [vmem:[%s348 + $0x68] sm:$0xff]
      %v448 = vld [vmem:[%s348 + $0x70] sm:$0xff]
      %v449 = vld [vmem:[%s348 + $0x78] sm:$0xff]
      %v450 = vld [vmem:[%s348 + $0x80] sm:$0xff]
      %v451 = vld [vmem:[%s348 + $0x88] sm:$0xff]
      %v452 = vld [vmem:[%s348 + $0x90] sm:$0xff]
      %v453 = vld [vmem:[%s348 + $0x98] sm:$0xff]
      %v454 = vld [vmem:[%s348 + $0xa0] sm:$0xff]
      %v455 = vld [vmem:[%s348 + $0xa8] sm:$0xff]
      %v456 = vld [vmem:[%s348 + $0xb0] sm:$0xff]
      %v457 = vld [vmem:[%s348 + $0xb8] sm:$0xff]
      %v458 = vld [vmem:[%s348 + $0xc0] sm:$0xff]
      %v459 = vld [vmem:[%s348 + $0xc8] sm:$0xff]
      %v460 = vld [vmem:[%s348 + $0xd0] sm:$0xff]
      %v461 = vld [vmem:[%s348 + $0xd8] sm:$0xff]
      %v462 = vld [vmem:[%s348 + $0xe0] sm:$0xff]
      %v463 = vld [vmem:[%s348 + $0xe8] sm:$0xff]
      %v464 = vld [vmem:[%s348 + $0xf0] sm:$0xff]
      %v465 = vld [vmem:[%s348 + $0xf8] sm:$0xff]
      %v466 = vpack.c.bf16 %v435, %v434
      %v467 = vpack.c.bf16 %v437, %v436
      %v468 = vpack.c.bf16 %v439, %v438
      %v469 = vpack.c.bf16 %v441, %v440
      %v470 = vpack.c.bf16 %v443, %v442
      %v471 = vpack.c.bf16 %v445, %v444
      %v472 = vpack.c.bf16 %v447, %v446
      %v473 = vpack.c.bf16 %v449, %v448
      %v474 = vpack.c.bf16 %v451, %v450
      %v475 = vpack.c.bf16 %v453, %v452
      %v476 = vpack.c.bf16 %v455, %v454
      %v477 = vpack.c.bf16 %v457, %v456
      %v478 = vpack.c.bf16 %v459, %v458
      %v479 = vpack.c.bf16 %v461, %v460
      %v480 = vpack.c.bf16 %v463, %v462
      %v481 = vpack.c.bf16 %v465, %v464
      %v482 = vld [vmem:[%s355] sm:$0xff]
      %v483 = vld [vmem:[%s355 + $0x8] sm:$0xff]
      %v484 = vld [vmem:[%s355 + $0x10] sm:$0xff]
      %v485 = vld [vmem:[%s355 + $0x18] sm:$0xff]
      %v486 = vld [vmem:[%s355 + $0x20] sm:$0xff]
      %v487 = vld [vmem:[%s355 + $0x28] sm:$0xff]
      %v488 = vld [vmem:[%s355 + $0x30] sm:$0xff]
      %v489 = vld [vmem:[%s355 + $0x38] sm:$0xff]
      %v490 = vld [vmem:[%s355 + $0x40] sm:$0xff]
      %v491 = vld [vmem:[%s355 + $0x48] sm:$0xff]
      %v492 = vld [vmem:[%s355 + $0x50] sm:$0xff]
      %v493 = vld [vmem:[%s355 + $0x58] sm:$0xff]
      %v494 = vld [vmem:[%s355 + $0x60] sm:$0xff]
      %v495 = vld [vmem:[%s355 + $0x68] sm:$0xff]
      %v496 = vld [vmem:[%s355 + $0x70] sm:$0xff]
      %v497 = vld [vmem:[%s355 + $0x78] sm:$0xff]
      %v498 = vld [vmem:[%s355 + $0x80] sm:$0xff]
      %v499 = vld [vmem:[%s355 + $0x88] sm:$0xff]
      %v500 = vld [vmem:[%s355 + $0x90] sm:$0xff]
      %v501 = vld [vmem:[%s355 + $0x98] sm:$0xff]
      %v502 = vld [vmem:[%s355 + $0xa0] sm:$0xff]
      %v503 = vld [vmem:[%s355 + $0xa8] sm:$0xff]
      %v504 = vld [vmem:[%s355 + $0xb0] sm:$0xff]
      %v505 = vld [vmem:[%s355 + $0xb8] sm:$0xff]
      %v506 = vld [vmem:[%s355 + $0xc0] sm:$0xff]
      %v507 = vld [vmem:[%s355 + $0xc8] sm:$0xff]
      %v508 = vld [vmem:[%s355 + $0xd0] sm:$0xff]
      %v509 = vld [vmem:[%s355 + $0xd8] sm:$0xff]
      %v510 = vld [vmem:[%s355 + $0xe0] sm:$0xff]
      %v511 = vld [vmem:[%s355 + $0xe8] sm:$0xff]
      %v512 = vld [vmem:[%s355 + $0xf0] sm:$0xff]
      %v513 = vld [vmem:[%s355 + $0xf8] sm:$0xff]
      %v514 = vpack.c.bf16 %v483, %v482
      %v515 = vpack.c.bf16 %v485, %v484
      %v516 = vpack.c.bf16 %v487, %v486
      %v517 = vpack.c.bf16 %v489, %v488
      %v518 = vpack.c.bf16 %v491, %v490
      %v519 = vpack.c.bf16 %v493, %v492
      %v520 = vpack.c.bf16 %v495, %v494
      %v521 = vpack.c.bf16 %v497, %v496
      %v522 = vpack.c.bf16 %v499, %v498
      %v523 = vpack.c.bf16 %v501, %v500
      %v524 = vpack.c.bf16 %v503, %v502
      %v525 = vpack.c.bf16 %v505, %v504
      %v526 = vpack.c.bf16 %v507, %v506
      %v527 = vpack.c.bf16 %v509, %v508
      %v528 = vpack.c.bf16 %v511, %v510
      %v529 = vpack.c.bf16 %v513, %v512
      %v530 = vld [vmem:[%s362] sm:$0xff]
      %v531 = vld [vmem:[%s362 + $0x8] sm:$0xff]
      %v532 = vld [vmem:[%s362 + $0x10] sm:$0xff]
      %v533 = vld [vmem:[%s362 + $0x18] sm:$0xff]
      %v534 = vld [vmem:[%s362 + $0x20] sm:$0xff]
      %v535 = vld [vmem:[%s362 + $0x28] sm:$0xff]
      %v536 = vld [vmem:[%s362 + $0x30] sm:$0xff]
      %v537 = vld [vmem:[%s362 + $0x38] sm:$0xff]
      %v538 = vld [vmem:[%s362 + $0x40] sm:$0xff]
      %v539 = vld [vmem:[%s362 + $0x48] sm:$0xff]
      %v540 = vld [vmem:[%s362 + $0x50] sm:$0xff]
      %v541 = vld [vmem:[%s362 + $0x58] sm:$0xff]
      %v542 = vld [vmem:[%s362 + $0x60] sm:$0xff]
      %v543 = vld [vmem:[%s362 + $0x68] sm:$0xff]
      %v544 = vld [vmem:[%s362 + $0x70] sm:$0xff]
      %v545 = vld [vmem:[%s362 + $0x78] sm:$0xff]
      %v546 = vld [vmem:[%s362 + $0x80] sm:$0xff]
      %v547 = vld [vmem:[%s362 + $0x88] sm:$0xff]
      %v548 = vld [vmem:[%s362 + $0x90] sm:$0xff]
      %v549 = vld [vmem:[%s362 + $0x98] sm:$0xff]
      %v550 = vld [vmem:[%s362 + $0xa0] sm:$0xff]
      %v551 = vld [vmem:[%s362 + $0xa8] sm:$0xff]
      %v552 = vld [vmem:[%s362 + $0xb0] sm:$0xff]
      %v553 = vld [vmem:[%s362 + $0xb8] sm:$0xff]
      %v554 = vld [vmem:[%s362 + $0xc0] sm:$0xff]
      %v555 = vld [vmem:[%s362 + $0xc8] sm:$0xff]
      %v556 = vld [vmem:[%s362 + $0xd0] sm:$0xff]
      %v557 = vld [vmem:[%s362 + $0xd8] sm:$0xff]
      %v558 = vld [vmem:[%s362 + $0xe0] sm:$0xff]
      %v559 = vld [vmem:[%s362 + $0xe8] sm:$0xff]
      %v560 = vld [vmem:[%s362 + $0xf0] sm:$0xff]
      %v561 = vld [vmem:[%s362 + $0xf8] sm:$0xff]
      %v562 = vpack.c.bf16 %v531, %v530
      %v563 = vpack.c.bf16 %v533, %v532
      %v564 = vpack.c.bf16 %v535, %v534
      %v565 = vpack.c.bf16 %v537, %v536
      %v566 = vpack.c.bf16 %v539, %v538
      %v567 = vpack.c.bf16 %v541, %v540
      %v568 = vpack.c.bf16 %v543, %v542
      %v569 = vpack.c.bf16 %v545, %v544
      %v570 = vpack.c.bf16 %v547, %v546
      %v571 = vpack.c.bf16 %v549, %v548
      %v572 = vpack.c.bf16 %v551, %v550
      %v573 = vpack.c.bf16 %v553, %v552
      %v574 = vpack.c.bf16 %v555, %v554
      %v575 = vpack.c.bf16 %v557, %v556
      %v576 = vpack.c.bf16 %v559, %v558
      %v577 = vpack.c.bf16 %v561, %v560
      %vm578 = vcmask 64512
      %v580 = vsel %vm578, %v418, 0
      %v583 = vsel %vm578, %v466, 0
      %585 = vmatprep.subr.bf16.mxu0 0
      %586 = vmatpush1.bf16.xpose.msra.mxu0 %v583
      %587 = vmatprep.subr.bf16.mxu0 0
      %588 = vmatpush1.bf16.xpose.msra.mxu0 0
      %589 = vmatprep.subr.bf16.mxu0 0
      %590 = vmatpush1.bf16.xpose.msra.mxu0 0
      %591 = vmatprep.subr.bf16.mxu0 0
      %592 = vmatpush1.bf16.xpose.msra.mxu0 0
      %593 = vmatprep.subr.bf16.mxu0 0
      %594 = vmatpush1.bf16.xpose.msra.mxu0 0
      %595 = vmatprep.subr.bf16.mxu0 0
      %596 = vmatpush1.bf16.xpose.msra.mxu0 0
      %597 = vmatprep.subr.bf16.mxu0 0
      %598 = vmatpush1.bf16.xpose.msra.mxu0 0
      %599 = vmatprep.subr.bf16.mxu0 0
      %600 = vmatpush1.bf16.xpose.msra.mxu0 0
      %601 = vmatprep.subr.bf16.mxu0 0
      %602 = vmatpush1.bf16.xpose.msra.mxu0 0
      %603 = vmatprep.subr.bf16.mxu0 0
      %604 = vmatpush1.bf16.xpose.msra.mxu0 0
      %605 = vmatprep.subr.bf16.mxu0 0
      %606 = vmatpush1.bf16.xpose.msra.mxu0 0
      %607 = vmatprep.subr.bf16.mxu0 0
      %608 = vmatpush1.bf16.xpose.msra.mxu0 0
      %609 = vmatprep.subr.bf16.mxu0 0
      %610 = vmatpush1.bf16.xpose.msra.mxu0 0
      %611 = vmatprep.subr.bf16.mxu0 0
      %612 = vmatpush1.bf16.xpose.msra.mxu0 0
      %613 = vmatprep.subr.bf16.mxu0 0
      %614 = vmatpush1.bf16.xpose.msra.mxu0 0
      %615 = vmatprep.subr.bf16.mxu0 0
      %616 = vmatpush1.bf16.xpose.msra.mxu0 0
      %617 = vmatprep.mubr.bf16.mxu0 0
      %618 = vmatmul.mubr.bf16.gmra.mrb[0].mxu0 %v580
      %v619 = vpop.f32.mrb[0].mxu0
      %v620 = vadd.f32 0.0, %v619
      %v621 = vpop.f32.mrb[0].mxu0
      %v622 = vpop.f32.mrb[0].mxu0
      %v623 = vadd.f32 0.0, %v622
      %v624 = vpop.f32.mrb[0].mxu0
      %625 = vdwg.mxu0
      %v627 = vsel %vm578, %v419, 0
      %v630 = vsel %vm578, %v467, 0
      %632 = vmatprep.subr.bf16.mxu0 0
      %633 = vmatpush1.bf16.xpose.msra.mxu0 %v630
      %634 = vmatprep.subr.bf16.mxu0 0
      %635 = vmatpush1.bf16.xpose.msra.mxu0 0
      %636 = vmatprep.subr.bf16.mxu0 0
      %637 = vmatpush1.bf16.xpose.msra.mxu0 0
      %638 = vmatprep.subr.bf16.mxu0 0
      %639 = vmatpush1.bf16.xpose.msra.mxu0 0
      %640 = vmatprep.subr.bf16.mxu0 0
      %641 = vmatpush1.bf16.xpose.msra.mxu0 0
      %642 = vmatprep.subr.bf16.mxu0 0
      %643 = vmatpush1.bf16.xpose.msra.mxu0 0
      %644 = vmatprep.subr.bf16.mxu0 0
      %645 = vmatpush1.bf16.xpose.msra.mxu0 0
      %646 = vmatprep.subr.bf16.mxu0 0
      %647 = vmatpush1.bf16.xpose.msra.mxu0 0
      %648 = vmatprep.subr.bf16.mxu0 0
      %649 = vmatpush1.bf16.xpose.msra.mxu0 0
      %650 = vmatprep.subr.bf16.mxu0 0
      %651 = vmatpush1.bf16.xpose.msra.mxu0 0
      %652 = vmatprep.subr.bf16.mxu0 0
      %653 = vmatpush1.bf16.xpose.msra.mxu0 0
      %654 = vmatprep.subr.bf16.mxu0 0
      %655 = vmatpush1.bf16.xpose.msra.mxu0 0
      %656 = vmatprep.subr.bf16.mxu0 0
      %657 = vmatpush1.bf16.xpose.msra.mxu0 0
      %658 = vmatprep.subr.bf16.mxu0 0
      %659 = vmatpush1.bf16.xpose.msra.mxu0 0
      %660 = vmatprep.subr.bf16.mxu0 0
      %661 = vmatpush1.bf16.xpose.msra.mxu0 0
      %662 = vmatprep.subr.bf16.mxu0 0
      %663 = vmatpush1.bf16.xpose.msra.mxu0 0
      %664 = vmatprep.mubr.bf16.mxu0 0
      %665 = vmatmul.mubr.bf16.gmra.mrb[0].mxu0 %v627
      %v666 = vpop.f32.mrb[0].mxu0
      %v667 = vadd.f32 0.0, %v666
      %v668 = vpop.f32.mrb[0].mxu0
      %v669 = vpop.f32.mrb[0].mxu0
      %v670 = vadd.f32 0.0, %v669
      %v671 = vpop.f32.mrb[0].mxu0
      %672 = vdwg.mxu0
      %v674 = vsel %vm578, %v420, 0
      %v677 = vsel %vm578, %v468, 0
      %679 = vmatprep.subr.bf16.mxu0 0
      %680 = vmatpush1.bf16.xpose.msra.mxu0 %v677
      %681 = vmatprep.subr.bf16.mxu0 0
      %682 = vmatpush1.bf16.xpose.msra.mxu0 0
      %683 = vmatprep.subr.bf16.mxu0 0
      %684 = vmatpush1.bf16.xpose.msra.mxu0 0
      %685 = vmatprep.subr.bf16.mxu0 0
      %686 = vmatpush1.bf16.xpose.msra.mxu0 0
      %687 = vmatprep.subr.bf16.mxu0 0
      %688 = vmatpush1.bf16.xpose.msra.mxu0 0
      %689 = vmatprep.subr.bf16.mxu0 0
      %690 = vmatpush1.bf16.xpose.msra.mxu0 0
      %691 = vmatprep.subr.bf16.mxu0 0
      %692 = vmatpush1.bf16.xpose.msra.mxu0 0
      %693 = vmatprep.subr.bf16.mxu0 0
      %694 = vmatpush1.bf16.xpose.msra.mxu0 0
      %695 = vmatprep.subr.bf16.mxu0 0
      %696 = vmatpush1.bf16.xpose.msra.mxu0 0
      %697 = vmatprep.subr.bf16.mxu0 0
      %698 = vmatpush1.bf16.xpose.msra.mxu0 0
      %699 = vmatprep.subr.bf16.mxu0 0
      %700 = vmatpush1.bf16.xpose.msra.mxu0 0
      %701 = vmatprep.subr.bf16.mxu0 0
      %702 = vmatpush1.bf16.xpose.msra.mxu0 0
      %703 = vmatprep.subr.bf16.mxu0 0
      %704 = vmatpush1.bf16.xpose.msra.mxu0 0
      %705 = vmatprep.subr.bf16.mxu0 0
      %706 = vmatpush1.bf16.xpose.msra.mxu0 0
      %707 = vmatprep.subr.bf16.mxu0 0
      %708 = vmatpush1.bf16.xpose.msra.mxu0 0
      %709 = vmatprep.subr.bf16.mxu0 0
      %710 = vmatpush1.bf16.xpose.msra.mxu0 0
      %711 = vmatprep.mubr.bf16.mxu0 0
      %712 = vmatmul.mubr.bf16.gmra.mrb[0].mxu0 %v674
      %v713 = vpop.f32.mrb[0].mxu0
      %v714 = vadd.f32 0.0, %v713
      %v715 = vpop.f32.mrb[0].mxu0
      %v716 = vpop.f32.mrb[0].mxu0
      %v717 = vadd.f32 0.0, %v716
      %v718 = vpop.f32.mrb[0].mxu0
      %719 = vdwg.mxu0
      %v721 = vsel %vm578, %v421, 0
      %v724 = vsel %vm578, %v469, 0
      %726 = vmatprep.subr.bf16.mxu0 0
      %727 = vmatpush1.bf16.xpose.msra.mxu0 %v724
      %728 = vmatprep.subr.bf16.mxu0 0
      %729 = vmatpush1.bf16.xpose.msra.mxu0 0
      %730 = vmatprep.subr.bf16.mxu0 0
      %731 = vmatpush1.bf16.xpose.msra.mxu0 0
      %732 = vmatprep.subr.bf16.mxu0 0
      %733 = vmatpush1.bf16.xpose.msra.mxu0 0
      %734 = vmatprep.subr.bf16.mxu0 0
      %735 = vmatpush1.bf16.xpose.msra.mxu0 0
      %736 = vmatprep.subr.bf16.mxu0 0
      %737 = vmatpush1.bf16.xpose.msra.mxu0 0
      %738 = vmatprep.subr.bf16.mxu0 0
      %739 = vmatpush1.bf16.xpose.msra.mxu0 0
      %740 = vmatprep.subr.bf16.mxu0 0
      %741 = vmatpush1.bf16.xpose.msra.mxu0 0
      %742 = vmatprep.subr.bf16.mxu0 0
      %743 = vmatpush1.bf16.xpose.msra.mxu0 0
      %744 = vmatprep.subr.bf16.mxu0 0
      %745 = vmatpush1.bf16.xpose.msra.mxu0 0
      %746 = vmatprep.subr.bf16.mxu0 0
      %747 = vmatpush1.bf16.xpose.msra.mxu0 0
      %748 = vmatprep.subr.bf16.mxu0 0
      %749 = vmatpush1.bf16.xpose.msra.mxu0 0
      %750 = vmatprep.subr.bf16.mxu0 0
      %751 = vmatpush1.bf16.xpose.msra.mxu0 0
      %752 = vmatprep.subr.bf16.mxu0 0
      %753 = vmatpush1.bf16.xpose.msra.mxu0 0
      %754 = vmatprep.subr.bf16.mxu0 0
      %755 = vmatpush1.bf16.xpose.msra.mxu0 0
      %756 = vmatprep.subr.bf16.mxu0 0
      %757 = vmatpush1.bf16.xpose.msra.mxu0 0
      %758 = vmatprep.mubr.bf16.mxu0 0
      %759 = vmatmul.mubr.bf16.gmra.mrb[0].mxu0 %v721
      %v760 = vpop.f32.mrb[0].mxu0
      %v761 = vadd.f32 0.0, %v760
      %v762 = vpop.f32.mrb[0].mxu0
      %v763 = vpop.f32.mrb[0].mxu0
      %v764 = vadd.f32 0.0, %v763
      %v765 = vpop.f32.mrb[0].mxu0
      %766 = vdwg.mxu0
      %v768 = vsel %vm578, %v422, 0
      %v771 = vsel %vm578, %v470, 0
      %773 = vmatprep.subr.bf16.mxu0 0
      %774 = vmatpush1.bf16.xpose.msra.mxu0 %v771
      %775 = vmatprep.subr.bf16.mxu0 0
      %776 = vmatpush1.bf16.xpose.msra.mxu0 0
      %777 = vmatprep.subr.bf16.mxu0 0
      %778 = vmatpush1.bf16.xpose.msra.mxu0 0
      %779 = vmatprep.subr.bf16.mxu0 0
      %780 = vmatpush1.bf16.xpose.msra.mxu0 0
      %781 = vmatprep.subr.bf16.mxu0 0
      %782 = vmatpush1.bf16.xpose.msra.mxu0 0
      %783 = vmatprep.subr.bf16.mxu0 0
      %784 = vmatpush1.bf16.xpose.msra.mxu0 0
      %785 = vmatprep.subr.bf16.mxu0 0
      %786 = vmatpush1.bf16.xpose.msra.mxu0 0
      %787 = vmatprep.subr.bf16.mxu0 0
      %788 = vmatpush1.bf16.xpose.msra.mxu0 0
      %789 = vmatprep.subr.bf16.mxu0 0
      %790 = vmatpush1.bf16.xpose.msra.mxu0 0
      %791 = vmatprep.subr.bf16.mxu0 0
      %792 = vmatpush1.bf16.xpose.msra.mxu0 0
      %793 = vmatprep.subr.bf16.mxu0 0
      %794 = vmatpush1.bf16.xpose.msra.mxu0 0
      %795 = vmatprep.subr.bf16.mxu0 0
      %796 = vmatpush1.bf16.xpose.msra.mxu0 0
      %797 = vmatprep.subr.bf16.mxu0 0
      %798 = vmatpush1.bf16.xpose.msra.mxu0 0
      %799 = vmatprep.subr.bf16.mxu0 0
      %800 = vmatpush1.bf16.xpose.msra.mxu0 0
      %801 = vmatprep.subr.bf16.mxu0 0
      %802 = vmatpush1.bf16.xpose.msra.mxu0 0
      %803 = vmatprep.subr.bf16.mxu0 0
      %804 = vmatpush1.bf16.xpose.msra.mxu0 0
      %805 = vmatprep.mubr.bf16.mxu0 0
      %806 = vmatmul.mubr.bf16.gmra.mrb[0].mxu0 %v768
      %v807 = vpop.f32.mrb[0].mxu0
      %v808 = vadd.f32 0.0, %v807
      %v809 = vpop.f32.mrb[0].mxu0
      %v810 = vpop.f32.mrb[0].mxu0
      %v811 = vadd.f32 0.0, %v810
      %v812 = vpop.f32.mrb[0].mxu0
      %813 = vdwg.mxu0
      %v815 = vsel %vm578, %v423, 0
      %v818 = vsel %vm578, %v471, 0
      %820 = vmatprep.subr.bf16.mxu0 0
      %821 = vmatpush1.bf16.xpose.msra.mxu0 %v818
      %822 = vmatprep.subr.bf16.mxu0 0
      %823 = vmatpush1.bf16.xpose.msra.mxu0 0
      %824 = vmatprep.subr.bf16.mxu0 0
      %825 = vmatpush1.bf16.xpose.msra.mxu0 0
      %826 = vmatprep.subr.bf16.mxu0 0
      %827 = vmatpush1.bf16.xpose.msra.mxu0 0
      %828 = vmatprep.subr.bf16.mxu0 0
      %829 = vmatpush1.bf16.xpose.msra.mxu0 0
      %830 = vmatprep.subr.bf16.mxu0 0
      %831 = vmatpush1.bf16.xpose.msra.mxu0 0
      %832 = vmatprep.subr.bf16.mxu0 0
      %833 = vmatpush1.bf16.xpose.msra.mxu0 0
      %834 = vmatprep.subr.bf16.mxu0 0
      %835 = vmatpush1.bf16.xpose.msra.mxu0 0
      %836 = vmatprep.subr.bf16.mxu0 0
      %837 = vmatpush1.bf16.xpose.msra.mxu0 0
      %838 = vmatprep.subr.bf16.mxu0 0
      %839 = vmatpush1.bf16.xpose.msra.mxu0 0
      %840 = vmatprep.subr.bf16.mxu0 0
      %841 = vmatpush1.bf16.xpose.msra.mxu0 0
      %842 = vmatprep.subr.bf16.mxu0 0
      %843 = vmatpush1.bf16.xpose.msra.mxu0 0
      %844 = vmatprep.subr.bf16.mxu0 0
      %845 = vmatpush1.bf16.xpose.msra.mxu0 0
      %846 = vmatprep.subr.bf16.mxu0 0
      %847 = vmatpush1.bf16.xpose.msra.mxu0 0
      %848 = vmatprep.subr.bf16.mxu0 0
      %849 = vmatpush1.bf16.xpose.msra.mxu0 0
      %850 = vmatprep.subr.bf16.mxu0 0
      %851 = vmatpush1.bf16.xpose.msra.mxu0 0
      %852 = vmatprep.mubr.bf16.mxu0 0
      %853 = vmatmul.mubr.bf16.gmra.mrb[0].mxu0 %v815
      %v854 = vpop.f32.mrb[0].mxu0
      %v855 = vadd.f32 0.0, %v854
      %v856 = vpop.f32.mrb[0].mxu0
      %v857 = vpop.f32.mrb[0].mxu0
      %v858 = vadd.f32 0.0, %v857
      %v859 = vpop.f32.mrb[0].mxu0
      %860 = vdwg.mxu0
      %v862 = vsel %vm578, %v424, 0
      %v865 = vsel %vm578, %v472, 0
      %867 = vmatprep.subr.bf16.mxu0 0
      %868 = vmatpush1.bf16.xpose.msra.mxu0 %v865
      %869 = vmatprep.subr.bf16.mxu0 0
      %870 = vmatpush1.bf16.xpose.msra.mxu0 0
      %871 = vmatprep.subr.bf16.mxu0 0
      %872 = vmatpush1.bf16.xpose.msra.mxu0 0
      %873 = vmatprep.subr.bf16.mxu0 0
      %874 = vmatpush1.bf16.xpose.msra.mxu0 0
      %875 = vmatprep.subr.bf16.mxu0 0
      %876 = vmatpush1.bf16.xpose.msra.mxu0 0
      %877 = vmatprep.subr.bf16.mxu0 0
      %878 = vmatpush1.bf16.xpose.msra.mxu0 0
      %879 = vmatprep.subr.bf16.mxu0 0
      %880 = vmatpush1.bf16.xpose.msra.mxu0 0
      %881 = vmatprep.subr.bf16.mxu0 0
      %882 = vmatpush1.bf16.xpose.msra.mxu0 0
      %883 = vmatprep.subr.bf16.mxu0 0
      %884 = vmatpush1.bf16.xpose.msra.mxu0 0
      %885 = vmatprep.subr.bf16.mxu0 0
      %886 = vmatpush1.bf16.xpose.msra.mxu0 0
      %887 = vmatprep.subr.bf16.mxu0 0
      %888 = vmatpush1.bf16.xpose.msra.mxu0 0
      %889 = vmatprep.subr.bf16.mxu0 0
      %890 = vmatpush1.bf16.xpose.msra.mxu0 0
      %891 = vmatprep.subr.bf16.mxu0 0
      %892 = vmatpush1.bf16.xpose.msra.mxu0 0
      %893 = vmatprep.subr.bf16.mxu0 0
      %894 = vmatpush1.bf16.xpose.msra.mxu0 0
      %895 = vmatprep.subr.bf16.mxu0 0
      %896 = vmatpush1.bf16.xpose.msra.mxu0 0
      %897 = vmatprep.subr.bf16.mxu0 0
      %898 = vmatpush1.bf16.xpose.msra.mxu0 0
      %899 = vmatprep.mubr.bf16.mxu0 0
      %900 = vmatmul.mubr.bf16.gmra.mrb[0].mxu0 %v862
      %v901 = vpop.f32.mrb[0].mxu0
      %v902 = vadd.f32 0.0, %v901
      %v903 = vpop.f32.mrb[0].mxu0
      %v904 = vpop.f32.mrb[0].mxu0
      %v905 = vadd.f32 0.0, %v904
      %v906 = vpop.f32.mrb[0].mxu0
      %907 = vdwg.mxu0
      %v909 = vsel %vm578, %v425, 0
      %v912 = vsel %vm578, %v473, 0
      %914 = vmatprep.subr.bf16.mxu0 0
      %915 = vmatpush1.bf16.xpose.msra.mxu0 %v912
      %916 = vmatprep.subr.bf16.mxu0 0
      %917 = vmatpush1.bf16.xpose.msra.mxu0 0
      %918 = vmatprep.subr.bf16.mxu0 0
      %919 = vmatpush1.bf16.xpose.msra.mxu0 0
      %920 = vmatprep.subr.bf16.mxu0 0
      %921 = vmatpush1.bf16.xpose.msra.mxu0 0
      %922 = vmatprep.subr.bf16.mxu0 0
      %923 = vmatpush1.bf16.xpose.msra.mxu0 0
      %924 = vmatprep.subr.bf16.mxu0 0
      %925 = vmatpush1.bf16.xpose.msra.mxu0 0
      %926 = vmatprep.subr.bf16.mxu0 0
      %927 = vmatpush1.bf16.xpose.msra.mxu0 0
      %928 = vmatprep.subr.bf16.mxu0 0
      %929 = vmatpush1.bf16.xpose.msra.mxu0 0
      %930 = vmatprep.subr.bf16.mxu0 0
      %931 = vmatpush1.bf16.xpose.msra.mxu0 0
      %932 = vmatprep.subr.bf16.mxu0 0
      %933 = vmatpush1.bf16.xpose.msra.mxu0 0
      %934 = vmatprep.subr.bf16.mxu0 0
      %935 = vmatpush1.bf16.xpose.msra.mxu0 0
      %936 = vmatprep.subr.bf16.mxu0 0
      %937 = vmatpush1.bf16.xpose.msra.mxu0 0
      %938 = vmatprep.subr.bf16.mxu0 0
      %939 = vmatpush1.bf16.xpose.msra.mxu0 0
      %940 = vmatprep.subr.bf16.mxu0 0
      %941 = vmatpush1.bf16.xpose.msra.mxu0 0
      %942 = vmatprep.subr.bf16.mxu0 0
      %943 = vmatpush1.bf16.xpose.msra.mxu0 0
      %944 = vmatprep.subr.bf16.mxu0 0
      %945 = vmatpush1.bf16.xpose.msra.mxu0 0
      %946 = vmatprep.mubr.bf16.mxu0 0
      %947 = vmatmul.mubr.bf16.gmra.mrb[0].mxu0 %v909
      %v948 = vpop.f32.mrb[0].mxu0
      %v949 = vadd.f32 0.0, %v948
      %v950 = vpop.f32.mrb[0].mxu0
      %v951 = vpop.f32.mrb[0].mxu0
      %v952 = vadd.f32 0.0, %v951
      %v953 = vpop.f32.mrb[0].mxu0
      %954 = vdwg.mxu0
      %v956 = vsel %vm578, %v426, 0
      %v959 = vsel %vm578, %v474, 0
      %961 = vmatprep.subr.bf16.mxu0 0
      %962 = vmatpush1.bf16.xpose.msra.mxu0 %v959
      %963 = vmatprep.subr.bf16.mxu0 0
      %964 = vmatpush1.bf16.xpose.msra.mxu0 0
      %965 = vmatprep.subr.bf16.mxu0 0
      %966 = vmatpush1.bf16.xpose.msra.mxu0 0
      %967 = vmatprep.subr.bf16.mxu0 0
      %968 = vmatpush1.bf16.xpose.msra.mxu0 0
      %969 = vmatprep.subr.bf16.mxu0 0
      %970 = vmatpush1.bf16.xpose.msra.mxu0 0
      %971 = vmatprep.subr.bf16.mxu0 0
      %972 = vmatpush1.bf16.xpose.msra.mxu0 0
      %973 = vmatprep.subr.bf16.mxu0 0
      %974 = vmatpush1.bf16.xpose.msra.mxu0 0
      %975 = vmatprep.subr.bf16.mxu0 0
      %976 = vmatpush1.bf16.xpose.msra.mxu0 0
      %977 = vmatprep.subr.bf16.mxu0 0
      %978 = vmatpush1.bf16.xpose.msra.mxu0 0
      %979 = vmatprep.subr.bf16.mxu0 0
      %980 = vmatpush1.bf16.xpose.msra.mxu0 0
      %981 = vmatprep.subr.bf16.mxu0 0
      %982 = vmatpush1.bf16.xpose.msra.mxu0 0
      %983 = vmatprep.subr.bf16.mxu0 0
      %984 = vmatpush1.bf16.xpose.msra.mxu0 0
      %985 = vmatprep.subr.bf16.mxu0 0
      %986 = vmatpush1.bf16.xpose.msra.mxu0 0
      %987 = vmatprep.subr.bf16.mxu0 0
      %988 = vmatpush1.bf16.xpose.msra.mxu0 0
      %989 = vmatprep.subr.bf16.mxu0 0
      %990 = vmatpush1.bf16.xpose.msra.mxu0 0
      %991 = vmatprep.subr.bf16.mxu0 0
      %992 = vmatpush1.bf16.xpose.msra.mxu0 0
      %993 = vmatprep.mubr.bf16.mxu0 0
      %994 = vmatmul.mubr.bf16.gmra.mrb[0].mxu0 %v956
      %v995 = vpop.f32.mrb[0].mxu0
      %v996 = vadd.f32 0.0, %v995
      %v997 = vpop.f32.mrb[0].mxu0
      %v998 = vpop.f32.mrb[0].mxu0
      %v999 = vadd.f32 0.0, %v998
      %v1000 = vpop.f32.mrb[0].mxu0
      %1001 = vdwg.mxu0
      %v1003 = vsel %vm578, %v427, 0
      %v1006 = vsel %vm578, %v475, 0
      %1008 = vmatprep.subr.bf16.mxu0 0
      %1009 = vmatpush1.bf16.xpose.msra.mxu0 %v1006
      %1010 = vmatprep.subr.bf16.mxu0 0
      %1011 = vmatpush1.bf16.xpose.msra.mxu0 0
      %1012 = vmatprep.subr.bf16.mxu0 0
      %1013 = vmatpush1.bf16.xpose.msra.mxu0 0
      %1014 = vmatprep.subr.bf16.mxu0 0
      %1015 = vmatpush1.bf16.xpose.msra.mxu0 0
      %1016 = vmatprep.subr.bf16.mxu0 0
      %1017 = vmatpush1.bf16.xpose.msra.mxu0 0
      %1018 = vmatprep.subr.bf16.mxu0 0
      %1019 = vmatpush1.bf16.xpose.msra.mxu0 0
      %1020 = vmatprep.subr.bf16.mxu0 0
      %1021 = vmatpush1.bf16.xpose.msra.mxu0 0
      %1022 = vmatprep.subr.bf16.mxu0 0
      %1023 = vmatpush1.bf16.xpose.msra.mxu0 0
      %1024 = vmatprep.subr.bf16.mxu0 0
      %1025 = vmatpush1.bf16.xpose.msra.mxu0 0
      %1026 = vmatprep.subr.bf16.mxu0 0
      %1027 = vmatpush1.bf16.xpose.msra.mxu0 0
      %1028 = vmatprep.subr.bf16.mxu0 0
      %1029 = vmatpush1.bf16.xpose.msra.mxu0 0
      %1030 = vmatprep.subr.bf16.mxu0 0
      %1031 = vmatpush1.bf16.xpose.msra.mxu0 0
      %1032 = vmatprep.subr.bf16.mxu0 0
      %1033 = vmatpush1.bf16.xpose.msra.mxu0 0
      %1034 = vmatprep.subr.bf16.mxu0 0
      %1035 = vmatpush1.bf16.xpose.msra.mxu0 0
      %1036 = vmatprep.subr.bf16.mxu0 0
      %1037 = vmatpush1.bf16.xpose.msra.mxu0 0
      %1038 = vmatprep.subr.bf16.mxu0 0
      %1039 = vmatpush1.bf16.xpose.msra.mxu0 0
      %1040 = vmatprep.mubr.bf16.mxu0 0
      %1041 = vmatmul.mubr.bf16.gmra.mrb[0].mxu0 %v1003
      %v1042 = vpop.f32.mrb[0].mxu0
      %v1043 = vadd.f32 0.0, %v1042
      %v1044 = vpop.f32.mrb[0].mxu0
      %v1045 = vpop.f32.mrb[0].mxu0
      %v1046 = vadd.f32 0.0, %v1045
      %v1047 = vpop.f32.mrb[0].mxu0
      %1048 = vdwg.mxu0
      %v1050 = vsel %vm578, %v428, 0
      %v1053 = vsel %vm578, %v476, 0
      %1055 = vmatprep.subr.bf16.mxu0 0
      %1056 = vmatpush1.bf16.xpose.msra.mxu0 %v1053
      %1057 = vmatprep.subr.bf16.mxu0 0
      %1058 = vmatpush1.bf16.xpose.msra.mxu0 0
      %1059 = vmatprep.subr.bf16.mxu0 0
      %1060 = vmatpush1.bf16.xpose.msra.mxu0 0
      %1061 = vmatprep.subr.bf16.mxu0 0
      %1062 = vmatpush1.bf16.xpose.msra.mxu0 0
      %1063 = vmatprep.subr.bf16.mxu0 0
      %1064 = vmatpush1.bf16.xpose.msra.mxu0 0
      %1065 = vmatprep.subr.bf16.mxu0 0
      %1066 = vmatpush1.bf16.xpose.msra.mxu0 0
      %1067 = vmatprep.subr.bf16.mxu0 0
      %1068 = vmatpush1.bf16.xpose.msra.mxu0 0
      %1069 = vmatprep.subr.bf16.mxu0 0
      %1070 = vmatpush1.bf16.xpose.msra.mxu0 0
      %1071 = vmatprep.subr.bf16.mxu0 0
      %1072 = vmatpush1.bf16.xpose.msra.mxu0 0
      %1073 = vmatprep.subr.bf16.mxu0 0
      %1074 = vmatpush1.bf16.xpose.msra.mxu0 0
      %1075 = vmatprep.subr.bf16.mxu0 0
      %1076 = vmatpush1.bf16.xpose.msra.mxu0 0
      %1077 = vmatprep.subr.bf16.mxu0 0
      %1078 = vmatpush1.bf16.xpose.msra.mxu0 0
      %1079 = vmatprep.subr.bf16.mxu0 0
      %1080 = vmatpush1.bf16.xpose.msra.mxu0 0
      %1081 = vmatprep.subr.bf16.mxu0 0
      %1082 = vmatpush1.bf16.xpose.msra.mxu0 0
      %1083 = vmatprep.subr.bf16.mxu0 0
      %1084 = vmatpush1.bf16.xpose.msra.mxu0 0
      %1085 = vmatprep.subr.bf16.mxu0 0
      %1086 = vmatpush1.bf16.xpose.msra.mxu0 0
      %1087 = vmatprep.mubr.bf16.mxu0 0
      %1088 = vmatmul.mubr.bf16.gmra.mrb[0].mxu0 %v1050
      %v1089 = vpop.f32.mrb[0].mxu0
      %v1090 = vadd.f32 0.0, %v1089
      %v1091 = vpop.f32.mrb[0].mxu0
      %v1092 = vpop.f32.mrb[0].mxu0
      %v1093 = vadd.f32 0.0, %v1092
      %v1094 = vpop.f32.mrb[0].mxu0
      %1095 = vdwg.mxu0
      %v1097 = vsel %vm578, %v429, 0
      %v1100 = vsel %vm578, %v477, 0
      %1102 = vmatprep.subr.bf16.mxu0 0
      %1103 = vmatpush1.bf16.xpose.msra.mxu0 %v1100
      %1104 = vmatprep.subr.bf16.mxu0 0
      %1105 = vmatpush1.bf16.xpose.msra.mxu0 0
      %1106 = vmatprep.subr.bf16.mxu0 0
      %1107 = vmatpush1.bf16.xpose.msra.mxu0 0
      %1108 = vmatprep.subr.bf16.mxu0 0
      %1109 = vmatpush1.bf16.xpose.msra.mxu0 0
      %1110 = vmatprep.subr.bf16.mxu0 0
      %1111 = vmatpush1.bf16.xpose.msra.mxu0 0
      %1112 = vmatprep.subr.bf16.mxu0 0
      %1113 = vmatpush1.bf16.xpose.msra.mxu0 0
      %1114 = vmatprep.subr.bf16.mxu0 0
      %1115 = vmatpush1.bf16.xpose.msra.mxu0 0
      %1116 = vmatprep.subr.bf16.mxu0 0
      %1117 = vmatpush1.bf16.xpose.msra.mxu0 0
      %1118 = vmatprep.subr.bf16.mxu0 0
      %1119 = vmatpush1.bf16.xpose.msra.mxu0 0
      %1120 = vmatprep.subr.bf16.mxu0 0
      %1121 = vmatpush1.bf16.xpose.msra.mxu0 0
      %1122 = vmatprep.subr.bf16.mxu0 0
      %1123 = vmatpush1.bf16.xpose.msra.mxu0 0
      %1124 = vmatprep.subr.bf16.mxu0 0
      %1125 = vmatpush1.bf16.xpose.msra.mxu0 0
      %1126 = vmatprep.subr.bf16.mxu0 0
      %1127 = vmatpush1.bf16.xpose.msra.mxu0 0
      %1128 = vmatprep.subr.bf16.mxu0 0
      %1129 = vmatpush1.bf16.xpose.msra.mxu0 0
      %1130 = vmatprep.subr.bf16.mxu0 0
      %1131 = vmatpush1.bf16.xpose.msra.mxu0 0
      %1132 = vmatprep.subr.bf16.mxu0 0
      %1133 = vmatpush1.bf16.xpose.msra.mxu0 0
      %1134 = vmatprep.mubr.bf16.mxu0 0
      %1135 = vmatmul.mubr.bf16.gmra.mrb[0].mxu0 %v1097
      %v1136 = vpop.f32.mrb[0].mxu0
      %v1137 = vadd.f32 0.0, %v1136
      %v1138 = vpop.f32.mrb[0].mxu0
      %v1139 = vpop.f32.mrb[0].mxu0
      %v1140 = vadd.f32 0.0, %v1139
      %v1141 = vpop.f32.mrb[0].mxu0
      %1142 = vdwg.mxu0
      %v1144 = vsel %vm578, %v430, 0
      %v1147 = vsel %vm578, %v478, 0
      %1149 = vmatprep.subr.bf16.mxu0 0
      %1150 = vmatpush1.bf16.xpose.msra.mxu0 %v1147
      %1151 = vmatprep.subr.bf16.mxu0 0
      %1152 = vmatpush1.bf16.xpose.msra.mxu0 0
      %1153 = vmatprep.subr.bf16.mxu0 0
      %1154 = vmatpush1.bf16.xpose.msra.mxu0 0
      %1155 = vmatprep.subr.bf16.mxu0 0
      %1156 = vmatpush1.bf16.xpose.msra.mxu0 0
      %1157 = vmatprep.subr.bf16.mxu0 0
      %1158 = vmatpush1.bf16.xpose.msra.mxu0 0
      %1159 = vmatprep.subr.bf16.mxu0 0
      %1160 = vmatpush1.bf16.xpose.msra.mxu0 0
      %1161 = vmatprep.subr.bf16.mxu0 0
      %1162 = vmatpush1.bf16.xpose.msra.mxu0 0
      %1163 = vmatprep.subr.bf16.mxu0 0
      %1164 = vmatpush1.bf16.xpose.msra.mxu0 0
      %1165 = vmatprep.subr.bf16.mxu0 0
      %1166 = vmatpush1.bf16.xpose.msra.mxu0 0
      %1167 = vmatprep.subr.bf16.mxu0 0
      %1168 = vmatpush1.bf16.xpose.msra.mxu0 0
      %1169 = vmatprep.subr.bf16.mxu0 0
      %1170 = vmatpush1.bf16.xpose.msra.mxu0 0
      %1171 = vmatprep.subr.bf16.mxu0 0
      %1172 = vmatpush1.bf16.xpose.msra.mxu0 0
      %1173 = vmatprep.subr.bf16.mxu0 0
      %1174 = vmatpush1.bf16.xpose.msra.mxu0 0
      %1175 = vmatprep.subr.bf16.mxu0 0
      %1176 = vmatpush1.bf16.xpose.msra.mxu0 0
      %1177 = vmatprep.subr.bf16.mxu0 0
      %1178 = vmatpush1.bf16.xpose.msra.mxu0 0
      %1179 = vmatprep.subr.bf16.mxu0 0
      %1180 = vmatpush1.bf16.xpose.msra.mxu0 0
      %1181 = vmatprep.mubr.bf16.mxu0 0
      %1182 = vmatmul.mubr.bf16.gmra.mrb[0].mxu0 %v1144
      %v1183 = vpop.f32.mrb[0].mxu0
      %v1184 = vadd.f32 0.0, %v1183
      %v1185 = vpop.f32.mrb[0].mxu0
      %v1186 = vpop.f32.mrb[0].mxu0
      %v1187 = vadd.f32 0.0, %v1186
      %v1188 = vpop.f32.mrb[0].mxu0
      %1189 = vdwg.mxu0
      %v1191 = vsel %vm578, %v431, 0
      %v1194 = vsel %vm578, %v479, 0
      %1196 = vmatprep.subr.bf16.mxu0 0
      %1197 = vmatpush1.bf16.xpose.msra.mxu0 %v1194
      %1198 = vmatprep.subr.bf16.mxu0 0
      %1199 = vmatpush1.bf16.xpose.msra.mxu0 0
      %1200 = vmatprep.subr.bf16.mxu0 0
      %1201 = vmatpush1.bf16.xpose.msra.mxu0 0
      %1202 = vmatprep.subr.bf16.mxu0 0
      %1203 = vmatpush1.bf16.xpose.msra.mxu0 0
      %1204 = vmatprep.subr.bf16.mxu0 0
      %1205 = vmatpush1.bf16.xpose.msra.mxu0 0
      %1206 = vmatprep.subr.bf16.mxu0 0
      %1207 = vmatpush1.bf16.xpose.msra.mxu0 0
      %1208 = vmatprep.subr.bf16.mxu0 0
      %1209 = vmatpush1.bf16.xpose.msra.mxu0 0
      %1210 = vmatprep.subr.bf16.mxu0 0
      %1211 = vmatpush1.bf16.xpose.msra.mxu0 0
      %1212 = vmatprep.subr.bf16.mxu0 0
      %1213 = vmatpush1.bf16.xpose.msra.mxu0 0
      %1214 = vmatprep.subr.bf16.mxu0 0
      %1215 = vmatpush1.bf16.xpose.msra.mxu0 0
      %1216 = vmatprep.subr.bf16.mxu0 0
      %1217 = vmatpush1.bf16.xpose.msra.mxu0 0
      %1218 = vmatprep.subr.bf16.mxu0 0
      %1219 = vmatpush1.bf16.xpose.msra.mxu0 0
      %1220 = vmatprep.subr.bf16.mxu0 0
      %1221 = vmatpush1.bf16.xpose.msra.mxu0 0
      %1222 = vmatprep.subr.bf16.mxu0 0
      %1223 = vmatpush1.bf16.xpose.msra.mxu0 0
      %1224 = vmatprep.subr.bf16.mxu0 0
      %1225 = vmatpush1.bf16.xpose.msra.mxu0 0
      %1226 = vmatprep.subr.bf16.mxu0 0
      %1227 = vmatpush1.bf16.xpose.msra.mxu0 0
      %1228 = vmatprep.mubr.bf16.mxu0 0
      %1229 = vmatmul.mubr.bf16.gmra.mrb[0].mxu0 %v1191
      %v1230 = vpop.f32.mrb[0].mxu0
      %v1231 = vadd.f32 0.0, %v1230
      %v1232 = vpop.f32.mrb[0].mxu0
      %v1233 = vpop.f32.mrb[0].mxu0
      %v1234 = vadd.f32 0.0, %v1233
      %v1235 = vpop.f32.mrb[0].mxu0
      %1236 = vdwg.mxu0
      %v1238 = vsel %vm578, %v432, 0
      %v1241 = vsel %vm578, %v480, 0
      %1243 = vmatprep.subr.bf16.mxu0 0
      %1244 = vmatpush1.bf16.xpose.msra.mxu0 %v1241
      %1245 = vmatprep.subr.bf16.mxu0 0
      %1246 = vmatpush1.bf16.xpose.msra.mxu0 0
      %1247 = vmatprep.subr.bf16.mxu0 0
      %1248 = vmatpush1.bf16.xpose.msra.mxu0 0
      %1249 = vmatprep.subr.bf16.mxu0 0
      %1250 = vmatpush1.bf16.xpose.msra.mxu0 0
      %1251 = vmatprep.subr.bf16.mxu0 0
      %1252 = vmatpush1.bf16.xpose.msra.mxu0 0
      %1253 = vmatprep.subr.bf16.mxu0 0
      %1254 = vmatpush1.bf16.xpose.msra.mxu0 0
      %1255 = vmatprep.subr.bf16.mxu0 0
      %1256 = vmatpush1.bf16.xpose.msra.mxu0 0
      %1257 = vmatprep.subr.bf16.mxu0 0
      %1258 = vmatpush1.bf16.xpose.msra.mxu0 0
      %1259 = vmatprep.subr.bf16.mxu0 0
      %1260 = vmatpush1.bf16.xpose.msra.mxu0 0
      %1261 = vmatprep.subr.bf16.mxu0 0
      %1262 = vmatpush1.bf16.xpose.msra.mxu0 0
      %1263 = vmatprep.subr.bf16.mxu0 0
      %1264 = vmatpush1.bf16.xpose.msra.mxu0 0
      %1265 = vmatprep.subr.bf16.mxu0 0
      %1266 = vmatpush1.bf16.xpose.msra.mxu0 0
      %1267 = vmatprep.subr.bf16.mxu0 0
      %1268 = vmatpush1.bf16.xpose.msra.mxu0 0
      %1269 = vmatprep.subr.bf16.mxu0 0
      %1270 = vmatpush1.bf16.xpose.msra.mxu0 0
      %1271 = vmatprep.subr.bf16.mxu0 0
      %1272 = vmatpush1.bf16.xpose.msra.mxu0 0
      %1273 = vmatprep.subr.bf16.mxu0 0
      %1274 = vmatpush1.bf16.xpose.msra.mxu0 0
      %1275 = vmatprep.mubr.bf16.mxu0 0
      %1276 = vmatmul.mubr.bf16.gmra.mrb[0].mxu0 %v1238
      %v1277 = vpop.f32.mrb[0].mxu0
      %v1278 = vadd.f32 0.0, %v1277
      %v1279 = vpop.f32.mrb[0].mxu0
      %v1280 = vpop.f32.mrb[0].mxu0
      %v1281 = vadd.f32 0.0, %v1280
      %v1282 = vpop.f32.mrb[0].mxu0
      %1283 = vdwg.mxu0
      %v1285 = vsel %vm578, %v433, 0
      %v1288 = vsel %vm578, %v481, 0
      %1290 = vmatprep.subr.bf16.mxu0 0
      %1291 = vmatpush1.bf16.xpose.msra.mxu0 %v1288
      %1292 = vmatprep.subr.bf16.mxu0 0
      %1293 = vmatpush1.bf16.xpose.msra.mxu0 0
      %1294 = vmatprep.subr.bf16.mxu0 0
      %1295 = vmatpush1.bf16.xpose.msra.mxu0 0
      %1296 = vmatprep.subr.bf16.mxu0 0
      %1297 = vmatpush1.bf16.xpose.msra.mxu0 0
      %1298 = vmatprep.subr.bf16.mxu0 0
      %1299 = vmatpush1.bf16.xpose.msra.mxu0 0
      %1300 = vmatprep.subr.bf16.mxu0 0
      %1301 = vmatpush1.bf16.xpose.msra.mxu0 0
      %1302 = vmatprep.subr.bf16.mxu0 0
      %1303 = vmatpush1.bf16.xpose.msra.mxu0 0
      %1304 = vmatprep.subr.bf16.mxu0 0
      %1305 = vmatpush1.bf16.xpose.msra.mxu0 0
      %1306 = vmatprep.subr.bf16.mxu0 0
      %1307 = vmatpush1.bf16.xpose.msra.mxu0 0
      %1308 = vmatprep.subr.bf16.mxu0 0
      %1309 = vmatpush1.bf16.xpose.msra.mxu0 0
      %1310 = vmatprep.subr.bf16.mxu0 0
      %1311 = vmatpush1.bf16.xpose.msra.mxu0 0
      %1312 = vmatprep.subr.bf16.mxu0 0
      %1313 = vmatpush1.bf16.xpose.msra.mxu0 0
      %1314 = vmatprep.subr.bf16.mxu0 0
      %1315 = vmatpush1.bf16.xpose.msra.mxu0 0
      %1316 = vmatprep.subr.bf16.mxu0 0
      %1317 = vmatpush1.bf16.xpose.msra.mxu0 0
      %1318 = vmatprep.subr.bf16.mxu0 0
      %1319 = vmatpush1.bf16.xpose.msra.mxu0 0
      %1320 = vmatprep.subr.bf16.mxu0 0
      %1321 = vmatpush1.bf16.xpose.msra.mxu0 0
      %1322 = vmatprep.mubr.bf16.mxu0 0
      %1323 = vmatmul.mubr.bf16.gmra.mrb[0].mxu0 %v1285
      %v1324 = vpop.f32.mrb[0].mxu0
      %v1325 = vadd.f32 0.0, %v1324
      %v1326 = vpop.f32.mrb[0].mxu0
      %v1327 = vpop.f32.mrb[0].mxu0
      %v1328 = vadd.f32 0.0, %v1327
      %v1329 = vpop.f32.mrb[0].mxu0
      %1330 = vdwg.mxu0
      %v1331 = vmul.f32 %v620, 0.35355338
      %v1332 = vmul.f32 %v623, 0.35355338
      %v1333 = vmul.f32 %v667, 0.35355338
      %v1334 = vmul.f32 %v670, 0.35355338
      %v1335 = vmul.f32 %v714, 0.35355338
      %v1336 = vmul.f32 %v717, 0.35355338
      %v1337 = vmul.f32 %v761, 0.35355338
      %v1338 = vmul.f32 %v764, 0.35355338
      %v1339 = vmul.f32 %v808, 0.35355338
      %v1340 = vmul.f32 %v811, 0.35355338
      %v1341 = vmul.f32 %v855, 0.35355338
      %v1342 = vmul.f32 %v858, 0.35355338
      %v1343 = vmul.f32 %v902, 0.35355338
      %v1344 = vmul.f32 %v905, 0.35355338
      %v1345 = vmul.f32 %v949, 0.35355338
      %v1346 = vmul.f32 %v952, 0.35355338
      %v1347 = vmul.f32 %v996, 0.35355338
      %v1348 = vmul.f32 %v999, 0.35355338
      %v1349 = vmul.f32 %v1043, 0.35355338
      %v1350 = vmul.f32 %v1046, 0.35355338
      %v1351 = vmul.f32 %v1090, 0.35355338
      %v1352 = vmul.f32 %v1093, 0.35355338
      %v1353 = vmul.f32 %v1137, 0.35355338
      %v1354 = vmul.f32 %v1140, 0.35355338
      %v1355 = vmul.f32 %v1184, 0.35355338
      %v1356 = vmul.f32 %v1187, 0.35355338
      %v1357 = vmul.f32 %v1231, 0.35355338
      %v1358 = vmul.f32 %v1234, 0.35355338
      %v1359 = vmul.f32 %v1278, 0.35355338
      %v1360 = vmul.f32 %v1281, 0.35355338
      %v1361 = vmul.f32 %v1325, 0.35355338
      %v1362 = vmul.f32 %v1328, 0.35355338
      %1363 = vmatprep.subr.bf16.mxu0 0
      %1364 = vmatpush1.bf16.xpose.msra.mxu0 %v580
      %1365 = vmatprep.subr.bf16.mxu0 0
      %1366 = vmatpush1.bf16.xpose.msra.mxu0 0
      %1367 = vmatprep.subr.bf16.mxu0 0
      %1368 = vmatpush1.bf16.xpose.msra.mxu0 0
      %1369 = vmatprep.subr.bf16.mxu0 0
      %1370 = vmatpush1.bf16.xpose.msra.mxu0 0
      %1371 = vmatprep.subr.bf16.mxu0 0
      %1372 = vmatpush1.bf16.xpose.msra.mxu0 0
      %1373 = vmatprep.subr.bf16.mxu0 0
      %1374 = vmatpush1.bf16.xpose.msra.mxu0 0
      %1375 = vmatprep.subr.bf16.mxu0 0
      %1376 = vmatpush1.bf16.xpose.msra.mxu0 0
      %1377 = vmatprep.subr.bf16.mxu0 0
      %1378 = vmatpush1.bf16.xpose.msra.mxu0 0
      %1379 = vmatprep.subr.bf16.mxu0 0
      %1380 = vmatpush1.bf16.xpose.msra.mxu0 0
      %1381 = vmatprep.subr.bf16.mxu0 0
      %1382 = vmatpush1.bf16.xpose.msra.mxu0 0
      %1383 = vmatprep.subr.bf16.mxu0 0
      %1384 = vmatpush1.bf16.xpose.msra.mxu0 0
      %1385 = vmatprep.subr.bf16.mxu0 0
      %1386 = vmatpush1.bf16.xpose.msra.mxu0 0
      %1387 = vmatprep.subr.bf16.mxu0 0
      %1388 = vmatpush1.bf16.xpose.msra.mxu0 0
      %1389 = vmatprep.subr.bf16.mxu0 0
      %1390 = vmatpush1.bf16.xpose.msra.mxu0 0
      %1391 = vmatprep.subr.bf16.mxu0 0
      %1392 = vmatpush1.bf16.xpose.msra.mxu0 0
      %1393 = vmatprep.subr.bf16.mxu0 0
      %1394 = vmatpush1.bf16.xpose.msra.mxu0 0
      %1395 = vmatprep.mubr.bf16.mxu0 0
      %1396 = vmatmul.mubr.bf16.gmra.mrb[0].mxu0 %v583
      %v1397 = vpop.f32.mrb[0].mxu0
      %v1398 = vadd.f32 0.0, %v1397
      %v1399 = vpop.f32.mrb[0].mxu0
      %v1400 = vpop.f32.mrb[0].mxu0
      %v1401 = vadd.f32 0.0, %v1400
      %v1402 = vpop.f32.mrb[0].mxu0
      %1403 = vdwg.mxu0
      %1404 = vmatprep.subr.bf16.mxu0 0
      %1405 = vmatpush1.bf16.xpose.msra.mxu0 %v627
      %1406 = vmatprep.subr.bf16.mxu0 0
      %1407 = vmatpush1.bf16.xpose.msra.mxu0 0
      %1408 = vmatprep.subr.bf16.mxu0 0
      %1409 = vmatpush1.bf16.xpose.msra.mxu0 0
      %1410 = vmatprep.subr.bf16.mxu0 0
      %1411 = vmatpush1.bf16.xpose.msra.mxu0 0
      %1412 = vmatprep.subr.bf16.mxu0 0
      %1413 = vmatpush1.bf16.xpose.msra.mxu0 0
      %1414 = vmatprep.subr.bf16.mxu0 0
      %1415 = vmatpush1.bf16.xpose.msra.mxu0 0
      %1416 = vmatprep.subr.bf16.mxu0 0
      %1417 = vmatpush1.bf16.xpose.msra.mxu0 0
      %1418 = vmatprep.subr.bf16.mxu0 0
      %1419 = vmatpush1.bf16.xpose.msra.mxu0 0
      %1420 = vmatprep.subr.bf16.mxu0 0
      %1421 = vmatpush1.bf16.xpose.msra.mxu0 0
      %1422 = vmatprep.subr.bf16.mxu0 0
      %1423 = vmatpush1.bf16.xpose.msra.mxu0 0
      %1424 = vmatprep.subr.bf16.mxu0 0
      %1425 = vmatpush1.bf16.xpose.msra.mxu0 0
      %1426 = vmatprep.subr.bf16.mxu0 0
      %1427 = vmatpush1.bf16.xpose.msra.mxu0 0
      %1428 = vmatprep.subr.bf16.mxu0 0
      %1429 = vmatpush1.bf16.xpose.msra.mxu0 0
      %1430 = vmatprep.subr.bf16.mxu0 0
      %1431 = vmatpush1.bf16.xpose.msra.mxu0 0
      %1432 = vmatprep.subr.bf16.mxu0 0
      %1433 = vmatpush1.bf16.xpose.msra.mxu0 0
      %1434 = vmatprep.subr.bf16.mxu0 0
      %1435 = vmatpush1.bf16.xpose.msra.mxu0 0
      %1436 = vmatprep.mubr.bf16.mxu0 0
      %1437 = vmatmul.mubr.bf16.gmra.mrb[0].mxu0 %v630
      %v1438 = vpop.f32.mrb[0].mxu0
      %v1439 = vadd.f32 0.0, %v1438
      %v1440 = vpop.f32.mrb[0].mxu0
      %v1441 = vpop.f32.mrb[0].mxu0
      %v1442 = vadd.f32 0.0, %v1441
      %v1443 = vpop.f32.mrb[0].mxu0
      %1444 = vdwg.mxu0
      %1445 = vmatprep.subr.bf16.mxu0 0
      %1446 = vmatpush1.bf16.xpose.msra.mxu0 %v674
      %1447 = vmatprep.subr.bf16.mxu0 0
      %1448 = vmatpush1.bf16.xpose.msra.mxu0 0
      %1449 = vmatprep.subr.bf16.mxu0 0
      %1450 = vmatpush1.bf16.xpose.msra.mxu0 0
      %1451 = vmatprep.subr.bf16.mxu0 0
      %1452 = vmatpush1.bf16.xpose.msra.mxu0 0
      %1453 = vmatprep.subr.bf16.mxu0 0
      %1454 = vmatpush1.bf16.xpose.msra.mxu0 0
      %1455 = vmatprep.subr.bf16.mxu0 0
      %1456 = vmatpush1.bf16.xpose.msra.mxu0 0
      %1457 = vmatprep.subr.bf16.mxu0 0
      %1458 = vmatpush1.bf16.xpose.msra.mxu0 0
      %1459 = vmatprep.subr.bf16.mxu0 0
      %1460 = vmatpush1.bf16.xpose.msra.mxu0 0
      %1461 = vmatprep.subr.bf16.mxu0 0
      %1462 = vmatpush1.bf16.xpose.msra.mxu0 0
      %1463 = vmatprep.subr.bf16.mxu0 0
      %1464 = vmatpush1.bf16.xpose.msra.mxu0 0
      %1465 = vmatprep.subr.bf16.mxu0 0
      %1466 = vmatpush1.bf16.xpose.msra.mxu0 0
      %1467 = vmatprep.subr.bf16.mxu0 0
      %1468 = vmatpush1.bf16.xpose.msra.mxu0 0
      %1469 = vmatprep.subr.bf16.mxu0 0
      %1470 = vmatpush1.bf16.xpose.msra.mxu0 0
      %1471 = vmatprep.subr.bf16.mxu0 0
      %1472 = vmatpush1.bf16.xpose.msra.mxu0 0
      %1473 = vmatprep.subr.bf16.mxu0 0
      %1474 = vmatpush1.bf16.xpose.msra.mxu0 0
      %1475 = vmatprep.subr.bf16.mxu0 0
      %1476 = vmatpush1.bf16.xpose.msra.mxu0 0
      %1477 = vmatprep.mubr.bf16.mxu0 0
      %1478 = vmatmul.mubr.bf16.gmra.mrb[0].mxu0 %v677
      %v1479 = vpop.f32.mrb[0].mxu0
      %v1480 = vadd.f32 0.0, %v1479
      %v1481 = vpop.f32.mrb[0].mxu0
      %v1482 = vpop.f32.mrb[0].mxu0
      %v1483 = vadd.f32 0.0, %v1482
      %v1484 = vpop.f32.mrb[0].mxu0
      %1485 = vdwg.mxu0
      %1486 = vmatprep.subr.bf16.mxu0 0
      %1487 = vmatpush1.bf16.xpose.msra.mxu0 %v721
      %1488 = vmatprep.subr.bf16.mxu0 0
      %1489 = vmatpush1.bf16.xpose.msra.mxu0 0
      %1490 = vmatprep.subr.bf16.mxu0 0
      %1491 = vmatpush1.bf16.xpose.msra.mxu0 0
      %1492 = vmatprep.subr.bf16.mxu0 0
      %1493 = vmatpush1.bf16.xpose.msra.mxu0 0
      %1494 = vmatprep.subr.bf16.mxu0 0
      %1495 = vmatpush1.bf16.xpose.msra.mxu0 0
      %1496 = vmatprep.subr.bf16.mxu0 0
      %1497 = vmatpush1.bf16.xpose.msra.mxu0 0
      %1498 = vmatprep.subr.bf16.mxu0 0
      %1499 = vmatpush1.bf16.xpose.msra.mxu0 0
      %1500 = vmatprep.subr.bf16.mxu0 0
      %1501 = vmatpush1.bf16.xpose.msra.mxu0 0
      %1502 = vmatprep.subr.bf16.mxu0 0
      %1503 = vmatpush1.bf16.xpose.msra.mxu0 0
      %1504 = vmatprep.subr.bf16.mxu0 0
      %1505 = vmatpush1.bf16.xpose.msra.mxu0 0
      %1506 = vmatprep.subr.bf16.mxu0 0
      %1507 = vmatpush1.bf16.xpose.msra.mxu0 0
      %1508 = vmatprep.subr.bf16.mxu0 0
      %1509 = vmatpush1.bf16.xpose.msra.mxu0 0
      %1510 = vmatprep.subr.bf16.mxu0 0
      %1511 = vmatpush1.bf16.xpose.msra.mxu0 0
      %1512 = vmatprep.subr.bf16.mxu0 0
      %1513 = vmatpush1.bf16.xpose.msra.mxu0 0
      %1514 = vmatprep.subr.bf16.mxu0 0
      %1515 = vmatpush1.bf16.xpose.msra.mxu0 0
      %1516 = vmatprep.subr.bf16.mxu0 0
      %1517 = vmatpush1.bf16.xpose.msra.mxu0 0
      %1518 = vmatprep.mubr.bf16.mxu0 0
      %1519 = vmatmul.mubr.bf16.gmra.mrb[0].mxu0 %v724
      %v1520 = vpop.f32.mrb[0].mxu0
      %v1521 = vadd.f32 0.0, %v1520
      %v1522 = vpop.f32.mrb[0].mxu0
      %v1523 = vpop.f32.mrb[0].mxu0
      %v1524 = vadd.f32 0.0, %v1523
      %v1525 = vpop.f32.mrb[0].mxu0
      %1526 = vdwg.mxu0
      %1527 = vmatprep.subr.bf16.mxu0 0
      %1528 = vmatpush1.bf16.xpose.msra.mxu0 %v768
      %1529 = vmatprep.subr.bf16.mxu0 0
      %1530 = vmatpush1.bf16.xpose.msra.mxu0 0
      %1531 = vmatprep.subr.bf16.mxu0 0
      %1532 = vmatpush1.bf16.xpose.msra.mxu0 0
      %1533 = vmatprep.subr.bf16.mxu0 0
      %1534 = vmatpush1.bf16.xpose.msra.mxu0 0
      %1535 = vmatprep.subr.bf16.mxu0 0
      %1536 = vmatpush1.bf16.xpose.msra.mxu0 0
      %1537 = vmatprep.subr.bf16.mxu0 0
      %1538 = vmatpush1.bf16.xpose.msra.mxu0 0
      %1539 = vmatprep.subr.bf16.mxu0 0
      %1540 = vmatpush1.bf16.xpose.msra.mxu0 0
      %1541 = vmatprep.subr.bf16.mxu0 0
      %1542 = vmatpush1.bf16.xpose.msra.mxu0 0
      %1543 = vmatprep.subr.bf16.mxu0 0
      %1544 = vmatpush1.bf16.xpose.msra.mxu0 0
      %1545 = vmatprep.subr.bf16.mxu0 0
      %1546 = vmatpush1.bf16.xpose.msra.mxu0 0
      %1547 = vmatprep.subr.bf16.mxu0 0
      %1548 = vmatpush1.bf16.xpose.msra.mxu0 0
      %1549 = vmatprep.subr.bf16.mxu0 0
      %1550 = vmatpush1.bf16.xpose.msra.mxu0 0
      %1551 = vmatprep.subr.bf16.mxu0 0
      %1552 = vmatpush1.bf16.xpose.msra.mxu0 0
      %1553 = vmatprep.subr.bf16.mxu0 0
      %1554 = vmatpush1.bf16.xpose.msra.mxu0 0
      %1555 = vmatprep.subr.bf16.mxu0 0
      %1556 = vmatpush1.bf16.xpose.msra.mxu0 0
      %1557 = vmatprep.subr.bf16.mxu0 0
      %1558 = vmatpush1.bf16.xpose.msra.mxu0 0
      %1559 = vmatprep.mubr.bf16.mxu0 0
      %1560 = vmatmul.mubr.bf16.gmra.mrb[0].mxu0 %v771
      %v1561 = vpop.f32.mrb[0].mxu0
      %v1562 = vadd.f32 0.0, %v1561
      %v1563 = vpop.f32.mrb[0].mxu0
      %v1564 = vpop.f32.mrb[0].mxu0
      %v1565 = vadd.f32 0.0, %v1564
      %v1566 = vpop.f32.mrb[0].mxu0
      %1567 = vdwg.mxu0
      %1568 = vmatprep.subr.bf16.mxu0 0
      %1569 = vmatpush1.bf16.xpose.msra.mxu0 %v815
      %1570 = vmatprep.subr.bf16.mxu0 0
      %1571 = vmatpush1.bf16.xpose.msra.mxu0 0
      %1572 = vmatprep.subr.bf16.mxu0 0
      %1573 = vmatpush1.bf16.xpose.msra.mxu0 0
      %1574 = vmatprep.subr.bf16.mxu0 0
      %1575 = vmatpush1.bf16.xpose.msra.mxu0 0
      %1576 = vmatprep.subr.bf16.mxu0 0
      %1577 = vmatpush1.bf16.xpose.msra.mxu0 0
      %1578 = vmatprep.subr.bf16.mxu0 0
      %1579 = vmatpush1.bf16.xpose.msra.mxu0 0
      %1580 = vmatprep.subr.bf16.mxu0 0
      %1581 = vmatpush1.bf16.xpose.msra.mxu0 0
      %1582 = vmatprep.subr.bf16.mxu0 0
      %1583 = vmatpush1.bf16.xpose.msra.mxu0 0
      %1584 = vmatprep.subr.bf16.mxu0 0
      %1585 = vmatpush1.bf16.xpose.msra.mxu0 0
      %1586 = vmatprep.subr.bf16.mxu0 0
      %1587 = vmatpush1.bf16.xpose.msra.mxu0 0
      %1588 = vmatprep.subr.bf16.mxu0 0
      %1589 = vmatpush1.bf16.xpose.msra.mxu0 0
      %1590 = vmatprep.subr.bf16.mxu0 0
      %1591 = vmatpush1.bf16.xpose.msra.mxu0 0
      %1592 = vmatprep.subr.bf16.mxu0 0
      %1593 = vmatpush1.bf16.xpose.msra.mxu0 0
      %1594 = vmatprep.subr.bf16.mxu0 0
      %1595 = vmatpush1.bf16.xpose.msra.mxu0 0
      %1596 = vmatprep.subr.bf16.mxu0 0
      %1597 = vmatpush1.bf16.xpose.msra.mxu0 0
      %1598 = vmatprep.subr.bf16.mxu0 0
      %1599 = vmatpush1.bf16.xpose.msra.mxu0 0
      %1600 = vmatprep.mubr.bf16.mxu0 0
      %1601 = vmatmul.mubr.bf16.gmra.mrb[0].mxu0 %v818
      %v1602 = vpop.f32.mrb[0].mxu0
      %v1603 = vadd.f32 0.0, %v1602
      %v1604 = vpop.f32.mrb[0].mxu0
      %v1605 = vpop.f32.mrb[0].mxu0
      %v1606 = vadd.f32 0.0, %v1605
      %v1607 = vpop.f32.mrb[0].mxu0
      %1608 = vdwg.mxu0
      %1609 = vmatprep.subr.bf16.mxu0 0
      %1610 = vmatpush1.bf16.xpose.msra.mxu0 %v862
      %1611 = vmatprep.subr.bf16.mxu0 0
      %1612 = vmatpush1.bf16.xpose.msra.mxu0 0
      %1613 = vmatprep.subr.bf16.mxu0 0
      %1614 = vmatpush1.bf16.xpose.msra.mxu0 0
      %1615 = vmatprep.subr.bf16.mxu0 0
      %1616 = vmatpush1.bf16.xpose.msra.mxu0 0
      %1617 = vmatprep.subr.bf16.mxu0 0
      %1618 = vmatpush1.bf16.xpose.msra.mxu0 0
      %1619 = vmatprep.subr.bf16.mxu0 0
      %1620 = vmatpush1.bf16.xpose.msra.mxu0 0
      %1621 = vmatprep.subr.bf16.mxu0 0
      %1622 = vmatpush1.bf16.xpose.msra.mxu0 0
      %1623 = vmatprep.subr.bf16.mxu0 0
      %1624 = vmatpush1.bf16.xpose.msra.mxu0 0
      %1625 = vmatprep.subr.bf16.mxu0 0
      %1626 = vmatpush1.bf16.xpose.msra.mxu0 0
      %1627 = vmatprep.subr.bf16.mxu0 0
      %1628 = vmatpush1.bf16.xpose.msra.mxu0 0
      %1629 = vmatprep.subr.bf16.mxu0 0
      %1630 = vmatpush1.bf16.xpose.msra.mxu0 0
      %1631 = vmatprep.subr.bf16.mxu0 0
      %1632 = vmatpush1.bf16.xpose.msra.mxu0 0
      %1633 = vmatprep.subr.bf16.mxu0 0
      %1634 = vmatpush1.bf16.xpose.msra.mxu0 0
      %1635 = vmatprep.subr.bf16.mxu0 0
      %1636 = vmatpush1.bf16.xpose.msra.mxu0 0
      %1637 = vmatprep.subr.bf16.mxu0 0
      %1638 = vmatpush1.bf16.xpose.msra.mxu0 0
      %1639 = vmatprep.subr.bf16.mxu0 0
      %1640 = vmatpush1.bf16.xpose.msra.mxu0 0
      %1641 = vmatprep.mubr.bf16.mxu0 0
      %1642 = vmatmul.mubr.bf16.gmra.mrb[0].mxu0 %v865
      %v1643 = vpop.f32.mrb[0].mxu0
      %v1644 = vadd.f32 0.0, %v1643
      %v1645 = vpop.f32.mrb[0].mxu0
      %v1646 = vpop.f32.mrb[0].mxu0
      %v1647 = vadd.f32 0.0, %v1646
      %v1648 = vpop.f32.mrb[0].mxu0
      %1649 = vdwg.mxu0
      %1650 = vmatprep.subr.bf16.mxu0 0
      %1651 = vmatpush1.bf16.xpose.msra.mxu0 %v909
      %1652 = vmatprep.subr.bf16.mxu0 0
      %1653 = vmatpush1.bf16.xpose.msra.mxu0 0
      %1654 = vmatprep.subr.bf16.mxu0 0
      %1655 = vmatpush1.bf16.xpose.msra.mxu0 0
      %1656 = vmatprep.subr.bf16.mxu0 0
      %1657 = vmatpush1.bf16.xpose.msra.mxu0 0
      %1658 = vmatprep.subr.bf16.mxu0 0
      %1659 = vmatpush1.bf16.xpose.msra.mxu0 0
      %1660 = vmatprep.subr.bf16.mxu0 0
      %1661 = vmatpush1.bf16.xpose.msra.mxu0 0
      %1662 = vmatprep.subr.bf16.mxu0 0
      %1663 = vmatpush1.bf16.xpose.msra.mxu0 0
      %1664 = vmatprep.subr.bf16.mxu0 0
      %1665 = vmatpush1.bf16.xpose.msra.mxu0 0
      %1666 = vmatprep.subr.bf16.mxu0 0
      %1667 = vmatpush1.bf16.xpose.msra.mxu0 0
      %1668 = vmatprep.subr.bf16.mxu0 0
      %1669 = vmatpush1.bf16.xpose.msra.mxu0 0
      %1670 = vmatprep.subr.bf16.mxu0 0
      %1671 = vmatpush1.bf16.xpose.msra.mxu0 0
      %1672 = vmatprep.subr.bf16.mxu0 0
      %1673 = vmatpush1.bf16.xpose.msra.mxu0 0
      %1674 = vmatprep.subr.bf16.mxu0 0
      %1675 = vmatpush1.bf16.xpose.msra.mxu0 0
      %1676 = vmatprep.subr.bf16.mxu0 0
      %1677 = vmatpush1.bf16.xpose.msra.mxu0 0
      %1678 = vmatprep.subr.bf16.mxu0 0
      %1679 = vmatpush1.bf16.xpose.msra.mxu0 0
      %1680 = vmatprep.subr.bf16.mxu0 0
      %1681 = vmatpush1.bf16.xpose.msra.mxu0 0
      %1682 = vmatprep.mubr.bf16.mxu0 0
      %1683 = vmatmul.mubr.bf16.gmra.mrb[0].mxu0 %v912
      %v1684 = vpop.f32.mrb[0].mxu0
      %v1685 = vadd.f32 0.0, %v1684
      %v1686 = vpop.f32.mrb[0].mxu0
      %v1687 = vpop.f32.mrb[0].mxu0
      %v1688 = vadd.f32 0.0, %v1687
      %v1689 = vpop.f32.mrb[0].mxu0
      %1690 = vdwg.mxu0
      %1691 = vmatprep.subr.bf16.mxu0 0
      %1692 = vmatpush1.bf16.xpose.msra.mxu0 %v956
      %1693 = vmatprep.subr.bf16.mxu0 0
      %1694 = vmatpush1.bf16.xpose.msra.mxu0 0
      %1695 = vmatprep.subr.bf16.mxu0 0
      %1696 = vmatpush1.bf16.xpose.msra.mxu0 0
      %1697 = vmatprep.subr.bf16.mxu0 0
      %1698 = vmatpush1.bf16.xpose.msra.mxu0 0
      %1699 = vmatprep.subr.bf16.mxu0 0
      %1700 = vmatpush1.bf16.xpose.msra.mxu0 0
      %1701 = vmatprep.subr.bf16.mxu0 0
      %1702 = vmatpush1.bf16.xpose.msra.mxu0 0
      %1703 = vmatprep.subr.bf16.mxu0 0
      %1704 = vmatpush1.bf16.xpose.msra.mxu0 0
      %1705 = vmatprep.subr.bf16.mxu0 0
      %1706 = vmatpush1.bf16.xpose.msra.mxu0 0
      %1707 = vmatprep.subr.bf16.mxu0 0
      %1708 = vmatpush1.bf16.xpose.msra.mxu0 0
      %1709 = vmatprep.subr.bf16.mxu0 0
      %1710 = vmatpush1.bf16.xpose.msra.mxu0 0
      %1711 = vmatprep.subr.bf16.mxu0 0
      %1712 = vmatpush1.bf16.xpose.msra.mxu0 0
      %1713 = vmatprep.subr.bf16.mxu0 0
      %1714 = vmatpush1.bf16.xpose.msra.mxu0 0
      %1715 = vmatprep.subr.bf16.mxu0 0
      %1716 = vmatpush1.bf16.xpose.msra.mxu0 0
      %1717 = vmatprep.subr.bf16.mxu0 0
      %1718 = vmatpush1.bf16.xpose.msra.mxu0 0
      %1719 = vmatprep.subr.bf16.mxu0 0
      %1720 = vmatpush1.bf16.xpose.msra.mxu0 0
      %1721 = vmatprep.subr.bf16.mxu0 0
      %1722 = vmatpush1.bf16.xpose.msra.mxu0 0
      %1723 = vmatprep.mubr.bf16.mxu0 0
      %1724 = vmatmul.mubr.bf16.gmra.mrb[0].mxu0 %v959
      %v1725 = vpop.f32.mrb[0].mxu0
      %v1726 = vadd.f32 0.0, %v1725
      %v1727 = vpop.f32.mrb[0].mxu0
      %v1728 = vpop.f32.mrb[0].mxu0
      %v1729 = vadd.f32 0.0, %v1728
      %v1730 = vpop.f32.mrb[0].mxu0
      %1731 = vdwg.mxu0
      %1732 = vmatprep.subr.bf16.mxu0 0
      %1733 = vmatpush1.bf16.xpose.msra.mxu0 %v1003
      %1734 = vmatprep.subr.bf16.mxu0 0
      %1735 = vmatpush1.bf16.xpose.msra.mxu0 0
      %1736 = vmatprep.subr.bf16.mxu0 0
      %1737 = vmatpush1.bf16.xpose.msra.mxu0 0
      %1738 = vmatprep.subr.bf16.mxu0 0
      %1739 = vmatpush1.bf16.xpose.msra.mxu0 0
      %1740 = vmatprep.subr.bf16.mxu0 0
      %1741 = vmatpush1.bf16.xpose.msra.mxu0 0
      %1742 = vmatprep.subr.bf16.mxu0 0
      %1743 = vmatpush1.bf16.xpose.msra.mxu0 0
      %1744 = vmatprep.subr.bf16.mxu0 0
      %1745 = vmatpush1.bf16.xpose.msra.mxu0 0
      %1746 = vmatprep.subr.bf16.mxu0 0
      %1747 = vmatpush1.bf16.xpose.msra.mxu0 0
      %1748 = vmatprep.subr.bf16.mxu0 0
      %1749 = vmatpush1.bf16.xpose.msra.mxu0 0
      %1750 = vmatprep.subr.bf16.mxu0 0
      %1751 = vmatpush1.bf16.xpose.msra.mxu0 0
      %1752 = vmatprep.subr.bf16.mxu0 0
      %1753 = vmatpush1.bf16.xpose.msra.mxu0 0
      %1754 = vmatprep.subr.bf16.mxu0 0
      %1755 = vmatpush1.bf16.xpose.msra.mxu0 0
      %1756 = vmatprep.subr.bf16.mxu0 0
      %1757 = vmatpush1.bf16.xpose.msra.mxu0 0
      %1758 = vmatprep.subr.bf16.mxu0 0
      %1759 = vmatpush1.bf16.xpose.msra.mxu0 0
      %1760 = vmatprep.subr.bf16.mxu0 0
      %1761 = vmatpush1.bf16.xpose.msra.mxu0 0
      %1762 = vmatprep.subr.bf16.mxu0 0
      %1763 = vmatpush1.bf16.xpose.msra.mxu0 0
      %1764 = vmatprep.mubr.bf16.mxu0 0
      %1765 = vmatmul.mubr.bf16.gmra.mrb[0].mxu0 %v1006
      %v1766 = vpop.f32.mrb[0].mxu0
      %v1767 = vadd.f32 0.0, %v1766
      %v1768 = vpop.f32.mrb[0].mxu0
      %v1769 = vpop.f32.mrb[0].mxu0
      %v1770 = vadd.f32 0.0, %v1769
      %v1771 = vpop.f32.mrb[0].mxu0
      %1772 = vdwg.mxu0
      %1773 = vmatprep.subr.bf16.mxu0 0
      %1774 = vmatpush1.bf16.xpose.msra.mxu0 %v1050
      %1775 = vmatprep.subr.bf16.mxu0 0
      %1776 = vmatpush1.bf16.xpose.msra.mxu0 0
      %1777 = vmatprep.subr.bf16.mxu0 0
      %1778 = vmatpush1.bf16.xpose.msra.mxu0 0
      %1779 = vmatprep.subr.bf16.mxu0 0
      %1780 = vmatpush1.bf16.xpose.msra.mxu0 0
      %1781 = vmatprep.subr.bf16.mxu0 0
      %1782 = vmatpush1.bf16.xpose.msra.mxu0 0
      %1783 = vmatprep.subr.bf16.mxu0 0
      %1784 = vmatpush1.bf16.xpose.msra.mxu0 0
      %1785 = vmatprep.subr.bf16.mxu0 0
      %1786 = vmatpush1.bf16.xpose.msra.mxu0 0
      %1787 = vmatprep.subr.bf16.mxu0 0
      %1788 = vmatpush1.bf16.xpose.msra.mxu0 0
      %1789 = vmatprep.subr.bf16.mxu0 0
      %1790 = vmatpush1.bf16.xpose.msra.mxu0 0
      %1791 = vmatprep.subr.bf16.mxu0 0
      %1792 = vmatpush1.bf16.xpose.msra.mxu0 0
      %1793 = vmatprep.subr.bf16.mxu0 0
      %1794 = vmatpush1.bf16.xpose.msra.mxu0 0
      %1795 = vmatprep.subr.bf16.mxu0 0
      %1796 = vmatpush1.bf16.xpose.msra.mxu0 0
      %1797 = vmatprep.subr.bf16.mxu0 0
      %1798 = vmatpush1.bf16.xpose.msra.mxu0 0
      %1799 = vmatprep.subr.bf16.mxu0 0
      %1800 = vmatpush1.bf16.xpose.msra.mxu0 0
      %1801 = vmatprep.subr.bf16.mxu0 0
      %1802 = vmatpush1.bf16.xpose.msra.mxu0 0
      %1803 = vmatprep.subr.bf16.mxu0 0
      %1804 = vmatpush1.bf16.xpose.msra.mxu0 0
      %1805 = vmatprep.mubr.bf16.mxu0 0
      %1806 = vmatmul.mubr.bf16.gmra.mrb[0].mxu0 %v1053
      %v1807 = vpop.f32.mrb[0].mxu0
      %v1808 = vadd.f32 0.0, %v1807
      %v1809 = vpop.f32.mrb[0].mxu0
      %v1810 = vpop.f32.mrb[0].mxu0
      %v1811 = vadd.f32 0.0, %v1810
      %v1812 = vpop.f32.mrb[0].mxu0
      %1813 = vdwg.mxu0
      %1814 = vmatprep.subr.bf16.mxu0 0
      %1815 = vmatpush1.bf16.xpose.msra.mxu0 %v1097
      %1816 = vmatprep.subr.bf16.mxu0 0
      %1817 = vmatpush1.bf16.xpose.msra.mxu0 0
      %1818 = vmatprep.subr.bf16.mxu0 0
      %1819 = vmatpush1.bf16.xpose.msra.mxu0 0
      %1820 = vmatprep.subr.bf16.mxu0 0
      %1821 = vmatpush1.bf16.xpose.msra.mxu0 0
      %1822 = vmatprep.subr.bf16.mxu0 0
      %1823 = vmatpush1.bf16.xpose.msra.mxu0 0
      %1824 = vmatprep.subr.bf16.mxu0 0
      %1825 = vmatpush1.bf16.xpose.msra.mxu0 0
      %1826 = vmatprep.subr.bf16.mxu0 0
      %1827 = vmatpush1.bf16.xpose.msra.mxu0 0
      %1828 = vmatprep.subr.bf16.mxu0 0
      %1829 = vmatpush1.bf16.xpose.msra.mxu0 0
      %1830 = vmatprep.subr.bf16.mxu0 0
      %1831 = vmatpush1.bf16.xpose.msra.mxu0 0
      %1832 = vmatprep.subr.bf16.mxu0 0
      %1833 = vmatpush1.bf16.xpose.msra.mxu0 0
      %1834 = vmatprep.subr.bf16.mxu0 0
      %1835 = vmatpush1.bf16.xpose.msra.mxu0 0
      %1836 = vmatprep.subr.bf16.mxu0 0
      %1837 = vmatpush1.bf16.xpose.msra.mxu0 0
      %1838 = vmatprep.subr.bf16.mxu0 0
      %1839 = vmatpush1.bf16.xpose.msra.mxu0 0
      %1840 = vmatprep.subr.bf16.mxu0 0
      %1841 = vmatpush1.bf16.xpose.msra.mxu0 0
      %1842 = vmatprep.subr.bf16.mxu0 0
      %1843 = vmatpush1.bf16.xpose.msra.mxu0 0
      %1844 = vmatprep.subr.bf16.mxu0 0
      %1845 = vmatpush1.bf16.xpose.msra.mxu0 0
      %1846 = vmatprep.mubr.bf16.mxu0 0
      %1847 = vmatmul.mubr.bf16.gmra.mrb[0].mxu0 %v1100
      %v1848 = vpop.f32.mrb[0].mxu0
      %v1849 = vadd.f32 0.0, %v1848
      %v1850 = vpop.f32.mrb[0].mxu0
      %v1851 = vpop.f32.mrb[0].mxu0
      %v1852 = vadd.f32 0.0, %v1851
      %v1853 = vpop.f32.mrb[0].mxu0
      %1854 = vdwg.mxu0
      %1855 = vmatprep.subr.bf16.mxu0 0
      %1856 = vmatpush1.bf16.xpose.msra.mxu0 %v1144
      %1857 = vmatprep.subr.bf16.mxu0 0
      %1858 = vmatpush1.bf16.xpose.msra.mxu0 0
      %1859 = vmatprep.subr.bf16.mxu0 0
      %1860 = vmatpush1.bf16.xpose.msra.mxu0 0
      %1861 = vmatprep.subr.bf16.mxu0 0
      %1862 = vmatpush1.bf16.xpose.msra.mxu0 0
      %1863 = vmatprep.subr.bf16.mxu0 0
      %1864 = vmatpush1.bf16.xpose.msra.mxu0 0
      %1865 = vmatprep.subr.bf16.mxu0 0
      %1866 = vmatpush1.bf16.xpose.msra.mxu0 0
      %1867 = vmatprep.subr.bf16.mxu0 0
      %1868 = vmatpush1.bf16.xpose.msra.mxu0 0
      %1869 = vmatprep.subr.bf16.mxu0 0
      %1870 = vmatpush1.bf16.xpose.msra.mxu0 0
      %1871 = vmatprep.subr.bf16.mxu0 0
      %1872 = vmatpush1.bf16.xpose.msra.mxu0 0
      %1873 = vmatprep.subr.bf16.mxu0 0
      %1874 = vmatpush1.bf16.xpose.msra.mxu0 0
      %1875 = vmatprep.subr.bf16.mxu0 0
      %1876 = vmatpush1.bf16.xpose.msra.mxu0 0
      %1877 = vmatprep.subr.bf16.mxu0 0
      %1878 = vmatpush1.bf16.xpose.msra.mxu0 0
      %1879 = vmatprep.subr.bf16.mxu0 0
      %1880 = vmatpush1.bf16.xpose.msra.mxu0 0
      %1881 = vmatprep.subr.bf16.mxu0 0
      %1882 = vmatpush1.bf16.xpose.msra.mxu0 0
      %1883 = vmatprep.subr.bf16.mxu0 0
      %1884 = vmatpush1.bf16.xpose.msra.mxu0 0
      %1885 = vmatprep.subr.bf16.mxu0 0
      %1886 = vmatpush1.bf16.xpose.msra.mxu0 0
      %1887 = vmatprep.mubr.bf16.mxu0 0
      %1888 = vmatmul.mubr.bf16.gmra.mrb[0].mxu0 %v1147
      %v1889 = vpop.f32.mrb[0].mxu0
      %v1890 = vadd.f32 0.0, %v1889
      %v1891 = vpop.f32.mrb[0].mxu0
      %v1892 = vpop.f32.mrb[0].mxu0
      %v1893 = vadd.f32 0.0, %v1892
      %v1894 = vpop.f32.mrb[0].mxu0
      %1895 = vdwg.mxu0
      %1896 = vmatprep.subr.bf16.mxu0 0
      %1897 = vmatpush1.bf16.xpose.msra.mxu0 %v1191
      %1898 = vmatprep.subr.bf16.mxu0 0
      %1899 = vmatpush1.bf16.xpose.msra.mxu0 0
      %1900 = vmatprep.subr.bf16.mxu0 0
      %1901 = vmatpush1.bf16.xpose.msra.mxu0 0
      %1902 = vmatprep.subr.bf16.mxu0 0
      %1903 = vmatpush1.bf16.xpose.msra.mxu0 0
      %1904 = vmatprep.subr.bf16.mxu0 0
      %1905 = vmatpush1.bf16.xpose.msra.mxu0 0
      %1906 = vmatprep.subr.bf16.mxu0 0
      %1907 = vmatpush1.bf16.xpose.msra.mxu0 0
      %1908 = vmatprep.subr.bf16.mxu0 0
      %1909 = vmatpush1.bf16.xpose.msra.mxu0 0
      %1910 = vmatprep.subr.bf16.mxu0 0
      %1911 = vmatpush1.bf16.xpose.msra.mxu0 0
      %1912 = vmatprep.subr.bf16.mxu0 0
      %1913 = vmatpush1.bf16.xpose.msra.mxu0 0
      %1914 = vmatprep.subr.bf16.mxu0 0
      %1915 = vmatpush1.bf16.xpose.msra.mxu0 0
      %1916 = vmatprep.subr.bf16.mxu0 0
      %1917 = vmatpush1.bf16.xpose.msra.mxu0 0
      %1918 = vmatprep.subr.bf16.mxu0 0
      %1919 = vmatpush1.bf16.xpose.msra.mxu0 0
      %1920 = vmatprep.subr.bf16.mxu0 0
      %1921 = vmatpush1.bf16.xpose.msra.mxu0 0
      %1922 = vmatprep.subr.bf16.mxu0 0
      %1923 = vmatpush1.bf16.xpose.msra.mxu0 0
      %1924 = vmatprep.subr.bf16.mxu0 0
      %1925 = vmatpush1.bf16.xpose.msra.mxu0 0
      %1926 = vmatprep.subr.bf16.mxu0 0
      %1927 = vmatpush1.bf16.xpose.msra.mxu0 0
      %1928 = vmatprep.mubr.bf16.mxu0 0
      %1929 = vmatmul.mubr.bf16.gmra.mrb[0].mxu0 %v1194
      %v1930 = vpop.f32.mrb[0].mxu0
      %v1931 = vadd.f32 0.0, %v1930
      %v1932 = vpop.f32.mrb[0].mxu0
      %v1933 = vpop.f32.mrb[0].mxu0
      %v1934 = vadd.f32 0.0, %v1933
      %v1935 = vpop.f32.mrb[0].mxu0
      %1936 = vdwg.mxu0
      %1937 = vmatprep.subr.bf16.mxu0 0
      %1938 = vmatpush1.bf16.xpose.msra.mxu0 %v1238
      %1939 = vmatprep.subr.bf16.mxu0 0
      %1940 = vmatpush1.bf16.xpose.msra.mxu0 0
      %1941 = vmatprep.subr.bf16.mxu0 0
      %1942 = vmatpush1.bf16.xpose.msra.mxu0 0
      %1943 = vmatprep.subr.bf16.mxu0 0
      %1944 = vmatpush1.bf16.xpose.msra.mxu0 0
      %1945 = vmatprep.subr.bf16.mxu0 0
      %1946 = vmatpush1.bf16.xpose.msra.mxu0 0
      %1947 = vmatprep.subr.bf16.mxu0 0
      %1948 = vmatpush1.bf16.xpose.msra.mxu0 0
      %1949 = vmatprep.subr.bf16.mxu0 0
      %1950 = vmatpush1.bf16.xpose.msra.mxu0 0
      %1951 = vmatprep.subr.bf16.mxu0 0
      %1952 = vmatpush1.bf16.xpose.msra.mxu0 0
      %1953 = vmatprep.subr.bf16.mxu0 0
      %1954 = vmatpush1.bf16.xpose.msra.mxu0 0
      %1955 = vmatprep.subr.bf16.mxu0 0
      %1956 = vmatpush1.bf16.xpose.msra.mxu0 0
      %1957 = vmatprep.subr.bf16.mxu0 0
      %1958 = vmatpush1.bf16.xpose.msra.mxu0 0
      %1959 = vmatprep.subr.bf16.mxu0 0
      %1960 = vmatpush1.bf16.xpose.msra.mxu0 0
      %1961 = vmatprep.subr.bf16.mxu0 0
      %1962 = vmatpush1.bf16.xpose.msra.mxu0 0
      %1963 = vmatprep.subr.bf16.mxu0 0
      %1964 = vmatpush1.bf16.xpose.msra.mxu0 0
      %1965 = vmatprep.subr.bf16.mxu0 0
      %1966 = vmatpush1.bf16.xpose.msra.mxu0 0
      %1967 = vmatprep.subr.bf16.mxu0 0
      %1968 = vmatpush1.bf16.xpose.msra.mxu0 0
      %1969 = vmatprep.mubr.bf16.mxu0 0
      %1970 = vmatmul.mubr.bf16.gmra.mrb[0].mxu0 %v1241
      %v1971 = vpop.f32.mrb[0].mxu0
      %v1972 = vadd.f32 0.0, %v1971
      %v1973 = vpop.f32.mrb[0].mxu0
      %v1974 = vpop.f32.mrb[0].mxu0
      %v1975 = vadd.f32 0.0, %v1974
      %v1976 = vpop.f32.mrb[0].mxu0
      %1977 = vdwg.mxu0
      %1978 = vmatprep.subr.bf16.mxu0 0
      %1979 = vmatpush1.bf16.xpose.msra.mxu0 %v1285
      %1980 = vmatprep.subr.bf16.mxu0 0
      %1981 = vmatpush1.bf16.xpose.msra.mxu0 0
      %1982 = vmatprep.subr.bf16.mxu0 0
      %1983 = vmatpush1.bf16.xpose.msra.mxu0 0
      %1984 = vmatprep.subr.bf16.mxu0 0
      %1985 = vmatpush1.bf16.xpose.msra.mxu0 0
      %1986 = vmatprep.subr.bf16.mxu0 0
      %1987 = vmatpush1.bf16.xpose.msra.mxu0 0
      %1988 = vmatprep.subr.bf16.mxu0 0
      %1989 = vmatpush1.bf16.xpose.msra.mxu0 0
      %1990 = vmatprep.subr.bf16.mxu0 0
      %1991 = vmatpush1.bf16.xpose.msra.mxu0 0
      %1992 = vmatprep.subr.bf16.mxu0 0
      %1993 = vmatpush1.bf16.xpose.msra.mxu0 0
      %1994 = vmatprep.subr.bf16.mxu0 0
      %1995 = vmatpush1.bf16.xpose.msra.mxu0 0
      %1996 = vmatprep.subr.bf16.mxu0 0
      %1997 = vmatpush1.bf16.xpose.msra.mxu0 0
      %1998 = vmatprep.subr.bf16.mxu0 0
      %1999 = vmatpush1.bf16.xpose.msra.mxu0 0
      %2000 = vmatprep.subr.bf16.mxu0 0
      %2001 = vmatpush1.bf16.xpose.msra.mxu0 0
      %2002 = vmatprep.subr.bf16.mxu0 0
      %2003 = vmatpush1.bf16.xpose.msra.mxu0 0
      %2004 = vmatprep.subr.bf16.mxu0 0
      %2005 = vmatpush1.bf16.xpose.msra.mxu0 0
      %2006 = vmatprep.subr.bf16.mxu0 0
      %2007 = vmatpush1.bf16.xpose.msra.mxu0 0
      %2008 = vmatprep.subr.bf16.mxu0 0
      %2009 = vmatpush1.bf16.xpose.msra.mxu0 0
      %2010 = vmatprep.mubr.bf16.mxu0 0
      %2011 = vmatmul.mubr.bf16.gmra.mrb[0].mxu0 %v1288
      %v2012 = vpop.f32.mrb[0].mxu0
      %v2013 = vadd.f32 0.0, %v2012
      %v2014 = vpop.f32.mrb[0].mxu0
      %v2015 = vpop.f32.mrb[0].mxu0
      %v2016 = vadd.f32 0.0, %v2015
      %v2017 = vpop.f32.mrb[0].mxu0
      %2018 = vdwg.mxu0
      %v2019 = vmul.f32 %v1398, 0.35355338
      %v2020 = vmul.f32 %v1401, 0.35355338
      %v2021 = vmul.f32 %v1439, 0.35355338
      %v2022 = vmul.f32 %v1442, 0.35355338
      %v2023 = vmul.f32 %v1480, 0.35355338
      %v2024 = vmul.f32 %v1483, 0.35355338
      %v2025 = vmul.f32 %v1521, 0.35355338
      %v2026 = vmul.f32 %v1524, 0.35355338
      %v2027 = vmul.f32 %v1562, 0.35355338
      %v2028 = vmul.f32 %v1565, 0.35355338
      %v2029 = vmul.f32 %v1603, 0.35355338
      %v2030 = vmul.f32 %v1606, 0.35355338
      %v2031 = vmul.f32 %v1644, 0.35355338
      %v2032 = vmul.f32 %v1647, 0.35355338
      %v2033 = vmul.f32 %v1685, 0.35355338
      %v2034 = vmul.f32 %v1688, 0.35355338
      %v2035 = vmul.f32 %v1726, 0.35355338
      %v2036 = vmul.f32 %v1729, 0.35355338
      %v2037 = vmul.f32 %v1767, 0.35355338
      %v2038 = vmul.f32 %v1770, 0.35355338
      %v2039 = vmul.f32 %v1808, 0.35355338
      %v2040 = vmul.f32 %v1811, 0.35355338
      %v2041 = vmul.f32 %v1849, 0.35355338
      %v2042 = vmul.f32 %v1852, 0.35355338
      %v2043 = vmul.f32 %v1890, 0.35355338
      %v2044 = vmul.f32 %v1893, 0.35355338
      %v2045 = vmul.f32 %v1931, 0.35355338
      %v2046 = vmul.f32 %v1934, 0.35355338
      %v2047 = vmul.f32 %v1972, 0.35355338
      %v2048 = vmul.f32 %v1975, 0.35355338
      %v2049 = vmul.f32 %v2013, 0.35355338
      %v2050 = vmul.f32 %v2016, 0.35355338
      %vm2051 = vcmask 130048
      %v2052 = vsel %vm2051, %v1331, -inf
      %2053 = vmax.xlane.f32.xlu0 %v2052
      %v2054 = vpop.xlane.xlu0 %2053
      %v2055 = vsel %vm2051, %v1332, -inf
      %2056 = vmax.xlane.f32.xlu0 %v2055
      %v2057 = vpop.xlane.xlu0 %2056
      %v2058 = vsel %vm2051, %v1333, -inf
      %2059 = vmax.xlane.f32.xlu0 %v2058
      %v2060 = vpop.xlane.xlu0 %2059
      %v2061 = vsel %vm2051, %v1334, -inf
      %2062 = vmax.xlane.f32.xlu0 %v2061
      %v2063 = vpop.xlane.xlu0 %2062
      %v2064 = vsel %vm2051, %v1335, -inf
      %2065 = vmax.xlane.f32.xlu0 %v2064
      %v2066 = vpop.xlane.xlu0 %2065
      %v2067 = vsel %vm2051, %v1336, -inf
      %2068 = vmax.xlane.f32.xlu0 %v2067
      %v2069 = vpop.xlane.xlu0 %2068
      %v2070 = vsel %vm2051, %v1337, -inf
      %2071 = vmax.xlane.f32.xlu0 %v2070
      %v2072 = vpop.xlane.xlu0 %2071
      %v2073 = vsel %vm2051, %v1338, -inf
      %2074 = vmax.xlane.f32.xlu0 %v2073
      %v2075 = vpop.xlane.xlu0 %2074
      %v2076 = vsel %vm2051, %v1339, -inf
      %2077 = vmax.xlane.f32.xlu0 %v2076
      %v2078 = vpop.xlane.xlu0 %2077
      %v2079 = vsel %vm2051, %v1340, -inf
      %2080 = vmax.xlane.f32.xlu0 %v2079
      %v2081 = vpop.xlane.xlu0 %2080
      %v2082 = vsel %vm2051, %v1341, -inf
      %2083 = vmax.xlane.f32.xlu0 %v2082
      %v2084 = vpop.xlane.xlu0 %2083
      %v2085 = vsel %vm2051, %v1342, -inf
      %2086 = vmax.xlane.f32.xlu0 %v2085
      %v2087 = vpop.xlane.xlu0 %2086
      %v2088 = vsel %vm2051, %v1343, -inf
      %2089 = vmax.xlane.f32.xlu0 %v2088
      %v2090 = vpop.xlane.xlu0 %2089
      %v2091 = vsel %vm2051, %v1344, -inf
      %2092 = vmax.xlane.f32.xlu0 %v2091
      %v2093 = vpop.xlane.xlu0 %2092
      %v2094 = vsel %vm2051, %v1345, -inf
      %2095 = vmax.xlane.f32.xlu0 %v2094
      %v2096 = vpop.xlane.xlu0 %2095
      %v2097 = vsel %vm2051, %v1346, -inf
      %2098 = vmax.xlane.f32.xlu0 %v2097
      %v2099 = vpop.xlane.xlu0 %2098
      %v2100 = vsel %vm2051, %v1347, -inf
      %2101 = vmax.xlane.f32.xlu0 %v2100
      %v2102 = vpop.xlane.xlu0 %2101
      %v2103 = vsel %vm2051, %v1348, -inf
      %2104 = vmax.xlane.f32.xlu0 %v2103
      %v2105 = vpop.xlane.xlu0 %2104
      %v2106 = vsel %vm2051, %v1349, -inf
      %2107 = vmax.xlane.f32.xlu0 %v2106
      %v2108 = vpop.xlane.xlu0 %2107
      %v2109 = vsel %vm2051, %v1350, -inf
      %2110 = vmax.xlane.f32.xlu0 %v2109
      %v2111 = vpop.xlane.xlu0 %2110
      %v2112 = vsel %vm2051, %v1351, -inf
      %2113 = vmax.xlane.f32.xlu0 %v2112
      %v2114 = vpop.xlane.xlu0 %2113
      %v2115 = vsel %vm2051, %v1352, -inf
      %2116 = vmax.xlane.f32.xlu0 %v2115
      %v2117 = vpop.xlane.xlu0 %2116
      %v2118 = vsel %vm2051, %v1353, -inf
      %2119 = vmax.xlane.f32.xlu0 %v2118
      %v2120 = vpop.xlane.xlu0 %2119
      %v2121 = vsel %vm2051, %v1354, -inf
      %2122 = vmax.xlane.f32.xlu0 %v2121
      %v2123 = vpop.xlane.xlu0 %2122
      %v2124 = vsel %vm2051, %v1355, -inf
      %2125 = vmax.xlane.f32.xlu0 %v2124
      %v2126 = vpop.xlane.xlu0 %2125
      %v2127 = vsel %vm2051, %v1356, -inf
      %2128 = vmax.xlane.f32.xlu0 %v2127
      %v2129 = vpop.xlane.xlu0 %2128
      %v2130 = vsel %vm2051, %v1357, -inf
      %2131 = vmax.xlane.f32.xlu0 %v2130
      %v2132 = vpop.xlane.xlu0 %2131
      %v2133 = vsel %vm2051, %v1358, -inf
      %2134 = vmax.xlane.f32.xlu0 %v2133
      %v2135 = vpop.xlane.xlu0 %2134
      %v2136 = vsel %vm2051, %v1359, -inf
      %2137 = vmax.xlane.f32.xlu0 %v2136
      %v2138 = vpop.xlane.xlu0 %2137
      %v2139 = vsel %vm2051, %v1360, -inf
      %2140 = vmax.xlane.f32.xlu0 %v2139
      %v2141 = vpop.xlane.xlu0 %2140
      %v2142 = vsel %vm2051, %v1361, -inf
      %2143 = vmax.xlane.f32.xlu0 %v2142
      %v2144 = vpop.xlane.xlu0 %2143
      %v2145 = vsel %vm2051, %v1362, -inf
      %2146 = vmax.xlane.f32.xlu0 %v2145
      %v2147 = vpop.xlane.xlu0 %2146
      %v2148 = vsub.f32 %v1331, %v2054
      %v2149 = vsub.f32 %v1332, %v2057
      %v2150 = vsub.f32 %v1333, %v2060
      %v2151 = vsub.f32 %v1334, %v2063
      %v2152 = vsub.f32 %v1335, %v2066
      %v2153 = vsub.f32 %v1336, %v2069
      %v2154 = vsub.f32 %v1337, %v2072
      %v2155 = vsub.f32 %v1338, %v2075
      %v2156 = vsub.f32 %v1339, %v2078
      %v2157 = vsub.f32 %v1340, %v2081
      %v2158 = vsub.f32 %v1341, %v2084
      %v2159 = vsub.f32 %v1342, %v2087
      %v2160 = vsub.f32 %v1343, %v2090
      %v2161 = vsub.f32 %v1344, %v2093
      %v2162 = vsub.f32 %v1345, %v2096
      %v2163 = vsub.f32 %v1346, %v2099
      %v2164 = vsub.f32 %v1347, %v2102
      %v2165 = vsub.f32 %v1348, %v2105
      %v2166 = vsub.f32 %v1349, %v2108
      %v2167 = vsub.f32 %v1350, %v2111
      %v2168 = vsub.f32 %v1351, %v2114
      %v2169 = vsub.f32 %v1352, %v2117
      %v2170 = vsub.f32 %v1353, %v2120
      %v2171 = vsub.f32 %v1354, %v2123
      %v2172 = vsub.f32 %v1355, %v2126
      %v2173 = vsub.f32 %v1356, %v2129
      %v2174 = vsub.f32 %v1357, %v2132
      %v2175 = vsub.f32 %v1358, %v2135
      %v2176 = vsub.f32 %v1359, %v2138
      %v2177 = vsub.f32 %v1360, %v2141
      %v2178 = vsub.f32 %v1361, %v2144
      %v2179 = vsub.f32 %v1362, %v2147
      %v2180 = vmul.f32 %v2148, 1.442695
      %v2181 = vpow.pop %v2180
      %v2182 = vmul.f32 %v2149, 1.442695
      %v2183 = vpow.pop %v2182
      %v2184 = vmul.f32 %v2150, 1.442695
      %v2185 = vpow.pop %v2184
      %v2186 = vmul.f32 %v2151, 1.442695
      %v2187 = vpow.pop %v2186
      %v2188 = vmul.f32 %v2152, 1.442695
      %v2189 = vpow.pop %v2188
      %v2190 = vmul.f32 %v2153, 1.442695
      %v2191 = vpow.pop %v2190
      %v2192 = vmul.f32 %v2154, 1.442695
      %v2193 = vpow.pop %v2192
      %v2194 = vmul.f32 %v2155, 1.442695
      %v2195 = vpow.pop %v2194
      %v2196 = vmul.f32 %v2156, 1.442695
      %v2197 = vpow.pop %v2196
      %v2198 = vmul.f32 %v2157, 1.442695
      %v2199 = vpow.pop %v2198
      %v2200 = vmul.f32 %v2158, 1.442695
      %v2201 = vpow.pop %v2200
      %v2202 = vmul.f32 %v2159, 1.442695
      %v2203 = vpow.pop %v2202
      %v2204 = vmul.f32 %v2160, 1.442695
      %v2205 = vpow.pop %v2204
      %v2206 = vmul.f32 %v2161, 1.442695
      %v2207 = vpow.pop %v2206
      %v2208 = vmul.f32 %v2162, 1.442695
      %v2209 = vpow.pop %v2208
      %v2210 = vmul.f32 %v2163, 1.442695
      %v2211 = vpow.pop %v2210
      %v2212 = vmul.f32 %v2164, 1.442695
      %v2213 = vpow.pop %v2212
      %v2214 = vmul.f32 %v2165, 1.442695
      %v2215 = vpow.pop %v2214
      %v2216 = vmul.f32 %v2166, 1.442695
      %v2217 = vpow.pop %v2216
      %v2218 = vmul.f32 %v2167, 1.442695
      %v2219 = vpow.pop %v2218
      %v2220 = vmul.f32 %v2168, 1.442695
      %v2221 = vpow.pop %v2220
      %v2222 = vmul.f32 %v2169, 1.442695
      %v2223 = vpow.pop %v2222
      %v2224 = vmul.f32 %v2170, 1.442695
      %v2225 = vpow.pop %v2224
      %v2226 = vmul.f32 %v2171, 1.442695
      %v2227 = vpow.pop %v2226
      %v2228 = vmul.f32 %v2172, 1.442695
      %v2229 = vpow.pop %v2228
      %v2230 = vmul.f32 %v2173, 1.442695
      %v2231 = vpow.pop %v2230
      %v2232 = vmul.f32 %v2174, 1.442695
      %v2233 = vpow.pop %v2232
      %v2234 = vmul.f32 %v2175, 1.442695
      %v2235 = vpow.pop %v2234
      %v2236 = vmul.f32 %v2176, 1.442695
      %v2237 = vpow.pop %v2236
      %v2238 = vmul.f32 %v2177, 1.442695
      %v2239 = vpow.pop %v2238
      %v2240 = vmul.f32 %v2178, 1.442695
      %v2241 = vpow.pop %v2240
      %v2242 = vmul.f32 %v2179, 1.442695
      %v2243 = vpow.pop %v2242
      %v2244 = vsel %vm2051, %v2181, 0.0
      %2245 = vadd.xlane.f32.xlu0 %v2244
      %v2246 = vpop.xlane.xlu0 %2245
      %v2247 = vsel %vm2051, %v2183, 0.0
      %2248 = vadd.xlane.f32.xlu0 %v2247
      %v2249 = vpop.xlane.xlu0 %2248
      %v2250 = vsel %vm2051, %v2185, 0.0
      %2251 = vadd.xlane.f32.xlu0 %v2250
      %v2252 = vpop.xlane.xlu0 %2251
      %v2253 = vsel %vm2051, %v2187, 0.0
      %2254 = vadd.xlane.f32.xlu0 %v2253
      %v2255 = vpop.xlane.xlu0 %2254
      %v2256 = vsel %vm2051, %v2189, 0.0
      %2257 = vadd.xlane.f32.xlu0 %v2256
      %v2258 = vpop.xlane.xlu0 %2257
      %v2259 = vsel %vm2051, %v2191, 0.0
      %2260 = vadd.xlane.f32.xlu0 %v2259
      %v2261 = vpop.xlane.xlu0 %2260
      %v2262 = vsel %vm2051, %v2193, 0.0
      %2263 = vadd.xlane.f32.xlu0 %v2262
      %v2264 = vpop.xlane.xlu0 %2263
      %v2265 = vsel %vm2051, %v2195, 0.0
      %2266 = vadd.xlane.f32.xlu0 %v2265
      %v2267 = vpop.xlane.xlu0 %2266
      %v2268 = vsel %vm2051, %v2197, 0.0
      %2269 = vadd.xlane.f32.xlu0 %v2268
      %v2270 = vpop.xlane.xlu0 %2269
      %v2271 = vsel %vm2051, %v2199, 0.0
      %2272 = vadd.xlane.f32.xlu0 %v2271
      %v2273 = vpop.xlane.xlu0 %2272
      %v2274 = vsel %vm2051, %v2201, 0.0
      %2275 = vadd.xlane.f32.xlu0 %v2274
      %v2276 = vpop.xlane.xlu0 %2275
      %v2277 = vsel %vm2051, %v2203, 0.0
      %2278 = vadd.xlane.f32.xlu0 %v2277
      %v2279 = vpop.xlane.xlu0 %2278
      %v2280 = vsel %vm2051, %v2205, 0.0
      %2281 = vadd.xlane.f32.xlu0 %v2280
      %v2282 = vpop.xlane.xlu0 %2281
      %v2283 = vsel %vm2051, %v2207, 0.0
      %2284 = vadd.xlane.f32.xlu0 %v2283
      %v2285 = vpop.xlane.xlu0 %2284
      %v2286 = vsel %vm2051, %v2209, 0.0
      %2287 = vadd.xlane.f32.xlu0 %v2286
      %v2288 = vpop.xlane.xlu0 %2287
      %v2289 = vsel %vm2051, %v2211, 0.0
      %2290 = vadd.xlane.f32.xlu0 %v2289
      %v2291 = vpop.xlane.xlu0 %2290
      %v2292 = vsel %vm2051, %v2213, 0.0
      %2293 = vadd.xlane.f32.xlu0 %v2292
      %v2294 = vpop.xlane.xlu0 %2293
      %v2295 = vsel %vm2051, %v2215, 0.0
      %2296 = vadd.xlane.f32.xlu0 %v2295
      %v2297 = vpop.xlane.xlu0 %2296
      %v2298 = vsel %vm2051, %v2217, 0.0
      %2299 = vadd.xlane.f32.xlu0 %v2298
      %v2300 = vpop.xlane.xlu0 %2299
      %v2301 = vsel %vm2051, %v2219, 0.0
      %2302 = vadd.xlane.f32.xlu0 %v2301
      %v2303 = vpop.xlane.xlu0 %2302
      %v2304 = vsel %vm2051, %v2221, 0.0
      %2305 = vadd.xlane.f32.xlu0 %v2304
      %v2306 = vpop.xlane.xlu0 %2305
      %v2307 = vsel %vm2051, %v2223, 0.0
      %2308 = vadd.xlane.f32.xlu0 %v2307
      %v2309 = vpop.xlane.xlu0 %2308
      %v2310 = vsel %vm2051, %v2225, 0.0
      %2311 = vadd.xlane.f32.xlu0 %v2310
      %v2312 = vpop.xlane.xlu0 %2311
      %v2313 = vsel %vm2051, %v2227, 0.0
      %2314 = vadd.xlane.f32.xlu0 %v2313
      %v2315 = vpop.xlane.xlu0 %2314
      %v2316 = vsel %vm2051, %v2229, 0.0
      %2317 = vadd.xlane.f32.xlu0 %v2316
      %v2318 = vpop.xlane.xlu0 %2317
      %v2319 = vsel %vm2051, %v2231, 0.0
      %2320 = vadd.xlane.f32.xlu0 %v2319
      %v2321 = vpop.xlane.xlu0 %2320
      %v2322 = vsel %vm2051, %v2233, 0.0
      %2323 = vadd.xlane.f32.xlu0 %v2322
      %v2324 = vpop.xlane.xlu0 %2323
      %v2325 = vsel %vm2051, %v2235, 0.0
      %2326 = vadd.xlane.f32.xlu0 %v2325
      %v2327 = vpop.xlane.xlu0 %2326
      %v2328 = vsel %vm2051, %v2237, 0.0
      %2329 = vadd.xlane.f32.xlu0 %v2328
      %v2330 = vpop.xlane.xlu0 %2329
      %v2331 = vsel %vm2051, %v2239, 0.0
      %2332 = vadd.xlane.f32.xlu0 %v2331
      %v2333 = vpop.xlane.xlu0 %2332
      %v2334 = vsel %vm2051, %v2241, 0.0
      %2335 = vadd.xlane.f32.xlu0 %v2334
      %v2336 = vpop.xlane.xlu0 %2335
      %v2337 = vsel %vm2051, %v2243, 0.0
      %2338 = vadd.xlane.f32.xlu0 %v2337
      %v2339 = vpop.xlane.xlu0 %2338
      %v2340 = vrcp.pop %v2246
      %v2341 = vrcp.pop %v2249
      %v2342 = vrcp.pop %v2252
      %v2343 = vrcp.pop %v2255
      %v2344 = vrcp.pop %v2258
      %v2345 = vrcp.pop %v2261
      %v2346 = vrcp.pop %v2264
      %v2347 = vrcp.pop %v2267
      %v2348 = vrcp.pop %v2270
      %v2349 = vrcp.pop %v2273
      %v2350 = vrcp.pop %v2276
      %v2351 = vrcp.pop %v2279
      %v2352 = vrcp.pop %v2282
      %v2353 = vrcp.pop %v2285
      %v2354 = vrcp.pop %v2288
      %v2355 = vrcp.pop %v2291
      %v2356 = vrcp.pop %v2294
      %v2357 = vrcp.pop %v2297
      %v2358 = vrcp.pop %v2300
      %v2359 = vrcp.pop %v2303
      %v2360 = vrcp.pop %v2306
      %v2361 = vrcp.pop %v2309
      %v2362 = vrcp.pop %v2312
      %v2363 = vrcp.pop %v2315
      %v2364 = vrcp.pop %v2318
      %v2365 = vrcp.pop %v2321
      %v2366 = vrcp.pop %v2324
      %v2367 = vrcp.pop %v2327
      %v2368 = vrcp.pop %v2330
      %v2369 = vrcp.pop %v2333
      %v2370 = vrcp.pop %v2336
      %v2371 = vrcp.pop %v2339
      %v2372 = vmul.f32 %v2181, %v2340
      %v2373 = vmul.f32 %v2183, %v2341
      %v2374 = vmul.f32 %v2185, %v2342
      %v2375 = vmul.f32 %v2187, %v2343
      %v2376 = vmul.f32 %v2189, %v2344
      %v2377 = vmul.f32 %v2191, %v2345
      %v2378 = vmul.f32 %v2193, %v2346
      %v2379 = vmul.f32 %v2195, %v2347
      %v2380 = vmul.f32 %v2197, %v2348
      %v2381 = vmul.f32 %v2199, %v2349
      %v2382 = vmul.f32 %v2201, %v2350
      %v2383 = vmul.f32 %v2203, %v2351
      %v2384 = vmul.f32 %v2205, %v2352
      %v2385 = vmul.f32 %v2207, %v2353
      %v2386 = vmul.f32 %v2209, %v2354
      %v2387 = vmul.f32 %v2211, %v2355
      %v2388 = vmul.f32 %v2213, %v2356
      %v2389 = vmul.f32 %v2215, %v2357
      %v2390 = vmul.f32 %v2217, %v2358
      %v2391 = vmul.f32 %v2219, %v2359
      %v2392 = vmul.f32 %v2221, %v2360
      %v2393 = vmul.f32 %v2223, %v2361
      %v2394 = vmul.f32 %v2225, %v2362
      %v2395 = vmul.f32 %v2227, %v2363
      %v2396 = vmul.f32 %v2229, %v2364
      %v2397 = vmul.f32 %v2231, %v2365
      %v2398 = vmul.f32 %v2233, %v2366
      %v2399 = vmul.f32 %v2235, %v2367
      %v2400 = vmul.f32 %v2237, %v2368
      %v2401 = vmul.f32 %v2239, %v2369
      %v2402 = vmul.f32 %v2241, %v2370
      %v2403 = vmul.f32 %v2243, %v2371
      %v2404 = vpack.c.bf16 %v2373, %v2372
      %v2405 = vpack.c.bf16 %v2375, %v2374
      %v2406 = vpack.c.bf16 %v2377, %v2376
      %v2407 = vpack.c.bf16 %v2379, %v2378
      %v2408 = vpack.c.bf16 %v2381, %v2380
      %v2409 = vpack.c.bf16 %v2383, %v2382
      %v2410 = vpack.c.bf16 %v2385, %v2384
      %v2411 = vpack.c.bf16 %v2387, %v2386
      %v2412 = vpack.c.bf16 %v2389, %v2388
      %v2413 = vpack.c.bf16 %v2391, %v2390
      %v2414 = vpack.c.bf16 %v2393, %v2392
      %v2415 = vpack.c.bf16 %v2395, %v2394
      %v2416 = vpack.c.bf16 %v2397, %v2396
      %v2417 = vpack.c.bf16 %v2399, %v2398
      %v2418 = vpack.c.bf16 %v2401, %v2400
      %v2419 = vpack.c.bf16 %v2403, %v2402
      %v2421 = vsel %vm2051, %v2404, 0
      %2423 = vmatprep.subr.bf16.mxu0 0
      %2424 = vmatpush1.bf16.msra.mxu0 %v562
      %2425 = vmatprep.subr.bf16.mxu0 0
      %2426 = vmatpush1.bf16.msra.mxu0 0
      %2427 = vmatprep.subr.bf16.mxu0 0
      %2428 = vmatpush1.bf16.msra.mxu0 0
      %2429 = vmatprep.subr.bf16.mxu0 0
      %2430 = vmatpush1.bf16.msra.mxu0 0
      %2431 = vmatprep.subr.bf16.mxu0 0
      %2432 = vmatpush1.bf16.msra.mxu0 0
      %2433 = vmatprep.subr.bf16.mxu0 0
      %2434 = vmatpush1.bf16.msra.mxu0 0
      %2435 = vmatprep.subr.bf16.mxu0 0
      %2436 = vmatpush1.bf16.msra.mxu0 0
      %2437 = vmatprep.subr.bf16.mxu0 0
      %2438 = vmatpush1.bf16.msra.mxu0 0
      %2439 = vmatprep.subr.bf16.mxu0 0
      %2440 = vmatpush1.bf16.msra.mxu0 0
      %2441 = vmatprep.subr.bf16.mxu0 0
      %2442 = vmatpush1.bf16.msra.mxu0 0
      %2443 = vmatprep.subr.bf16.mxu0 0
      %2444 = vmatpush1.bf16.msra.mxu0 0
      %2445 = vmatprep.subr.bf16.mxu0 0
      %2446 = vmatpush1.bf16.msra.mxu0 0
      %2447 = vmatprep.subr.bf16.mxu0 0
      %2448 = vmatpush1.bf16.msra.mxu0 0
      %2449 = vmatprep.subr.bf16.mxu0 0
      %2450 = vmatpush1.bf16.msra.mxu0 0
      %2451 = vmatprep.subr.bf16.mxu0 0
      %2452 = vmatpush1.bf16.msra.mxu0 0
      %2453 = vmatprep.subr.bf16.mxu0 0
      %2454 = vmatpush1.bf16.msra.mxu0 0
      %2455 = vmatprep.mubr.bf16.mxu0 0
      %2456 = vmatmul.mubr.bf16.gmra.mrb[0].mxu0 %v2421
      %v2457 = vpop.f32.mrb[0].mxu0
      %v2458 = vadd.f32 0.0, %v2457
      %v2459 = vpop.f32.mrb[0].mxu0
      %v2460 = vpop.f32.mrb[0].mxu0
      %v2461 = vadd.f32 0.0, %v2460
      %v2462 = vpop.f32.mrb[0].mxu0
      %2463 = vdwg.mxu0
      %v2465 = vsel %vm2051, %v2405, 0
      %2467 = vmatprep.subr.bf16.mxu0 0
      %2468 = vmatpush1.bf16.msra.mxu0 %v563
      %2469 = vmatprep.subr.bf16.mxu0 0
      %2470 = vmatpush1.bf16.msra.mxu0 0
      %2471 = vmatprep.subr.bf16.mxu0 0
      %2472 = vmatpush1.bf16.msra.mxu0 0
      %2473 = vmatprep.subr.bf16.mxu0 0
      %2474 = vmatpush1.bf16.msra.mxu0 0
      %2475 = vmatprep.subr.bf16.mxu0 0
      %2476 = vmatpush1.bf16.msra.mxu0 0
      %2477 = vmatprep.subr.bf16.mxu0 0
      %2478 = vmatpush1.bf16.msra.mxu0 0
      %2479 = vmatprep.subr.bf16.mxu0 0
      %2480 = vmatpush1.bf16.msra.mxu0 0
      %2481 = vmatprep.subr.bf16.mxu0 0
      %2482 = vmatpush1.bf16.msra.mxu0 0
      %2483 = vmatprep.subr.bf16.mxu0 0
      %2484 = vmatpush1.bf16.msra.mxu0 0
      %2485 = vmatprep.subr.bf16.mxu0 0
      %2486 = vmatpush1.bf16.msra.mxu0 0
      %2487 = vmatprep.subr.bf16.mxu0 0
      %2488 = vmatpush1.bf16.msra.mxu0 0
      %2489 = vmatprep.subr.bf16.mxu0 0
      %2490 = vmatpush1.bf16.msra.mxu0 0
      %2491 = vmatprep.subr.bf16.mxu0 0
      %2492 = vmatpush1.bf16.msra.mxu0 0
      %2493 = vmatprep.subr.bf16.mxu0 0
      %2494 = vmatpush1.bf16.msra.mxu0 0
      %2495 = vmatprep.subr.bf16.mxu0 0
      %2496 = vmatpush1.bf16.msra.mxu0 0
      %2497 = vmatprep.subr.bf16.mxu0 0
      %2498 = vmatpush1.bf16.msra.mxu0 0
      %2499 = vmatprep.mubr.bf16.mxu0 0
      %2500 = vmatmul.mubr.bf16.gmra.mrb[0].mxu0 %v2465
      %v2501 = vpop.f32.mrb[0].mxu0
      %v2502 = vadd.f32 0.0, %v2501
      %v2503 = vpop.f32.mrb[0].mxu0
      %v2504 = vpop.f32.mrb[0].mxu0
      %v2505 = vadd.f32 0.0, %v2504
      %v2506 = vpop.f32.mrb[0].mxu0
      %2507 = vdwg.mxu0
      %v2509 = vsel %vm2051, %v2406, 0
      %2511 = vmatprep.subr.bf16.mxu0 0
      %2512 = vmatpush1.bf16.msra.mxu0 %v564
      %2513 = vmatprep.subr.bf16.mxu0 0
      %2514 = vmatpush1.bf16.msra.mxu0 0
      %2515 = vmatprep.subr.bf16.mxu0 0
      %2516 = vmatpush1.bf16.msra.mxu0 0
      %2517 = vmatprep.subr.bf16.mxu0 0
      %2518 = vmatpush1.bf16.msra.mxu0 0
      %2519 = vmatprep.subr.bf16.mxu0 0
      %2520 = vmatpush1.bf16.msra.mxu0 0
      %2521 = vmatprep.subr.bf16.mxu0 0
      %2522 = vmatpush1.bf16.msra.mxu0 0
      %2523 = vmatprep.subr.bf16.mxu0 0
      %2524 = vmatpush1.bf16.msra.mxu0 0
      %2525 = vmatprep.subr.bf16.mxu0 0
      %2526 = vmatpush1.bf16.msra.mxu0 0
      %2527 = vmatprep.subr.bf16.mxu0 0
      %2528 = vmatpush1.bf16.msra.mxu0 0
      %2529 = vmatprep.subr.bf16.mxu0 0
      %2530 = vmatpush1.bf16.msra.mxu0 0
      %2531 = vmatprep.subr.bf16.mxu0 0
      %2532 = vmatpush1.bf16.msra.mxu0 0
      %2533 = vmatprep.subr.bf16.mxu0 0
      %2534 = vmatpush1.bf16.msra.mxu0 0
      %2535 = vmatprep.subr.bf16.mxu0 0
      %2536 = vmatpush1.bf16.msra.mxu0 0
      %2537 = vmatprep.subr.bf16.mxu0 0
      %2538 = vmatpush1.bf16.msra.mxu0 0
      %2539 = vmatprep.subr.bf16.mxu0 0
      %2540 = vmatpush1.bf16.msra.mxu0 0
      %2541 = vmatprep.subr.bf16.mxu0 0
      %2542 = vmatpush1.bf16.msra.mxu0 0
      %2543 = vmatprep.mubr.bf16.mxu0 0
      %2544 = vmatmul.mubr.bf16.gmra.mrb[0].mxu0 %v2509
      %v2545 = vpop.f32.mrb[0].mxu0
      %v2546 = vadd.f32 0.0, %v2545
      %v2547 = vpop.f32.mrb[0].mxu0
      %v2548 = vpop.f32.mrb[0].mxu0
      %v2549 = vadd.f32 0.0, %v2548
      %v2550 = vpop.f32.mrb[0].mxu0
      %2551 = vdwg.mxu0
      %v2553 = vsel %vm2051, %v2407, 0
      %2555 = vmatprep.subr.bf16.mxu0 0
      %2556 = vmatpush1.bf16.msra.mxu0 %v565
      %2557 = vmatprep.subr.bf16.mxu0 0
      %2558 = vmatpush1.bf16.msra.mxu0 0
      %2559 = vmatprep.subr.bf16.mxu0 0
      %2560 = vmatpush1.bf16.msra.mxu0 0
      %2561 = vmatprep.subr.bf16.mxu0 0
      %2562 = vmatpush1.bf16.msra.mxu0 0
      %2563 = vmatprep.subr.bf16.mxu0 0
      %2564 = vmatpush1.bf16.msra.mxu0 0
      %2565 = vmatprep.subr.bf16.mxu0 0
      %2566 = vmatpush1.bf16.msra.mxu0 0
      %2567 = vmatprep.subr.bf16.mxu0 0
      %2568 = vmatpush1.bf16.msra.mxu0 0
      %2569 = vmatprep.subr.bf16.mxu0 0
      %2570 = vmatpush1.bf16.msra.mxu0 0
      %2571 = vmatprep.subr.bf16.mxu0 0
      %2572 = vmatpush1.bf16.msra.mxu0 0
      %2573 = vmatprep.subr.bf16.mxu0 0
      %2574 = vmatpush1.bf16.msra.mxu0 0
      %2575 = vmatprep.subr.bf16.mxu0 0
      %2576 = vmatpush1.bf16.msra.mxu0 0
      %2577 = vmatprep.subr.bf16.mxu0 0
      %2578 = vmatpush1.bf16.msra.mxu0 0
      %2579 = vmatprep.subr.bf16.mxu0 0
      %2580 = vmatpush1.bf16.msra.mxu0 0
      %2581 = vmatprep.subr.bf16.mxu0 0
      %2582 = vmatpush1.bf16.msra.mxu0 0
      %2583 = vmatprep.subr.bf16.mxu0 0
      %2584 = vmatpush1.bf16.msra.mxu0 0
      %2585 = vmatprep.subr.bf16.mxu0 0
      %2586 = vmatpush1.bf16.msra.mxu0 0
      %2587 = vmatprep.mubr.bf16.mxu0 0
      %2588 = vmatmul.mubr.bf16.gmra.mrb[0].mxu0 %v2553
      %v2589 = vpop.f32.mrb[0].mxu0
      %v2590 = vadd.f32 0.0, %v2589
      %v2591 = vpop.f32.mrb[0].mxu0
      %v2592 = vpop.f32.mrb[0].mxu0
      %v2593 = vadd.f32 0.0, %v2592
      %v2594 = vpop.f32.mrb[0].mxu0
      %2595 = vdwg.mxu0
      %v2597 = vsel %vm2051, %v2408, 0
      %2599 = vmatprep.subr.bf16.mxu0 0
      %2600 = vmatpush1.bf16.msra.mxu0 %v566
      %2601 = vmatprep.subr.bf16.mxu0 0
      %2602 = vmatpush1.bf16.msra.mxu0 0
      %2603 = vmatprep.subr.bf16.mxu0 0
      %2604 = vmatpush1.bf16.msra.mxu0 0
      %2605 = vmatprep.subr.bf16.mxu0 0
      %2606 = vmatpush1.bf16.msra.mxu0 0
      %2607 = vmatprep.subr.bf16.mxu0 0
      %2608 = vmatpush1.bf16.msra.mxu0 0
      %2609 = vmatprep.subr.bf16.mxu0 0
      %2610 = vmatpush1.bf16.msra.mxu0 0
      %2611 = vmatprep.subr.bf16.mxu0 0
      %2612 = vmatpush1.bf16.msra.mxu0 0
      %2613 = vmatprep.subr.bf16.mxu0 0
      %2614 = vmatpush1.bf16.msra.mxu0 0
      %2615 = vmatprep.subr.bf16.mxu0 0
      %2616 = vmatpush1.bf16.msra.mxu0 0
      %2617 = vmatprep.subr.bf16.mxu0 0
      %2618 = vmatpush1.bf16.msra.mxu0 0
      %2619 = vmatprep.subr.bf16.mxu0 0
      %2620 = vmatpush1.bf16.msra.mxu0 0
      %2621 = vmatprep.subr.bf16.mxu0 0
      %2622 = vmatpush1.bf16.msra.mxu0 0
      %2623 = vmatprep.subr.bf16.mxu0 0
      %2624 = vmatpush1.bf16.msra.mxu0 0
      %2625 = vmatprep.subr.bf16.mxu0 0
      %2626 = vmatpush1.bf16.msra.mxu0 0
      %2627 = vmatprep.subr.bf16.mxu0 0
      %2628 = vmatpush1.bf16.msra.mxu0 0
      %2629 = vmatprep.subr.bf16.mxu0 0
      %2630 = vmatpush1.bf16.msra.mxu0 0
      %2631 = vmatprep.mubr.bf16.mxu0 0
      %2632 = vmatmul.mubr.bf16.gmra.mrb[0].mxu0 %v2597
      %v2633 = vpop.f32.mrb[0].mxu0
      %v2634 = vadd.f32 0.0, %v2633
      %v2635 = vpop.f32.mrb[0].mxu0
      %v2636 = vpop.f32.mrb[0].mxu0
      %v2637 = vadd.f32 0.0, %v2636
      %v2638 = vpop.f32.mrb[0].mxu0
      %2639 = vdwg.mxu0
      %v2641 = vsel %vm2051, %v2409, 0
      %2643 = vmatprep.subr.bf16.mxu0 0
      %2644 = vmatpush1.bf16.msra.mxu0 %v567
      %2645 = vmatprep.subr.bf16.mxu0 0
      %2646 = vmatpush1.bf16.msra.mxu0 0
      %2647 = vmatprep.subr.bf16.mxu0 0
      %2648 = vmatpush1.bf16.msra.mxu0 0
      %2649 = vmatprep.subr.bf16.mxu0 0
      %2650 = vmatpush1.bf16.msra.mxu0 0
      %2651 = vmatprep.subr.bf16.mxu0 0
      %2652 = vmatpush1.bf16.msra.mxu0 0
      %2653 = vmatprep.subr.bf16.mxu0 0
      %2654 = vmatpush1.bf16.msra.mxu0 0
      %2655 = vmatprep.subr.bf16.mxu0 0
      %2656 = vmatpush1.bf16.msra.mxu0 0
      %2657 = vmatprep.subr.bf16.mxu0 0
      %2658 = vmatpush1.bf16.msra.mxu0 0
      %2659 = vmatprep.subr.bf16.mxu0 0
      %2660 = vmatpush1.bf16.msra.mxu0 0
      %2661 = vmatprep.subr.bf16.mxu0 0
      %2662 = vmatpush1.bf16.msra.mxu0 0
      %2663 = vmatprep.subr.bf16.mxu0 0
      %2664 = vmatpush1.bf16.msra.mxu0 0
      %2665 = vmatprep.subr.bf16.mxu0 0
      %2666 = vmatpush1.bf16.msra.mxu0 0
      %2667 = vmatprep.subr.bf16.mxu0 0
      %2668 = vmatpush1.bf16.msra.mxu0 0
      %2669 = vmatprep.subr.bf16.mxu0 0
      %2670 = vmatpush1.bf16.msra.mxu0 0
      %2671 = vmatprep.subr.bf16.mxu0 0
      %2672 = vmatpush1.bf16.msra.mxu0 0
      %2673 = vmatprep.subr.bf16.mxu0 0
      %2674 = vmatpush1.bf16.msra.mxu0 0
      %2675 = vmatprep.mubr.bf16.mxu0 0
      %2676 = vmatmul.mubr.bf16.gmra.mrb[0].mxu0 %v2641
      %v2677 = vpop.f32.mrb[0].mxu0
      %v2678 = vadd.f32 0.0, %v2677
      %v2679 = vpop.f32.mrb[0].mxu0
      %v2680 = vpop.f32.mrb[0].mxu0
      %v2681 = vadd.f32 0.0, %v2680
      %v2682 = vpop.f32.mrb[0].mxu0
      %2683 = vdwg.mxu0
      %v2685 = vsel %vm2051, %v2410, 0
      %2687 = vmatprep.subr.bf16.mxu0 0
      %2688 = vmatpush1.bf16.msra.mxu0 %v568
      %2689 = vmatprep.subr.bf16.mxu0 0
      %2690 = vmatpush1.bf16.msra.mxu0 0
      %2691 = vmatprep.subr.bf16.mxu0 0
      %2692 = vmatpush1.bf16.msra.mxu0 0
      %2693 = vmatprep.subr.bf16.mxu0 0
      %2694 = vmatpush1.bf16.msra.mxu0 0
      %2695 = vmatprep.subr.bf16.mxu0 0
      %2696 = vmatpush1.bf16.msra.mxu0 0
      %2697 = vmatprep.subr.bf16.mxu0 0
      %2698 = vmatpush1.bf16.msra.mxu0 0
      %2699 = vmatprep.subr.bf16.mxu0 0
      %2700 = vmatpush1.bf16.msra.mxu0 0
      %2701 = vmatprep.subr.bf16.mxu0 0
      %2702 = vmatpush1.bf16.msra.mxu0 0
      %2703 = vmatprep.subr.bf16.mxu0 0
      %2704 = vmatpush1.bf16.msra.mxu0 0
      %2705 = vmatprep.subr.bf16.mxu0 0
      %2706 = vmatpush1.bf16.msra.mxu0 0
      %2707 = vmatprep.subr.bf16.mxu0 0
      %2708 = vmatpush1.bf16.msra.mxu0 0
      %2709 = vmatprep.subr.bf16.mxu0 0
      %2710 = vmatpush1.bf16.msra.mxu0 0
      %2711 = vmatprep.subr.bf16.mxu0 0
      %2712 = vmatpush1.bf16.msra.mxu0 0
      %2713 = vmatprep.subr.bf16.mxu0 0
      %2714 = vmatpush1.bf16.msra.mxu0 0
      %2715 = vmatprep.subr.bf16.mxu0 0
      %2716 = vmatpush1.bf16.msra.mxu0 0
      %2717 = vmatprep.subr.bf16.mxu0 0
      %2718 = vmatpush1.bf16.msra.mxu0 0
      %2719 = vmatprep.mubr.bf16.mxu0 0
      %2720 = vmatmul.mubr.bf16.gmra.mrb[0].mxu0 %v2685
      %v2721 = vpop.f32.mrb[0].mxu0
      %v2722 = vadd.f32 0.0, %v2721
      %v2723 = vpop.f32.mrb[0].mxu0
      %v2724 = vpop.f32.mrb[0].mxu0
      %v2725 = vadd.f32 0.0, %v2724
      %v2726 = vpop.f32.mrb[0].mxu0
      %2727 = vdwg.mxu0
      %v2729 = vsel %vm2051, %v2411, 0
      %2731 = vmatprep.subr.bf16.mxu0 0
      %2732 = vmatpush1.bf16.msra.mxu0 %v569
      %2733 = vmatprep.subr.bf16.mxu0 0
      %2734 = vmatpush1.bf16.msra.mxu0 0
      %2735 = vmatprep.subr.bf16.mxu0 0
      %2736 = vmatpush1.bf16.msra.mxu0 0
      %2737 = vmatprep.subr.bf16.mxu0 0
      %2738 = vmatpush1.bf16.msra.mxu0 0
      %2739 = vmatprep.subr.bf16.mxu0 0
      %2740 = vmatpush1.bf16.msra.mxu0 0
      %2741 = vmatprep.subr.bf16.mxu0 0
      %2742 = vmatpush1.bf16.msra.mxu0 0
      %2743 = vmatprep.subr.bf16.mxu0 0
      %2744 = vmatpush1.bf16.msra.mxu0 0
      %2745 = vmatprep.subr.bf16.mxu0 0
      %2746 = vmatpush1.bf16.msra.mxu0 0
      %2747 = vmatprep.subr.bf16.mxu0 0
      %2748 = vmatpush1.bf16.msra.mxu0 0
      %2749 = vmatprep.subr.bf16.mxu0 0
      %2750 = vmatpush1.bf16.msra.mxu0 0
      %2751 = vmatprep.subr.bf16.mxu0 0
      %2752 = vmatpush1.bf16.msra.mxu0 0
      %2753 = vmatprep.subr.bf16.mxu0 0
      %2754 = vmatpush1.bf16.msra.mxu0 0
      %2755 = vmatprep.subr.bf16.mxu0 0
      %2756 = vmatpush1.bf16.msra.mxu0 0
      %2757 = vmatprep.subr.bf16.mxu0 0
      %2758 = vmatpush1.bf16.msra.mxu0 0
      %2759 = vmatprep.subr.bf16.mxu0 0
      %2760 = vmatpush1.bf16.msra.mxu0 0
      %2761 = vmatprep.subr.bf16.mxu0 0
      %2762 = vmatpush1.bf16.msra.mxu0 0
      %2763 = vmatprep.mubr.bf16.mxu0 0
      %2764 = vmatmul.mubr.bf16.gmra.mrb[0].mxu0 %v2729
      %v2765 = vpop.f32.mrb[0].mxu0
      %v2766 = vadd.f32 0.0, %v2765
      %v2767 = vpop.f32.mrb[0].mxu0
      %v2768 = vpop.f32.mrb[0].mxu0
      %v2769 = vadd.f32 0.0, %v2768
      %v2770 = vpop.f32.mrb[0].mxu0
      %2771 = vdwg.mxu0
      %v2773 = vsel %vm2051, %v2412, 0
      %2775 = vmatprep.subr.bf16.mxu0 0
      %2776 = vmatpush1.bf16.msra.mxu0 %v570
      %2777 = vmatprep.subr.bf16.mxu0 0
      %2778 = vmatpush1.bf16.msra.mxu0 0
      %2779 = vmatprep.subr.bf16.mxu0 0
      %2780 = vmatpush1.bf16.msra.mxu0 0
      %2781 = vmatprep.subr.bf16.mxu0 0
      %2782 = vmatpush1.bf16.msra.mxu0 0
      %2783 = vmatprep.subr.bf16.mxu0 0
      %2784 = vmatpush1.bf16.msra.mxu0 0
      %2785 = vmatprep.subr.bf16.mxu0 0
      %2786 = vmatpush1.bf16.msra.mxu0 0
      %2787 = vmatprep.subr.bf16.mxu0 0
      %2788 = vmatpush1.bf16.msra.mxu0 0
      %2789 = vmatprep.subr.bf16.mxu0 0
      %2790 = vmatpush1.bf16.msra.mxu0 0
      %2791 = vmatprep.subr.bf16.mxu0 0
      %2792 = vmatpush1.bf16.msra.mxu0 0
      %2793 = vmatprep.subr.bf16.mxu0 0
      %2794 = vmatpush1.bf16.msra.mxu0 0
      %2795 = vmatprep.subr.bf16.mxu0 0
      %2796 = vmatpush1.bf16.msra.mxu0 0
      %2797 = vmatprep.subr.bf16.mxu0 0
      %2798 = vmatpush1.bf16.msra.mxu0 0
      %2799 = vmatprep.subr.bf16.mxu0 0
      %2800 = vmatpush1.bf16.msra.mxu0 0
      %2801 = vmatprep.subr.bf16.mxu0 0
      %2802 = vmatpush1.bf16.msra.mxu0 0
      %2803 = vmatprep.subr.bf16.mxu0 0
      %2804 = vmatpush1.bf16.msra.mxu0 0
      %2805 = vmatprep.subr.bf16.mxu0 0
      %2806 = vmatpush1.bf16.msra.mxu0 0
      %2807 = vmatprep.mubr.bf16.mxu0 0
      %2808 = vmatmul.mubr.bf16.gmra.mrb[0].mxu0 %v2773
      %v2809 = vpop.f32.mrb[0].mxu0
      %v2810 = vadd.f32 0.0, %v2809
      %v2811 = vpop.f32.mrb[0].mxu0
      %v2812 = vpop.f32.mrb[0].mxu0
      %v2813 = vadd.f32 0.0, %v2812
      %v2814 = vpop.f32.mrb[0].mxu0
      %2815 = vdwg.mxu0
      %v2817 = vsel %vm2051, %v2413, 0
      %2819 = vmatprep.subr.bf16.mxu0 0
      %2820 = vmatpush1.bf16.msra.mxu0 %v571
      %2821 = vmatprep.subr.bf16.mxu0 0
      %2822 = vmatpush1.bf16.msra.mxu0 0
      %2823 = vmatprep.subr.bf16.mxu0 0
      %2824 = vmatpush1.bf16.msra.mxu0 0
      %2825 = vmatprep.subr.bf16.mxu0 0
      %2826 = vmatpush1.bf16.msra.mxu0 0
      %2827 = vmatprep.subr.bf16.mxu0 0
      %2828 = vmatpush1.bf16.msra.mxu0 0
      %2829 = vmatprep.subr.bf16.mxu0 0
      %2830 = vmatpush1.bf16.msra.mxu0 0
      %2831 = vmatprep.subr.bf16.mxu0 0
      %2832 = vmatpush1.bf16.msra.mxu0 0
      %2833 = vmatprep.subr.bf16.mxu0 0
      %2834 = vmatpush1.bf16.msra.mxu0 0
      %2835 = vmatprep.subr.bf16.mxu0 0
      %2836 = vmatpush1.bf16.msra.mxu0 0
      %2837 = vmatprep.subr.bf16.mxu0 0
      %2838 = vmatpush1.bf16.msra.mxu0 0
      %2839 = vmatprep.subr.bf16.mxu0 0
      %2840 = vmatpush1.bf16.msra.mxu0 0
      %2841 = vmatprep.subr.bf16.mxu0 0
      %2842 = vmatpush1.bf16.msra.mxu0 0
      %2843 = vmatprep.subr.bf16.mxu0 0
      %2844 = vmatpush1.bf16.msra.mxu0 0
      %2845 = vmatprep.subr.bf16.mxu0 0
      %2846 = vmatpush1.bf16.msra.mxu0 0
      %2847 = vmatprep.subr.bf16.mxu0 0
      %2848 = vmatpush1.bf16.msra.mxu0 0
      %2849 = vmatprep.subr.bf16.mxu0 0
      %2850 = vmatpush1.bf16.msra.mxu0 0
      %2851 = vmatprep.mubr.bf16.mxu0 0
      %2852 = vmatmul.mubr.bf16.gmra.mrb[0].mxu0 %v2817
      %v2853 = vpop.f32.mrb[0].mxu0
      %v2854 = vadd.f32 0.0, %v2853
      %v2855 = vpop.f32.mrb[0].mxu0
      %v2856 = vpop.f32.mrb[0].mxu0
      %v2857 = vadd.f32 0.0, %v2856
      %v2858 = vpop.f32.mrb[0].mxu0
      %2859 = vdwg.mxu0
      %v2861 = vsel %vm2051, %v2414, 0
      %2863 = vmatprep.subr.bf16.mxu0 0
      %2864 = vmatpush1.bf16.msra.mxu0 %v572
      %2865 = vmatprep.subr.bf16.mxu0 0
      %2866 = vmatpush1.bf16.msra.mxu0 0
      %2867 = vmatprep.subr.bf16.mxu0 0
      %2868 = vmatpush1.bf16.msra.mxu0 0
      %2869 = vmatprep.subr.bf16.mxu0 0
      %2870 = vmatpush1.bf16.msra.mxu0 0
      %2871 = vmatprep.subr.bf16.mxu0 0
      %2872 = vmatpush1.bf16.msra.mxu0 0
      %2873 = vmatprep.subr.bf16.mxu0 0
      %2874 = vmatpush1.bf16.msra.mxu0 0
      %2875 = vmatprep.subr.bf16.mxu0 0
      %2876 = vmatpush1.bf16.msra.mxu0 0
      %2877 = vmatprep.subr.bf16.mxu0 0
      %2878 = vmatpush1.bf16.msra.mxu0 0
      %2879 = vmatprep.subr.bf16.mxu0 0
      %2880 = vmatpush1.bf16.msra.mxu0 0
      %2881 = vmatprep.subr.bf16.mxu0 0
      %2882 = vmatpush1.bf16.msra.mxu0 0
      %2883 = vmatprep.subr.bf16.mxu0 0
      %2884 = vmatpush1.bf16.msra.mxu0 0
      %2885 = vmatprep.subr.bf16.mxu0 0
      %2886 = vmatpush1.bf16.msra.mxu0 0
      %2887 = vmatprep.subr.bf16.mxu0 0
      %2888 = vmatpush1.bf16.msra.mxu0 0
      %2889 = vmatprep.subr.bf16.mxu0 0
      %2890 = vmatpush1.bf16.msra.mxu0 0
      %2891 = vmatprep.subr.bf16.mxu0 0
      %2892 = vmatpush1.bf16.msra.mxu0 0
      %2893 = vmatprep.subr.bf16.mxu0 0
      %2894 = vmatpush1.bf16.msra.mxu0 0
      %2895 = vmatprep.mubr.bf16.mxu0 0
      %2896 = vmatmul.mubr.bf16.gmra.mrb[0].mxu0 %v2861
      %v2897 = vpop.f32.mrb[0].mxu0
      %v2898 = vadd.f32 0.0, %v2897
      %v2899 = vpop.f32.mrb[0].mxu0
      %v2900 = vpop.f32.mrb[0].mxu0
      %v2901 = vadd.f32 0.0, %v2900
      %v2902 = vpop.f32.mrb[0].mxu0
      %2903 = vdwg.mxu0
      %v2905 = vsel %vm2051, %v2415, 0
      %2907 = vmatprep.subr.bf16.mxu0 0
      %2908 = vmatpush1.bf16.msra.mxu0 %v573
      %2909 = vmatprep.subr.bf16.mxu0 0
      %2910 = vmatpush1.bf16.msra.mxu0 0
      %2911 = vmatprep.subr.bf16.mxu0 0
      %2912 = vmatpush1.bf16.msra.mxu0 0
      %2913 = vmatprep.subr.bf16.mxu0 0
      %2914 = vmatpush1.bf16.msra.mxu0 0
      %2915 = vmatprep.subr.bf16.mxu0 0
      %2916 = vmatpush1.bf16.msra.mxu0 0
      %2917 = vmatprep.subr.bf16.mxu0 0
      %2918 = vmatpush1.bf16.msra.mxu0 0
      %2919 = vmatprep.subr.bf16.mxu0 0
      %2920 = vmatpush1.bf16.msra.mxu0 0
      %2921 = vmatprep.subr.bf16.mxu0 0
      %2922 = vmatpush1.bf16.msra.mxu0 0
      %2923 = vmatprep.subr.bf16.mxu0 0
      %2924 = vmatpush1.bf16.msra.mxu0 0
      %2925 = vmatprep.subr.bf16.mxu0 0
      %2926 = vmatpush1.bf16.msra.mxu0 0
      %2927 = vmatprep.subr.bf16.mxu0 0
      %2928 = vmatpush1.bf16.msra.mxu0 0
      %2929 = vmatprep.subr.bf16.mxu0 0
      %2930 = vmatpush1.bf16.msra.mxu0 0
      %2931 = vmatprep.subr.bf16.mxu0 0
      %2932 = vmatpush1.bf16.msra.mxu0 0
      %2933 = vmatprep.subr.bf16.mxu0 0
      %2934 = vmatpush1.bf16.msra.mxu0 0
      %2935 = vmatprep.subr.bf16.mxu0 0
      %2936 = vmatpush1.bf16.msra.mxu0 0
      %2937 = vmatprep.subr.bf16.mxu0 0
      %2938 = vmatpush1.bf16.msra.mxu0 0
      %2939 = vmatprep.mubr.bf16.mxu0 0
      %2940 = vmatmul.mubr.bf16.gmra.mrb[0].mxu0 %v2905
      %v2941 = vpop.f32.mrb[0].mxu0
      %v2942 = vadd.f32 0.0, %v2941
      %v2943 = vpop.f32.mrb[0].mxu0
      %v2944 = vpop.f32.mrb[0].mxu0
      %v2945 = vadd.f32 0.0, %v2944
      %v2946 = vpop.f32.mrb[0].mxu0
      %2947 = vdwg.mxu0
      %v2949 = vsel %vm2051, %v2416, 0
      %2951 = vmatprep.subr.bf16.mxu0 0
      %2952 = vmatpush1.bf16.msra.mxu0 %v574
      %2953 = vmatprep.subr.bf16.mxu0 0
      %2954 = vmatpush1.bf16.msra.mxu0 0
      %2955 = vmatprep.subr.bf16.mxu0 0
      %2956 = vmatpush1.bf16.msra.mxu0 0
      %2957 = vmatprep.subr.bf16.mxu0 0
      %2958 = vmatpush1.bf16.msra.mxu0 0
      %2959 = vmatprep.subr.bf16.mxu0 0
      %2960 = vmatpush1.bf16.msra.mxu0 0
      %2961 = vmatprep.subr.bf16.mxu0 0
      %2962 = vmatpush1.bf16.msra.mxu0 0
      %2963 = vmatprep.subr.bf16.mxu0 0
      %2964 = vmatpush1.bf16.msra.mxu0 0
      %2965 = vmatprep.subr.bf16.mxu0 0
      %2966 = vmatpush1.bf16.msra.mxu0 0
      %2967 = vmatprep.subr.bf16.mxu0 0
      %2968 = vmatpush1.bf16.msra.mxu0 0
      %2969 = vmatprep.subr.bf16.mxu0 0
      %2970 = vmatpush1.bf16.msra.mxu0 0
      %2971 = vmatprep.subr.bf16.mxu0 0
      %2972 = vmatpush1.bf16.msra.mxu0 0
      %2973 = vmatprep.subr.bf16.mxu0 0
      %2974 = vmatpush1.bf16.msra.mxu0 0
      %2975 = vmatprep.subr.bf16.mxu0 0
      %2976 = vmatpush1.bf16.msra.mxu0 0
      %2977 = vmatprep.subr.bf16.mxu0 0
      %2978 = vmatpush1.bf16.msra.mxu0 0
      %2979 = vmatprep.subr.bf16.mxu0 0
      %2980 = vmatpush1.bf16.msra.mxu0 0
      %2981 = vmatprep.subr.bf16.mxu0 0
      %2982 = vmatpush1.bf16.msra.mxu0 0
      %2983 = vmatprep.mubr.bf16.mxu0 0
      %2984 = vmatmul.mubr.bf16.gmra.mrb[0].mxu0 %v2949
      %v2985 = vpop.f32.mrb[0].mxu0
      %v2986 = vadd.f32 0.0, %v2985
      %v2987 = vpop.f32.mrb[0].mxu0
      %v2988 = vpop.f32.mrb[0].mxu0
      %v2989 = vadd.f32 0.0, %v2988
      %v2990 = vpop.f32.mrb[0].mxu0
      %2991 = vdwg.mxu0
      %v2993 = vsel %vm2051, %v2417, 0
      %2995 = vmatprep.subr.bf16.mxu0 0
      %2996 = vmatpush1.bf16.msra.mxu0 %v575
      %2997 = vmatprep.subr.bf16.mxu0 0
      %2998 = vmatpush1.bf16.msra.mxu0 0
      %2999 = vmatprep.subr.bf16.mxu0 0
      %3000 = vmatpush1.bf16.msra.mxu0 0
      %3001 = vmatprep.subr.bf16.mxu0 0
      %3002 = vmatpush1.bf16.msra.mxu0 0
      %3003 = vmatprep.subr.bf16.mxu0 0
      %3004 = vmatpush1.bf16.msra.mxu0 0
      %3005 = vmatprep.subr.bf16.mxu0 0
      %3006 = vmatpush1.bf16.msra.mxu0 0
      %3007 = vmatprep.subr.bf16.mxu0 0
      %3008 = vmatpush1.bf16.msra.mxu0 0
      %3009 = vmatprep.subr.bf16.mxu0 0
      %3010 = vmatpush1.bf16.msra.mxu0 0
      %3011 = vmatprep.subr.bf16.mxu0 0
      %3012 = vmatpush1.bf16.msra.mxu0 0
      %3013 = vmatprep.subr.bf16.mxu0 0
      %3014 = vmatpush1.bf16.msra.mxu0 0
      %3015 = vmatprep.subr.bf16.mxu0 0
      %3016 = vmatpush1.bf16.msra.mxu0 0
      %3017 = vmatprep.subr.bf16.mxu0 0
      %3018 = vmatpush1.bf16.msra.mxu0 0
      %3019 = vmatprep.subr.bf16.mxu0 0
      %3020 = vmatpush1.bf16.msra.mxu0 0
      %3021 = vmatprep.subr.bf16.mxu0 0
      %3022 = vmatpush1.bf16.msra.mxu0 0
      %3023 = vmatprep.subr.bf16.mxu0 0
      %3024 = vmatpush1.bf16.msra.mxu0 0
      %3025 = vmatprep.subr.bf16.mxu0 0
      %3026 = vmatpush1.bf16.msra.mxu0 0
      %3027 = vmatprep.mubr.bf16.mxu0 0
      %3028 = vmatmul.mubr.bf16.gmra.mrb[0].mxu0 %v2993
      %v3029 = vpop.f32.mrb[0].mxu0
      %v3030 = vadd.f32 0.0, %v3029
      %v3031 = vpop.f32.mrb[0].mxu0
      %v3032 = vpop.f32.mrb[0].mxu0
      %v3033 = vadd.f32 0.0, %v3032
      %v3034 = vpop.f32.mrb[0].mxu0
      %3035 = vdwg.mxu0
      %v3037 = vsel %vm2051, %v2418, 0
      %3039 = vmatprep.subr.bf16.mxu0 0
      %3040 = vmatpush1.bf16.msra.mxu0 %v576
      %3041 = vmatprep.subr.bf16.mxu0 0
      %3042 = vmatpush1.bf16.msra.mxu0 0
      %3043 = vmatprep.subr.bf16.mxu0 0
      %3044 = vmatpush1.bf16.msra.mxu0 0
      %3045 = vmatprep.subr.bf16.mxu0 0
      %3046 = vmatpush1.bf16.msra.mxu0 0
      %3047 = vmatprep.subr.bf16.mxu0 0
      %3048 = vmatpush1.bf16.msra.mxu0 0
      %3049 = vmatprep.subr.bf16.mxu0 0
      %3050 = vmatpush1.bf16.msra.mxu0 0
      %3051 = vmatprep.subr.bf16.mxu0 0
      %3052 = vmatpush1.bf16.msra.mxu0 0
      %3053 = vmatprep.subr.bf16.mxu0 0
      %3054 = vmatpush1.bf16.msra.mxu0 0
      %3055 = vmatprep.subr.bf16.mxu0 0
      %3056 = vmatpush1.bf16.msra.mxu0 0
      %3057 = vmatprep.subr.bf16.mxu0 0
      %3058 = vmatpush1.bf16.msra.mxu0 0
      %3059 = vmatprep.subr.bf16.mxu0 0
      %3060 = vmatpush1.bf16.msra.mxu0 0
      %3061 = vmatprep.subr.bf16.mxu0 0
      %3062 = vmatpush1.bf16.msra.mxu0 0
      %3063 = vmatprep.subr.bf16.mxu0 0
      %3064 = vmatpush1.bf16.msra.mxu0 0
      %3065 = vmatprep.subr.bf16.mxu0 0
      %3066 = vmatpush1.bf16.msra.mxu0 0
      %3067 = vmatprep.subr.bf16.mxu0 0
      %3068 = vmatpush1.bf16.msra.mxu0 0
      %3069 = vmatprep.subr.bf16.mxu0 0
      %3070 = vmatpush1.bf16.msra.mxu0 0
      %3071 = vmatprep.mubr.bf16.mxu0 0
      %3072 = vmatmul.mubr.bf16.gmra.mrb[0].mxu0 %v3037
      %v3073 = vpop.f32.mrb[0].mxu0
      %v3074 = vadd.f32 0.0, %v3073
      %v3075 = vpop.f32.mrb[0].mxu0
      %v3076 = vpop.f32.mrb[0].mxu0
      %v3077 = vadd.f32 0.0, %v3076
      %v3078 = vpop.f32.mrb[0].mxu0
      %3079 = vdwg.mxu0
      %v3081 = vsel %vm2051, %v2419, 0
      %3083 = vmatprep.subr.bf16.mxu0 0
      %3084 = vmatpush1.bf16.msra.mxu0 %v577
      %3085 = vmatprep.subr.bf16.mxu0 0
      %3086 = vmatpush1.bf16.msra.mxu0 0
      %3087 = vmatprep.subr.bf16.mxu0 0
      %3088 = vmatpush1.bf16.msra.mxu0 0
      %3089 = vmatprep.subr.bf16.mxu0 0
      %3090 = vmatpush1.bf16.msra.mxu0 0
      %3091 = vmatprep.subr.bf16.mxu0 0
      %3092 = vmatpush1.bf16.msra.mxu0 0
      %3093 = vmatprep.subr.bf16.mxu0 0
      %3094 = vmatpush1.bf16.msra.mxu0 0
      %3095 = vmatprep.subr.bf16.mxu0 0
      %3096 = vmatpush1.bf16.msra.mxu0 0
      %3097 = vmatprep.subr.bf16.mxu0 0
      %3098 = vmatpush1.bf16.msra.mxu0 0
      %3099 = vmatprep.subr.bf16.mxu0 0
      %3100 = vmatpush1.bf16.msra.mxu0 0
      %3101 = vmatprep.subr.bf16.mxu0 0
      %3102 = vmatpush1.bf16.msra.mxu0 0
      %3103 = vmatprep.subr.bf16.mxu0 0
      %3104 = vmatpush1.bf16.msra.mxu0 0
      %3105 = vmatprep.subr.bf16.mxu0 0
      %3106 = vmatpush1.bf16.msra.mxu0 0
      %3107 = vmatprep.subr.bf16.mxu0 0
      %3108 = vmatpush1.bf16.msra.mxu0 0
      %3109 = vmatprep.subr.bf16.mxu0 0
      %3110 = vmatpush1.bf16.msra.mxu0 0
      %3111 = vmatprep.subr.bf16.mxu0 0
      %3112 = vmatpush1.bf16.msra.mxu0 0
      %3113 = vmatprep.subr.bf16.mxu0 0
      %3114 = vmatpush1.bf16.msra.mxu0 0
      %3115 = vmatprep.mubr.bf16.mxu0 0
      %3116 = vmatmul.mubr.bf16.gmra.mrb[0].mxu0 %v3081
      %v3117 = vpop.f32.mrb[0].mxu0
      %v3118 = vadd.f32 0.0, %v3117
      %v3119 = vpop.f32.mrb[0].mxu0
      %v3120 = vpop.f32.mrb[0].mxu0
      %v3121 = vadd.f32 0.0, %v3120
      %v3122 = vpop.f32.mrb[0].mxu0
      %3123 = vdwg.mxu0
      %v3124 = vsel %vm2051, %v2019, -inf
      %3125 = vmax.xlane.f32.xlu0 %v3124
      %v3126 = vpop.xlane.xlu0 %3125
      %v3127 = vsel %vm2051, %v2020, -inf
      %3128 = vmax.xlane.f32.xlu0 %v3127
      %v3129 = vpop.xlane.xlu0 %3128
      %v3130 = vsel %vm2051, %v2021, -inf
      %3131 = vmax.xlane.f32.xlu0 %v3130
      %v3132 = vpop.xlane.xlu0 %3131
      %v3133 = vsel %vm2051, %v2022, -inf
      %3134 = vmax.xlane.f32.xlu0 %v3133
      %v3135 = vpop.xlane.xlu0 %3134
      %v3136 = vsel %vm2051, %v2023, -inf
      %3137 = vmax.xlane.f32.xlu0 %v3136
      %v3138 = vpop.xlane.xlu0 %3137
      %v3139 = vsel %vm2051, %v2024, -inf
      %3140 = vmax.xlane.f32.xlu0 %v3139
      %v3141 = vpop.xlane.xlu0 %3140
      %v3142 = vsel %vm2051, %v2025, -inf
      %3143 = vmax.xlane.f32.xlu0 %v3142
      %v3144 = vpop.xlane.xlu0 %3143
      %v3145 = vsel %vm2051, %v2026, -inf
      %3146 = vmax.xlane.f32.xlu0 %v3145
      %v3147 = vpop.xlane.xlu0 %3146
      %v3148 = vsel %vm2051, %v2027, -inf
      %3149 = vmax.xlane.f32.xlu0 %v3148
      %v3150 = vpop.xlane.xlu0 %3149
      %v3151 = vsel %vm2051, %v2028, -inf
      %3152 = vmax.xlane.f32.xlu0 %v3151
      %v3153 = vpop.xlane.xlu0 %3152
      %v3154 = vsel %vm2051, %v2029, -inf
      %3155 = vmax.xlane.f32.xlu0 %v3154
      %v3156 = vpop.xlane.xlu0 %3155
      %v3157 = vsel %vm2051, %v2030, -inf
      %3158 = vmax.xlane.f32.xlu0 %v3157
      %v3159 = vpop.xlane.xlu0 %3158
      %v3160 = vsel %vm2051, %v2031, -inf
      %3161 = vmax.xlane.f32.xlu0 %v3160
      %v3162 = vpop.xlane.xlu0 %3161
      %v3163 = vsel %vm2051, %v2032, -inf
      %3164 = vmax.xlane.f32.xlu0 %v3163
      %v3165 = vpop.xlane.xlu0 %3164
      %v3166 = vsel %vm2051, %v2033, -inf
      %3167 = vmax.xlane.f32.xlu0 %v3166
      %v3168 = vpop.xlane.xlu0 %3167
      %v3169 = vsel %vm2051, %v2034, -inf
      %3170 = vmax.xlane.f32.xlu0 %v3169
      %v3171 = vpop.xlane.xlu0 %3170
      %v3172 = vsel %vm2051, %v2035, -inf
      %3173 = vmax.xlane.f32.xlu0 %v3172
      %v3174 = vpop.xlane.xlu0 %3173
      %v3175 = vsel %vm2051, %v2036, -inf
      %3176 = vmax.xlane.f32.xlu0 %v3175
      %v3177 = vpop.xlane.xlu0 %3176
      %v3178 = vsel %vm2051, %v2037, -inf
      %3179 = vmax.xlane.f32.xlu0 %v3178
      %v3180 = vpop.xlane.xlu0 %3179
      %v3181 = vsel %vm2051, %v2038, -inf
      %3182 = vmax.xlane.f32.xlu0 %v3181
      %v3183 = vpop.xlane.xlu0 %3182
      %v3184 = vsel %vm2051, %v2039, -inf
      %3185 = vmax.xlane.f32.xlu0 %v3184
      %v3186 = vpop.xlane.xlu0 %3185
      %v3187 = vsel %vm2051, %v2040, -inf
      %3188 = vmax.xlane.f32.xlu0 %v3187
      %v3189 = vpop.xlane.xlu0 %3188
      %v3190 = vsel %vm2051, %v2041, -inf
      %3191 = vmax.xlane.f32.xlu0 %v3190
      %v3192 = vpop.xlane.xlu0 %3191
      %v3193 = vsel %vm2051, %v2042, -inf
      %3194 = vmax.xlane.f32.xlu0 %v3193
      %v3195 = vpop.xlane.xlu0 %3194
      %v3196 = vsel %vm2051, %v2043, -inf
      %3197 = vmax.xlane.f32.xlu0 %v3196
      %v3198 = vpop.xlane.xlu0 %3197
      %v3199 = vsel %vm2051, %v2044, -inf
      %3200 = vmax.xlane.f32.xlu0 %v3199
      %v3201 = vpop.xlane.xlu0 %3200
      %v3202 = vsel %vm2051, %v2045, -inf
      %3203 = vmax.xlane.f32.xlu0 %v3202
      %v3204 = vpop.xlane.xlu0 %3203
      %v3205 = vsel %vm2051, %v2046, -inf
      %3206 = vmax.xlane.f32.xlu0 %v3205
      %v3207 = vpop.xlane.xlu0 %3206
      %v3208 = vsel %vm2051, %v2047, -inf
      %3209 = vmax.xlane.f32.xlu0 %v3208
      %v3210 = vpop.xlane.xlu0 %3209
      %v3211 = vsel %vm2051, %v2048, -inf
      %3212 = vmax.xlane.f32.xlu0 %v3211
      %v3213 = vpop.xlane.xlu0 %3212
      %v3214 = vsel %vm2051, %v2049, -inf
      %3215 = vmax.xlane.f32.xlu0 %v3214
      %v3216 = vpop.xlane.xlu0 %3215
      %v3217 = vsel %vm2051, %v2050, -inf
      %3218 = vmax.xlane.f32.xlu0 %v3217
      %v3219 = vpop.xlane.xlu0 %3218
      %v3220 = vsub.f32 %v2019, %v3126
      %v3221 = vsub.f32 %v2020, %v3129
      %v3222 = vsub.f32 %v2021, %v3132
      %v3223 = vsub.f32 %v2022, %v3135
      %v3224 = vsub.f32 %v2023, %v3138
      %v3225 = vsub.f32 %v2024, %v3141
      %v3226 = vsub.f32 %v2025, %v3144
      %v3227 = vsub.f32 %v2026, %v3147
      %v3228 = vsub.f32 %v2027, %v3150
      %v3229 = vsub.f32 %v2028, %v3153
      %v3230 = vsub.f32 %v2029, %v3156
      %v3231 = vsub.f32 %v2030, %v3159
      %v3232 = vsub.f32 %v2031, %v3162
      %v3233 = vsub.f32 %v2032, %v3165
      %v3234 = vsub.f32 %v2033, %v3168
      %v3235 = vsub.f32 %v2034, %v3171
      %v3236 = vsub.f32 %v2035, %v3174
      %v3237 = vsub.f32 %v2036, %v3177
      %v3238 = vsub.f32 %v2037, %v3180
      %v3239 = vsub.f32 %v2038, %v3183
      %v3240 = vsub.f32 %v2039, %v3186
      %v3241 = vsub.f32 %v2040, %v3189
      %v3242 = vsub.f32 %v2041, %v3192
      %v3243 = vsub.f32 %v2042, %v3195
      %v3244 = vsub.f32 %v2043, %v3198
      %v3245 = vsub.f32 %v2044, %v3201
      %v3246 = vsub.f32 %v2045, %v3204
      %v3247 = vsub.f32 %v2046, %v3207
      %v3248 = vsub.f32 %v2047, %v3210
      %v3249 = vsub.f32 %v2048, %v3213
      %v3250 = vsub.f32 %v2049, %v3216
      %v3251 = vsub.f32 %v2050, %v3219
      %v3252 = vmul.f32 %v3220, 1.442695
      %v3253 = vpow.pop %v3252
      %v3254 = vmul.f32 %v3221, 1.442695
      %v3255 = vpow.pop %v3254
      %v3256 = vmul.f32 %v3222, 1.442695
      %v3257 = vpow.pop %v3256
      %v3258 = vmul.f32 %v3223, 1.442695
      %v3259 = vpow.pop %v3258
      %v3260 = vmul.f32 %v3224, 1.442695
      %v3261 = vpow.pop %v3260
      %v3262 = vmul.f32 %v3225, 1.442695
      %v3263 = vpow.pop %v3262
      %v3264 = vmul.f32 %v3226, 1.442695
      %v3265 = vpow.pop %v3264
      %v3266 = vmul.f32 %v3227, 1.442695
      %v3267 = vpow.pop %v3266
      %v3268 = vmul.f32 %v3228, 1.442695
      %v3269 = vpow.pop %v3268
      %v3270 = vmul.f32 %v3229, 1.442695
      %v3271 = vpow.pop %v3270
      %v3272 = vmul.f32 %v3230, 1.442695
      %v3273 = vpow.pop %v3272
      %v3274 = vmul.f32 %v3231, 1.442695
      %v3275 = vpow.pop %v3274
      %v3276 = vmul.f32 %v3232, 1.442695
      %v3277 = vpow.pop %v3276
      %v3278 = vmul.f32 %v3233, 1.442695
      %v3279 = vpow.pop %v3278
      %v3280 = vmul.f32 %v3234, 1.442695
      %v3281 = vpow.pop %v3280
      %v3282 = vmul.f32 %v3235, 1.442695
      %v3283 = vpow.pop %v3282
      %v3284 = vmul.f32 %v3236, 1.442695
      %v3285 = vpow.pop %v3284
      %v3286 = vmul.f32 %v3237, 1.442695
      %v3287 = vpow.pop %v3286
      %v3288 = vmul.f32 %v3238, 1.442695
      %v3289 = vpow.pop %v3288
      %v3290 = vmul.f32 %v3239, 1.442695
      %v3291 = vpow.pop %v3290
      %v3292 = vmul.f32 %v3240, 1.442695
      %v3293 = vpow.pop %v3292
      %v3294 = vmul.f32 %v3241, 1.442695
      %v3295 = vpow.pop %v3294
      %v3296 = vmul.f32 %v3242, 1.442695
      %v3297 = vpow.pop %v3296
      %v3298 = vmul.f32 %v3243, 1.442695
      %v3299 = vpow.pop %v3298
      %v3300 = vmul.f32 %v3244, 1.442695
      %v3301 = vpow.pop %v3300
      %v3302 = vmul.f32 %v3245, 1.442695
      %v3303 = vpow.pop %v3302
      %v3304 = vmul.f32 %v3246, 1.442695
      %v3305 = vpow.pop %v3304
      %v3306 = vmul.f32 %v3247, 1.442695
      %v3307 = vpow.pop %v3306
      %v3308 = vmul.f32 %v3248, 1.442695
      %v3309 = vpow.pop %v3308
      %v3310 = vmul.f32 %v3249, 1.442695
      %v3311 = vpow.pop %v3310
      %v3312 = vmul.f32 %v3250, 1.442695
      %v3313 = vpow.pop %v3312
      %v3314 = vmul.f32 %v3251, 1.442695
      %v3315 = vpow.pop %v3314
      %v3316 = vsel %vm2051, %v3253, 0.0
      %3317 = vadd.xlane.f32.xlu0 %v3316
      %v3318 = vpop.xlane.xlu0 %3317
      %v3319 = vsel %vm2051, %v3255, 0.0
      %3320 = vadd.xlane.f32.xlu0 %v3319
      %v3321 = vpop.xlane.xlu0 %3320
      %v3322 = vsel %vm2051, %v3257, 0.0
      %3323 = vadd.xlane.f32.xlu0 %v3322
      %v3324 = vpop.xlane.xlu0 %3323
      %v3325 = vsel %vm2051, %v3259, 0.0
      %3326 = vadd.xlane.f32.xlu0 %v3325
      %v3327 = vpop.xlane.xlu0 %3326
      %v3328 = vsel %vm2051, %v3261, 0.0
      %3329 = vadd.xlane.f32.xlu0 %v3328
      %v3330 = vpop.xlane.xlu0 %3329
      %v3331 = vsel %vm2051, %v3263, 0.0
      %3332 = vadd.xlane.f32.xlu0 %v3331
      %v3333 = vpop.xlane.xlu0 %3332
      %v3334 = vsel %vm2051, %v3265, 0.0
      %3335 = vadd.xlane.f32.xlu0 %v3334
      %v3336 = vpop.xlane.xlu0 %3335
      %v3337 = vsel %vm2051, %v3267, 0.0
      %3338 = vadd.xlane.f32.xlu0 %v3337
      %v3339 = vpop.xlane.xlu0 %3338
      %v3340 = vsel %vm2051, %v3269, 0.0
      %3341 = vadd.xlane.f32.xlu0 %v3340
      %v3342 = vpop.xlane.xlu0 %3341
      %v3343 = vsel %vm2051, %v3271, 0.0
      %3344 = vadd.xlane.f32.xlu0 %v3343
      %v3345 = vpop.xlane.xlu0 %3344
      %v3346 = vsel %vm2051, %v3273, 0.0
      %3347 = vadd.xlane.f32.xlu0 %v3346
      %v3348 = vpop.xlane.xlu0 %3347
      %v3349 = vsel %vm2051, %v3275, 0.0
      %3350 = vadd.xlane.f32.xlu0 %v3349
      %v3351 = vpop.xlane.xlu0 %3350
      %v3352 = vsel %vm2051, %v3277, 0.0
      %3353 = vadd.xlane.f32.xlu0 %v3352
      %v3354 = vpop.xlane.xlu0 %3353
      %v3355 = vsel %vm2051, %v3279, 0.0
      %3356 = vadd.xlane.f32.xlu0 %v3355
      %v3357 = vpop.xlane.xlu0 %3356
      %v3358 = vsel %vm2051, %v3281, 0.0
      %3359 = vadd.xlane.f32.xlu0 %v3358
      %v3360 = vpop.xlane.xlu0 %3359
      %v3361 = vsel %vm2051, %v3283, 0.0
      %3362 = vadd.xlane.f32.xlu0 %v3361
      %v3363 = vpop.xlane.xlu0 %3362
      %v3364 = vsel %vm2051, %v3285, 0.0
      %3365 = vadd.xlane.f32.xlu0 %v3364
      %v3366 = vpop.xlane.xlu0 %3365
      %v3367 = vsel %vm2051, %v3287, 0.0
      %3368 = vadd.xlane.f32.xlu0 %v3367
      %v3369 = vpop.xlane.xlu0 %3368
      %v3370 = vsel %vm2051, %v3289, 0.0
      %3371 = vadd.xlane.f32.xlu0 %v3370
      %v3372 = vpop.xlane.xlu0 %3371
      %v3373 = vsel %vm2051, %v3291, 0.0
      %3374 = vadd.xlane.f32.xlu0 %v3373
      %v3375 = vpop.xlane.xlu0 %3374
      %v3376 = vsel %vm2051, %v3293, 0.0
      %3377 = vadd.xlane.f32.xlu0 %v3376
      %v3378 = vpop.xlane.xlu0 %3377
      %v3379 = vsel %vm2051, %v3295, 0.0
      %3380 = vadd.xlane.f32.xlu0 %v3379
      %v3381 = vpop.xlane.xlu0 %3380
      %v3382 = vsel %vm2051, %v3297, 0.0
      %3383 = vadd.xlane.f32.xlu0 %v3382
      %v3384 = vpop.xlane.xlu0 %3383
      %v3385 = vsel %vm2051, %v3299, 0.0
      %3386 = vadd.xlane.f32.xlu0 %v3385
      %v3387 = vpop.xlane.xlu0 %3386
      %v3388 = vsel %vm2051, %v3301, 0.0
      %3389 = vadd.xlane.f32.xlu0 %v3388
      %v3390 = vpop.xlane.xlu0 %3389
      %v3391 = vsel %vm2051, %v3303, 0.0
      %3392 = vadd.xlane.f32.xlu0 %v3391
      %v3393 = vpop.xlane.xlu0 %3392
      %v3394 = vsel %vm2051, %v3305, 0.0
      %3395 = vadd.xlane.f32.xlu0 %v3394
      %v3396 = vpop.xlane.xlu0 %3395
      %v3397 = vsel %vm2051, %v3307, 0.0
      %3398 = vadd.xlane.f32.xlu0 %v3397
      %v3399 = vpop.xlane.xlu0 %3398
      %v3400 = vsel %vm2051, %v3309, 0.0
      %3401 = vadd.xlane.f32.xlu0 %v3400
      %v3402 = vpop.xlane.xlu0 %3401
      %v3403 = vsel %vm2051, %v3311, 0.0
      %3404 = vadd.xlane.f32.xlu0 %v3403
      %v3405 = vpop.xlane.xlu0 %3404
      %v3406 = vsel %vm2051, %v3313, 0.0
      %3407 = vadd.xlane.f32.xlu0 %v3406
      %v3408 = vpop.xlane.xlu0 %3407
      %v3409 = vsel %vm2051, %v3315, 0.0
      %3410 = vadd.xlane.f32.xlu0 %v3409
      %v3411 = vpop.xlane.xlu0 %3410
      %v3412 = vrcp.pop %v3318
      %v3413 = vrcp.pop %v3321
      %v3414 = vrcp.pop %v3324
      %v3415 = vrcp.pop %v3327
      %v3416 = vrcp.pop %v3330
      %v3417 = vrcp.pop %v3333
      %v3418 = vrcp.pop %v3336
      %v3419 = vrcp.pop %v3339
      %v3420 = vrcp.pop %v3342
      %v3421 = vrcp.pop %v3345
      %v3422 = vrcp.pop %v3348
      %v3423 = vrcp.pop %v3351
      %v3424 = vrcp.pop %v3354
      %v3425 = vrcp.pop %v3357
      %v3426 = vrcp.pop %v3360
      %v3427 = vrcp.pop %v3363
      %v3428 = vrcp.pop %v3366
      %v3429 = vrcp.pop %v3369
      %v3430 = vrcp.pop %v3372
      %v3431 = vrcp.pop %v3375
      %v3432 = vrcp.pop %v3378
      %v3433 = vrcp.pop %v3381
      %v3434 = vrcp.pop %v3384
      %v3435 = vrcp.pop %v3387
      %v3436 = vrcp.pop %v3390
      %v3437 = vrcp.pop %v3393
      %v3438 = vrcp.pop %v3396
      %v3439 = vrcp.pop %v3399
      %v3440 = vrcp.pop %v3402
      %v3441 = vrcp.pop %v3405
      %v3442 = vrcp.pop %v3408
      %v3443 = vrcp.pop %v3411
      %v3444 = vmul.f32 %v3253, %v3412
      %v3445 = vmul.f32 %v3255, %v3413
      %v3446 = vmul.f32 %v3257, %v3414
      %v3447 = vmul.f32 %v3259, %v3415
      %v3448 = vmul.f32 %v3261, %v3416
      %v3449 = vmul.f32 %v3263, %v3417
      %v3450 = vmul.f32 %v3265, %v3418
      %v3451 = vmul.f32 %v3267, %v3419
      %v3452 = vmul.f32 %v3269, %v3420
      %v3453 = vmul.f32 %v3271, %v3421
      %v3454 = vmul.f32 %v3273, %v3422
      %v3455 = vmul.f32 %v3275, %v3423
      %v3456 = vmul.f32 %v3277, %v3424
      %v3457 = vmul.f32 %v3279, %v3425
      %v3458 = vmul.f32 %v3281, %v3426
      %v3459 = vmul.f32 %v3283, %v3427
      %v3460 = vmul.f32 %v3285, %v3428
      %v3461 = vmul.f32 %v3287, %v3429
      %v3462 = vmul.f32 %v3289, %v3430
      %v3463 = vmul.f32 %v3291, %v3431
      %v3464 = vmul.f32 %v3293, %v3432
      %v3465 = vmul.f32 %v3295, %v3433
      %v3466 = vmul.f32 %v3297, %v3434
      %v3467 = vmul.f32 %v3299, %v3435
      %v3468 = vmul.f32 %v3301, %v3436
      %v3469 = vmul.f32 %v3303, %v3437
      %v3470 = vmul.f32 %v3305, %v3438
      %v3471 = vmul.f32 %v3307, %v3439
      %v3472 = vmul.f32 %v3309, %v3440
      %v3473 = vmul.f32 %v3311, %v3441
      %v3474 = vmul.f32 %v3313, %v3442
      %v3475 = vmul.f32 %v3315, %v3443
      %v3476 = vpack.c.bf16 %v3445, %v3444
      %v3477 = vpack.c.bf16 %v3447, %v3446
      %v3478 = vpack.c.bf16 %v3449, %v3448
      %v3479 = vpack.c.bf16 %v3451, %v3450
      %v3480 = vpack.c.bf16 %v3453, %v3452
      %v3481 = vpack.c.bf16 %v3455, %v3454
      %v3482 = vpack.c.bf16 %v3457, %v3456
      %v3483 = vpack.c.bf16 %v3459, %v3458
      %v3484 = vpack.c.bf16 %v3461, %v3460
      %v3485 = vpack.c.bf16 %v3463, %v3462
      %v3486 = vpack.c.bf16 %v3465, %v3464
      %v3487 = vpack.c.bf16 %v3467, %v3466
      %v3488 = vpack.c.bf16 %v3469, %v3468
      %v3489 = vpack.c.bf16 %v3471, %v3470
      %v3490 = vpack.c.bf16 %v3473, %v3472
      %v3491 = vpack.c.bf16 %v3475, %v3474
      %v3493 = vsel %vm2051, %v3476, 0
      %3495 = vmatprep.subr.bf16.mxu0 0
      %3496 = vmatpush1.bf16.msra.mxu0 %v514
      %3497 = vmatprep.subr.bf16.mxu0 0
      %3498 = vmatpush1.bf16.msra.mxu0 0
      %3499 = vmatprep.subr.bf16.mxu0 0
      %3500 = vmatpush1.bf16.msra.mxu0 0
      %3501 = vmatprep.subr.bf16.mxu0 0
      %3502 = vmatpush1.bf16.msra.mxu0 0
      %3503 = vmatprep.subr.bf16.mxu0 0
      %3504 = vmatpush1.bf16.msra.mxu0 0
      %3505 = vmatprep.subr.bf16.mxu0 0
      %3506 = vmatpush1.bf16.msra.mxu0 0
      %3507 = vmatprep.subr.bf16.mxu0 0
      %3508 = vmatpush1.bf16.msra.mxu0 0
      %3509 = vmatprep.subr.bf16.mxu0 0
      %3510 = vmatpush1.bf16.msra.mxu0 0
      %3511 = vmatprep.subr.bf16.mxu0 0
      %3512 = vmatpush1.bf16.msra.mxu0 0
      %3513 = vmatprep.subr.bf16.mxu0 0
      %3514 = vmatpush1.bf16.msra.mxu0 0
      %3515 = vmatprep.subr.bf16.mxu0 0
      %3516 = vmatpush1.bf16.msra.mxu0 0
      %3517 = vmatprep.subr.bf16.mxu0 0
      %3518 = vmatpush1.bf16.msra.mxu0 0
      %3519 = vmatprep.subr.bf16.mxu0 0
      %3520 = vmatpush1.bf16.msra.mxu0 0
      %3521 = vmatprep.subr.bf16.mxu0 0
      %3522 = vmatpush1.bf16.msra.mxu0 0
      %3523 = vmatprep.subr.bf16.mxu0 0
      %3524 = vmatpush1.bf16.msra.mxu0 0
      %3525 = vmatprep.subr.bf16.mxu0 0
      %3526 = vmatpush1.bf16.msra.mxu0 0
      %3527 = vmatprep.mubr.bf16.mxu0 0
      %3528 = vmatmul.mubr.bf16.gmra.mrb[0].mxu0 %v3493
      %v3529 = vpop.f32.mrb[0].mxu0
      %v3530 = vadd.f32 0.0, %v3529
      %v3531 = vpop.f32.mrb[0].mxu0
      %v3532 = vpop.f32.mrb[0].mxu0
      %v3533 = vadd.f32 0.0, %v3532
      %v3534 = vpop.f32.mrb[0].mxu0
      %3535 = vdwg.mxu0
      %v3537 = vsel %vm2051, %v3477, 0
      %3539 = vmatprep.subr.bf16.mxu0 0
      %3540 = vmatpush1.bf16.msra.mxu0 %v515
      %3541 = vmatprep.subr.bf16.mxu0 0
      %3542 = vmatpush1.bf16.msra.mxu0 0
      %3543 = vmatprep.subr.bf16.mxu0 0
      %3544 = vmatpush1.bf16.msra.mxu0 0
      %3545 = vmatprep.subr.bf16.mxu0 0
      %3546 = vmatpush1.bf16.msra.mxu0 0
      %3547 = vmatprep.subr.bf16.mxu0 0
      %3548 = vmatpush1.bf16.msra.mxu0 0
      %3549 = vmatprep.subr.bf16.mxu0 0
      %3550 = vmatpush1.bf16.msra.mxu0 0
      %3551 = vmatprep.subr.bf16.mxu0 0
      %3552 = vmatpush1.bf16.msra.mxu0 0
      %3553 = vmatprep.subr.bf16.mxu0 0
      %3554 = vmatpush1.bf16.msra.mxu0 0
      %3555 = vmatprep.subr.bf16.mxu0 0
      %3556 = vmatpush1.bf16.msra.mxu0 0
      %3557 = vmatprep.subr.bf16.mxu0 0
      %3558 = vmatpush1.bf16.msra.mxu0 0
      %3559 = vmatprep.subr.bf16.mxu0 0
      %3560 = vmatpush1.bf16.msra.mxu0 0
      %3561 = vmatprep.subr.bf16.mxu0 0
      %3562 = vmatpush1.bf16.msra.mxu0 0
      %3563 = vmatprep.subr.bf16.mxu0 0
      %3564 = vmatpush1.bf16.msra.mxu0 0
      %3565 = vmatprep.subr.bf16.mxu0 0
      %3566 = vmatpush1.bf16.msra.mxu0 0
      %3567 = vmatprep.subr.bf16.mxu0 0
      %3568 = vmatpush1.bf16.msra.mxu0 0
      %3569 = vmatprep.subr.bf16.mxu0 0
      %3570 = vmatpush1.bf16.msra.mxu0 0
      %3571 = vmatprep.mubr.bf16.mxu0 0
      %3572 = vmatmul.mubr.bf16.gmra.mrb[0].mxu0 %v3537
      %v3573 = vpop.f32.mrb[0].mxu0
      %v3574 = vadd.f32 0.0, %v3573
      %v3575 = vpop.f32.mrb[0].mxu0
      %v3576 = vpop.f32.mrb[0].mxu0
      %v3577 = vadd.f32 0.0, %v3576
      %v3578 = vpop.f32.mrb[0].mxu0
      %3579 = vdwg.mxu0
      %v3581 = vsel %vm2051, %v3478, 0
      %3583 = vmatprep.subr.bf16.mxu0 0
      %3584 = vmatpush1.bf16.msra.mxu0 %v516
      %3585 = vmatprep.subr.bf16.mxu0 0
      %3586 = vmatpush1.bf16.msra.mxu0 0
      %3587 = vmatprep.subr.bf16.mxu0 0
      %3588 = vmatpush1.bf16.msra.mxu0 0
      %3589 = vmatprep.subr.bf16.mxu0 0
      %3590 = vmatpush1.bf16.msra.mxu0 0
      %3591 = vmatprep.subr.bf16.mxu0 0
      %3592 = vmatpush1.bf16.msra.mxu0 0
      %3593 = vmatprep.subr.bf16.mxu0 0
      %3594 = vmatpush1.bf16.msra.mxu0 0
      %3595 = vmatprep.subr.bf16.mxu0 0
      %3596 = vmatpush1.bf16.msra.mxu0 0
      %3597 = vmatprep.subr.bf16.mxu0 0
      %3598 = vmatpush1.bf16.msra.mxu0 0
      %3599 = vmatprep.subr.bf16.mxu0 0
      %3600 = vmatpush1.bf16.msra.mxu0 0
      %3601 = vmatprep.subr.bf16.mxu0 0
      %3602 = vmatpush1.bf16.msra.mxu0 0
      %3603 = vmatprep.subr.bf16.mxu0 0
      %3604 = vmatpush1.bf16.msra.mxu0 0
      %3605 = vmatprep.subr.bf16.mxu0 0
      %3606 = vmatpush1.bf16.msra.mxu0 0
      %3607 = vmatprep.subr.bf16.mxu0 0
      %3608 = vmatpush1.bf16.msra.mxu0 0
      %3609 = vmatprep.subr.bf16.mxu0 0
      %3610 = vmatpush1.bf16.msra.mxu0 0
      %3611 = vmatprep.subr.bf16.mxu0 0
      %3612 = vmatpush1.bf16.msra.mxu0 0
      %3613 = vmatprep.subr.bf16.mxu0 0
      %3614 = vmatpush1.bf16.msra.mxu0 0
      %3615 = vmatprep.mubr.bf16.mxu0 0
      %3616 = vmatmul.mubr.bf16.gmra.mrb[0].mxu0 %v3581
      %v3617 = vpop.f32.mrb[0].mxu0
      %v3618 = vadd.f32 0.0, %v3617
      %v3619 = vpop.f32.mrb[0].mxu0
      %v3620 = vpop.f32.mrb[0].mxu0
      %v3621 = vadd.f32 0.0, %v3620
      %v3622 = vpop.f32.mrb[0].mxu0
      %3623 = vdwg.mxu0
      %v3625 = vsel %vm2051, %v3479, 0
      %3627 = vmatprep.subr.bf16.mxu0 0
      %3628 = vmatpush1.bf16.msra.mxu0 %v517
      %3629 = vmatprep.subr.bf16.mxu0 0
      %3630 = vmatpush1.bf16.msra.mxu0 0
      %3631 = vmatprep.subr.bf16.mxu0 0
      %3632 = vmatpush1.bf16.msra.mxu0 0
      %3633 = vmatprep.subr.bf16.mxu0 0
      %3634 = vmatpush1.bf16.msra.mxu0 0
      %3635 = vmatprep.subr.bf16.mxu0 0
      %3636 = vmatpush1.bf16.msra.mxu0 0
      %3637 = vmatprep.subr.bf16.mxu0 0
      %3638 = vmatpush1.bf16.msra.mxu0 0
      %3639 = vmatprep.subr.bf16.mxu0 0
      %3640 = vmatpush1.bf16.msra.mxu0 0
      %3641 = vmatprep.subr.bf16.mxu0 0
      %3642 = vmatpush1.bf16.msra.mxu0 0
      %3643 = vmatprep.subr.bf16.mxu0 0
      %3644 = vmatpush1.bf16.msra.mxu0 0
      %3645 = vmatprep.subr.bf16.mxu0 0
      %3646 = vmatpush1.bf16.msra.mxu0 0
      %3647 = vmatprep.subr.bf16.mxu0 0
      %3648 = vmatpush1.bf16.msra.mxu0 0
      %3649 = vmatprep.subr.bf16.mxu0 0
      %3650 = vmatpush1.bf16.msra.mxu0 0
      %3651 = vmatprep.subr.bf16.mxu0 0
      %3652 = vmatpush1.bf16.msra.mxu0 0
      %3653 = vmatprep.subr.bf16.mxu0 0
      %3654 = vmatpush1.bf16.msra.mxu0 0
      %3655 = vmatprep.subr.bf16.mxu0 0
      %3656 = vmatpush1.bf16.msra.mxu0 0
      %3657 = vmatprep.subr.bf16.mxu0 0
      %3658 = vmatpush1.bf16.msra.mxu0 0
      %3659 = vmatprep.mubr.bf16.mxu0 0
      %3660 = vmatmul.mubr.bf16.gmra.mrb[0].mxu0 %v3625
      %v3661 = vpop.f32.mrb[0].mxu0
      %v3662 = vadd.f32 0.0, %v3661
      %v3663 = vpop.f32.mrb[0].mxu0
      %v3664 = vpop.f32.mrb[0].mxu0
      %v3665 = vadd.f32 0.0, %v3664
      %v3666 = vpop.f32.mrb[0].mxu0
      %3667 = vdwg.mxu0
      %v3669 = vsel %vm2051, %v3480, 0
      %3671 = vmatprep.subr.bf16.mxu0 0
      %3672 = vmatpush1.bf16.msra.mxu0 %v518
      %3673 = vmatprep.subr.bf16.mxu0 0
      %3674 = vmatpush1.bf16.msra.mxu0 0
      %3675 = vmatprep.subr.bf16.mxu0 0
      %3676 = vmatpush1.bf16.msra.mxu0 0
      %3677 = vmatprep.subr.bf16.mxu0 0
      %3678 = vmatpush1.bf16.msra.mxu0 0
      %3679 = vmatprep.subr.bf16.mxu0 0
      %3680 = vmatpush1.bf16.msra.mxu0 0
      %3681 = vmatprep.subr.bf16.mxu0 0
      %3682 = vmatpush1.bf16.msra.mxu0 0
      %3683 = vmatprep.subr.bf16.mxu0 0
      %3684 = vmatpush1.bf16.msra.mxu0 0
      %3685 = vmatprep.subr.bf16.mxu0 0
      %3686 = vmatpush1.bf16.msra.mxu0 0
      %3687 = vmatprep.subr.bf16.mxu0 0
      %3688 = vmatpush1.bf16.msra.mxu0 0
      %3689 = vmatprep.subr.bf16.mxu0 0
      %3690 = vmatpush1.bf16.msra.mxu0 0
      %3691 = vmatprep.subr.bf16.mxu0 0
      %3692 = vmatpush1.bf16.msra.mxu0 0
      %3693 = vmatprep.subr.bf16.mxu0 0
      %3694 = vmatpush1.bf16.msra.mxu0 0
      %3695 = vmatprep.subr.bf16.mxu0 0
      %3696 = vmatpush1.bf16.msra.mxu0 0
      %3697 = vmatprep.subr.bf16.mxu0 0
      %3698 = vmatpush1.bf16.msra.mxu0 0
      %3699 = vmatprep.subr.bf16.mxu0 0
      %3700 = vmatpush1.bf16.msra.mxu0 0
      %3701 = vmatprep.subr.bf16.mxu0 0
      %3702 = vmatpush1.bf16.msra.mxu0 0
      %3703 = vmatprep.mubr.bf16.mxu0 0
      %3704 = vmatmul.mubr.bf16.gmra.mrb[0].mxu0 %v3669
      %v3705 = vpop.f32.mrb[0].mxu0
      %v3706 = vadd.f32 0.0, %v3705
      %v3707 = vpop.f32.mrb[0].mxu0
      %v3708 = vpop.f32.mrb[0].mxu0
      %v3709 = vadd.f32 0.0, %v3708
      %v3710 = vpop.f32.mrb[0].mxu0
      %3711 = vdwg.mxu0
      %v3713 = vsel %vm2051, %v3481, 0
      %3715 = vmatprep.subr.bf16.mxu0 0
      %3716 = vmatpush1.bf16.msra.mxu0 %v519
      %3717 = vmatprep.subr.bf16.mxu0 0
      %3718 = vmatpush1.bf16.msra.mxu0 0
      %3719 = vmatprep.subr.bf16.mxu0 0
      %3720 = vmatpush1.bf16.msra.mxu0 0
      %3721 = vmatprep.subr.bf16.mxu0 0
      %3722 = vmatpush1.bf16.msra.mxu0 0
      %3723 = vmatprep.subr.bf16.mxu0 0
      %3724 = vmatpush1.bf16.msra.mxu0 0
      %3725 = vmatprep.subr.bf16.mxu0 0
      %3726 = vmatpush1.bf16.msra.mxu0 0
      %3727 = vmatprep.subr.bf16.mxu0 0
      %3728 = vmatpush1.bf16.msra.mxu0 0
      %3729 = vmatprep.subr.bf16.mxu0 0
      %3730 = vmatpush1.bf16.msra.mxu0 0
      %3731 = vmatprep.subr.bf16.mxu0 0
      %3732 = vmatpush1.bf16.msra.mxu0 0
      %3733 = vmatprep.subr.bf16.mxu0 0
      %3734 = vmatpush1.bf16.msra.mxu0 0
      %3735 = vmatprep.subr.bf16.mxu0 0
      %3736 = vmatpush1.bf16.msra.mxu0 0
      %3737 = vmatprep.subr.bf16.mxu0 0
      %3738 = vmatpush1.bf16.msra.mxu0 0
      %3739 = vmatprep.subr.bf16.mxu0 0
      %3740 = vmatpush1.bf16.msra.mxu0 0
      %3741 = vmatprep.subr.bf16.mxu0 0
      %3742 = vmatpush1.bf16.msra.mxu0 0
      %3743 = vmatprep.subr.bf16.mxu0 0
      %3744 = vmatpush1.bf16.msra.mxu0 0
      %3745 = vmatprep.subr.bf16.mxu0 0
      %3746 = vmatpush1.bf16.msra.mxu0 0
      %3747 = vmatprep.mubr.bf16.mxu0 0
      %3748 = vmatmul.mubr.bf16.gmra.mrb[0].mxu0 %v3713
      %v3749 = vpop.f32.mrb[0].mxu0
      %v3750 = vadd.f32 0.0, %v3749
      %v3751 = vpop.f32.mrb[0].mxu0
      %v3752 = vpop.f32.mrb[0].mxu0
      %v3753 = vadd.f32 0.0, %v3752
      %v3754 = vpop.f32.mrb[0].mxu0
      %3755 = vdwg.mxu0
      %v3757 = vsel %vm2051, %v3482, 0
      %3759 = vmatprep.subr.bf16.mxu0 0
      %3760 = vmatpush1.bf16.msra.mxu0 %v520
      %3761 = vmatprep.subr.bf16.mxu0 0
      %3762 = vmatpush1.bf16.msra.mxu0 0
      %3763 = vmatprep.subr.bf16.mxu0 0
      %3764 = vmatpush1.bf16.msra.mxu0 0
      %3765 = vmatprep.subr.bf16.mxu0 0
      %3766 = vmatpush1.bf16.msra.mxu0 0
      %3767 = vmatprep.subr.bf16.mxu0 0
      %3768 = vmatpush1.bf16.msra.mxu0 0
      %3769 = vmatprep.subr.bf16.mxu0 0
      %3770 = vmatpush1.bf16.msra.mxu0 0
      %3771 = vmatprep.subr.bf16.mxu0 0
      %3772 = vmatpush1.bf16.msra.mxu0 0
      %3773 = vmatprep.subr.bf16.mxu0 0
      %3774 = vmatpush1.bf16.msra.mxu0 0
      %3775 = vmatprep.subr.bf16.mxu0 0
      %3776 = vmatpush1.bf16.msra.mxu0 0
      %3777 = vmatprep.subr.bf16.mxu0 0
      %3778 = vmatpush1.bf16.msra.mxu0 0
      %3779 = vmatprep.subr.bf16.mxu0 0
      %3780 = vmatpush1.bf16.msra.mxu0 0
      %3781 = vmatprep.subr.bf16.mxu0 0
      %3782 = vmatpush1.bf16.msra.mxu0 0
      %3783 = vmatprep.subr.bf16.mxu0 0
      %3784 = vmatpush1.bf16.msra.mxu0 0
      %3785 = vmatprep.subr.bf16.mxu0 0
      %3786 = vmatpush1.bf16.msra.mxu0 0
      %3787 = vmatprep.subr.bf16.mxu0 0
      %3788 = vmatpush1.bf16.msra.mxu0 0
      %3789 = vmatprep.subr.bf16.mxu0 0
      %3790 = vmatpush1.bf16.msra.mxu0 0
      %3791 = vmatprep.mubr.bf16.mxu0 0
      %3792 = vmatmul.mubr.bf16.gmra.mrb[0].mxu0 %v3757
      %v3793 = vpop.f32.mrb[0].mxu0
      %v3794 = vadd.f32 0.0, %v3793
      %v3795 = vpop.f32.mrb[0].mxu0
      %v3796 = vpop.f32.mrb[0].mxu0
      %v3797 = vadd.f32 0.0, %v3796
      %v3798 = vpop.f32.mrb[0].mxu0
      %3799 = vdwg.mxu0
      %v3801 = vsel %vm2051, %v3483, 0
      %3803 = vmatprep.subr.bf16.mxu0 0
      %3804 = vmatpush1.bf16.msra.mxu0 %v521
      %3805 = vmatprep.subr.bf16.mxu0 0
      %3806 = vmatpush1.bf16.msra.mxu0 0
      %3807 = vmatprep.subr.bf16.mxu0 0
      %3808 = vmatpush1.bf16.msra.mxu0 0
      %3809 = vmatprep.subr.bf16.mxu0 0
      %3810 = vmatpush1.bf16.msra.mxu0 0
      %3811 = vmatprep.subr.bf16.mxu0 0
      %3812 = vmatpush1.bf16.msra.mxu0 0
      %3813 = vmatprep.subr.bf16.mxu0 0
      %3814 = vmatpush1.bf16.msra.mxu0 0
      %3815 = vmatprep.subr.bf16.mxu0 0
      %3816 = vmatpush1.bf16.msra.mxu0 0
      %3817 = vmatprep.subr.bf16.mxu0 0
      %3818 = vmatpush1.bf16.msra.mxu0 0
      %3819 = vmatprep.subr.bf16.mxu0 0
      %3820 = vmatpush1.bf16.msra.mxu0 0
      %3821 = vmatprep.subr.bf16.mxu0 0
      %3822 = vmatpush1.bf16.msra.mxu0 0
      %3823 = vmatprep.subr.bf16.mxu0 0
      %3824 = vmatpush1.bf16.msra.mxu0 0
      %3825 = vmatprep.subr.bf16.mxu0 0
      %3826 = vmatpush1.bf16.msra.mxu0 0
      %3827 = vmatprep.subr.bf16.mxu0 0
      %3828 = vmatpush1.bf16.msra.mxu0 0
      %3829 = vmatprep.subr.bf16.mxu0 0
      %3830 = vmatpush1.bf16.msra.mxu0 0
      %3831 = vmatprep.subr.bf16.mxu0 0
      %3832 = vmatpush1.bf16.msra.mxu0 0
      %3833 = vmatprep.subr.bf16.mxu0 0
      %3834 = vmatpush1.bf16.msra.mxu0 0
      %3835 = vmatprep.mubr.bf16.mxu0 0
      %3836 = vmatmul.mubr.bf16.gmra.mrb[0].mxu0 %v3801
      %v3837 = vpop.f32.mrb[0].mxu0
      %v3838 = vadd.f32 0.0, %v3837
      %v3839 = vpop.f32.mrb[0].mxu0
      %v3840 = vpop.f32.mrb[0].mxu0
      %v3841 = vadd.f32 0.0, %v3840
      %v3842 = vpop.f32.mrb[0].mxu0
      %3843 = vdwg.mxu0
      %v3845 = vsel %vm2051, %v3484, 0
      %3847 = vmatprep.subr.bf16.mxu0 0
      %3848 = vmatpush1.bf16.msra.mxu0 %v522
      %3849 = vmatprep.subr.bf16.mxu0 0
      %3850 = vmatpush1.bf16.msra.mxu0 0
      %3851 = vmatprep.subr.bf16.mxu0 0
      %3852 = vmatpush1.bf16.msra.mxu0 0
      %3853 = vmatprep.subr.bf16.mxu0 0
      %3854 = vmatpush1.bf16.msra.mxu0 0
      %3855 = vmatprep.subr.bf16.mxu0 0
      %3856 = vmatpush1.bf16.msra.mxu0 0
      %3857 = vmatprep.subr.bf16.mxu0 0
      %3858 = vmatpush1.bf16.msra.mxu0 0
      %3859 = vmatprep.subr.bf16.mxu0 0
      %3860 = vmatpush1.bf16.msra.mxu0 0
      %3861 = vmatprep.subr.bf16.mxu0 0
      %3862 = vmatpush1.bf16.msra.mxu0 0
      %3863 = vmatprep.subr.bf16.mxu0 0
      %3864 = vmatpush1.bf16.msra.mxu0 0
      %3865 = vmatprep.subr.bf16.mxu0 0
      %3866 = vmatpush1.bf16.msra.mxu0 0
      %3867 = vmatprep.subr.bf16.mxu0 0
      %3868 = vmatpush1.bf16.msra.mxu0 0
      %3869 = vmatprep.subr.bf16.mxu0 0
      %3870 = vmatpush1.bf16.msra.mxu0 0
      %3871 = vmatprep.subr.bf16.mxu0 0
      %3872 = vmatpush1.bf16.msra.mxu0 0
      %3873 = vmatprep.subr.bf16.mxu0 0
      %3874 = vmatpush1.bf16.msra.mxu0 0
      %3875 = vmatprep.subr.bf16.mxu0 0
      %3876 = vmatpush1.bf16.msra.mxu0 0
      %3877 = vmatprep.subr.bf16.mxu0 0
      %3878 = vmatpush1.bf16.msra.mxu0 0
      %3879 = vmatprep.mubr.bf16.mxu0 0
      %3880 = vmatmul.mubr.bf16.gmra.mrb[0].mxu0 %v3845
      %v3881 = vpop.f32.mrb[0].mxu0
      %v3882 = vadd.f32 0.0, %v3881
      %v3883 = vpop.f32.mrb[0].mxu0
      %v3884 = vpop.f32.mrb[0].mxu0
      %v3885 = vadd.f32 0.0, %v3884
      %v3886 = vpop.f32.mrb[0].mxu0
      %3887 = vdwg.mxu0
      %v3889 = vsel %vm2051, %v3485, 0
      %3891 = vmatprep.subr.bf16.mxu0 0
      %3892 = vmatpush1.bf16.msra.mxu0 %v523
      %3893 = vmatprep.subr.bf16.mxu0 0
      %3894 = vmatpush1.bf16.msra.mxu0 0
      %3895 = vmatprep.subr.bf16.mxu0 0
      %3896 = vmatpush1.bf16.msra.mxu0 0
      %3897 = vmatprep.subr.bf16.mxu0 0
      %3898 = vmatpush1.bf16.msra.mxu0 0
      %3899 = vmatprep.subr.bf16.mxu0 0
      %3900 = vmatpush1.bf16.msra.mxu0 0
      %3901 = vmatprep.subr.bf16.mxu0 0
      %3902 = vmatpush1.bf16.msra.mxu0 0
      %3903 = vmatprep.subr.bf16.mxu0 0
      %3904 = vmatpush1.bf16.msra.mxu0 0
      %3905 = vmatprep.subr.bf16.mxu0 0
      %3906 = vmatpush1.bf16.msra.mxu0 0
      %3907 = vmatprep.subr.bf16.mxu0 0
      %3908 = vmatpush1.bf16.msra.mxu0 0
      %3909 = vmatprep.subr.bf16.mxu0 0
      %3910 = vmatpush1.bf16.msra.mxu0 0
      %3911 = vmatprep.subr.bf16.mxu0 0
      %3912 = vmatpush1.bf16.msra.mxu0 0
      %3913 = vmatprep.subr.bf16.mxu0 0
      %3914 = vmatpush1.bf16.msra.mxu0 0
      %3915 = vmatprep.subr.bf16.mxu0 0
      %3916 = vmatpush1.bf16.msra.mxu0 0
      %3917 = vmatprep.subr.bf16.mxu0 0
      %3918 = vmatpush1.bf16.msra.mxu0 0
      %3919 = vmatprep.subr.bf16.mxu0 0
      %3920 = vmatpush1.bf16.msra.mxu0 0
      %3921 = vmatprep.subr.bf16.mxu0 0
      %3922 = vmatpush1.bf16.msra.mxu0 0
      %3923 = vmatprep.mubr.bf16.mxu0 0
      %3924 = vmatmul.mubr.bf16.gmra.mrb[0].mxu0 %v3889
      %v3925 = vpop.f32.mrb[0].mxu0
      %v3926 = vadd.f32 0.0, %v3925
      %v3927 = vpop.f32.mrb[0].mxu0
      %v3928 = vpop.f32.mrb[0].mxu0
      %v3929 = vadd.f32 0.0, %v3928
      %v3930 = vpop.f32.mrb[0].mxu0
      %3931 = vdwg.mxu0
      %v3933 = vsel %vm2051, %v3486, 0
      %3935 = vmatprep.subr.bf16.mxu0 0
      %3936 = vmatpush1.bf16.msra.mxu0 %v524
      %3937 = vmatprep.subr.bf16.mxu0 0
      %3938 = vmatpush1.bf16.msra.mxu0 0
      %3939 = vmatprep.subr.bf16.mxu0 0
      %3940 = vmatpush1.bf16.msra.mxu0 0
      %3941 = vmatprep.subr.bf16.mxu0 0
      %3942 = vmatpush1.bf16.msra.mxu0 0
      %3943 = vmatprep.subr.bf16.mxu0 0
      %3944 = vmatpush1.bf16.msra.mxu0 0
      %3945 = vmatprep.subr.bf16.mxu0 0
      %3946 = vmatpush1.bf16.msra.mxu0 0
      %3947 = vmatprep.subr.bf16.mxu0 0
      %3948 = vmatpush1.bf16.msra.mxu0 0
      %3949 = vmatprep.subr.bf16.mxu0 0
      %3950 = vmatpush1.bf16.msra.mxu0 0
      %3951 = vmatprep.subr.bf16.mxu0 0
      %3952 = vmatpush1.bf16.msra.mxu0 0
      %3953 = vmatprep.subr.bf16.mxu0 0
      %3954 = vmatpush1.bf16.msra.mxu0 0
      %3955 = vmatprep.subr.bf16.mxu0 0
      %3956 = vmatpush1.bf16.msra.mxu0 0
      %3957 = vmatprep.subr.bf16.mxu0 0
      %3958 = vmatpush1.bf16.msra.mxu0 0
      %3959 = vmatprep.subr.bf16.mxu0 0
      %3960 = vmatpush1.bf16.msra.mxu0 0
      %3961 = vmatprep.subr.bf16.mxu0 0
      %3962 = vmatpush1.bf16.msra.mxu0 0
      %3963 = vmatprep.subr.bf16.mxu0 0
      %3964 = vmatpush1.bf16.msra.mxu0 0
      %3965 = vmatprep.subr.bf16.mxu0 0
      %3966 = vmatpush1.bf16.msra.mxu0 0
      %3967 = vmatprep.mubr.bf16.mxu0 0
      %3968 = vmatmul.mubr.bf16.gmra.mrb[0].mxu0 %v3933
      %v3969 = vpop.f32.mrb[0].mxu0
      %v3970 = vadd.f32 0.0, %v3969
      %v3971 = vpop.f32.mrb[0].mxu0
      %v3972 = vpop.f32.mrb[0].mxu0
      %v3973 = vadd.f32 0.0, %v3972
      %v3974 = vpop.f32.mrb[0].mxu0
      %3975 = vdwg.mxu0
      %v3977 = vsel %vm2051, %v3487, 0
      %3979 = vmatprep.subr.bf16.mxu0 0
      %3980 = vmatpush1.bf16.msra.mxu0 %v525
      %3981 = vmatprep.subr.bf16.mxu0 0
      %3982 = vmatpush1.bf16.msra.mxu0 0
      %3983 = vmatprep.subr.bf16.mxu0 0
      %3984 = vmatpush1.bf16.msra.mxu0 0
      %3985 = vmatprep.subr.bf16.mxu0 0
      %3986 = vmatpush1.bf16.msra.mxu0 0
      %3987 = vmatprep.subr.bf16.mxu0 0
      %3988 = vmatpush1.bf16.msra.mxu0 0
      %3989 = vmatprep.subr.bf16.mxu0 0
      %3990 = vmatpush1.bf16.msra.mxu0 0
      %3991 = vmatprep.subr.bf16.mxu0 0
      %3992 = vmatpush1.bf16.msra.mxu0 0
      %3993 = vmatprep.subr.bf16.mxu0 0
      %3994 = vmatpush1.bf16.msra.mxu0 0
      %3995 = vmatprep.subr.bf16.mxu0 0
      %3996 = vmatpush1.bf16.msra.mxu0 0
      %3997 = vmatprep.subr.bf16.mxu0 0
      %3998 = vmatpush1.bf16.msra.mxu0 0
      %3999 = vmatprep.subr.bf16.mxu0 0
      %4000 = vmatpush1.bf16.msra.mxu0 0
      %4001 = vmatprep.subr.bf16.mxu0 0
      %4002 = vmatpush1.bf16.msra.mxu0 0
      %4003 = vmatprep.subr.bf16.mxu0 0
      %4004 = vmatpush1.bf16.msra.mxu0 0
      %4005 = vmatprep.subr.bf16.mxu0 0
      %4006 = vmatpush1.bf16.msra.mxu0 0
      %4007 = vmatprep.subr.bf16.mxu0 0
      %4008 = vmatpush1.bf16.msra.mxu0 0
      %4009 = vmatprep.subr.bf16.mxu0 0
      %4010 = vmatpush1.bf16.msra.mxu0 0
      %4011 = vmatprep.mubr.bf16.mxu0 0
      %4012 = vmatmul.mubr.bf16.gmra.mrb[0].mxu0 %v3977
      %v4013 = vpop.f32.mrb[0].mxu0
      %v4014 = vadd.f32 0.0, %v4013
      %v4015 = vpop.f32.mrb[0].mxu0
      %v4016 = vpop.f32.mrb[0].mxu0
      %v4017 = vadd.f32 0.0, %v4016
      %v4018 = vpop.f32.mrb[0].mxu0
      %4019 = vdwg.mxu0
      %v4021 = vsel %vm2051, %v3488, 0
      %4023 = vmatprep.subr.bf16.mxu0 0
      %4024 = vmatpush1.bf16.msra.mxu0 %v526
      %4025 = vmatprep.subr.bf16.mxu0 0
      %4026 = vmatpush1.bf16.msra.mxu0 0
      %4027 = vmatprep.subr.bf16.mxu0 0
      %4028 = vmatpush1.bf16.msra.mxu0 0
      %4029 = vmatprep.subr.bf16.mxu0 0
      %4030 = vmatpush1.bf16.msra.mxu0 0
      %4031 = vmatprep.subr.bf16.mxu0 0
      %4032 = vmatpush1.bf16.msra.mxu0 0
      %4033 = vmatprep.subr.bf16.mxu0 0
      %4034 = vmatpush1.bf16.msra.mxu0 0
      %4035 = vmatprep.subr.bf16.mxu0 0
      %4036 = vmatpush1.bf16.msra.mxu0 0
      %4037 = vmatprep.subr.bf16.mxu0 0
      %4038 = vmatpush1.bf16.msra.mxu0 0
      %4039 = vmatprep.subr.bf16.mxu0 0
      %4040 = vmatpush1.bf16.msra.mxu0 0
      %4041 = vmatprep.subr.bf16.mxu0 0
      %4042 = vmatpush1.bf16.msra.mxu0 0
      %4043 = vmatprep.subr.bf16.mxu0 0
      %4044 = vmatpush1.bf16.msra.mxu0 0
      %4045 = vmatprep.subr.bf16.mxu0 0
      %4046 = vmatpush1.bf16.msra.mxu0 0
      %4047 = vmatprep.subr.bf16.mxu0 0
      %4048 = vmatpush1.bf16.msra.mxu0 0
      %4049 = vmatprep.subr.bf16.mxu0 0
      %4050 = vmatpush1.bf16.msra.mxu0 0
      %4051 = vmatprep.subr.bf16.mxu0 0
      %4052 = vmatpush1.bf16.msra.mxu0 0
      %4053 = vmatprep.subr.bf16.mxu0 0
      %4054 = vmatpush1.bf16.msra.mxu0 0
      %4055 = vmatprep.mubr.bf16.mxu0 0
      %4056 = vmatmul.mubr.bf16.gmra.mrb[0].mxu0 %v4021
      %v4057 = vpop.f32.mrb[0].mxu0
      %v4058 = vadd.f32 0.0, %v4057
      %v4059 = vpop.f32.mrb[0].mxu0
      %v4060 = vpop.f32.mrb[0].mxu0
      %v4061 = vadd.f32 0.0, %v4060
      %v4062 = vpop.f32.mrb[0].mxu0
      %4063 = vdwg.mxu0
      %v4065 = vsel %vm2051, %v3489, 0
      %4067 = vmatprep.subr.bf16.mxu0 0
      %4068 = vmatpush1.bf16.msra.mxu0 %v527
      %4069 = vmatprep.subr.bf16.mxu0 0
      %4070 = vmatpush1.bf16.msra.mxu0 0
      %4071 = vmatprep.subr.bf16.mxu0 0
      %4072 = vmatpush1.bf16.msra.mxu0 0
      %4073 = vmatprep.subr.bf16.mxu0 0
      %4074 = vmatpush1.bf16.msra.mxu0 0
      %4075 = vmatprep.subr.bf16.mxu0 0
      %4076 = vmatpush1.bf16.msra.mxu0 0
      %4077 = vmatprep.subr.bf16.mxu0 0
      %4078 = vmatpush1.bf16.msra.mxu0 0
      %4079 = vmatprep.subr.bf16.mxu0 0
      %4080 = vmatpush1.bf16.msra.mxu0 0
      %4081 = vmatprep.subr.bf16.mxu0 0
      %4082 = vmatpush1.bf16.msra.mxu0 0
      %4083 = vmatprep.subr.bf16.mxu0 0
      %4084 = vmatpush1.bf16.msra.mxu0 0
      %4085 = vmatprep.subr.bf16.mxu0 0
      %4086 = vmatpush1.bf16.msra.mxu0 0
      %4087 = vmatprep.subr.bf16.mxu0 0
      %4088 = vmatpush1.bf16.msra.mxu0 0
      %4089 = vmatprep.subr.bf16.mxu0 0
      %4090 = vmatpush1.bf16.msra.mxu0 0
      %4091 = vmatprep.subr.bf16.mxu0 0
      %4092 = vmatpush1.bf16.msra.mxu0 0
      %4093 = vmatprep.subr.bf16.mxu0 0
      %4094 = vmatpush1.bf16.msra.mxu0 0
      %4095 = vmatprep.subr.bf16.mxu0 0
      %4096 = vmatpush1.bf16.msra.mxu0 0
      %4097 = vmatprep.subr.bf16.mxu0 0
      %4098 = vmatpush1.bf16.msra.mxu0 0
      %4099 = vmatprep.mubr.bf16.mxu0 0
      %4100 = vmatmul.mubr.bf16.gmra.mrb[0].mxu0 %v4065
      %v4101 = vpop.f32.mrb[0].mxu0
      %v4102 = vadd.f32 0.0, %v4101
      %v4103 = vpop.f32.mrb[0].mxu0
      %v4104 = vpop.f32.mrb[0].mxu0
      %v4105 = vadd.f32 0.0, %v4104
      %v4106 = vpop.f32.mrb[0].mxu0
      %4107 = vdwg.mxu0
      %v4109 = vsel %vm2051, %v3490, 0
      %4111 = vmatprep.subr.bf16.mxu0 0
      %4112 = vmatpush1.bf16.msra.mxu0 %v528
      %4113 = vmatprep.subr.bf16.mxu0 0
      %4114 = vmatpush1.bf16.msra.mxu0 0
      %4115 = vmatprep.subr.bf16.mxu0 0
      %4116 = vmatpush1.bf16.msra.mxu0 0
      %4117 = vmatprep.subr.bf16.mxu0 0
      %4118 = vmatpush1.bf16.msra.mxu0 0
      %4119 = vmatprep.subr.bf16.mxu0 0
      %4120 = vmatpush1.bf16.msra.mxu0 0
      %4121 = vmatprep.subr.bf16.mxu0 0
      %4122 = vmatpush1.bf16.msra.mxu0 0
      %4123 = vmatprep.subr.bf16.mxu0 0
      %4124 = vmatpush1.bf16.msra.mxu0 0
      %4125 = vmatprep.subr.bf16.mxu0 0
      %4126 = vmatpush1.bf16.msra.mxu0 0
      %4127 = vmatprep.subr.bf16.mxu0 0
      %4128 = vmatpush1.bf16.msra.mxu0 0
      %4129 = vmatprep.subr.bf16.mxu0 0
      %4130 = vmatpush1.bf16.msra.mxu0 0
      %4131 = vmatprep.subr.bf16.mxu0 0
      %4132 = vmatpush1.bf16.msra.mxu0 0
      %4133 = vmatprep.subr.bf16.mxu0 0
      %4134 = vmatpush1.bf16.msra.mxu0 0
      %4135 = vmatprep.subr.bf16.mxu0 0
      %4136 = vmatpush1.bf16.msra.mxu0 0
      %4137 = vmatprep.subr.bf16.mxu0 0
      %4138 = vmatpush1.bf16.msra.mxu0 0
      %4139 = vmatprep.subr.bf16.mxu0 0
      %4140 = vmatpush1.bf16.msra.mxu0 0
      %4141 = vmatprep.subr.bf16.mxu0 0
      %4142 = vmatpush1.bf16.msra.mxu0 0
      %4143 = vmatprep.mubr.bf16.mxu0 0
      %4144 = vmatmul.mubr.bf16.gmra.mrb[0].mxu0 %v4109
      %v4145 = vpop.f32.mrb[0].mxu0
      %v4146 = vadd.f32 0.0, %v4145
      %v4147 = vpop.f32.mrb[0].mxu0
      %v4148 = vpop.f32.mrb[0].mxu0
      %v4149 = vadd.f32 0.0, %v4148
      %v4150 = vpop.f32.mrb[0].mxu0
      %4151 = vdwg.mxu0
      %v4153 = vsel %vm2051, %v3491, 0
      %4155 = vmatprep.subr.bf16.mxu0 0
      %4156 = vmatpush1.bf16.msra.mxu0 %v529
      %4157 = vmatprep.subr.bf16.mxu0 0
      %4158 = vmatpush1.bf16.msra.mxu0 0
      %4159 = vmatprep.subr.bf16.mxu0 0
      %4160 = vmatpush1.bf16.msra.mxu0 0
      %4161 = vmatprep.subr.bf16.mxu0 0
      %4162 = vmatpush1.bf16.msra.mxu0 0
      %4163 = vmatprep.subr.bf16.mxu0 0
      %4164 = vmatpush1.bf16.msra.mxu0 0
      %4165 = vmatprep.subr.bf16.mxu0 0
      %4166 = vmatpush1.bf16.msra.mxu0 0
      %4167 = vmatprep.subr.bf16.mxu0 0
      %4168 = vmatpush1.bf16.msra.mxu0 0
      %4169 = vmatprep.subr.bf16.mxu0 0
      %4170 = vmatpush1.bf16.msra.mxu0 0
      %4171 = vmatprep.subr.bf16.mxu0 0
      %4172 = vmatpush1.bf16.msra.mxu0 0
      %4173 = vmatprep.subr.bf16.mxu0 0
      %4174 = vmatpush1.bf16.msra.mxu0 0
      %4175 = vmatprep.subr.bf16.mxu0 0
      %4176 = vmatpush1.bf16.msra.mxu0 0
      %4177 = vmatprep.subr.bf16.mxu0 0
      %4178 = vmatpush1.bf16.msra.mxu0 0
      %4179 = vmatprep.subr.bf16.mxu0 0
      %4180 = vmatpush1.bf16.msra.mxu0 0
      %4181 = vmatprep.subr.bf16.mxu0 0
      %4182 = vmatpush1.bf16.msra.mxu0 0
      %4183 = vmatprep.subr.bf16.mxu0 0
      %4184 = vmatpush1.bf16.msra.mxu0 0
      %4185 = vmatprep.subr.bf16.mxu0 0
      %4186 = vmatpush1.bf16.msra.mxu0 0
      %4187 = vmatprep.mubr.bf16.mxu0 0
      %4188 = vmatmul.mubr.bf16.gmra.mrb[0].mxu0 %v4153
      %v4189 = vpop.f32.mrb[0].mxu0
      %v4190 = vadd.f32 0.0, %v4189
      %v4191 = vpop.f32.mrb[0].mxu0
      %v4192 = vpop.f32.mrb[0].mxu0
      %v4193 = vadd.f32 0.0, %v4192
      %v4194 = vpop.f32.mrb[0].mxu0
      %4195 = vdwg.mxu0
      %v4196 = vld [vmem:[%s369] sm:$0xff]
      %v4197 = vld [vmem:[%s369 + $0x8] sm:$0xff]
      %v4198 = vld [vmem:[%s369 + $0x10] sm:$0xff]
      %v4199 = vld [vmem:[%s369 + $0x18] sm:$0xff]
      %v4200 = vld [vmem:[%s369 + $0x20] sm:$0xff]
      %v4201 = vld [vmem:[%s369 + $0x28] sm:$0xff]
      %v4202 = vld [vmem:[%s369 + $0x30] sm:$0xff]
      %v4203 = vld [vmem:[%s369 + $0x38] sm:$0xff]
      %v4204 = vld [vmem:[%s369 + $0x40] sm:$0xff]
      %v4205 = vld [vmem:[%s369 + $0x48] sm:$0xff]
      %v4206 = vld [vmem:[%s369 + $0x50] sm:$0xff]
      %v4207 = vld [vmem:[%s369 + $0x58] sm:$0xff]
      %v4208 = vld [vmem:[%s369 + $0x60] sm:$0xff]
      %v4209 = vld [vmem:[%s369 + $0x68] sm:$0xff]
      %v4210 = vld [vmem:[%s369 + $0x70] sm:$0xff]
      %v4211 = vld [vmem:[%s369 + $0x78] sm:$0xff]
      %v4212 = vld [vmem:[%s369 + $0x80] sm:$0xff]
      %v4213 = vld [vmem:[%s369 + $0x88] sm:$0xff]
      %v4214 = vld [vmem:[%s369 + $0x90] sm:$0xff]
      %v4215 = vld [vmem:[%s369 + $0x98] sm:$0xff]
      %v4216 = vld [vmem:[%s369 + $0xa0] sm:$0xff]
      %v4217 = vld [vmem:[%s369 + $0xa8] sm:$0xff]
      %v4218 = vld [vmem:[%s369 + $0xb0] sm:$0xff]
      %v4219 = vld [vmem:[%s369 + $0xb8] sm:$0xff]
      %v4220 = vld [vmem:[%s369 + $0xc0] sm:$0xff]
      %v4221 = vld [vmem:[%s369 + $0xc8] sm:$0xff]
      %v4222 = vld [vmem:[%s369 + $0xd0] sm:$0xff]
      %v4223 = vld [vmem:[%s369 + $0xd8] sm:$0xff]
      %v4224 = vld [vmem:[%s369 + $0xe0] sm:$0xff]
      %v4225 = vld [vmem:[%s369 + $0xe8] sm:$0xff]
      %v4226 = vld [vmem:[%s369 + $0xf0] sm:$0xff]
      %v4227 = vld [vmem:[%s369 + $0xf8] sm:$0xff]
      %v4228 = vld [vmem:[%s376] sm:$0xff]
      %v4229 = vld [vmem:[%s376 + $0x8] sm:$0xff]
      %v4230 = vld [vmem:[%s376 + $0x10] sm:$0xff]
      %v4231 = vld [vmem:[%s376 + $0x18] sm:$0xff]
      %v4232 = vld [vmem:[%s376 + $0x20] sm:$0xff]
      %v4233 = vld [vmem:[%s376 + $0x28] sm:$0xff]
      %v4234 = vld [vmem:[%s376 + $0x30] sm:$0xff]
      %v4235 = vld [vmem:[%s376 + $0x38] sm:$0xff]
      %v4236 = vld [vmem:[%s376 + $0x40] sm:$0xff]
      %v4237 = vld [vmem:[%s376 + $0x48] sm:$0xff]
      %v4238 = vld [vmem:[%s376 + $0x50] sm:$0xff]
      %v4239 = vld [vmem:[%s376 + $0x58] sm:$0xff]
      %v4240 = vld [vmem:[%s376 + $0x60] sm:$0xff]
      %v4241 = vld [vmem:[%s376 + $0x68] sm:$0xff]
      %v4242 = vld [vmem:[%s376 + $0x70] sm:$0xff]
      %v4243 = vld [vmem:[%s376 + $0x78] sm:$0xff]
      %v4244 = vld [vmem:[%s376 + $0x80] sm:$0xff]
      %v4245 = vld [vmem:[%s376 + $0x88] sm:$0xff]
      %v4246 = vld [vmem:[%s376 + $0x90] sm:$0xff]
      %v4247 = vld [vmem:[%s376 + $0x98] sm:$0xff]
      %v4248 = vld [vmem:[%s376 + $0xa0] sm:$0xff]
      %v4249 = vld [vmem:[%s376 + $0xa8] sm:$0xff]
      %v4250 = vld [vmem:[%s376 + $0xb0] sm:$0xff]
      %v4251 = vld [vmem:[%s376 + $0xb8] sm:$0xff]
      %v4252 = vld [vmem:[%s376 + $0xc0] sm:$0xff]
      %v4253 = vld [vmem:[%s376 + $0xc8] sm:$0xff]
      %v4254 = vld [vmem:[%s376 + $0xd0] sm:$0xff]
      %v4255 = vld [vmem:[%s376 + $0xd8] sm:$0xff]
      %v4256 = vld [vmem:[%s376 + $0xe0] sm:$0xff]
      %v4257 = vld [vmem:[%s376 + $0xe8] sm:$0xff]
      %v4258 = vld [vmem:[%s376 + $0xf0] sm:$0xff]
      %v4259 = vld [vmem:[%s376 + $0xf8] sm:$0xff]
      %v4260 = vadd.f32 %v4196, %v4228
      %v4261 = vadd.f32 %v4197, %v4229
      %v4262 = vadd.f32 %v4198, %v4230
      %v4263 = vadd.f32 %v4199, %v4231
      %v4264 = vadd.f32 %v4200, %v4232
      %v4265 = vadd.f32 %v4201, %v4233
      %v4266 = vadd.f32 %v4202, %v4234
      %v4267 = vadd.f32 %v4203, %v4235
      %v4268 = vadd.f32 %v4204, %v4236
      %v4269 = vadd.f32 %v4205, %v4237
      %v4270 = vadd.f32 %v4206, %v4238
      %v4271 = vadd.f32 %v4207, %v4239
      %v4272 = vadd.f32 %v4208, %v4240
      %v4273 = vadd.f32 %v4209, %v4241
      %v4274 = vadd.f32 %v4210, %v4242
      %v4275 = vadd.f32 %v4211, %v4243
      %v4276 = vadd.f32 %v4212, %v4244
      %v4277 = vadd.f32 %v4213, %v4245
      %v4278 = vadd.f32 %v4214, %v4246
      %v4279 = vadd.f32 %v4215, %v4247
      %v4280 = vadd.f32 %v4216, %v4248
      %v4281 = vadd.f32 %v4217, %v4249
      %v4282 = vadd.f32 %v4218, %v4250
      %v4283 = vadd.f32 %v4219, %v4251
      %v4284 = vadd.f32 %v4220, %v4252
      %v4285 = vadd.f32 %v4221, %v4253
      %v4286 = vadd.f32 %v4222, %v4254
      %v4287 = vadd.f32 %v4223, %v4255
      %v4288 = vadd.f32 %v4224, %v4256
      %v4289 = vadd.f32 %v4225, %v4257
      %v4290 = vadd.f32 %v4226, %v4258
      %v4291 = vadd.f32 %v4227, %v4259
      %v4292 = vadd.f32 %v4260, %v2458
      %v4293 = vadd.f32 %v4261, %v2461
      %v4294 = vadd.f32 %v4262, %v2502
      %v4295 = vadd.f32 %v4263, %v2505
      %v4296 = vadd.f32 %v4264, %v2546
      %v4297 = vadd.f32 %v4265, %v2549
      %v4298 = vadd.f32 %v4266, %v2590
      %v4299 = vadd.f32 %v4267, %v2593
      %v4300 = vadd.f32 %v4268, %v2634
      %v4301 = vadd.f32 %v4269, %v2637
      %v4302 = vadd.f32 %v4270, %v2678
      %v4303 = vadd.f32 %v4271, %v2681
      %v4304 = vadd.f32 %v4272, %v2722
      %v4305 = vadd.f32 %v4273, %v2725
      %v4306 = vadd.f32 %v4274, %v2766
      %v4307 = vadd.f32 %v4275, %v2769
      %v4308 = vadd.f32 %v4276, %v2810
      %v4309 = vadd.f32 %v4277, %v2813
      %v4310 = vadd.f32 %v4278, %v2854
      %v4311 = vadd.f32 %v4279, %v2857
      %v4312 = vadd.f32 %v4280, %v2898
      %v4313 = vadd.f32 %v4281, %v2901
      %v4314 = vadd.f32 %v4282, %v2942
      %v4315 = vadd.f32 %v4283, %v2945
      %v4316 = vadd.f32 %v4284, %v2986
      %v4317 = vadd.f32 %v4285, %v2989
      %v4318 = vadd.f32 %v4286, %v3030
      %v4319 = vadd.f32 %v4287, %v3033
      %v4320 = vadd.f32 %v4288, %v3074
      %v4321 = vadd.f32 %v4289, %v3077
      %v4322 = vadd.f32 %v4290, %v3118
      %v4323 = vadd.f32 %v4291, %v3121
      %v4324 = vadd.f32 %v4292, %v3530
      %v4325 = vadd.f32 %v4293, %v3533
      %v4326 = vadd.f32 %v4294, %v3574
      %v4327 = vadd.f32 %v4295, %v3577
      %v4328 = vadd.f32 %v4296, %v3618
      %v4329 = vadd.f32 %v4297, %v3621
      %v4330 = vadd.f32 %v4298, %v3662
      %v4331 = vadd.f32 %v4299, %v3665
      %v4332 = vadd.f32 %v4300, %v3706
      %v4333 = vadd.f32 %v4301, %v3709
      %v4334 = vadd.f32 %v4302, %v3750
      %v4335 = vadd.f32 %v4303, %v3753
      %v4336 = vadd.f32 %v4304, %v3794
      %v4337 = vadd.f32 %v4305, %v3797
      %v4338 = vadd.f32 %v4306, %v3838
      %v4339 = vadd.f32 %v4307, %v3841
      %v4340 = vadd.f32 %v4308, %v3882
      %v4341 = vadd.f32 %v4309, %v3885
      %v4342 = vadd.f32 %v4310, %v3926
      %v4343 = vadd.f32 %v4311, %v3929
      %v4344 = vadd.f32 %v4312, %v3970
      %v4345 = vadd.f32 %v4313, %v3973
      %v4346 = vadd.f32 %v4314, %v4014
      %v4347 = vadd.f32 %v4315, %v4017
      %v4348 = vadd.f32 %v4316, %v4058
      %v4349 = vadd.f32 %v4317, %v4061
      %v4350 = vadd.f32 %v4318, %v4102
      %v4351 = vadd.f32 %v4319, %v4105
      %v4352 = vadd.f32 %v4320, %v4146
      %v4353 = vadd.f32 %v4321, %v4149
      %v4354 = vadd.f32 %v4322, %v4190
      %v4355 = vadd.f32 %v4323, %v4193
      %4356 = vst.msk [vmem:[%s383] sm:$0xff] %vm578, %v4324
      %4357 = vst.msk [vmem:[%s383 + $0x8] sm:$0xff] %vm578, %v4325
      %4358 = vst.msk [vmem:[%s383 + $0x10] sm:$0xff] %vm578, %v4326
      %4359 = vst.msk [vmem:[%s383 + $0x18] sm:$0xff] %vm578, %v4327
      %4360 = vst.msk [vmem:[%s383 + $0x20] sm:$0xff] %vm578, %v4328
      %4361 = vst.msk [vmem:[%s383 + $0x28] sm:$0xff] %vm578, %v4329
      %4362 = vst.msk [vmem:[%s383 + $0x30] sm:$0xff] %vm578, %v4330
      %4363 = vst.msk [vmem:[%s383 + $0x38] sm:$0xff] %vm578, %v4331
      %4364 = vst.msk [vmem:[%s383 + $0x40] sm:$0xff] %vm578, %v4332
      %4365 = vst.msk [vmem:[%s383 + $0x48] sm:$0xff] %vm578, %v4333
      %4366 = vst.msk [vmem:[%s383 + $0x50] sm:$0xff] %vm578, %v4334
      %4367 = vst.msk [vmem:[%s383 + $0x58] sm:$0xff] %vm578, %v4335
      %4368 = vst.msk [vmem:[%s383 + $0x60] sm:$0xff] %vm578, %v4336
      %4369 = vst.msk [vmem:[%s383 + $0x68] sm:$0xff] %vm578, %v4337
      %4370 = vst.msk [vmem:[%s383 + $0x70] sm:$0xff] %vm578, %v4338
      %4371 = vst.msk [vmem:[%s383 + $0x78] sm:$0xff] %vm578, %v4339
      %4372 = vst.msk [vmem:[%s383 + $0x80] sm:$0xff] %vm578, %v4340
      %4373 = vst.msk [vmem:[%s383 + $0x88] sm:$0xff] %vm578, %v4341
      %4374 = vst.msk [vmem:[%s383 + $0x90] sm:$0xff] %vm578, %v4342
      %4375 = vst.msk [vmem:[%s383 + $0x98] sm:$0xff] %vm578, %v4343
      %4376 = vst.msk [vmem:[%s383 + $0xa0] sm:$0xff] %vm578, %v4344
      %4377 = vst.msk [vmem:[%s383 + $0xa8] sm:$0xff] %vm578, %v4345
      %4378 = vst.msk [vmem:[%s383 + $0xb0] sm:$0xff] %vm578, %v4346
      %4379 = vst.msk [vmem:[%s383 + $0xb8] sm:$0xff] %vm578, %v4347
      %4380 = vst.msk [vmem:[%s383 + $0xc0] sm:$0xff] %vm578, %v4348
      %4381 = vst.msk [vmem:[%s383 + $0xc8] sm:$0xff] %vm578, %v4349
      %4382 = vst.msk [vmem:[%s383 + $0xd0] sm:$0xff] %vm578, %v4350
      %4383 = vst.msk [vmem:[%s383 + $0xd8] sm:$0xff] %vm578, %v4351
      %4384 = vst.msk [vmem:[%s383 + $0xe0] sm:$0xff] %vm578, %v4352
      %4385 = vst.msk [vmem:[%s383 + $0xe8] sm:$0xff] %vm578, %v4353
      %4386 = vst.msk [vmem:[%s383 + $0xf0] sm:$0xff] %vm578, %v4354
      %4387 = vst.msk [vmem:[%s383 + $0xf8] sm:$0xff] %vm578, %v4355
      %s4388 = smul.u32 16, %s17
      %p4389 = scmp.lt.s32.totalorder %s4388, 31
      %s4390 = scalar_select %p4389, %s4388, 31
      %s4391 = smul.addr %s4390, 2
      %s4392 = smul.addr %s4391, 8
      %s4393 = scalar_lea.vmem %s6, %s4392
      // Predicated region
      $region45: #{cross_block.17} parent=43 // pred_check
        %p4394 = pneg %p191
      $region46: #{cross_block.17} parent=43 // pred_check_branch
        %4396 = sbr.rel (%p4394) target = $region48
      $region47: #{cross_block.17} parent=43 // pred_region
        %s4397 = smul.u32 16, %s17
      $region48: #{cross_block.17} parent=43 // pred_fallthru
        _
    $region44: #{cross_block.17} parent=5 // pred_fallthru
      _
    %p4398 = scmp.le.s32.totalorder 2, %s12
    // Predicated region
    $region49: #{cross_block.17} parent=5 // pred_check
      %p4399 = pneg %p4398
    $region50: #{cross_block.17} parent=5 // pred_check_branch
      %4401 = sbr.rel (%p4399) target = $region52
    $region51: #{cross_block.17} parent=5 // pred_region
      %s4402 = ssub.s32 %s12, 2
      // Predicated region
      $region53: #{cross_block.17} parent=51 // pred_check
        %p4403 = pneg %p197
      $region54: #{cross_block.17} parent=51 // pred_check_branch
        %4405 = sbr.rel (%p4403) target = $region56
      $region55: #{cross_block.17} parent=51 // pred_region
        %s4406 = smul.u32 16, %s18
        %p4407 = scmp.lt.s32.totalorder %s4406, 31
        %s4408 = scalar_select %p4407, %s4406, 31
        %s4409 = smul.addr %s4408, 2
        %s4410 = smul.addr %s4409, 8
        %s4411 = scalar_lea.vmem %s6, %s4410
      $region56: #{cross_block.17} parent=51 // pred_fallthru
        _
    $region52: #{cross_block.17} parent=5 // pred_fallthru
      _
  $region6: #{cross_block.17} parent=0 // loop_footer
    %s16 = sadd.s32 1, %s12
  $region7: #{cross_block.17} parent=0 // loop_footer_branch
    %11 = sbr.rel target = $region3
  $region8: #{cross_block.17} parent=0 // loop_exit
    _

</llo_original>
